<compile_context>
chip_gen: v7x
topology: tpu7x:2x2x1
jax: 0.10.0
libtpu: 0.0.40
codegen_flags: <defaults>
</compile_context>

<pallas_src>
import functools

import jax
import jax.numpy as jnp
from jax.experimental import pallas as pl
from jax.experimental.pallas import tpu as pltpu

EPS = 1e-5


def _round_up(x, m):
    return (x + m - 1) // m * m


# ------------------------------- fused kernel -------------------------------
def _res_block_kernel(x_ref, w1_ref, w2_ref, g1_ref, b1_ref, g2_ref, b2_ref,
                      out_ref, xpad_ref, col_ref, *, eps):
    """Fused: relu(BN(conv(x))) -> y1 ; relu(BN(conv(y1)) + x) -> out.

    x_ref   : (N, H, W, Cp)     input, channels zero-padded to Cp (lane-dense)
    w*_ref  : (9*Cp, Cp)        im2col conv weights, row = (kh*3+kw)*Cp + c_in
    g*/b*   : (1, Cp)           BN gamma / beta (zero-padded)
    out_ref : (N, H, W, Cp)
    xpad_ref: (N, H+2, W+2, Cp) VMEM scratch, zero halo (in-kernel padding)
    col_ref : (N*H*W, 9*Cp)     VMEM scratch, im2col slab
    """
    N, H, W, Cp = out_ref.shape
    M = N * H * W
    inv_m = 1.0 / M

    # Zero the halo once; only the interior is rewritten per half.
    xpad_ref[...] = jnp.zeros_like(xpad_ref)

    def conv_bn(w_ref, g_ref, b_ref):
        # im2col: 9 shifted windows -> one lane-dense (M, 9*Cp) slab.
        for t in range(9):
            dh, dw = divmod(t, 3)
            col_ref[:, t * Cp:(t + 1) * Cp] = (
                xpad_ref[:, dh:dh + H, dw:dw + W, :].reshape(M, Cp))
        # Single MXU matmul, contraction dim K = 9*Cp.
        acc = jnp.dot(col_ref[...], w_ref[...],
                      preferred_element_type=jnp.float32)
        # BatchNorm2d, training mode: one-pass batch stats (biased variance),
        # folded into a single per-channel scale/shift.
        s1 = jnp.sum(acc, axis=0, keepdims=True)
        s2 = jnp.sum(acc * acc, axis=0, keepdims=True)
        mean = s1 * inv_m
        var = jnp.maximum(s2 * inv_m - mean * mean, 0.0)
        scale = g_ref[...] * jax.lax.rsqrt(var + eps)
        shift = b_ref[...] - mean * scale
        return acc * scale + shift

    # ---- half 1: conv -> BN -> ReLU (no residual => no zero-residual work) --
    xpad_ref[:, 1:H + 1, 1:W + 1, :] = x_ref[...].astype(jnp.float32)
    y1 = jnp.maximum(conv_bn(w1_ref, g1_ref, b1_ref), 0.0)

    # ---- half 2: conv -> BN -> +residual -> ReLU (y1 stays on-chip) ---------
    xpad_ref[:, 1:H + 1, 1:W + 1, :] = y1.reshape(N, H, W, Cp)
    y2 = (conv_bn(w2_ref, g2_ref, b2_ref)
          + x_ref[...].reshape(M, Cp).astype(jnp.float32))
    out_ref[...] = jnp.maximum(y2, 0.0).reshape(N, H, W, Cp).astype(out_ref.dtype)


# ------------------------------ wrappers -------------------------------------
def prepare_kernel_params(params, c, cp):
    """PyTorch-layout params -> lane-dense kernel layout (channels -> cp)."""
    def conv_w(w_oihw):
        # (C_out, C_in, 3, 3) -> HWIO (3, 3, C_in, C_out), zero-pad channels,
        # then flatten taps: row = (kh*3+kw)*cp + c_in, col = c_out.
        w = jnp.transpose(w_oihw, (2, 3, 1, 0)).astype(jnp.float32)
        w = jnp.pad(w, ((0, 0), (0, 0), (0, cp - c), (0, cp - c)))
        return w.reshape(9 * cp, cp)

    def vec(v):
        return jnp.pad(v.astype(jnp.float32), (0, cp - c)).reshape(1, cp)

    return (conv_w(params["w1"]), conv_w(params["w2"]),
            vec(params["g1"]), vec(params["b1"]),
            vec(params["g2"]), vec(params["b2"]))


def residual_block_forward_nhwc(x_nhwc, kparams, *, eps=EPS):
    """Hot path: NHWC input with channel dim already padded to a multiple of 128."""
    N, H, W, Cp = x_nhwc.shape
    M = N * H * W
    w1, w2, g1, b1, g2, b2 = kparams
    vmem = pl.BlockSpec(memory_space=pltpu.MemorySpace.VMEM)
    cost = pl.CostEstimate(
        flops=2 * 2 * M * (9 * Cp) * Cp,                     # two im2col matmuls
        transcendentals=2 * Cp,                              # two rsqrt passes
        bytes_accessed=4 * (2 * x_nhwc.size + w1.size + w2.size
                            + g1.size + b1.size + g2.size + b2.size),
    )
    return pl.pallas_call(
        functools.partial(_res_block_kernel, eps=eps),
        out_shape=jax.ShapeDtypeStruct((N, H, W, Cp), x_nhwc.dtype),
        in_specs=[vmem] * 7,
        out_specs=vmem,
        scratch_shapes=[
            pltpu.VMEM((N, H + 2, W + 2, Cp), jnp.float32),  # padded activations
            pltpu.VMEM((M, 9 * Cp), jnp.float32),            # im2col slab
        ],
        compiler_params=pltpu.CompilerParams(
            vmem_limit_bytes=48 * 1024 * 1024),              # fits v7x's 64 MiB VMEM
        cost_estimate=cost,
    )(x_nhwc, w1, w2, g1, b1, g2, b2)


def residual_block_forward(x_nchw, params, *, eps=EPS):
    """PyTorch-parity wrapper: NCHW in / NCHW out, unpadded channels.

    (If the caller can supply NHWC, lane-padded activations directly, use
    residual_block_forward_nhwc and skip the transposes / channel pad.)
    """
    N, C, H, W = x_nchw.shape
    cp = _round_up(C, 128)
    kparams = prepare_kernel_params(params, C, cp)
    x = jnp.transpose(x_nchw, (0, 2, 3, 1))                  # -> NHWC
    if cp != C:
        x = jnp.pad(x, ((0, 0), (0, 0), (0, 0), (0, cp - C)))
    y = residual_block_forward_nhwc(x, kparams, eps=eps)
    return jnp.transpose(y[..., :C], (0, 3, 1, 2))           # -> NCHW


# ----------------------------- pure-JAX reference ----------------------------
def _ref_forward(x_nchw, params, eps=EPS):
    x = jnp.transpose(x_nchw, (0, 2, 3, 1))

    def conv(inp, w_oihw):
        w = jnp.transpose(w_oihw, (2, 3, 1, 0))              # HWIO
        return jax.lax.conv_general_dilated(
            inp, w, (1, 1), "SAME",
            dimension_numbers=("NHWC", "HWIO", "NHWC"))

    def bn(y, g, b):
        mean = y.mean(axis=(0, 1, 2), keepdims=True)
        var = ((y - mean) ** 2).mean(axis=(0, 1, 2), keepdims=True)
        return (y - mean) * jax.lax.rsqrt(var + eps) * g.reshape(1, 1, 1, -1) \
            + b.reshape(1, 1, 1, -1)

    y1 = jnp.maximum(bn(conv(x, params["w1"]), params["g1"], params["b1"]), 0.0)
    y2 = bn(conv(y1, params["w2"]), params["g2"], params["b2"]) + x
    return jnp.transpose(jnp.maximum(y2, 0.0), (0, 3, 1, 2))


# ----------------------------- param construction ----------------------------
def init_params(key, c):
    """Synthetic params matching nn.Conv2d(c, c, 3, bias=False) x2 (PyTorch
    OIHW layout) and BatchNorm2d(c) x2 (affine, randomized to exercise it)."""
    k1, k2, k3, k4, k5, k6 = jax.random.split(key, 6)
    scale = (2.0 / (c * 9)) ** 0.5
    return {
        "w1": scale * jax.random.normal(k1, (c, c, 3, 3), jnp.float32),
        "w2": scale * jax.random.normal(k2, (c, c, 3, 3), jnp.float32),
        "g1": 1.0 + 0.1 * jax.random.normal(k3, (c,), jnp.float32),
        "b1": 0.1 * jax.random.normal(k4, (c,), jnp.float32),
        "g2": 1.0 + 0.1 * jax.random.normal(k5, (c,), jnp.float32),
        "b2": 0.1 * jax.random.normal(k6, (c,), jnp.float32),
    }


if __name__ == "__main__":
    key = jax.random.PRNGKey(0)
    kx, kp = jax.random.split(key)

    # Module default is in_features=64; keep spatial/batch small.
    N, C, H, W = 2, 64, 16, 16
    x = jax.random.normal(kx, (N, C, H, W), jnp.float32)
    params = init_params(kp, C)

    out = jax.block_until_ready(residual_block_forward(x, params))
    ref = jax.block_until_ready(_ref_forward(x, params))

    assert out.shape == (N, C, H, W)
    max_err = float(jnp.max(jnp.abs(out - ref)))
    assert jnp.allclose(out, ref, atol=2e-3, rtol=2e-3), max_err
    print("KERNEL_OK")
</pallas_src>

<mosaic_0001>
module attributes {stable_mosaic.version = 11 : i64} {
  func.func @_res_block_kernel(%arg0: memref<2x16x16x128xf32, #tpu.memory_space<vmem>>, %arg1: memref<1152x128xf32, #tpu.memory_space<vmem>>, %arg2: memref<1152x128xf32, #tpu.memory_space<vmem>>, %arg3: memref<1x128xf32, #tpu.memory_space<vmem>>, %arg4: memref<1x128xf32, #tpu.memory_space<vmem>>, %arg5: memref<1x128xf32, #tpu.memory_space<vmem>>, %arg6: memref<1x128xf32, #tpu.memory_space<vmem>>, %arg7: memref<2x16x16x128xf32, #tpu.memory_space<vmem>>, %arg8: memref<2x18x18x128xf32, #tpu.memory_space<vmem>>, %arg9: memref<512x1152xf32, #tpu.memory_space<vmem>>) attributes {dimension_semantics = [], scalar_prefetch = 0 : i64, scratch_operands = 2 : i64, tpu.core_type = #tpu.core_type<tc>} {
    %cst = arith.constant 0.000000e+00 : f32
    %0 = vector.broadcast %cst : f32 to vector<2x18x18x128xf32>
    %c0 = arith.constant 0 : index
    %c0_0 = arith.constant 0 : index
    %c0_1 = arith.constant 0 : index
    %c0_2 = arith.constant 0 : index
    %1 = vector.load %arg8[%c0, %c0_0, %c0_1, %c0_2] : memref<2x18x18x128xf32, #tpu.memory_space<vmem>>, vector<2x18x18x128xf32>
    tpu.vector_store %arg8[%c0, %c0_0, %c0_1, %c0_2], %0 {strides = array<i32>} : memref<2x18x18x128xf32, #tpu.memory_space<vmem>>, vector<2x18x18x128xf32>,
    %c0_3 = arith.constant 0 : index
    %c0_4 = arith.constant 0 : index
    %c0_5 = arith.constant 0 : index
    %c0_6 = arith.constant 0 : index
    %2 = vector.load %arg0[%c0_3, %c0_4, %c0_5, %c0_6] : memref<2x16x16x128xf32, #tpu.memory_space<vmem>>, vector<2x16x16x128xf32>
    %c0_7 = arith.constant 0 : index
    %c1 = arith.constant 1 : index
    %c1_8 = arith.constant 1 : index
    %c0_9 = arith.constant 0 : index
    %3 = vector.load %arg8[%c0_7, %c1, %c1_8, %c0_9] : memref<2x18x18x128xf32, #tpu.memory_space<vmem>>, vector<2x16x16x128xf32>
    tpu.vector_store %arg8[%c0_7, %c1, %c1_8, %c0_9], %2 {strides = array<i32>} : memref<2x18x18x128xf32, #tpu.memory_space<vmem>>, vector<2x16x16x128xf32>,
    %c0_10 = arith.constant 0 : index
    %c0_11 = arith.constant 0 : index
    %c0_12 = arith.constant 0 : index
    %c0_13 = arith.constant 0 : index
    %4 = vector.load %arg8[%c0_10, %c0_11, %c0_12, %c0_13] : memref<2x18x18x128xf32, #tpu.memory_space<vmem>>, vector<2x16x16x128xf32>
    %5 = vector.shape_cast %4 : vector<2x16x16x128xf32> to vector<512x128xf32>
    %c0_14 = arith.constant 0 : index
    %c0_15 = arith.constant 0 : index
    %6 = vector.load %arg9[%c0_14, %c0_15] : memref<512x1152xf32, #tpu.memory_space<vmem>>, vector<512x128xf32>
    tpu.vector_store %arg9[%c0_14, %c0_15], %5 {strides = array<i32>} : memref<512x1152xf32, #tpu.memory_space<vmem>>, vector<512x128xf32>,
    %c0_16 = arith.constant 0 : index
    %c0_17 = arith.constant 0 : index
    %c1_18 = arith.constant 1 : index
    %c0_19 = arith.constant 0 : index
    %7 = vector.load %arg8[%c0_16, %c0_17, %c1_18, %c0_19] : memref<2x18x18x128xf32, #tpu.memory_space<vmem>>, vector<2x16x16x128xf32>
    %8 = vector.shape_cast %7 : vector<2x16x16x128xf32> to vector<512x128xf32>
    %c0_20 = arith.constant 0 : index
    %c128 = arith.constant 128 : index
    %9 = vector.load %arg9[%c0_20, %c128] : memref<512x1152xf32, #tpu.memory_space<vmem>>, vector<512x128xf32>
    tpu.vector_store %arg9[%c0_20, %c128], %8 {strides = array<i32>} : memref<512x1152xf32, #tpu.memory_space<vmem>>, vector<512x128xf32>,
    %c0_21 = arith.constant 0 : index
    %c0_22 = arith.constant 0 : index
    %c2 = arith.constant 2 : index
    %c0_23 = arith.constant 0 : index
    %10 = vector.load %arg8[%c0_21, %c0_22, %c2, %c0_23] : memref<2x18x18x128xf32, #tpu.memory_space<vmem>>, vector<2x16x16x128xf32>
    %11 = vector.shape_cast %10 : vector<2x16x16x128xf32> to vector<512x128xf32>
    %c0_24 = arith.constant 0 : index
    %c256 = arith.constant 256 : index
    %12 = vector.load %arg9[%c0_24, %c256] : memref<512x1152xf32, #tpu.memory_space<vmem>>, vector<512x128xf32>
    tpu.vector_store %arg9[%c0_24, %c256], %11 {strides = array<i32>} : memref<512x1152xf32, #tpu.memory_space<vmem>>, vector<512x128xf32>,
    %c0_25 = arith.constant 0 : index
    %c1_26 = arith.constant 1 : index
    %c0_27 = arith.constant 0 : index
    %c0_28 = arith.constant 0 : index
    %13 = vector.load %arg8[%c0_25, %c1_26, %c0_27, %c0_28] : memref<2x18x18x128xf32, #tpu.memory_space<vmem>>, vector<2x16x16x128xf32>
    %14 = vector.shape_cast %13 : vector<2x16x16x128xf32> to vector<512x128xf32>
    %c0_29 = arith.constant 0 : index
    %c384 = arith.constant 384 : index
    %15 = vector.load %arg9[%c0_29, %c384] : memref<512x1152xf32, #tpu.memory_space<vmem>>, vector<512x128xf32>
    tpu.vector_store %arg9[%c0_29, %c384], %14 {strides = array<i32>} : memref<512x1152xf32, #tpu.memory_space<vmem>>, vector<512x128xf32>,
    %c0_30 = arith.constant 0 : index
    %c1_31 = arith.constant 1 : index
    %c1_32 = arith.constant 1 : index
    %c0_33 = arith.constant 0 : index
    %16 = vector.load %arg8[%c0_30, %c1_31, %c1_32, %c0_33] : memref<2x18x18x128xf32, #tpu.memory_space<vmem>>, vector<2x16x16x128xf32>
    %17 = vector.shape_cast %16 : vector<2x16x16x128xf32> to vector<512x128xf32>
    %c0_34 = arith.constant 0 : index
    %c512 = arith.constant 512 : index
    %18 = vector.load %arg9[%c0_34, %c512] : memref<512x1152xf32, #tpu.memory_space<vmem>>, vector<512x128xf32>
    tpu.vector_store %arg9[%c0_34, %c512], %17 {strides = array<i32>} : memref<512x1152xf32, #tpu.memory_space<vmem>>, vector<512x128xf32>,
    %c0_35 = arith.constant 0 : index
    %c1_36 = arith.constant 1 : index
    %c2_37 = arith.constant 2 : index
    %c0_38 = arith.constant 0 : index
    %19 = vector.load %arg8[%c0_35, %c1_36, %c2_37, %c0_38] : memref<2x18x18x128xf32, #tpu.memory_space<vmem>>, vector<2x16x16x128xf32>
    %20 = vector.shape_cast %19 : vector<2x16x16x128xf32> to vector<512x128xf32>
    %c0_39 = arith.constant 0 : index
    %c640 = arith.constant 640 : index
    %21 = vector.load %arg9[%c0_39, %c640] : memref<512x1152xf32, #tpu.memory_space<vmem>>, vector<512x128xf32>
    tpu.vector_store %arg9[%c0_39, %c640], %20 {strides = array<i32>} : memref<512x1152xf32, #tpu.memory_space<vmem>>, vector<512x128xf32>,
    %c0_40 = arith.constant 0 : index
    %c2_41 = arith.constant 2 : index
    %c0_42 = arith.constant 0 : index
    %c0_43 = arith.constant 0 : index
    %22 = vector.load %arg8[%c0_40, %c2_41, %c0_42, %c0_43] : memref<2x18x18x128xf32, #tpu.memory_space<vmem>>, vector<2x16x16x128xf32>
    %23 = vector.shape_cast %22 : vector<2x16x16x128xf32> to vector<512x128xf32>
    %c0_44 = arith.constant 0 : index
    %c768 = arith.constant 768 : index
    %24 = vector.load %arg9[%c0_44, %c768] : memref<512x1152xf32, #tpu.memory_space<vmem>>, vector<512x128xf32>
    tpu.vector_store %arg9[%c0_44, %c768], %23 {strides = array<i32>} : memref<512x1152xf32, #tpu.memory_space<vmem>>, vector<512x128xf32>,
    %c0_45 = arith.constant 0 : index
    %c2_46 = arith.constant 2 : index
    %c1_47 = arith.constant 1 : index
    %c0_48 = arith.constant 0 : index
    %25 = vector.load %arg8[%c0_45, %c2_46, %c1_47, %c0_48] : memref<2x18x18x128xf32, #tpu.memory_space<vmem>>, vector<2x16x16x128xf32>
    %26 = vector.shape_cast %25 : vector<2x16x16x128xf32> to vector<512x128xf32>
    %c0_49 = arith.constant 0 : index
    %c896 = arith.constant 896 : index
    %27 = vector.load %arg9[%c0_49, %c896] : memref<512x1152xf32, #tpu.memory_space<vmem>>, vector<512x128xf32>
    tpu.vector_store %arg9[%c0_49, %c896], %26 {strides = array<i32>} : memref<512x1152xf32, #tpu.memory_space<vmem>>, vector<512x128xf32>,
    %c0_50 = arith.constant 0 : index
    %c2_51 = arith.constant 2 : index
    %c2_52 = arith.constant 2 : index
    %c0_53 = arith.constant 0 : index
    %28 = vector.load %arg8[%c0_50, %c2_51, %c2_52, %c0_53] : memref<2x18x18x128xf32, #tpu.memory_space<vmem>>, vector<2x16x16x128xf32>
    %29 = vector.shape_cast %28 : vector<2x16x16x128xf32> to vector<512x128xf32>
    %c0_54 = arith.constant 0 : index
    %c1024 = arith.constant 1024 : index
    %30 = vector.load %arg9[%c0_54, %c1024] : memref<512x1152xf32, #tpu.memory_space<vmem>>, vector<512x128xf32>
    tpu.vector_store %arg9[%c0_54, %c1024], %29 {strides = array<i32>} : memref<512x1152xf32, #tpu.memory_space<vmem>>, vector<512x128xf32>,
    %c0_55 = arith.constant 0 : index
    %c0_56 = arith.constant 0 : index
    %31 = vector.load %arg9[%c0_55, %c0_56] : memref<512x1152xf32, #tpu.memory_space<vmem>>, vector<512x1152xf32>
    %c0_57 = arith.constant 0 : index
    %c0_58 = arith.constant 0 : index
    %32 = vector.load %arg1[%c0_57, %c0_58] : memref<1152x128xf32, #tpu.memory_space<vmem>>, vector<1152x128xf32>
    %cst_59 = arith.constant dense<0.000000e+00> : vector<512x128xf32>
    %33 = tpu.matmul %31, %32, %cst_59 {dimension_numbers = #tpu.dot_dimension_numbers<[1], [0], [0], [1], [0, 0, 1, 1], [], []>} : vector<512x1152xf32>, vector<1152x128xf32>, vector<512x128xf32> -> vector<512x128xf32>
    %cst_60 = arith.constant dense<0.000000e+00> : vector<128xf32>
    %34 = vector.multi_reduction <add>, %33, %cst_60 [0] : vector<512x128xf32> to vector<128xf32>
    %35 = vector.shape_cast %34 : vector<128xf32> to vector<1x128xf32>
    %36 = arith.mulf %33, %33 : vector<512x128xf32>
    %cst_61 = arith.constant dense<0.000000e+00> : vector<128xf32>
    %37 = vector.multi_reduction <add>, %36, %cst_61 [0] : vector<512x128xf32> to vector<128xf32>
    %38 = vector.shape_cast %37 : vector<128xf32> to vector<1x128xf32>
    %cst_62 = arith.constant 0.001953125 : f32
    %39 = vector.broadcast %cst_62 : f32 to vector<1x128xf32>
    %40 = arith.mulf %35, %39 : vector<1x128xf32>
    %cst_63 = arith.constant 0.001953125 : f32
    %41 = vector.broadcast %cst_63 : f32 to vector<1x128xf32>
    %42 = arith.mulf %38, %41 : vector<1x128xf32>
    %43 = arith.mulf %40, %40 : vector<1x128xf32>
    %44 = arith.subf %42, %43 : vector<1x128xf32>
    %cst_64 = arith.constant 0.000000e+00 : f32
    %45 = vector.broadcast %cst_64 : f32 to vector<1x128xf32>
    %46 = arith.maximumf %44, %45 : vector<1x128xf32>
    %c0_65 = arith.constant 0 : index
    %c0_66 = arith.constant 0 : index
    %47 = vector.load %arg3[%c0_65, %c0_66] : memref<1x128xf32, #tpu.memory_space<vmem>>, vector<1x128xf32>
    %cst_67 = arith.constant 9.99999974E-6 : f32
    %48 = vector.broadcast %cst_67 : f32 to vector<1x128xf32>
    %49 = arith.addf %46, %48 : vector<1x128xf32>
    %50 = math.rsqrt %49 : vector<1x128xf32>
    %51 = arith.mulf %47, %50 : vector<1x128xf32>
    %c0_68 = arith.constant 0 : index
    %c0_69 = arith.constant 0 : index
    %52 = vector.load %arg4[%c0_68, %c0_69] : memref<1x128xf32, #tpu.memory_space<vmem>>, vector<1x128xf32>
    %53 = arith.mulf %40, %51 : vector<1x128xf32>
    %54 = arith.subf %52, %53 : vector<1x128xf32>
    %55 = vector.broadcast %51 : vector<1x128xf32> to vector<512x128xf32>
    %56 = arith.mulf %33, %55 : vector<512x128xf32>
    %57 = vector.broadcast %54 : vector<1x128xf32> to vector<512x128xf32>
    %58 = arith.addf %56, %57 : vector<512x128xf32>
    %cst_70 = arith.constant 0.000000e+00 : f32
    %59 = vector.broadcast %cst_70 : f32 to vector<512x128xf32>
    %60 = arith.maximumf %58, %59 : vector<512x128xf32>
    %61 = vector.shape_cast %60 : vector<512x128xf32> to vector<2x16x16x128xf32>
    %c0_71 = arith.constant 0 : index
    %c1_72 = arith.constant 1 : index
    %c1_73 = arith.constant 1 : index
    %c0_74 = arith.constant 0 : index
    %62 = vector.load %arg8[%c0_71, %c1_72, %c1_73, %c0_74] : memref<2x18x18x128xf32, #tpu.memory_space<vmem>>, vector<2x16x16x128xf32>
    tpu.vector_store %arg8[%c0_71, %c1_72, %c1_73, %c0_74], %61 {strides = array<i32>} : memref<2x18x18x128xf32, #tpu.memory_space<vmem>>, vector<2x16x16x128xf32>,
    %c0_75 = arith.constant 0 : index
    %c0_76 = arith.constant 0 : index
    %c0_77 = arith.constant 0 : index
    %c0_78 = arith.constant 0 : index
    %63 = vector.load %arg8[%c0_75, %c0_76, %c0_77, %c0_78] : memref<2x18x18x128xf32, #tpu.memory_space<vmem>>, vector<2x16x16x128xf32>
    %64 = vector.shape_cast %63 : vector<2x16x16x128xf32> to vector<512x128xf32>
    %c0_79 = arith.constant 0 : index
    %c0_80 = arith.constant 0 : index
    %65 = vector.load %arg9[%c0_79, %c0_80] : memref<512x1152xf32, #tpu.memory_space<vmem>>, vector<512x128xf32>
    tpu.vector_store %arg9[%c0_79, %c0_80], %64 {strides = array<i32>} : memref<512x1152xf32, #tpu.memory_space<vmem>>, vector<512x128xf32>,
    %c0_81 = arith.constant 0 : index
    %c0_82 = arith.constant 0 : index
    %c1_83 = arith.constant 1 : index
    %c0_84 = arith.constant 0 : index
    %66 = vector.load %arg8[%c0_81, %c0_82, %c1_83, %c0_84] : memref<2x18x18x128xf32, #tpu.memory_space<vmem>>, vector<2x16x16x128xf32>
    %67 = vector.shape_cast %66 : vector<2x16x16x128xf32> to vector<512x128xf32>
    %c0_85 = arith.constant 0 : index
    %c128_86 = arith.constant 128 : index
    %68 = vector.load %arg9[%c0_85, %c128_86] : memref<512x1152xf32, #tpu.memory_space<vmem>>, vector<512x128xf32>
    tpu.vector_store %arg9[%c0_85, %c128_86], %67 {strides = array<i32>} : memref<512x1152xf32, #tpu.memory_space<vmem>>, vector<512x128xf32>,
    %c0_87 = arith.constant 0 : index
    %c0_88 = arith.constant 0 : index
    %c2_89 = arith.constant 2 : index
    %c0_90 = arith.constant 0 : index
    %69 = vector.load %arg8[%c0_87, %c0_88, %c2_89, %c0_90] : memref<2x18x18x128xf32, #tpu.memory_space<vmem>>, vector<2x16x16x128xf32>
    %70 = vector.shape_cast %69 : vector<2x16x16x128xf32> to vector<512x128xf32>
    %c0_91 = arith.constant 0 : index
    %c256_92 = arith.constant 256 : index
    %71 = vector.load %arg9[%c0_91, %c256_92] : memref<512x1152xf32, #tpu.memory_space<vmem>>, vector<512x128xf32>
    tpu.vector_store %arg9[%c0_91, %c256_92], %70 {strides = array<i32>} : memref<512x1152xf32, #tpu.memory_space<vmem>>, vector<512x128xf32>,
    %c0_93 = arith.constant 0 : index
    %c1_94 = arith.constant 1 : index
    %c0_95 = arith.constant 0 : index
    %c0_96 = arith.constant 0 : index
    %72 = vector.load %arg8[%c0_93, %c1_94, %c0_95, %c0_96] : memref<2x18x18x128xf32, #tpu.memory_space<vmem>>, vector<2x16x16x128xf32>
    %73 = vector.shape_cast %72 : vector<2x16x16x128xf32> to vector<512x128xf32>
    %c0_97 = arith.constant 0 : index
    %c384_98 = arith.constant 384 : index
    %74 = vector.load %arg9[%c0_97, %c384_98] : memref<512x1152xf32, #tpu.memory_space<vmem>>, vector<512x128xf32>
    tpu.vector_store %arg9[%c0_97, %c384_98], %73 {strides = array<i32>} : memref<512x1152xf32, #tpu.memory_space<vmem>>, vector<512x128xf32>,
    %c0_99 = arith.constant 0 : index
    %c1_100 = arith.constant 1 : index
    %c1_101 = arith.constant 1 : index
    %c0_102 = arith.constant 0 : index
    %75 = vector.load %arg8[%c0_99, %c1_100, %c1_101, %c0_102] : memref<2x18x18x128xf32, #tpu.memory_space<vmem>>, vector<2x16x16x128xf32>
    %76 = vector.shape_cast %75 : vector<2x16x16x128xf32> to vector<512x128xf32>
    %c0_103 = arith.constant 0 : index
    %c512_104 = arith.constant 512 : index
    %77 = vector.load %arg9[%c0_103, %c512_104] : memref<512x1152xf32, #tpu.memory_space<vmem>>, vector<512x128xf32>
    tpu.vector_store %arg9[%c0_103, %c512_104], %76 {strides = array<i32>} : memref<512x1152xf32, #tpu.memory_space<vmem>>, vector<512x128xf32>,
    %c0_105 = arith.constant 0 : index
    %c1_106 = arith.constant 1 : index
    %c2_107 = arith.constant 2 : index
    %c0_108 = arith.constant 0 : index
    %78 = vector.load %arg8[%c0_105, %c1_106, %c2_107, %c0_108] : memref<2x18x18x128xf32, #tpu.memory_space<vmem>>, vector<2x16x16x128xf32>
    %79 = vector.shape_cast %78 : vector<2x16x16x128xf32> to vector<512x128xf32>
    %c0_109 = arith.constant 0 : index
    %c640_110 = arith.constant 640 : index
    %80 = vector.load %arg9[%c0_109, %c640_110] : memref<512x1152xf32, #tpu.memory_space<vmem>>, vector<512x128xf32>
    tpu.vector_store %arg9[%c0_109, %c640_110], %79 {strides = array<i32>} : memref<512x1152xf32, #tpu.memory_space<vmem>>, vector<512x128xf32>,
    %c0_111 = arith.constant 0 : index
    %c2_112 = arith.constant 2 : index
    %c0_113 = arith.constant 0 : index
    %c0_114 = arith.constant 0 : index
    %81 = vector.load %arg8[%c0_111, %c2_112, %c0_113, %c0_114] : memref<2x18x18x128xf32, #tpu.memory_space<vmem>>, vector<2x16x16x128xf32>
    %82 = vector.shape_cast %81 : vector<2x16x16x128xf32> to vector<512x128xf32>
    %c0_115 = arith.constant 0 : index
    %c768_116 = arith.constant 768 : index
    %83 = vector.load %arg9[%c0_115, %c768_116] : memref<512x1152xf32, #tpu.memory_space<vmem>>, vector<512x128xf32>
    tpu.vector_store %arg9[%c0_115, %c768_116], %82 {strides = array<i32>} : memref<512x1152xf32, #tpu.memory_space<vmem>>, vector<512x128xf32>,
    %c0_117 = arith.constant 0 : index
    %c2_118 = arith.constant 2 : index
    %c1_119 = arith.constant 1 : index
    %c0_120 = arith.constant 0 : index
    %84 = vector.load %arg8[%c0_117, %c2_118, %c1_119, %c0_120] : memref<2x18x18x128xf32, #tpu.memory_space<vmem>>, vector<2x16x16x128xf32>
    %85 = vector.shape_cast %84 : vector<2x16x16x128xf32> to vector<512x128xf32>
    %c0_121 = arith.constant 0 : index
    %c896_122 = arith.constant 896 : index
    %86 = vector.load %arg9[%c0_121, %c896_122] : memref<512x1152xf32, #tpu.memory_space<vmem>>, vector<512x128xf32>
    tpu.vector_store %arg9[%c0_121, %c896_122], %85 {strides = array<i32>} : memref<512x1152xf32, #tpu.memory_space<vmem>>, vector<512x128xf32>,
    %c0_123 = arith.constant 0 : index
    %c2_124 = arith.constant 2 : index
    %c2_125 = arith.constant 2 : index
    %c0_126 = arith.constant 0 : index
    %87 = vector.load %arg8[%c0_123, %c2_124, %c2_125, %c0_126] : memref<2x18x18x128xf32, #tpu.memory_space<vmem>>, vector<2x16x16x128xf32>
    %88 = vector.shape_cast %87 : vector<2x16x16x128xf32> to vector<512x128xf32>
    %c0_127 = arith.constant 0 : index
    %c1024_128 = arith.constant 1024 : index
    %89 = vector.load %arg9[%c0_127, %c1024_128] : memref<512x1152xf32, #tpu.memory_space<vmem>>, vector<512x128xf32>
    tpu.vector_store %arg9[%c0_127, %c1024_128], %88 {strides = array<i32>} : memref<512x1152xf32, #tpu.memory_space<vmem>>, vector<512x128xf32>,
    %c0_129 = arith.constant 0 : index
    %c0_130 = arith.constant 0 : index
    %90 = vector.load %arg9[%c0_129, %c0_130] : memref<512x1152xf32, #tpu.memory_space<vmem>>, vector<512x1152xf32>
    %c0_131 = arith.constant 0 : index
    %c0_132 = arith.constant 0 : index
    %91 = vector.load %arg2[%c0_131, %c0_132] : memref<1152x128xf32, #tpu.memory_space<vmem>>, vector<1152x128xf32>
    %cst_133 = arith.constant dense<0.000000e+00> : vector<512x128xf32>
    %92 = tpu.matmul %90, %91, %cst_133 {dimension_numbers = #tpu.dot_dimension_numbers<[1], [0], [0], [1], [0, 0, 1, 1], [], []>} : vector<512x1152xf32>, vector<1152x128xf32>, vector<512x128xf32> -> vector<512x128xf32>
    %cst_134 = arith.constant dense<0.000000e+00> : vector<128xf32>
    %93 = vector.multi_reduction <add>, %92, %cst_134 [0] : vector<512x128xf32> to vector<128xf32>
    %94 = vector.shape_cast %93 : vector<128xf32> to vector<1x128xf32>
    %95 = arith.mulf %92, %92 : vector<512x128xf32>
    %cst_135 = arith.constant dense<0.000000e+00> : vector<128xf32>
    %96 = vector.multi_reduction <add>, %95, %cst_135 [0] : vector<512x128xf32> to vector<128xf32>
    %97 = vector.shape_cast %96 : vector<128xf32> to vector<1x128xf32>
    %cst_136 = arith.constant 0.001953125 : f32
    %98 = vector.broadcast %cst_136 : f32 to vector<1x128xf32>
    %99 = arith.mulf %94, %98 : vector<1x128xf32>
    %cst_137 = arith.constant 0.001953125 : f32
    %100 = vector.broadcast %cst_137 : f32 to vector<1x128xf32>
    %101 = arith.mulf %97, %100 : vector<1x128xf32>
    %102 = arith.mulf %99, %99 : vector<1x128xf32>
    %103 = arith.subf %101, %102 : vector<1x128xf32>
    %cst_138 = arith.constant 0.000000e+00 : f32
    %104 = vector.broadcast %cst_138 : f32 to vector<1x128xf32>
    %105 = arith.maximumf %103, %104 : vector<1x128xf32>
    %c0_139 = arith.constant 0 : index
    %c0_140 = arith.constant 0 : index
    %106 = vector.load %arg5[%c0_139, %c0_140] : memref<1x128xf32, #tpu.memory_space<vmem>>, vector<1x128xf32>
    %cst_141 = arith.constant 9.99999974E-6 : f32
    %107 = vector.broadcast %cst_141 : f32 to vector<1x128xf32>
    %108 = arith.addf %105, %107 : vector<1x128xf32>
    %109 = math.rsqrt %108 : vector<1x128xf32>
    %110 = arith.mulf %106, %109 : vector<1x128xf32>
    %c0_142 = arith.constant 0 : index
    %c0_143 = arith.constant 0 : index
    %111 = vector.load %arg6[%c0_142, %c0_143] : memref<1x128xf32, #tpu.memory_space<vmem>>, vector<1x128xf32>
    %112 = arith.mulf %99, %110 : vector<1x128xf32>
    %113 = arith.subf %111, %112 : vector<1x128xf32>
    %114 = vector.broadcast %110 : vector<1x128xf32> to vector<512x128xf32>
    %115 = arith.mulf %92, %114 : vector<512x128xf32>
    %116 = vector.broadcast %113 : vector<1x128xf32> to vector<512x128xf32>
    %117 = arith.addf %115, %116 : vector<512x128xf32>
    %c0_144 = arith.constant 0 : index
    %c0_145 = arith.constant 0 : index
    %c0_146 = arith.constant 0 : index
    %c0_147 = arith.constant 0 : index
    %118 = vector.load %arg0[%c0_144, %c0_145, %c0_146, %c0_147] : memref<2x16x16x128xf32, #tpu.memory_space<vmem>>, vector<2x16x16x128xf32>
    %119 = vector.shape_cast %118 : vector<2x16x16x128xf32> to vector<512x128xf32>
    %120 = arith.addf %117, %119 : vector<512x128xf32>
    %cst_148 = arith.constant 0.000000e+00 : f32
    %121 = vector.broadcast %cst_148 : f32 to vector<512x128xf32>
    %122 = arith.maximumf %120, %121 : vector<512x128xf32>
    %123 = vector.shape_cast %122 : vector<512x128xf32> to vector<2x16x16x128xf32>
    %c0_149 = arith.constant 0 : index
    %c0_150 = arith.constant 0 : index
    %c0_151 = arith.constant 0 : index
    %c0_152 = arith.constant 0 : index
    %124 = vector.load %arg7[%c0_149, %c0_150, %c0_151, %c0_152] : memref<2x16x16x128xf32, #tpu.memory_space<vmem>>, vector<2x16x16x128xf32>
    tpu.vector_store %arg7[%c0_149, %c0_150, %c0_151, %c0_152], %123 {strides = array<i32>} : memref<2x16x16x128xf32, #tpu.memory_space<vmem>>, vector<2x16x16x128xf32>,
    return
  }
}

</mosaic_0001>

<llo_original>
// kernel: tpu_custom_call.1
$region0: #{tpu_custom_call.1}
  #allocation0 [shape = 'u32[]', space=smem, size = 0x4, offset = 0x4, fixed_abs, tag = 'smem constant byte address 0x4 - core index']
  #allocation1 [shape = 'u32[144,128]{1,0:T(1,128)}', space=vmem, size = 0x12000, scoped, tag = 'internal scratch']
  #allocation2 [shape = 'f32[2,18,18,128]{3,2,1,0:T(8,128)}', space=vmem, size = 0x6c000, scoped, tag = 'scratch operand']
  #allocation3 [shape = 'f32[512,1152]{1,0:T(8,128)}', space=vmem, size = 0x240000, scoped, tag = 'scratch operand']
  %s0 = inlined_call_operand.hbm [shape: f32[2,16,16,128], index: 0, kind: input, shape index: {}]
  %s1 = inlined_call_operand.hbm [shape: f32[1152,128], index: 1, kind: input, shape index: {}]
  %s2 = inlined_call_operand.hbm [shape: f32[1152,128], index: 2, kind: input, shape index: {}]
  %s3 = inlined_call_operand.vmem [shape: f32[1,128], index: 3, kind: input, shape index: {}]
  %s4 = inlined_call_operand.vmem [shape: f32[1,128], index: 4, kind: input, shape index: {}]
  %s5 = inlined_call_operand.vmem [shape: f32[1,128], index: 5, kind: input, shape index: {}]
  %s6 = inlined_call_operand.vmem [shape: f32[1,128], index: 6, kind: input, shape index: {}]
  %s7 = inlined_call_operand.hbm [shape: f32[2,16,16,128], index: 7, kind: output, shape index: {}]
  %s8 = sld [smem:[#allocation0]]
  $region50: #{tpu_custom_call.1} parent=0
    _
  %s10 = ssub.s32 1, %s8
  %s11 = scalar_select 0, %s10, %s8
  $region1: #{tpu_custom_call.1} parent=0
    #allocation4 [shape = 'u8[262144]{0}', space=vmem, size = 0x40000, scoped, tag = 'input window, operand 0, single buffered']
    #allocation5 [shape = 's32[1]{0}', space=sflag, size = 0x4, scoped, tag = 'scoped memory for tpu_custom_call.1']
    #allocation6 [shape = 's32[1]{0}', space=sflag, size = 0x4, scoped, tag = 'scoped memory for tpu_custom_call.1']
    #allocation7 [shape = 'u8[589824]{0}', space=vmem, size = 0x90000, scoped, tag = 'input window, operand 1, single buffered']
    #allocation8 [shape = 's32[1]{0}', space=sflag, size = 0x4, scoped, tag = 'scoped memory for tpu_custom_call.1']
    #allocation9 [shape = 'u8[589824]{0}', space=vmem, size = 0x90000, scoped, tag = 'input window, operand 2, single buffered']
    #allocation10 [shape = 'u8[262144]{0}', space=vmem, size = 0x40000, scoped, tag = 'output window, operand 0, single buffered']
    %12 = vsyncpa [#allocation5], 0
    %13 = vsyncpa [#allocation8], 0
    %14 = vsyncpa [#allocation6], 0
    // Predicated region
    $region2: #{tpu_custom_call.1} parent=1 // pred_check
      _
    $region3: #{tpu_custom_call.1} parent=1 // pred_check_branch
      %16 = sbr.rel (0) target = $region5
    $region4: #{tpu_custom_call.1} parent=1 // pred_region
      %s18 = ssub.s32 8192, 8192
      %19 = vsyncadd [#allocation5], %s18
      %s20 = sshll.u32 [#allocation4], 4
      %s21 = int_to_ptr.vmem [resolvable:$true] %s20
      %26 = dma.hbm_to_vmem [thread:$0]  %s0, 8192, %s21, [#allocation5], 128, 128, 8
    $region5: #{tpu_custom_call.1} parent=1 // pred_fallthru
      _
    // Predicated region
    $region6: #{tpu_custom_call.1} parent=1 // pred_check
      _
    $region7: #{tpu_custom_call.1} parent=1 // pred_check_branch
      %28 = sbr.rel (0) target = $region9
    $region8: #{tpu_custom_call.1} parent=1 // pred_region
      %s30 = ssub.s32 18432, 18432
      %31 = vsyncadd [#allocation8], %s30
      %s32 = sshll.u32 [#allocation7], 4
      %s33 = int_to_ptr.vmem [resolvable:$true] %s32
      %38 = dma.hbm_to_vmem [thread:$0]  %s1, 18432, %s33, [#allocation8], 128, 128, 8
    $region9: #{tpu_custom_call.1} parent=1 // pred_fallthru
      _
    // Predicated region
    $region10: #{tpu_custom_call.1} parent=1 // pred_check
      _
    $region11: #{tpu_custom_call.1} parent=1 // pred_check_branch
      %40 = sbr.rel (0) target = $region13
    $region12: #{tpu_custom_call.1} parent=1 // pred_region
      %s42 = ssub.s32 18432, 18432
      %43 = vsyncadd [#allocation8], %s42
      %s44 = sshll.u32 [#allocation9], 4
      %s45 = int_to_ptr.vmem [resolvable:$true] %s44
      %50 = dma.hbm_to_vmem [thread:$0]  %s2, 18432, %s45, [#allocation8], 128, 128, 8
    $region13: #{tpu_custom_call.1} parent=1 // pred_fallthru
      _
    // Predicated region
    $region14: #{tpu_custom_call.1} parent=1 // pred_check
      _
    $region15: #{tpu_custom_call.1} parent=1 // pred_check_branch
      %52 = sbr.rel (0) target = $region17
    $region16: #{tpu_custom_call.1} parent=1 // pred_region
      _
    $region17: #{tpu_custom_call.1} parent=1 // pred_fallthru
      _
    // Predicated region
    $region18: #{tpu_custom_call.1} parent=1 // pred_check
      _
    $region19: #{tpu_custom_call.1} parent=1 // pred_check_branch
      %54 = sbr.rel (0) target = $region21
    $region20: #{tpu_custom_call.1} parent=1 // pred_region
      _
    $region21: #{tpu_custom_call.1} parent=1 // pred_fallthru
      _
    // Predicated region
    $region22: #{tpu_custom_call.1} parent=1 // pred_check
      _
    $region23: #{tpu_custom_call.1} parent=1 // pred_check_branch
      %56 = sbr.rel (0) target = $region25
    $region24: #{tpu_custom_call.1} parent=1 // pred_region
      _
    $region25: #{tpu_custom_call.1} parent=1 // pred_fallthru
      _
    // Predicated region
    $region26: #{tpu_custom_call.1} parent=1 // pred_check
      _
    $region27: #{tpu_custom_call.1} parent=1 // pred_check_branch
      %58 = sbr.rel (0) target = $region29
    $region28: #{tpu_custom_call.1} parent=1 // pred_region
      _
    $region29: #{tpu_custom_call.1} parent=1 // pred_fallthru
      _
    // Predicated region
    $region30: #{tpu_custom_call.1} parent=1 // pred_check
      _
    $region31: #{tpu_custom_call.1} parent=1 // pred_check_branch
      %60 = sbr.rel (0) target = $region33
    $region32: #{tpu_custom_call.1} parent=1 // pred_region
      %61 = dma.done [#allocation5], 8192
    $region33: #{tpu_custom_call.1} parent=1 // pred_fallthru
      _
    // Predicated region
    $region34: #{tpu_custom_call.1} parent=1 // pred_check
      _
    $region35: #{tpu_custom_call.1} parent=1 // pred_check_branch
      %63 = sbr.rel (0) target = $region37
    $region36: #{tpu_custom_call.1} parent=1 // pred_region
      %64 = dma.done [#allocation8], 18432
    $region37: #{tpu_custom_call.1} parent=1 // pred_fallthru
      _
    // Predicated region
    $region38: #{tpu_custom_call.1} parent=1 // pred_check
      _
    $region39: #{tpu_custom_call.1} parent=1 // pred_check_branch
      %66 = sbr.rel (0) target = $region41
    $region40: #{tpu_custom_call.1} parent=1 // pred_region
      %67 = dma.done [#allocation8], 18432
    $region41: #{tpu_custom_call.1} parent=1 // pred_fallthru
      _
    %68 = vst [vmem:[#allocation2] sm:$0xff] 0.0
    %69 = vst [vmem:[#allocation2 + $0x8] sm:$0xff] 0.0
    %70 = vst [vmem:[#allocation2 + $0x10] sm:$0x3] 0.0
    %71 = vst [vmem:[#allocation2 + $0x18] sm:$0xff] 0.0
    %72 = vst [vmem:[#allocation2 + $0x20] sm:$0xff] 0.0
    %73 = vst [vmem:[#allocation2 + $0x28] sm:$0x3] 0.0
    %74 = vst [vmem:[#allocation2 + $0x30] sm:$0xff] 0.0
    %75 = vst [vmem:[#allocation2 + $0x38] sm:$0xff] 0.0
    %76 = vst [vmem:[#allocation2 + $0x40] sm:$0x3] 0.0
    %77 = vst [vmem:[#allocation2 + $0x48] sm:$0xff] 0.0
    %78 = vst [vmem:[#allocation2 + $0x50] sm:$0xff] 0.0
    %79 = vst [vmem:[#allocation2 + $0x58] sm:$0x3] 0.0
    %80 = vst [vmem:[#allocation2 + $0x60] sm:$0xff] 0.0
    %81 = vst [vmem:[#allocation2 + $0x68] sm:$0xff] 0.0
    %82 = vst [vmem:[#allocation2 + $0x70] sm:$0x3] 0.0
    %83 = vst [vmem:[#allocation2 + $0x78] sm:$0xff] 0.0
    %84 = vst [vmem:[#allocation2 + $0x80] sm:$0xff] 0.0
    %85 = vst [vmem:[#allocation2 + $0x88] sm:$0x3] 0.0
    %86 = vst [vmem:[#allocation2 + $0x90] sm:$0xff] 0.0
    %87 = vst [vmem:[#allocation2 + $0x98] sm:$0xff] 0.0
    %88 = vst [vmem:[#allocation2 + $0xa0] sm:$0x3] 0.0
    %89 = vst [vmem:[#allocation2 + $0xa8] sm:$0xff] 0.0
    %90 = vst [vmem:[#allocation2 + $0xb0] sm:$0xff] 0.0
    %91 = vst [vmem:[#allocation2 + $0xb8] sm:$0x3] 0.0
    %92 = vst [vmem:[#allocation2 + $0xc0] sm:$0xff] 0.0
    %93 = vst [vmem:[#allocation2 + $0xc8] sm:$0xff] 0.0
    %94 = vst [vmem:[#allocation2 + $0xd0] sm:$0x3] 0.0
    %95 = vst [vmem:[#allocation2 + $0xd8] sm:$0xff] 0.0
    %96 = vst [vmem:[#allocation2 + $0xe0] sm:$0xff] 0.0
    %97 = vst [vmem:[#allocation2 + $0xe8] sm:$0x3] 0.0
    %98 = vst [vmem:[#allocation2 + $0xf0] sm:$0xff] 0.0
    %99 = vst [vmem:[#allocation2 + $0xf8] sm:$0xff] 0.0
    %100 = vst [vmem:[#allocation2 + $0x100] sm:$0x3] 0.0
    %101 = vst [vmem:[#allocation2 + $0x108] sm:$0xff] 0.0
    %102 = vst [vmem:[#allocation2 + $0x110] sm:$0xff] 0.0
    %103 = vst [vmem:[#allocation2 + $0x118] sm:$0x3] 0.0
    %104 = vst [vmem:[#allocation2 + $0x120] sm:$0xff] 0.0
    %105 = vst [vmem:[#allocation2 + $0x128] sm:$0xff] 0.0
    %106 = vst [vmem:[#allocation2 + $0x130] sm:$0x3] 0.0
    %107 = vst [vmem:[#allocation2 + $0x138] sm:$0xff] 0.0
    %108 = vst [vmem:[#allocation2 + $0x140] sm:$0xff] 0.0
    %109 = vst [vmem:[#allocation2 + $0x148] sm:$0x3] 0.0
    %110 = vst [vmem:[#allocation2 + $0x150] sm:$0xff] 0.0
    %111 = vst [vmem:[#allocation2 + $0x158] sm:$0xff] 0.0
    %112 = vst [vmem:[#allocation2 + $0x160] sm:$0x3] 0.0
    %113 = vst [vmem:[#allocation2 + $0x168] sm:$0xff] 0.0
    %114 = vst [vmem:[#allocation2 + $0x170] sm:$0xff] 0.0
    %115 = vst [vmem:[#allocation2 + $0x178] sm:$0x3] 0.0
    %116 = vst [vmem:[#allocation2 + $0x180] sm:$0xff] 0.0
    %117 = vst [vmem:[#allocation2 + $0x188] sm:$0xff] 0.0
    %118 = vst [vmem:[#allocation2 + $0x190] sm:$0x3] 0.0
    %119 = vst [vmem:[#allocation2 + $0x198] sm:$0xff] 0.0
    %120 = vst [vmem:[#allocation2 + $0x1a0] sm:$0xff] 0.0
    %121 = vst [vmem:[#allocation2 + $0x1a8] sm:$0x3] 0.0
    %122 = vst [vmem:[#allocation2 + $0x1b0] sm:$0xff] 0.0
    %123 = vst [vmem:[#allocation2 + $0x1b8] sm:$0xff] 0.0
    %124 = vst [vmem:[#allocation2 + $0x1c0] sm:$0x3] 0.0
    %125 = vst [vmem:[#allocation2 + $0x1c8] sm:$0xff] 0.0
    %126 = vst [vmem:[#allocation2 + $0x1d0] sm:$0xff] 0.0
    %127 = vst [vmem:[#allocation2 + $0x1d8] sm:$0x3] 0.0
    %128 = vst [vmem:[#allocation2 + $0x1e0] sm:$0xff] 0.0
    %129 = vst [vmem:[#allocation2 + $0x1e8] sm:$0xff] 0.0
    %130 = vst [vmem:[#allocation2 + $0x1f0] sm:$0x3] 0.0
    %131 = vst [vmem:[#allocation2 + $0x1f8] sm:$0xff] 0.0
    %132 = vst [vmem:[#allocation2 + $0x200] sm:$0xff] 0.0
    %133 = vst [vmem:[#allocation2 + $0x208] sm:$0x3] 0.0
    %134 = vst [vmem:[#allocation2 + $0x210] sm:$0xff] 0.0
    %135 = vst [vmem:[#allocation2 + $0x218] sm:$0xff] 0.0
    %136 = vst [vmem:[#allocation2 + $0x220] sm:$0x3] 0.0
    %137 = vst [vmem:[#allocation2 + $0x228] sm:$0xff] 0.0
    %138 = vst [vmem:[#allocation2 + $0x230] sm:$0xff] 0.0
    %139 = vst [vmem:[#allocation2 + $0x238] sm:$0x3] 0.0
    %140 = vst [vmem:[#allocation2 + $0x240] sm:$0xff] 0.0
    %141 = vst [vmem:[#allocation2 + $0x248] sm:$0xff] 0.0
    %142 = vst [vmem:[#allocation2 + $0x250] sm:$0x3] 0.0
    %143 = vst [vmem:[#allocation2 + $0x258] sm:$0xff] 0.0
    %144 = vst [vmem:[#allocation2 + $0x260] sm:$0xff] 0.0
    %145 = vst [vmem:[#allocation2 + $0x268] sm:$0x3] 0.0
    %146 = vst [vmem:[#allocation2 + $0x270] sm:$0xff] 0.0
    %147 = vst [vmem:[#allocation2 + $0x278] sm:$0xff] 0.0
    %148 = vst [vmem:[#allocation2 + $0x280] sm:$0x3] 0.0
    %149 = vst [vmem:[#allocation2 + $0x288] sm:$0xff] 0.0
    %150 = vst [vmem:[#allocation2 + $0x290] sm:$0xff] 0.0
    %151 = vst [vmem:[#allocation2 + $0x298] sm:$0x3] 0.0
    %152 = vst [vmem:[#allocation2 + $0x2a0] sm:$0xff] 0.0
    %153 = vst [vmem:[#allocation2 + $0x2a8] sm:$0xff] 0.0
    %154 = vst [vmem:[#allocation2 + $0x2b0] sm:$0x3] 0.0
    %155 = vst [vmem:[#allocation2 + $0x2b8] sm:$0xff] 0.0
    %156 = vst [vmem:[#allocation2 + $0x2c0] sm:$0xff] 0.0
    %157 = vst [vmem:[#allocation2 + $0x2c8] sm:$0x3] 0.0
    %158 = vst [vmem:[#allocation2 + $0x2d0] sm:$0xff] 0.0
    %159 = vst [vmem:[#allocation2 + $0x2d8] sm:$0xff] 0.0
    %160 = vst [vmem:[#allocation2 + $0x2e0] sm:$0x3] 0.0
    %161 = vst [vmem:[#allocation2 + $0x2e8] sm:$0xff] 0.0
    %162 = vst [vmem:[#allocation2 + $0x2f0] sm:$0xff] 0.0
    %163 = vst [vmem:[#allocation2 + $0x2f8] sm:$0x3] 0.0
    %164 = vst [vmem:[#allocation2 + $0x300] sm:$0xff] 0.0
    %165 = vst [vmem:[#allocation2 + $0x308] sm:$0xff] 0.0
    %166 = vst [vmem:[#allocation2 + $0x310] sm:$0x3] 0.0
    %167 = vst [vmem:[#allocation2 + $0x318] sm:$0xff] 0.0
    %168 = vst [vmem:[#allocation2 + $0x320] sm:$0xff] 0.0
    %169 = vst [vmem:[#allocation2 + $0x328] sm:$0x3] 0.0
    %170 = vst [vmem:[#allocation2 + $0x330] sm:$0xff] 0.0
    %171 = vst [vmem:[#allocation2 + $0x338] sm:$0xff] 0.0
    %172 = vst [vmem:[#allocation2 + $0x340] sm:$0x3] 0.0
    %173 = vst [vmem:[#allocation2 + $0x348] sm:$0xff] 0.0
    %174 = vst [vmem:[#allocation2 + $0x350] sm:$0xff] 0.0
    %175 = vst [vmem:[#allocation2 + $0x358] sm:$0x3] 0.0
    %v176 = vld [vmem:[#allocation4] sm:$0xff]
    %v177 = vld [vmem:[#allocation4 + $0x8] sm:$0xff]
    %v178 = vld [vmem:[#allocation4 + $0x10] sm:$0xff]
    %v179 = vld [vmem:[#allocation4 + $0x18] sm:$0xff]
    %v180 = vld [vmem:[#allocation4 + $0x20] sm:$0xff]
    %v181 = vld [vmem:[#allocation4 + $0x28] sm:$0xff]
    %v182 = vld [vmem:[#allocation4 + $0x30] sm:$0xff]
    %v183 = vld [vmem:[#allocation4 + $0x38] sm:$0xff]
    %v184 = vld [vmem:[#allocation4 + $0x40] sm:$0xff]
    %v185 = vld [vmem:[#allocation4 + $0x48] sm:$0xff]
    %v186 = vld [vmem:[#allocation4 + $0x50] sm:$0xff]
    %v187 = vld [vmem:[#allocation4 + $0x58] sm:$0xff]
    %v188 = vld [vmem:[#allocation4 + $0x60] sm:$0xff]
    %v189 = vld [vmem:[#allocation4 + $0x68] sm:$0xff]
    %v190 = vld [vmem:[#allocation4 + $0x70] sm:$0xff]
    %v191 = vld [vmem:[#allocation4 + $0x78] sm:$0xff]
    %v192 = vld [vmem:[#allocation4 + $0x80] sm:$0xff]
    %v193 = vld [vmem:[#allocation4 + $0x88] sm:$0xff]
    %v194 = vld [vmem:[#allocation4 + $0x90] sm:$0xff]
    %v195 = vld [vmem:[#allocation4 + $0x98] sm:$0xff]
    %v196 = vld [vmem:[#allocation4 + $0xa0] sm:$0xff]
    %v197 = vld [vmem:[#allocation4 + $0xa8] sm:$0xff]
    %v198 = vld [vmem:[#allocation4 + $0xb0] sm:$0xff]
    %v199 = vld [vmem:[#allocation4 + $0xb8] sm:$0xff]
    %v200 = vld [vmem:[#allocation4 + $0xc0] sm:$0xff]
    %v201 = vld [vmem:[#allocation4 + $0xc8] sm:$0xff]
    %v202 = vld [vmem:[#allocation4 + $0xd0] sm:$0xff]
    %v203 = vld [vmem:[#allocation4 + $0xd8] sm:$0xff]
    %v204 = vld [vmem:[#allocation4 + $0xe0] sm:$0xff]
    %v205 = vld [vmem:[#allocation4 + $0xe8] sm:$0xff]
    %v206 = vld [vmem:[#allocation4 + $0xf0] sm:$0xff]
    %v207 = vld [vmem:[#allocation4 + $0xf8] sm:$0xff]
    %v208 = vld [vmem:[#allocation4 + $0x100] sm:$0xff]
    %v209 = vld [vmem:[#allocation4 + $0x108] sm:$0xff]
    %v210 = vld [vmem:[#allocation4 + $0x110] sm:$0xff]
    %v211 = vld [vmem:[#allocation4 + $0x118] sm:$0xff]
    %v212 = vld [vmem:[#allocation4 + $0x120] sm:$0xff]
    %v213 = vld [vmem:[#allocation4 + $0x128] sm:$0xff]
    %v214 = vld [vmem:[#allocation4 + $0x130] sm:$0xff]
    %v215 = vld [vmem:[#allocation4 + $0x138] sm:$0xff]
    %v216 = vld [vmem:[#allocation4 + $0x140] sm:$0xff]
    %v217 = vld [vmem:[#allocation4 + $0x148] sm:$0xff]
    %v218 = vld [vmem:[#allocation4 + $0x150] sm:$0xff]
    %v219 = vld [vmem:[#allocation4 + $0x158] sm:$0xff]
    %v220 = vld [vmem:[#allocation4 + $0x160] sm:$0xff]
    %v221 = vld [vmem:[#allocation4 + $0x168] sm:$0xff]
    %v222 = vld [vmem:[#allocation4 + $0x170] sm:$0xff]
    %v223 = vld [vmem:[#allocation4 + $0x178] sm:$0xff]
    %v224 = vld [vmem:[#allocation4 + $0x180] sm:$0xff]
    %v225 = vld [vmem:[#allocation4 + $0x188] sm:$0xff]
    %v226 = vld [vmem:[#allocation4 + $0x190] sm:$0xff]
    %v227 = vld [vmem:[#allocation4 + $0x198] sm:$0xff]
    %v228 = vld [vmem:[#allocation4 + $0x1a0] sm:$0xff]
    %v229 = vld [vmem:[#allocation4 + $0x1a8] sm:$0xff]
    %v230 = vld [vmem:[#allocation4 + $0x1b0] sm:$0xff]
    %v231 = vld [vmem:[#allocation4 + $0x1b8] sm:$0xff]
    %v232 = vld [vmem:[#allocation4 + $0x1c0] sm:$0xff]
    %v233 = vld [vmem:[#allocation4 + $0x1c8] sm:$0xff]
    %v234 = vld [vmem:[#allocation4 + $0x1d0] sm:$0xff]
    %v235 = vld [vmem:[#allocation4 + $0x1d8] sm:$0xff]
    %v236 = vld [vmem:[#allocation4 + $0x1e0] sm:$0xff]
    %v237 = vld [vmem:[#allocation4 + $0x1e8] sm:$0xff]
    %v238 = vld [vmem:[#allocation4 + $0x1f0] sm:$0xff]
    %v239 = vld [vmem:[#allocation4 + $0x1f8] sm:$0xff]
    %s240 = scalar_lea.vmem [#allocation2], 24
    %241 = vst [vmem:[%s240 + $0x1] sm:$0xff] %v176
    %242 = vst [vmem:[%s240 + $0x9] sm:$0xff] %v177
    %243 = vst [vmem:[%s240 + $0x19] sm:$0xff] %v178
    %244 = vst [vmem:[%s240 + $0x21] sm:$0xff] %v179
    %245 = vst [vmem:[%s240 + $0x31] sm:$0xff] %v180
    %246 = vst [vmem:[%s240 + $0x39] sm:$0xff] %v181
    %247 = vst [vmem:[%s240 + $0x49] sm:$0xff] %v182
    %248 = vst [vmem:[%s240 + $0x51] sm:$0xff] %v183
    %249 = vst [vmem:[%s240 + $0x61] sm:$0xff] %v184
    %250 = vst [vmem:[%s240 + $0x69] sm:$0xff] %v185
    %251 = vst [vmem:[%s240 + $0x79] sm:$0xff] %v186
    %252 = vst [vmem:[%s240 + $0x81] sm:$0xff] %v187
    %253 = vst [vmem:[%s240 + $0x91] sm:$0xff] %v188
    %254 = vst [vmem:[%s240 + $0x99] sm:$0xff] %v189
    %255 = vst [vmem:[%s240 + $0xa9] sm:$0xff] %v190
    %256 = vst [vmem:[%s240 + $0xb1] sm:$0xff] %v191
    %257 = vst [vmem:[%s240 + $0xc1] sm:$0xff] %v192
    %258 = vst [vmem:[%s240 + $0xc9] sm:$0xff] %v193
    %259 = vst [vmem:[%s240 + $0xd9] sm:$0xff] %v194
    %260 = vst [vmem:[%s240 + $0xe1] sm:$0xff] %v195
    %261 = vst [vmem:[%s240 + $0xf1] sm:$0xff] %v196
    %262 = vst [vmem:[%s240 + $0xf9] sm:$0xff] %v197
    %263 = vst [vmem:[%s240 + $0x109] sm:$0xff] %v198
    %264 = vst [vmem:[%s240 + $0x111] sm:$0xff] %v199
    %265 = vst [vmem:[%s240 + $0x121] sm:$0xff] %v200
    %266 = vst [vmem:[%s240 + $0x129] sm:$0xff] %v201
    %267 = vst [vmem:[%s240 + $0x139] sm:$0xff] %v202
    %268 = vst [vmem:[%s240 + $0x141] sm:$0xff] %v203
    %269 = vst [vmem:[%s240 + $0x151] sm:$0xff] %v204
    %270 = vst [vmem:[%s240 + $0x159] sm:$0xff] %v205
    %271 = vst [vmem:[%s240 + $0x169] sm:$0xff] %v206
    %272 = vst [vmem:[%s240 + $0x171] sm:$0xff] %v207
    %273 = vst [vmem:[%s240 + $0x1b1] sm:$0xff] %v208
    %274 = vst [vmem:[%s240 + $0x1b9] sm:$0xff] %v209
    %275 = vst [vmem:[%s240 + $0x1c9] sm:$0xff] %v210
    %276 = vst [vmem:[%s240 + $0x1d1] sm:$0xff] %v211
    %277 = vst [vmem:[%s240 + $0x1e1] sm:$0xff] %v212
    %278 = vst [vmem:[%s240 + $0x1e9] sm:$0xff] %v213
    %279 = vst [vmem:[%s240 + $0x1f9] sm:$0xff] %v214
    %280 = vst [vmem:[%s240 + $0x201] sm:$0xff] %v215
    %281 = vst [vmem:[%s240 + $0x211] sm:$0xff] %v216
    %282 = vst [vmem:[%s240 + $0x219] sm:$0xff] %v217
    %283 = vst [vmem:[%s240 + $0x229] sm:$0xff] %v218
    %284 = vst [vmem:[%s240 + $0x231] sm:$0xff] %v219
    %285 = vst [vmem:[%s240 + $0x241] sm:$0xff] %v220
    %286 = vst [vmem:[%s240 + $0x249] sm:$0xff] %v221
    %287 = vst [vmem:[%s240 + $0x259] sm:$0xff] %v222
    %288 = vst [vmem:[%s240 + $0x261] sm:$0xff] %v223
    %289 = vst [vmem:[%s240 + $0x271] sm:$0xff] %v224
    %290 = vst [vmem:[%s240 + $0x279] sm:$0xff] %v225
    %291 = vst [vmem:[%s240 + $0x289] sm:$0xff] %v226
    %292 = vst [vmem:[%s240 + $0x291] sm:$0xff] %v227
    %293 = vst [vmem:[%s240 + $0x2a1] sm:$0xff] %v228
    %294 = vst [vmem:[%s240 + $0x2a9] sm:$0xff] %v229
    %295 = vst [vmem:[%s240 + $0x2b9] sm:$0xff] %v230
    %296 = vst [vmem:[%s240 + $0x2c1] sm:$0xff] %v231
    %297 = vst [vmem:[%s240 + $0x2d1] sm:$0xff] %v232
    %298 = vst [vmem:[%s240 + $0x2d9] sm:$0xff] %v233
    %299 = vst [vmem:[%s240 + $0x2e9] sm:$0xff] %v234
    %300 = vst [vmem:[%s240 + $0x2f1] sm:$0xff] %v235
    %301 = vst [vmem:[%s240 + $0x301] sm:$0xff] %v236
    %302 = vst [vmem:[%s240 + $0x309] sm:$0xff] %v237
    %303 = vst [vmem:[%s240 + $0x319] sm:$0xff] %v238
    %304 = vst [vmem:[%s240 + $0x321] sm:$0xff] %v239
    %v305 = vld [vmem:[#allocation2] sm:$0xff]
    %v306 = vld [vmem:[#allocation2 + $0x8] sm:$0xff]
    %v307 = vld [vmem:[#allocation2 + $0x18] sm:$0xff]
    %v308 = vld [vmem:[#allocation2 + $0x20] sm:$0xff]
    %v309 = vld [vmem:[#allocation2 + $0x30] sm:$0xff]
    %v310 = vld [vmem:[#allocation2 + $0x38] sm:$0xff]
    %v311 = vld [vmem:[#allocation2 + $0x48] sm:$0xff]
    %v312 = vld [vmem:[#allocation2 + $0x50] sm:$0xff]
    %v313 = vld [vmem:[#allocation2 + $0x60] sm:$0xff]
    %v314 = vld [vmem:[#allocation2 + $0x68] sm:$0xff]
    %v315 = vld [vmem:[#allocation2 + $0x78] sm:$0xff]
    %v316 = vld [vmem:[#allocation2 + $0x80] sm:$0xff]
    %v317 = vld [vmem:[#allocation2 + $0x90] sm:$0xff]
    %v318 = vld [vmem:[#allocation2 + $0x98] sm:$0xff]
    %v319 = vld [vmem:[#allocation2 + $0xa8] sm:$0xff]
    %v320 = vld [vmem:[#allocation2 + $0xb0] sm:$0xff]
    %v321 = vld [vmem:[#allocation2 + $0xc0] sm:$0xff]
    %v322 = vld [vmem:[#allocation2 + $0xc8] sm:$0xff]
    %v323 = vld [vmem:[#allocation2 + $0xd8] sm:$0xff]
    %v324 = vld [vmem:[#allocation2 + $0xe0] sm:$0xff]
    %v325 = vld [vmem:[#allocation2 + $0xf0] sm:$0xff]
    %v326 = vld [vmem:[#allocation2 + $0xf8] sm:$0xff]
    %v327 = vld [vmem:[#allocation2 + $0x108] sm:$0xff]
    %v328 = vld [vmem:[#allocation2 + $0x110] sm:$0xff]
    %v329 = vld [vmem:[#allocation2 + $0x120] sm:$0xff]
    %v330 = vld [vmem:[#allocation2 + $0x128] sm:$0xff]
    %v331 = vld [vmem:[#allocation2 + $0x138] sm:$0xff]
    %v332 = vld [vmem:[#allocation2 + $0x140] sm:$0xff]
    %v333 = vld [vmem:[#allocation2 + $0x150] sm:$0xff]
    %v334 = vld [vmem:[#allocation2 + $0x158] sm:$0xff]
    %v335 = vld [vmem:[#allocation2 + $0x168] sm:$0xff]
    %v336 = vld [vmem:[#allocation2 + $0x170] sm:$0xff]
    %v337 = vld [vmem:[#allocation2 + $0x1b0] sm:$0xff]
    %v338 = vld [vmem:[#allocation2 + $0x1b8] sm:$0xff]
    %v339 = vld [vmem:[#allocation2 + $0x1c8] sm:$0xff]
    %v340 = vld [vmem:[#allocation2 + $0x1d0] sm:$0xff]
    %v341 = vld [vmem:[#allocation2 + $0x1e0] sm:$0xff]
    %v342 = vld [vmem:[#allocation2 + $0x1e8] sm:$0xff]
    %v343 = vld [vmem:[#allocation2 + $0x1f8] sm:$0xff]
    %v344 = vld [vmem:[#allocation2 + $0x200] sm:$0xff]
    %v345 = vld [vmem:[#allocation2 + $0x210] sm:$0xff]
    %v346 = vld [vmem:[#allocation2 + $0x218] sm:$0xff]
    %v347 = vld [vmem:[#allocation2 + $0x228] sm:$0xff]
    %v348 = vld [vmem:[#allocation2 + $0x230] sm:$0xff]
    %v349 = vld [vmem:[#allocation2 + $0x240] sm:$0xff]
    %v350 = vld [vmem:[#allocation2 + $0x248] sm:$0xff]
    %v351 = vld [vmem:[#allocation2 + $0x258] sm:$0xff]
    %v352 = vld [vmem:[#allocation2 + $0x260] sm:$0xff]
    %v353 = vld [vmem:[#allocation2 + $0x270] sm:$0xff]
    %v354 = vld [vmem:[#allocation2 + $0x278] sm:$0xff]
    %v355 = vld [vmem:[#allocation2 + $0x288] sm:$0xff]
    %v356 = vld [vmem:[#allocation2 + $0x290] sm:$0xff]
    %v357 = vld [vmem:[#allocation2 + $0x2a0] sm:$0xff]
    %v358 = vld [vmem:[#allocation2 + $0x2a8] sm:$0xff]
    %v359 = vld [vmem:[#allocation2 + $0x2b8] sm:$0xff]
    %v360 = vld [vmem:[#allocation2 + $0x2c0] sm:$0xff]
    %v361 = vld [vmem:[#allocation2 + $0x2d0] sm:$0xff]
    %v362 = vld [vmem:[#allocation2 + $0x2d8] sm:$0xff]
    %v363 = vld [vmem:[#allocation2 + $0x2e8] sm:$0xff]
    %v364 = vld [vmem:[#allocation2 + $0x2f0] sm:$0xff]
    %v365 = vld [vmem:[#allocation2 + $0x300] sm:$0xff]
    %v366 = vld [vmem:[#allocation2 + $0x308] sm:$0xff]
    %v367 = vld [vmem:[#allocation2 + $0x318] sm:$0xff]
    %v368 = vld [vmem:[#allocation2 + $0x320] sm:$0xff]
    %369 = vst [vmem:[#allocation3] sm:$0xff] %v305
    %370 = vst [vmem:[#allocation3 + $0x48] sm:$0xff] %v306
    %371 = vst [vmem:[#allocation3 + $0x90] sm:$0xff] %v307
    %372 = vst [vmem:[#allocation3 + $0xd8] sm:$0xff] %v308
    %373 = vst [vmem:[#allocation3 + $0x120] sm:$0xff] %v309
    %374 = vst [vmem:[#allocation3 + $0x168] sm:$0xff] %v310
    %375 = vst [vmem:[#allocation3 + $0x1b0] sm:$0xff] %v311
    %376 = vst [vmem:[#allocation3 + $0x1f8] sm:$0xff] %v312
    %377 = vst [vmem:[#allocation3 + $0x240] sm:$0xff] %v313
    %378 = vst [vmem:[#allocation3 + $0x288] sm:$0xff] %v314
    %379 = vst [vmem:[#allocation3 + $0x2d0] sm:$0xff] %v315
    %380 = vst [vmem:[#allocation3 + $0x318] sm:$0xff] %v316
    %381 = vst [vmem:[#allocation3 + $0x360] sm:$0xff] %v317
    %382 = vst [vmem:[#allocation3 + $0x3a8] sm:$0xff] %v318
    %383 = vst [vmem:[#allocation3 + $0x3f0] sm:$0xff] %v319
    %384 = vst [vmem:[#allocation3 + $0x438] sm:$0xff] %v320
    %385 = vst [vmem:[#allocation3 + $0x480] sm:$0xff] %v321
    %386 = vst [vmem:[#allocation3 + $0x4c8] sm:$0xff] %v322
    %387 = vst [vmem:[#allocation3 + $0x510] sm:$0xff] %v323
    %388 = vst [vmem:[#allocation3 + $0x558] sm:$0xff] %v324
    %389 = vst [vmem:[#allocation3 + $0x5a0] sm:$0xff] %v325
    %390 = vst [vmem:[#allocation3 + $0x5e8] sm:$0xff] %v326
    %391 = vst [vmem:[#allocation3 + $0x630] sm:$0xff] %v327
    %392 = vst [vmem:[#allocation3 + $0x678] sm:$0xff] %v328
    %393 = vst [vmem:[#allocation3 + $0x6c0] sm:$0xff] %v329
    %394 = vst [vmem:[#allocation3 + $0x708] sm:$0xff] %v330
    %395 = vst [vmem:[#allocation3 + $0x750] sm:$0xff] %v331
    %396 = vst [vmem:[#allocation3 + $0x798] sm:$0xff] %v332
    %397 = vst [vmem:[#allocation3 + $0x7e0] sm:$0xff] %v333
    %398 = vst [vmem:[#allocation3 + $0x828] sm:$0xff] %v334
    %399 = vst [vmem:[#allocation3 + $0x870] sm:$0xff] %v335
    %400 = vst [vmem:[#allocation3 + $0x8b8] sm:$0xff] %v336
    %401 = vst [vmem:[#allocation3 + $0x900] sm:$0xff] %v337
    %402 = vst [vmem:[#allocation3 + $0x948] sm:$0xff] %v338
    %403 = vst [vmem:[#allocation3 + $0x990] sm:$0xff] %v339
    %404 = vst [vmem:[#allocation3 + $0x9d8] sm:$0xff] %v340
    %405 = vst [vmem:[#allocation3 + $0xa20] sm:$0xff] %v341
    %406 = vst [vmem:[#allocation3 + $0xa68] sm:$0xff] %v342
    %407 = vst [vmem:[#allocation3 + $0xab0] sm:$0xff] %v343
    %408 = vst [vmem:[#allocation3 + $0xaf8] sm:$0xff] %v344
    %409 = vst [vmem:[#allocation3 + $0xb40] sm:$0xff] %v345
    %410 = vst [vmem:[#allocation3 + $0xb88] sm:$0xff] %v346
    %411 = vst [vmem:[#allocation3 + $0xbd0] sm:$0xff] %v347
    %412 = vst [vmem:[#allocation3 + $0xc18] sm:$0xff] %v348
    %413 = vst [vmem:[#allocation3 + $0xc60] sm:$0xff] %v349
    %414 = vst [vmem:[#allocation3 + $0xca8] sm:$0xff] %v350
    %415 = vst [vmem:[#allocation3 + $0xcf0] sm:$0xff] %v351
    %416 = vst [vmem:[#allocation3 + $0xd38] sm:$0xff] %v352
    %417 = vst [vmem:[#allocation3 + $0xd80] sm:$0xff] %v353
    %418 = vst [vmem:[#allocation3 + $0xdc8] sm:$0xff] %v354
    %419 = vst [vmem:[#allocation3 + $0xe10] sm:$0xff] %v355
    %420 = vst [vmem:[#allocation3 + $0xe58] sm:$0xff] %v356
    %421 = vst [vmem:[#allocation3 + $0xea0] sm:$0xff] %v357
    %422 = vst [vmem:[#allocation3 + $0xee8] sm:$0xff] %v358
    %423 = vst [vmem:[#allocation3 + $0xf30] sm:$0xff] %v359
    %424 = vst [vmem:[#allocation3 + $0xf78] sm:$0xff] %v360
    %425 = vst [vmem:[#allocation3 + $0xfc0] sm:$0xff] %v361
    %426 = vst [vmem:[#allocation3 + $0x1008] sm:$0xff] %v362
    %427 = vst [vmem:[#allocation3 + $0x1050] sm:$0xff] %v363
    %428 = vst [vmem:[#allocation3 + $0x1098] sm:$0xff] %v364
    %429 = vst [vmem:[#allocation3 + $0x10e0] sm:$0xff] %v365
    %430 = vst [vmem:[#allocation3 + $0x1128] sm:$0xff] %v366
    %431 = vst [vmem:[#allocation3 + $0x1170] sm:$0xff] %v367
    %432 = vst [vmem:[#allocation3 + $0x11b8] sm:$0xff] %v368
    %v433 = vld [vmem:[#allocation2 + $0x1] sm:$0xff]
    %v434 = vld [vmem:[#allocation2 + $0x9] sm:$0xff]
    %v435 = vld [vmem:[#allocation2 + $0x19] sm:$0xff]
    %v436 = vld [vmem:[#allocation2 + $0x21] sm:$0xff]
    %v437 = vld [vmem:[#allocation2 + $0x31] sm:$0xff]
    %v438 = vld [vmem:[#allocation2 + $0x39] sm:$0xff]
    %v439 = vld [vmem:[#allocation2 + $0x49] sm:$0xff]
    %v440 = vld [vmem:[#allocation2 + $0x51] sm:$0xff]
    %v441 = vld [vmem:[#allocation2 + $0x61] sm:$0xff]
    %v442 = vld [vmem:[#allocation2 + $0x69] sm:$0xff]
    %v443 = vld [vmem:[#allocation2 + $0x79] sm:$0xff]
    %v444 = vld [vmem:[#allocation2 + $0x81] sm:$0xff]
    %v445 = vld [vmem:[#allocation2 + $0x91] sm:$0xff]
    %v446 = vld [vmem:[#allocation2 + $0x99] sm:$0xff]
    %v447 = vld [vmem:[#allocation2 + $0xa9] sm:$0xff]
    %v448 = vld [vmem:[#allocation2 + $0xb1] sm:$0xff]
    %v449 = vld [vmem:[#allocation2 + $0xc1] sm:$0xff]
    %v450 = vld [vmem:[#allocation2 + $0xc9] sm:$0xff]
    %v451 = vld [vmem:[#allocation2 + $0xd9] sm:$0xff]
    %v452 = vld [vmem:[#allocation2 + $0xe1] sm:$0xff]
    %v453 = vld [vmem:[#allocation2 + $0xf1] sm:$0xff]
    %v454 = vld [vmem:[#allocation2 + $0xf9] sm:$0xff]
    %v455 = vld [vmem:[#allocation2 + $0x109] sm:$0xff]
    %v456 = vld [vmem:[#allocation2 + $0x111] sm:$0xff]
    %v457 = vld [vmem:[#allocation2 + $0x121] sm:$0xff]
    %v458 = vld [vmem:[#allocation2 + $0x129] sm:$0xff]
    %v459 = vld [vmem:[#allocation2 + $0x139] sm:$0xff]
    %v460 = vld [vmem:[#allocation2 + $0x141] sm:$0xff]
    %v461 = vld [vmem:[#allocation2 + $0x151] sm:$0xff]
    %v462 = vld [vmem:[#allocation2 + $0x159] sm:$0xff]
    %v463 = vld [vmem:[#allocation2 + $0x169] sm:$0xff]
    %v464 = vld [vmem:[#allocation2 + $0x171] sm:$0xff]
    %v465 = vld [vmem:[#allocation2 + $0x1b1] sm:$0xff]
    %v466 = vld [vmem:[#allocation2 + $0x1b9] sm:$0xff]
    %v467 = vld [vmem:[#allocation2 + $0x1c9] sm:$0xff]
    %v468 = vld [vmem:[#allocation2 + $0x1d1] sm:$0xff]
    %v469 = vld [vmem:[#allocation2 + $0x1e1] sm:$0xff]
    %v470 = vld [vmem:[#allocation2 + $0x1e9] sm:$0xff]
    %v471 = vld [vmem:[#allocation2 + $0x1f9] sm:$0xff]
    %v472 = vld [vmem:[#allocation2 + $0x201] sm:$0xff]
    %v473 = vld [vmem:[#allocation2 + $0x211] sm:$0xff]
    %v474 = vld [vmem:[#allocation2 + $0x219] sm:$0xff]
    %v475 = vld [vmem:[#allocation2 + $0x229] sm:$0xff]
    %v476 = vld [vmem:[#allocation2 + $0x231] sm:$0xff]
    %v477 = vld [vmem:[#allocation2 + $0x241] sm:$0xff]
    %v478 = vld [vmem:[#allocation2 + $0x249] sm:$0xff]
    %v479 = vld [vmem:[#allocation2 + $0x259] sm:$0xff]
    %v480 = vld [vmem:[#allocation2 + $0x261] sm:$0xff]
    %v481 = vld [vmem:[#allocation2 + $0x271] sm:$0xff]
    %v482 = vld [vmem:[#allocation2 + $0x279] sm:$0xff]
    %v483 = vld [vmem:[#allocation2 + $0x289] sm:$0xff]
    %v484 = vld [vmem:[#allocation2 + $0x291] sm:$0xff]
    %v485 = vld [vmem:[#allocation2 + $0x2a1] sm:$0xff]
    %v486 = vld [vmem:[#allocation2 + $0x2a9] sm:$0xff]
    %v487 = vld [vmem:[#allocation2 + $0x2b9] sm:$0xff]
    %v488 = vld [vmem:[#allocation2 + $0x2c1] sm:$0xff]
    %v489 = vld [vmem:[#allocation2 + $0x2d1] sm:$0xff]
    %v490 = vld [vmem:[#allocation2 + $0x2d9] sm:$0xff]
    %v491 = vld [vmem:[#allocation2 + $0x2e9] sm:$0xff]
    %v492 = vld [vmem:[#allocation2 + $0x2f1] sm:$0xff]
    %v493 = vld [vmem:[#allocation2 + $0x301] sm:$0xff]
    %v494 = vld [vmem:[#allocation2 + $0x309] sm:$0xff]
    %v495 = vld [vmem:[#allocation2 + $0x319] sm:$0xff]
    %v496 = vld [vmem:[#allocation2 + $0x321] sm:$0xff]
    %497 = vst [vmem:[#allocation3 + $0x8] sm:$0xff] %v433
    %498 = vst [vmem:[#allocation3 + $0x50] sm:$0xff] %v434
    %499 = vst [vmem:[#allocation3 + $0x98] sm:$0xff] %v435
    %500 = vst [vmem:[#allocation3 + $0xe0] sm:$0xff] %v436
    %501 = vst [vmem:[#allocation3 + $0x128] sm:$0xff] %v437
    %502 = vst [vmem:[#allocation3 + $0x170] sm:$0xff] %v438
    %503 = vst [vmem:[#allocation3 + $0x1b8] sm:$0xff] %v439
    %504 = vst [vmem:[#allocation3 + $0x200] sm:$0xff] %v440
    %505 = vst [vmem:[#allocation3 + $0x248] sm:$0xff] %v441
    %506 = vst [vmem:[#allocation3 + $0x290] sm:$0xff] %v442
    %507 = vst [vmem:[#allocation3 + $0x2d8] sm:$0xff] %v443
    %508 = vst [vmem:[#allocation3 + $0x320] sm:$0xff] %v444
    %509 = vst [vmem:[#allocation3 + $0x368] sm:$0xff] %v445
    %510 = vst [vmem:[#allocation3 + $0x3b0] sm:$0xff] %v446
    %511 = vst [vmem:[#allocation3 + $0x3f8] sm:$0xff] %v447
    %512 = vst [vmem:[#allocation3 + $0x440] sm:$0xff] %v448
    %513 = vst [vmem:[#allocation3 + $0x488] sm:$0xff] %v449
    %514 = vst [vmem:[#allocation3 + $0x4d0] sm:$0xff] %v450
    %515 = vst [vmem:[#allocation3 + $0x518] sm:$0xff] %v451
    %516 = vst [vmem:[#allocation3 + $0x560] sm:$0xff] %v452
    %517 = vst [vmem:[#allocation3 + $0x5a8] sm:$0xff] %v453
    %518 = vst [vmem:[#allocation3 + $0x5f0] sm:$0xff] %v454
    %519 = vst [vmem:[#allocation3 + $0x638] sm:$0xff] %v455
    %520 = vst [vmem:[#allocation3 + $0x680] sm:$0xff] %v456
    %521 = vst [vmem:[#allocation3 + $0x6c8] sm:$0xff] %v457
    %522 = vst [vmem:[#allocation3 + $0x710] sm:$0xff] %v458
    %523 = vst [vmem:[#allocation3 + $0x758] sm:$0xff] %v459
    %524 = vst [vmem:[#allocation3 + $0x7a0] sm:$0xff] %v460
    %525 = vst [vmem:[#allocation3 + $0x7e8] sm:$0xff] %v461
    %526 = vst [vmem:[#allocation3 + $0x830] sm:$0xff] %v462
    %527 = vst [vmem:[#allocation3 + $0x878] sm:$0xff] %v463
    %528 = vst [vmem:[#allocation3 + $0x8c0] sm:$0xff] %v464
    %529 = vst [vmem:[#allocation3 + $0x908] sm:$0xff] %v465
    %530 = vst [vmem:[#allocation3 + $0x950] sm:$0xff] %v466
    %531 = vst [vmem:[#allocation3 + $0x998] sm:$0xff] %v467
    %532 = vst [vmem:[#allocation3 + $0x9e0] sm:$0xff] %v468
    %533 = vst [vmem:[#allocation3 + $0xa28] sm:$0xff] %v469
    %534 = vst [vmem:[#allocation3 + $0xa70] sm:$0xff] %v470
    %535 = vst [vmem:[#allocation3 + $0xab8] sm:$0xff] %v471
    %536 = vst [vmem:[#allocation3 + $0xb00] sm:$0xff] %v472
    %537 = vst [vmem:[#allocation3 + $0xb48] sm:$0xff] %v473
    %538 = vst [vmem:[#allocation3 + $0xb90] sm:$0xff] %v474
    %539 = vst [vmem:[#allocation3 + $0xbd8] sm:$0xff] %v475
    %540 = vst [vmem:[#allocation3 + $0xc20] sm:$0xff] %v476
    %541 = vst [vmem:[#allocation3 + $0xc68] sm:$0xff] %v477
    %542 = vst [vmem:[#allocation3 + $0xcb0] sm:$0xff] %v478
    %543 = vst [vmem:[#allocation3 + $0xcf8] sm:$0xff] %v479
    %544 = vst [vmem:[#allocation3 + $0xd40] sm:$0xff] %v480
    %545 = vst [vmem:[#allocation3 + $0xd88] sm:$0xff] %v481
    %546 = vst [vmem:[#allocation3 + $0xdd0] sm:$0xff] %v482
    %547 = vst [vmem:[#allocation3 + $0xe18] sm:$0xff] %v483
    %548 = vst [vmem:[#allocation3 + $0xe60] sm:$0xff] %v484
    %549 = vst [vmem:[#allocation3 + $0xea8] sm:$0xff] %v485
    %550 = vst [vmem:[#allocation3 + $0xef0] sm:$0xff] %v486
    %551 = vst [vmem:[#allocation3 + $0xf38] sm:$0xff] %v487
    %552 = vst [vmem:[#allocation3 + $0xf80] sm:$0xff] %v488
    %553 = vst [vmem:[#allocation3 + $0xfc8] sm:$0xff] %v489
    %554 = vst [vmem:[#allocation3 + $0x1010] sm:$0xff] %v490
    %555 = vst [vmem:[#allocation3 + $0x1058] sm:$0xff] %v491
    %556 = vst [vmem:[#allocation3 + $0x10a0] sm:$0xff] %v492
    %557 = vst [vmem:[#allocation3 + $0x10e8] sm:$0xff] %v493
    %558 = vst [vmem:[#allocation3 + $0x1130] sm:$0xff] %v494
    %559 = vst [vmem:[#allocation3 + $0x1178] sm:$0xff] %v495
    %560 = vst [vmem:[#allocation3 + $0x11c0] sm:$0xff] %v496
    %v561 = vld [vmem:[#allocation2 + $0x2] sm:$0xff]
    %v562 = vld [vmem:[#allocation2 + $0xa] sm:$0xff]
    %v563 = vld [vmem:[#allocation2 + $0x1a] sm:$0xff]
    %v564 = vld [vmem:[#allocation2 + $0x22] sm:$0xff]
    %v565 = vld [vmem:[#allocation2 + $0x32] sm:$0xff]
    %v566 = vld [vmem:[#allocation2 + $0x3a] sm:$0xff]
    %v567 = vld [vmem:[#allocation2 + $0x4a] sm:$0xff]
    %v568 = vld [vmem:[#allocation2 + $0x52] sm:$0xff]
    %v569 = vld [vmem:[#allocation2 + $0x62] sm:$0xff]
    %v570 = vld [vmem:[#allocation2 + $0x6a] sm:$0xff]
    %v571 = vld [vmem:[#allocation2 + $0x7a] sm:$0xff]
    %v572 = vld [vmem:[#allocation2 + $0x82] sm:$0xff]
    %v573 = vld [vmem:[#allocation2 + $0x92] sm:$0xff]
    %v574 = vld [vmem:[#allocation2 + $0x9a] sm:$0xff]
    %v575 = vld [vmem:[#allocation2 + $0xaa] sm:$0xff]
    %v576 = vld [vmem:[#allocation2 + $0xb2] sm:$0xff]
    %v577 = vld [vmem:[#allocation2 + $0xc2] sm:$0xff]
    %v578 = vld [vmem:[#allocation2 + $0xca] sm:$0xff]
    %v579 = vld [vmem:[#allocation2 + $0xda] sm:$0xff]
    %v580 = vld [vmem:[#allocation2 + $0xe2] sm:$0xff]
    %v581 = vld [vmem:[#allocation2 + $0xf2] sm:$0xff]
    %v582 = vld [vmem:[#allocation2 + $0xfa] sm:$0xff]
    %v583 = vld [vmem:[#allocation2 + $0x10a] sm:$0xff]
    %v584 = vld [vmem:[#allocation2 + $0x112] sm:$0xff]
    %v585 = vld [vmem:[#allocation2 + $0x122] sm:$0xff]
    %v586 = vld [vmem:[#allocation2 + $0x12a] sm:$0xff]
    %v587 = vld [vmem:[#allocation2 + $0x13a] sm:$0xff]
    %v588 = vld [vmem:[#allocation2 + $0x142] sm:$0xff]
    %v589 = vld [vmem:[#allocation2 + $0x152] sm:$0xff]
    %v590 = vld [vmem:[#allocation2 + $0x15a] sm:$0xff]
    %v591 = vld [vmem:[#allocation2 + $0x16a] sm:$0xff]
    %v592 = vld [vmem:[#allocation2 + $0x172] sm:$0xff]
    %v593 = vld [vmem:[#allocation2 + $0x1b2] sm:$0xff]
    %v594 = vld [vmem:[#allocation2 + $0x1ba] sm:$0xff]
    %v595 = vld [vmem:[#allocation2 + $0x1ca] sm:$0xff]
    %v596 = vld [vmem:[#allocation2 + $0x1d2] sm:$0xff]
    %v597 = vld [vmem:[#allocation2 + $0x1e2] sm:$0xff]
    %v598 = vld [vmem:[#allocation2 + $0x1ea] sm:$0xff]
    %v599 = vld [vmem:[#allocation2 + $0x1fa] sm:$0xff]
    %v600 = vld [vmem:[#allocation2 + $0x202] sm:$0xff]
    %v601 = vld [vmem:[#allocation2 + $0x212] sm:$0xff]
    %v602 = vld [vmem:[#allocation2 + $0x21a] sm:$0xff]
    %v603 = vld [vmem:[#allocation2 + $0x22a] sm:$0xff]
    %v604 = vld [vmem:[#allocation2 + $0x232] sm:$0xff]
    %v605 = vld [vmem:[#allocation2 + $0x242] sm:$0xff]
    %v606 = vld [vmem:[#allocation2 + $0x24a] sm:$0xff]
    %v607 = vld [vmem:[#allocation2 + $0x25a] sm:$0xff]
    %v608 = vld [vmem:[#allocation2 + $0x262] sm:$0xff]
    %v609 = vld [vmem:[#allocation2 + $0x272] sm:$0xff]
    %v610 = vld [vmem:[#allocation2 + $0x27a] sm:$0xff]
    %v611 = vld [vmem:[#allocation2 + $0x28a] sm:$0xff]
    %v612 = vld [vmem:[#allocation2 + $0x292] sm:$0xff]
    %v613 = vld [vmem:[#allocation2 + $0x2a2] sm:$0xff]
    %v614 = vld [vmem:[#allocation2 + $0x2aa] sm:$0xff]
    %v615 = vld [vmem:[#allocation2 + $0x2ba] sm:$0xff]
    %v616 = vld [vmem:[#allocation2 + $0x2c2] sm:$0xff]
    %v617 = vld [vmem:[#allocation2 + $0x2d2] sm:$0xff]
    %v618 = vld [vmem:[#allocation2 + $0x2da] sm:$0xff]
    %v619 = vld [vmem:[#allocation2 + $0x2ea] sm:$0xff]
    %v620 = vld [vmem:[#allocation2 + $0x2f2] sm:$0xff]
    %v621 = vld [vmem:[#allocation2 + $0x302] sm:$0xff]
    %v622 = vld [vmem:[#allocation2 + $0x30a] sm:$0xff]
    %v623 = vld [vmem:[#allocation2 + $0x31a] sm:$0xff]
    %v624 = vld [vmem:[#allocation2 + $0x322] sm:$0xff]
    %625 = vst [vmem:[#allocation3 + $0x10] sm:$0xff] %v561
    %626 = vst [vmem:[#allocation3 + $0x58] sm:$0xff] %v562
    %627 = vst [vmem:[#allocation3 + $0xa0] sm:$0xff] %v563
    %628 = vst [vmem:[#allocation3 + $0xe8] sm:$0xff] %v564
    %629 = vst [vmem:[#allocation3 + $0x130] sm:$0xff] %v565
    %630 = vst [vmem:[#allocation3 + $0x178] sm:$0xff] %v566
    %631 = vst [vmem:[#allocation3 + $0x1c0] sm:$0xff] %v567
    %632 = vst [vmem:[#allocation3 + $0x208] sm:$0xff] %v568
    %633 = vst [vmem:[#allocation3 + $0x250] sm:$0xff] %v569
    %634 = vst [vmem:[#allocation3 + $0x298] sm:$0xff] %v570
    %635 = vst [vmem:[#allocation3 + $0x2e0] sm:$0xff] %v571
    %636 = vst [vmem:[#allocation3 + $0x328] sm:$0xff] %v572
    %637 = vst [vmem:[#allocation3 + $0x370] sm:$0xff] %v573
    %638 = vst [vmem:[#allocation3 + $0x3b8] sm:$0xff] %v574
    %639 = vst [vmem:[#allocation3 + $0x400] sm:$0xff] %v575
    %640 = vst [vmem:[#allocation3 + $0x448] sm:$0xff] %v576
    %641 = vst [vmem:[#allocation3 + $0x490] sm:$0xff] %v577
    %642 = vst [vmem:[#allocation3 + $0x4d8] sm:$0xff] %v578
    %643 = vst [vmem:[#allocation3 + $0x520] sm:$0xff] %v579
    %644 = vst [vmem:[#allocation3 + $0x568] sm:$0xff] %v580
    %645 = vst [vmem:[#allocation3 + $0x5b0] sm:$0xff] %v581
    %646 = vst [vmem:[#allocation3 + $0x5f8] sm:$0xff] %v582
    %647 = vst [vmem:[#allocation3 + $0x640] sm:$0xff] %v583
    %648 = vst [vmem:[#allocation3 + $0x688] sm:$0xff] %v584
    %649 = vst [vmem:[#allocation3 + $0x6d0] sm:$0xff] %v585
    %650 = vst [vmem:[#allocation3 + $0x718] sm:$0xff] %v586
    %651 = vst [vmem:[#allocation3 + $0x760] sm:$0xff] %v587
    %652 = vst [vmem:[#allocation3 + $0x7a8] sm:$0xff] %v588
    %653 = vst [vmem:[#allocation3 + $0x7f0] sm:$0xff] %v589
    %654 = vst [vmem:[#allocation3 + $0x838] sm:$0xff] %v590
    %655 = vst [vmem:[#allocation3 + $0x880] sm:$0xff] %v591
    %656 = vst [vmem:[#allocation3 + $0x8c8] sm:$0xff] %v592
    %657 = vst [vmem:[#allocation3 + $0x910] sm:$0xff] %v593
    %658 = vst [vmem:[#allocation3 + $0x958] sm:$0xff] %v594
    %659 = vst [vmem:[#allocation3 + $0x9a0] sm:$0xff] %v595
    %660 = vst [vmem:[#allocation3 + $0x9e8] sm:$0xff] %v596
    %661 = vst [vmem:[#allocation3 + $0xa30] sm:$0xff] %v597
    %662 = vst [vmem:[#allocation3 + $0xa78] sm:$0xff] %v598
    %663 = vst [vmem:[#allocation3 + $0xac0] sm:$0xff] %v599
    %664 = vst [vmem:[#allocation3 + $0xb08] sm:$0xff] %v600
    %665 = vst [vmem:[#allocation3 + $0xb50] sm:$0xff] %v601
    %666 = vst [vmem:[#allocation3 + $0xb98] sm:$0xff] %v602
    %667 = vst [vmem:[#allocation3 + $0xbe0] sm:$0xff] %v603
    %668 = vst [vmem:[#allocation3 + $0xc28] sm:$0xff] %v604
    %669 = vst [vmem:[#allocation3 + $0xc70] sm:$0xff] %v605
    %670 = vst [vmem:[#allocation3 + $0xcb8] sm:$0xff] %v606
    %671 = vst [vmem:[#allocation3 + $0xd00] sm:$0xff] %v607
    %672 = vst [vmem:[#allocation3 + $0xd48] sm:$0xff] %v608
    %673 = vst [vmem:[#allocation3 + $0xd90] sm:$0xff] %v609
    %674 = vst [vmem:[#allocation3 + $0xdd8] sm:$0xff] %v610
    %675 = vst [vmem:[#allocation3 + $0xe20] sm:$0xff] %v611
    %676 = vst [vmem:[#allocation3 + $0xe68] sm:$0xff] %v612
    %677 = vst [vmem:[#allocation3 + $0xeb0] sm:$0xff] %v613
    %678 = vst [vmem:[#allocation3 + $0xef8] sm:$0xff] %v614
    %679 = vst [vmem:[#allocation3 + $0xf40] sm:$0xff] %v615
    %680 = vst [vmem:[#allocation3 + $0xf88] sm:$0xff] %v616
    %681 = vst [vmem:[#allocation3 + $0xfd0] sm:$0xff] %v617
    %682 = vst [vmem:[#allocation3 + $0x1018] sm:$0xff] %v618
    %683 = vst [vmem:[#allocation3 + $0x1060] sm:$0xff] %v619
    %684 = vst [vmem:[#allocation3 + $0x10a8] sm:$0xff] %v620
    %685 = vst [vmem:[#allocation3 + $0x10f0] sm:$0xff] %v621
    %686 = vst [vmem:[#allocation3 + $0x1138] sm:$0xff] %v622
    %687 = vst [vmem:[#allocation3 + $0x1180] sm:$0xff] %v623
    %688 = vst [vmem:[#allocation3 + $0x11c8] sm:$0xff] %v624
    %v689 = vld [vmem:[%s240] sm:$0xff]
    %v690 = vld [vmem:[%s240 + $0x8] sm:$0xff]
    %v691 = vld [vmem:[%s240 + $0x18] sm:$0xff]
    %v692 = vld [vmem:[%s240 + $0x20] sm:$0xff]
    %v693 = vld [vmem:[%s240 + $0x30] sm:$0xff]
    %v694 = vld [vmem:[%s240 + $0x38] sm:$0xff]
    %v695 = vld [vmem:[%s240 + $0x48] sm:$0xff]
    %v696 = vld [vmem:[%s240 + $0x50] sm:$0xff]
    %v697 = vld [vmem:[%s240 + $0x60] sm:$0xff]
    %v698 = vld [vmem:[%s240 + $0x68] sm:$0xff]
    %v699 = vld [vmem:[%s240 + $0x78] sm:$0xff]
    %v700 = vld [vmem:[%s240 + $0x80] sm:$0xff]
    %v701 = vld [vmem:[%s240 + $0x90] sm:$0xff]
    %v702 = vld [vmem:[%s240 + $0x98] sm:$0xff]
    %v703 = vld [vmem:[%s240 + $0xa8] sm:$0xff]
    %v704 = vld [vmem:[%s240 + $0xb0] sm:$0xff]
    %v705 = vld [vmem:[%s240 + $0xc0] sm:$0xff]
    %v706 = vld [vmem:[%s240 + $0xc8] sm:$0xff]
    %v707 = vld [vmem:[%s240 + $0xd8] sm:$0xff]
    %v708 = vld [vmem:[%s240 + $0xe0] sm:$0xff]
    %v709 = vld [vmem:[%s240 + $0xf0] sm:$0xff]
    %v710 = vld [vmem:[%s240 + $0xf8] sm:$0xff]
    %v711 = vld [vmem:[%s240 + $0x108] sm:$0xff]
    %v712 = vld [vmem:[%s240 + $0x110] sm:$0xff]
    %v713 = vld [vmem:[%s240 + $0x120] sm:$0xff]
    %v714 = vld [vmem:[%s240 + $0x128] sm:$0xff]
    %v715 = vld [vmem:[%s240 + $0x138] sm:$0xff]
    %v716 = vld [vmem:[%s240 + $0x140] sm:$0xff]
    %v717 = vld [vmem:[%s240 + $0x150] sm:$0xff]
    %v718 = vld [vmem:[%s240 + $0x158] sm:$0xff]
    %v719 = vld [vmem:[%s240 + $0x168] sm:$0xff]
    %v720 = vld [vmem:[%s240 + $0x170] sm:$0xff]
    %v721 = vld [vmem:[%s240 + $0x1b0] sm:$0xff]
    %v722 = vld [vmem:[%s240 + $0x1b8] sm:$0xff]
    %v723 = vld [vmem:[%s240 + $0x1c8] sm:$0xff]
    %v724 = vld [vmem:[%s240 + $0x1d0] sm:$0xff]
    %v725 = vld [vmem:[%s240 + $0x1e0] sm:$0xff]
    %v726 = vld [vmem:[%s240 + $0x1e8] sm:$0xff]
    %v727 = vld [vmem:[%s240 + $0x1f8] sm:$0xff]
    %v728 = vld [vmem:[%s240 + $0x200] sm:$0xff]
    %v729 = vld [vmem:[%s240 + $0x210] sm:$0xff]
    %v730 = vld [vmem:[%s240 + $0x218] sm:$0xff]
    %v731 = vld [vmem:[%s240 + $0x228] sm:$0xff]
    %v732 = vld [vmem:[%s240 + $0x230] sm:$0xff]
    %v733 = vld [vmem:[%s240 + $0x240] sm:$0xff]
    %v734 = vld [vmem:[%s240 + $0x248] sm:$0xff]
    %v735 = vld [vmem:[%s240 + $0x258] sm:$0xff]
    %v736 = vld [vmem:[%s240 + $0x260] sm:$0xff]
    %v737 = vld [vmem:[%s240 + $0x270] sm:$0xff]
    %v738 = vld [vmem:[%s240 + $0x278] sm:$0xff]
    %v739 = vld [vmem:[%s240 + $0x288] sm:$0xff]
    %v740 = vld [vmem:[%s240 + $0x290] sm:$0xff]
    %v741 = vld [vmem:[%s240 + $0x2a0] sm:$0xff]
    %v742 = vld [vmem:[%s240 + $0x2a8] sm:$0xff]
    %v743 = vld [vmem:[%s240 + $0x2b8] sm:$0xff]
    %v744 = vld [vmem:[%s240 + $0x2c0] sm:$0xff]
    %v745 = vld [vmem:[%s240 + $0x2d0] sm:$0xff]
    %v746 = vld [vmem:[%s240 + $0x2d8] sm:$0xff]
    %v747 = vld [vmem:[%s240 + $0x2e8] sm:$0xff]
    %v748 = vld [vmem:[%s240 + $0x2f0] sm:$0xff]
    %v749 = vld [vmem:[%s240 + $0x300] sm:$0xff]
    %v750 = vld [vmem:[%s240 + $0x308] sm:$0xff]
    %v751 = vld [vmem:[%s240 + $0x318] sm:$0xff]
    %v752 = vld [vmem:[%s240 + $0x320] sm:$0xff]
    %753 = vst [vmem:[#allocation3 + $0x18] sm:$0xff] %v689
    %754 = vst [vmem:[#allocation3 + $0x60] sm:$0xff] %v690
    %755 = vst [vmem:[#allocation3 + $0xa8] sm:$0xff] %v691
    %756 = vst [vmem:[#allocation3 + $0xf0] sm:$0xff] %v692
    %757 = vst [vmem:[#allocation3 + $0x138] sm:$0xff] %v693
    %758 = vst [vmem:[#allocation3 + $0x180] sm:$0xff] %v694
    %759 = vst [vmem:[#allocation3 + $0x1c8] sm:$0xff] %v695
    %760 = vst [vmem:[#allocation3 + $0x210] sm:$0xff] %v696
    %761 = vst [vmem:[#allocation3 + $0x258] sm:$0xff] %v697
    %762 = vst [vmem:[#allocation3 + $0x2a0] sm:$0xff] %v698
    %763 = vst [vmem:[#allocation3 + $0x2e8] sm:$0xff] %v699
    %764 = vst [vmem:[#allocation3 + $0x330] sm:$0xff] %v700
    %765 = vst [vmem:[#allocation3 + $0x378] sm:$0xff] %v701
    %766 = vst [vmem:[#allocation3 + $0x3c0] sm:$0xff] %v702
    %767 = vst [vmem:[#allocation3 + $0x408] sm:$0xff] %v703
    %768 = vst [vmem:[#allocation3 + $0x450] sm:$0xff] %v704
    %769 = vst [vmem:[#allocation3 + $0x498] sm:$0xff] %v705
    %770 = vst [vmem:[#allocation3 + $0x4e0] sm:$0xff] %v706
    %771 = vst [vmem:[#allocation3 + $0x528] sm:$0xff] %v707
    %772 = vst [vmem:[#allocation3 + $0x570] sm:$0xff] %v708
    %773 = vst [vmem:[#allocation3 + $0x5b8] sm:$0xff] %v709
    %774 = vst [vmem:[#allocation3 + $0x600] sm:$0xff] %v710
    %775 = vst [vmem:[#allocation3 + $0x648] sm:$0xff] %v711
    %776 = vst [vmem:[#allocation3 + $0x690] sm:$0xff] %v712
    %777 = vst [vmem:[#allocation3 + $0x6d8] sm:$0xff] %v713
    %778 = vst [vmem:[#allocation3 + $0x720] sm:$0xff] %v714
    %779 = vst [vmem:[#allocation3 + $0x768] sm:$0xff] %v715
    %780 = vst [vmem:[#allocation3 + $0x7b0] sm:$0xff] %v716
    %781 = vst [vmem:[#allocation3 + $0x7f8] sm:$0xff] %v717
    %782 = vst [vmem:[#allocation3 + $0x840] sm:$0xff] %v718
    %783 = vst [vmem:[#allocation3 + $0x888] sm:$0xff] %v719
    %784 = vst [vmem:[#allocation3 + $0x8d0] sm:$0xff] %v720
    %785 = vst [vmem:[#allocation3 + $0x918] sm:$0xff] %v721
    %786 = vst [vmem:[#allocation3 + $0x960] sm:$0xff] %v722
    %787 = vst [vmem:[#allocation3 + $0x9a8] sm:$0xff] %v723
    %788 = vst [vmem:[#allocation3 + $0x9f0] sm:$0xff] %v724
    %789 = vst [vmem:[#allocation3 + $0xa38] sm:$0xff] %v725
    %790 = vst [vmem:[#allocation3 + $0xa80] sm:$0xff] %v726
    %791 = vst [vmem:[#allocation3 + $0xac8] sm:$0xff] %v727
    %792 = vst [vmem:[#allocation3 + $0xb10] sm:$0xff] %v728
    %793 = vst [vmem:[#allocation3 + $0xb58] sm:$0xff] %v729
    %794 = vst [vmem:[#allocation3 + $0xba0] sm:$0xff] %v730
    %795 = vst [vmem:[#allocation3 + $0xbe8] sm:$0xff] %v731
    %796 = vst [vmem:[#allocation3 + $0xc30] sm:$0xff] %v732
    %797 = vst [vmem:[#allocation3 + $0xc78] sm:$0xff] %v733
    %798 = vst [vmem:[#allocation3 + $0xcc0] sm:$0xff] %v734
    %799 = vst [vmem:[#allocation3 + $0xd08] sm:$0xff] %v735
    %800 = vst [vmem:[#allocation3 + $0xd50] sm:$0xff] %v736
    %801 = vst [vmem:[#allocation3 + $0xd98] sm:$0xff] %v737
    %802 = vst [vmem:[#allocation3 + $0xde0] sm:$0xff] %v738
    %803 = vst [vmem:[#allocation3 + $0xe28] sm:$0xff] %v739
    %804 = vst [vmem:[#allocation3 + $0xe70] sm:$0xff] %v740
    %805 = vst [vmem:[#allocation3 + $0xeb8] sm:$0xff] %v741
    %806 = vst [vmem:[#allocation3 + $0xf00] sm:$0xff] %v742
    %807 = vst [vmem:[#allocation3 + $0xf48] sm:$0xff] %v743
    %808 = vst [vmem:[#allocation3 + $0xf90] sm:$0xff] %v744
    %809 = vst [vmem:[#allocation3 + $0xfd8] sm:$0xff] %v745
    %810 = vst [vmem:[#allocation3 + $0x1020] sm:$0xff] %v746
    %811 = vst [vmem:[#allocation3 + $0x1068] sm:$0xff] %v747
    %812 = vst [vmem:[#allocation3 + $0x10b0] sm:$0xff] %v748
    %813 = vst [vmem:[#allocation3 + $0x10f8] sm:$0xff] %v749
    %814 = vst [vmem:[#allocation3 + $0x1140] sm:$0xff] %v750
    %815 = vst [vmem:[#allocation3 + $0x1188] sm:$0xff] %v751
    %816 = vst [vmem:[#allocation3 + $0x11d0] sm:$0xff] %v752
    %v817 = vld [vmem:[%s240 + $0x1] sm:$0xff]
    %v818 = vld [vmem:[%s240 + $0x9] sm:$0xff]
    %v819 = vld [vmem:[%s240 + $0x19] sm:$0xff]
    %v820 = vld [vmem:[%s240 + $0x21] sm:$0xff]
    %v821 = vld [vmem:[%s240 + $0x31] sm:$0xff]
    %v822 = vld [vmem:[%s240 + $0x39] sm:$0xff]
    %v823 = vld [vmem:[%s240 + $0x49] sm:$0xff]
    %v824 = vld [vmem:[%s240 + $0x51] sm:$0xff]
    %v825 = vld [vmem:[%s240 + $0x61] sm:$0xff]
    %v826 = vld [vmem:[%s240 + $0x69] sm:$0xff]
    %v827 = vld [vmem:[%s240 + $0x79] sm:$0xff]
    %v828 = vld [vmem:[%s240 + $0x81] sm:$0xff]
    %v829 = vld [vmem:[%s240 + $0x91] sm:$0xff]
    %v830 = vld [vmem:[%s240 + $0x99] sm:$0xff]
    %v831 = vld [vmem:[%s240 + $0xa9] sm:$0xff]
    %v832 = vld [vmem:[%s240 + $0xb1] sm:$0xff]
    %v833 = vld [vmem:[%s240 + $0xc1] sm:$0xff]
    %v834 = vld [vmem:[%s240 + $0xc9] sm:$0xff]
    %v835 = vld [vmem:[%s240 + $0xd9] sm:$0xff]
    %v836 = vld [vmem:[%s240 + $0xe1] sm:$0xff]
    %v837 = vld [vmem:[%s240 + $0xf1] sm:$0xff]
    %v838 = vld [vmem:[%s240 + $0xf9] sm:$0xff]
    %v839 = vld [vmem:[%s240 + $0x109] sm:$0xff]
    %v840 = vld [vmem:[%s240 + $0x111] sm:$0xff]
    %v841 = vld [vmem:[%s240 + $0x121] sm:$0xff]
    %v842 = vld [vmem:[%s240 + $0x129] sm:$0xff]
    %v843 = vld [vmem:[%s240 + $0x139] sm:$0xff]
    %v844 = vld [vmem:[%s240 + $0x141] sm:$0xff]
    %v845 = vld [vmem:[%s240 + $0x151] sm:$0xff]
    %v846 = vld [vmem:[%s240 + $0x159] sm:$0xff]
    %v847 = vld [vmem:[%s240 + $0x169] sm:$0xff]
    %v848 = vld [vmem:[%s240 + $0x171] sm:$0xff]
    %v849 = vld [vmem:[%s240 + $0x1b1] sm:$0xff]
    %v850 = vld [vmem:[%s240 + $0x1b9] sm:$0xff]
    %v851 = vld [vmem:[%s240 + $0x1c9] sm:$0xff]
    %v852 = vld [vmem:[%s240 + $0x1d1] sm:$0xff]
    %v853 = vld [vmem:[%s240 + $0x1e1] sm:$0xff]
    %v854 = vld [vmem:[%s240 + $0x1e9] sm:$0xff]
    %v855 = vld [vmem:[%s240 + $0x1f9] sm:$0xff]
    %v856 = vld [vmem:[%s240 + $0x201] sm:$0xff]
    %v857 = vld [vmem:[%s240 + $0x211] sm:$0xff]
    %v858 = vld [vmem:[%s240 + $0x219] sm:$0xff]
    %v859 = vld [vmem:[%s240 + $0x229] sm:$0xff]
    %v860 = vld [vmem:[%s240 + $0x231] sm:$0xff]
    %v861 = vld [vmem:[%s240 + $0x241] sm:$0xff]
    %v862 = vld [vmem:[%s240 + $0x249] sm:$0xff]
    %v863 = vld [vmem:[%s240 + $0x259] sm:$0xff]
    %v864 = vld [vmem:[%s240 + $0x261] sm:$0xff]
    %v865 = vld [vmem:[%s240 + $0x271] sm:$0xff]
    %v866 = vld [vmem:[%s240 + $0x279] sm:$0xff]
    %v867 = vld [vmem:[%s240 + $0x289] sm:$0xff]
    %v868 = vld [vmem:[%s240 + $0x291] sm:$0xff]
    %v869 = vld [vmem:[%s240 + $0x2a1] sm:$0xff]
    %v870 = vld [vmem:[%s240 + $0x2a9] sm:$0xff]
    %v871 = vld [vmem:[%s240 + $0x2b9] sm:$0xff]
    %v872 = vld [vmem:[%s240 + $0x2c1] sm:$0xff]
    %v873 = vld [vmem:[%s240 + $0x2d1] sm:$0xff]
    %v874 = vld [vmem:[%s240 + $0x2d9] sm:$0xff]
    %v875 = vld [vmem:[%s240 + $0x2e9] sm:$0xff]
    %v876 = vld [vmem:[%s240 + $0x2f1] sm:$0xff]
    %v877 = vld [vmem:[%s240 + $0x301] sm:$0xff]
    %v878 = vld [vmem:[%s240 + $0x309] sm:$0xff]
    %v879 = vld [vmem:[%s240 + $0x319] sm:$0xff]
    %v880 = vld [vmem:[%s240 + $0x321] sm:$0xff]
    %881 = vst [vmem:[#allocation3 + $0x20] sm:$0xff] %v817
    %882 = vst [vmem:[#allocation3 + $0x68] sm:$0xff] %v818
    %883 = vst [vmem:[#allocation3 + $0xb0] sm:$0xff] %v819
    %884 = vst [vmem:[#allocation3 + $0xf8] sm:$0xff] %v820
    %885 = vst [vmem:[#allocation3 + $0x140] sm:$0xff] %v821
    %886 = vst [vmem:[#allocation3 + $0x188] sm:$0xff] %v822
    %887 = vst [vmem:[#allocation3 + $0x1d0] sm:$0xff] %v823
    %888 = vst [vmem:[#allocation3 + $0x218] sm:$0xff] %v824
    %889 = vst [vmem:[#allocation3 + $0x260] sm:$0xff] %v825
    %890 = vst [vmem:[#allocation3 + $0x2a8] sm:$0xff] %v826
    %891 = vst [vmem:[#allocation3 + $0x2f0] sm:$0xff] %v827
    %892 = vst [vmem:[#allocation3 + $0x338] sm:$0xff] %v828
    %893 = vst [vmem:[#allocation3 + $0x380] sm:$0xff] %v829
    %894 = vst [vmem:[#allocation3 + $0x3c8] sm:$0xff] %v830
    %895 = vst [vmem:[#allocation3 + $0x410] sm:$0xff] %v831
    %896 = vst [vmem:[#allocation3 + $0x458] sm:$0xff] %v832
    %897 = vst [vmem:[#allocation3 + $0x4a0] sm:$0xff] %v833
    %898 = vst [vmem:[#allocation3 + $0x4e8] sm:$0xff] %v834
    %899 = vst [vmem:[#allocation3 + $0x530] sm:$0xff] %v835
    %900 = vst [vmem:[#allocation3 + $0x578] sm:$0xff] %v836
    %901 = vst [vmem:[#allocation3 + $0x5c0] sm:$0xff] %v837
    %902 = vst [vmem:[#allocation3 + $0x608] sm:$0xff] %v838
    %903 = vst [vmem:[#allocation3 + $0x650] sm:$0xff] %v839
    %904 = vst [vmem:[#allocation3 + $0x698] sm:$0xff] %v840
    %905 = vst [vmem:[#allocation3 + $0x6e0] sm:$0xff] %v841
    %906 = vst [vmem:[#allocation3 + $0x728] sm:$0xff] %v842
    %907 = vst [vmem:[#allocation3 + $0x770] sm:$0xff] %v843
    %908 = vst [vmem:[#allocation3 + $0x7b8] sm:$0xff] %v844
    %909 = vst [vmem:[#allocation3 + $0x800] sm:$0xff] %v845
    %910 = vst [vmem:[#allocation3 + $0x848] sm:$0xff] %v846
    %911 = vst [vmem:[#allocation3 + $0x890] sm:$0xff] %v847
    %912 = vst [vmem:[#allocation3 + $0x8d8] sm:$0xff] %v848
    %913 = vst [vmem:[#allocation3 + $0x920] sm:$0xff] %v849
    %914 = vst [vmem:[#allocation3 + $0x968] sm:$0xff] %v850
    %915 = vst [vmem:[#allocation3 + $0x9b0] sm:$0xff] %v851
    %916 = vst [vmem:[#allocation3 + $0x9f8] sm:$0xff] %v852
    %917 = vst [vmem:[#allocation3 + $0xa40] sm:$0xff] %v853
    %918 = vst [vmem:[#allocation3 + $0xa88] sm:$0xff] %v854
    %919 = vst [vmem:[#allocation3 + $0xad0] sm:$0xff] %v855
    %920 = vst [vmem:[#allocation3 + $0xb18] sm:$0xff] %v856
    %921 = vst [vmem:[#allocation3 + $0xb60] sm:$0xff] %v857
    %922 = vst [vmem:[#allocation3 + $0xba8] sm:$0xff] %v858
    %923 = vst [vmem:[#allocation3 + $0xbf0] sm:$0xff] %v859
    %924 = vst [vmem:[#allocation3 + $0xc38] sm:$0xff] %v860
    %925 = vst [vmem:[#allocation3 + $0xc80] sm:$0xff] %v861
    %926 = vst [vmem:[#allocation3 + $0xcc8] sm:$0xff] %v862
    %927 = vst [vmem:[#allocation3 + $0xd10] sm:$0xff] %v863
    %928 = vst [vmem:[#allocation3 + $0xd58] sm:$0xff] %v864
    %929 = vst [vmem:[#allocation3 + $0xda0] sm:$0xff] %v865
    %930 = vst [vmem:[#allocation3 + $0xde8] sm:$0xff] %v866
    %931 = vst [vmem:[#allocation3 + $0xe30] sm:$0xff] %v867
    %932 = vst [vmem:[#allocation3 + $0xe78] sm:$0xff] %v868
    %933 = vst [vmem:[#allocation3 + $0xec0] sm:$0xff] %v869
    %934 = vst [vmem:[#allocation3 + $0xf08] sm:$0xff] %v870
    %935 = vst [vmem:[#allocation3 + $0xf50] sm:$0xff] %v871
    %936 = vst [vmem:[#allocation3 + $0xf98] sm:$0xff] %v872
    %937 = vst [vmem:[#allocation3 + $0xfe0] sm:$0xff] %v873
    %938 = vst [vmem:[#allocation3 + $0x1028] sm:$0xff] %v874
    %939 = vst [vmem:[#allocation3 + $0x1070] sm:$0xff] %v875
    %940 = vst [vmem:[#allocation3 + $0x10b8] sm:$0xff] %v876
    %941 = vst [vmem:[#allocation3 + $0x1100] sm:$0xff] %v877
    %942 = vst [vmem:[#allocation3 + $0x1148] sm:$0xff] %v878
    %943 = vst [vmem:[#allocation3 + $0x1190] sm:$0xff] %v879
    %944 = vst [vmem:[#allocation3 + $0x11d8] sm:$0xff] %v880
    %v945 = vld [vmem:[%s240 + $0x2] sm:$0xff]
    %v946 = vld [vmem:[%s240 + $0xa] sm:$0xff]
    %v947 = vld [vmem:[%s240 + $0x1a] sm:$0xff]
    %v948 = vld [vmem:[%s240 + $0x22] sm:$0xff]
    %v949 = vld [vmem:[%s240 + $0x32] sm:$0xff]
    %v950 = vld [vmem:[%s240 + $0x3a] sm:$0xff]
    %v951 = vld [vmem:[%s240 + $0x4a] sm:$0xff]
    %v952 = vld [vmem:[%s240 + $0x52] sm:$0xff]
    %v953 = vld [vmem:[%s240 + $0x62] sm:$0xff]
    %v954 = vld [vmem:[%s240 + $0x6a] sm:$0xff]
    %v955 = vld [vmem:[%s240 + $0x7a] sm:$0xff]
    %v956 = vld [vmem:[%s240 + $0x82] sm:$0xff]
    %v957 = vld [vmem:[%s240 + $0x92] sm:$0xff]
    %v958 = vld [vmem:[%s240 + $0x9a] sm:$0xff]
    %v959 = vld [vmem:[%s240 + $0xaa] sm:$0xff]
    %v960 = vld [vmem:[%s240 + $0xb2] sm:$0xff]
    %v961 = vld [vmem:[%s240 + $0xc2] sm:$0xff]
    %v962 = vld [vmem:[%s240 + $0xca] sm:$0xff]
    %v963 = vld [vmem:[%s240 + $0xda] sm:$0xff]
    %v964 = vld [vmem:[%s240 + $0xe2] sm:$0xff]
    %v965 = vld [vmem:[%s240 + $0xf2] sm:$0xff]
    %v966 = vld [vmem:[%s240 + $0xfa] sm:$0xff]
    %v967 = vld [vmem:[%s240 + $0x10a] sm:$0xff]
    %v968 = vld [vmem:[%s240 + $0x112] sm:$0xff]
    %v969 = vld [vmem:[%s240 + $0x122] sm:$0xff]
    %v970 = vld [vmem:[%s240 + $0x12a] sm:$0xff]
    %v971 = vld [vmem:[%s240 + $0x13a] sm:$0xff]
    %v972 = vld [vmem:[%s240 + $0x142] sm:$0xff]
    %v973 = vld [vmem:[%s240 + $0x152] sm:$0xff]
    %v974 = vld [vmem:[%s240 + $0x15a] sm:$0xff]
    %v975 = vld [vmem:[%s240 + $0x16a] sm:$0xff]
    %v976 = vld [vmem:[%s240 + $0x172] sm:$0xff]
    %v977 = vld [vmem:[%s240 + $0x1b2] sm:$0xff]
    %v978 = vld [vmem:[%s240 + $0x1ba] sm:$0xff]
    %v979 = vld [vmem:[%s240 + $0x1ca] sm:$0xff]
    %v980 = vld [vmem:[%s240 + $0x1d2] sm:$0xff]
    %v981 = vld [vmem:[%s240 + $0x1e2] sm:$0xff]
    %v982 = vld [vmem:[%s240 + $0x1ea] sm:$0xff]
    %v983 = vld [vmem:[%s240 + $0x1fa] sm:$0xff]
    %v984 = vld [vmem:[%s240 + $0x202] sm:$0xff]
    %v985 = vld [vmem:[%s240 + $0x212] sm:$0xff]
    %v986 = vld [vmem:[%s240 + $0x21a] sm:$0xff]
    %v987 = vld [vmem:[%s240 + $0x22a] sm:$0xff]
    %v988 = vld [vmem:[%s240 + $0x232] sm:$0xff]
    %v989 = vld [vmem:[%s240 + $0x242] sm:$0xff]
    %v990 = vld [vmem:[%s240 + $0x24a] sm:$0xff]
    %v991 = vld [vmem:[%s240 + $0x25a] sm:$0xff]
    %v992 = vld [vmem:[%s240 + $0x262] sm:$0xff]
    %v993 = vld [vmem:[%s240 + $0x272] sm:$0xff]
    %v994 = vld [vmem:[%s240 + $0x27a] sm:$0xff]
    %v995 = vld [vmem:[%s240 + $0x28a] sm:$0xff]
    %v996 = vld [vmem:[%s240 + $0x292] sm:$0xff]
    %v997 = vld [vmem:[%s240 + $0x2a2] sm:$0xff]
    %v998 = vld [vmem:[%s240 + $0x2aa] sm:$0xff]
    %v999 = vld [vmem:[%s240 + $0x2ba] sm:$0xff]
    %v1000 = vld [vmem:[%s240 + $0x2c2] sm:$0xff]
    %v1001 = vld [vmem:[%s240 + $0x2d2] sm:$0xff]
    %v1002 = vld [vmem:[%s240 + $0x2da] sm:$0xff]
    %v1003 = vld [vmem:[%s240 + $0x2ea] sm:$0xff]
    %v1004 = vld [vmem:[%s240 + $0x2f2] sm:$0xff]
    %v1005 = vld [vmem:[%s240 + $0x302] sm:$0xff]
    %v1006 = vld [vmem:[%s240 + $0x30a] sm:$0xff]
    %v1007 = vld [vmem:[%s240 + $0x31a] sm:$0xff]
    %v1008 = vld [vmem:[%s240 + $0x322] sm:$0xff]
    %1009 = vst [vmem:[#allocation3 + $0x28] sm:$0xff] %v945
    %1010 = vst [vmem:[#allocation3 + $0x70] sm:$0xff] %v946
    %1011 = vst [vmem:[#allocation3 + $0xb8] sm:$0xff] %v947
    %1012 = vst [vmem:[#allocation3 + $0x100] sm:$0xff] %v948
    %1013 = vst [vmem:[#allocation3 + $0x148] sm:$0xff] %v949
    %1014 = vst [vmem:[#allocation3 + $0x190] sm:$0xff] %v950
    %1015 = vst [vmem:[#allocation3 + $0x1d8] sm:$0xff] %v951
    %1016 = vst [vmem:[#allocation3 + $0x220] sm:$0xff] %v952
    %1017 = vst [vmem:[#allocation3 + $0x268] sm:$0xff] %v953
    %1018 = vst [vmem:[#allocation3 + $0x2b0] sm:$0xff] %v954
    %1019 = vst [vmem:[#allocation3 + $0x2f8] sm:$0xff] %v955
    %1020 = vst [vmem:[#allocation3 + $0x340] sm:$0xff] %v956
    %1021 = vst [vmem:[#allocation3 + $0x388] sm:$0xff] %v957
    %1022 = vst [vmem:[#allocation3 + $0x3d0] sm:$0xff] %v958
    %1023 = vst [vmem:[#allocation3 + $0x418] sm:$0xff] %v959
    %1024 = vst [vmem:[#allocation3 + $0x460] sm:$0xff] %v960
    %1025 = vst [vmem:[#allocation3 + $0x4a8] sm:$0xff] %v961
    %1026 = vst [vmem:[#allocation3 + $0x4f0] sm:$0xff] %v962
    %1027 = vst [vmem:[#allocation3 + $0x538] sm:$0xff] %v963
    %1028 = vst [vmem:[#allocation3 + $0x580] sm:$0xff] %v964
    %1029 = vst [vmem:[#allocation3 + $0x5c8] sm:$0xff] %v965
    %1030 = vst [vmem:[#allocation3 + $0x610] sm:$0xff] %v966
    %1031 = vst [vmem:[#allocation3 + $0x658] sm:$0xff] %v967
    %1032 = vst [vmem:[#allocation3 + $0x6a0] sm:$0xff] %v968
    %1033 = vst [vmem:[#allocation3 + $0x6e8] sm:$0xff] %v969
    %1034 = vst [vmem:[#allocation3 + $0x730] sm:$0xff] %v970
    %1035 = vst [vmem:[#allocation3 + $0x778] sm:$0xff] %v971
    %1036 = vst [vmem:[#allocation3 + $0x7c0] sm:$0xff] %v972
    %1037 = vst [vmem:[#allocation3 + $0x808] sm:$0xff] %v973
    %1038 = vst [vmem:[#allocation3 + $0x850] sm:$0xff] %v974
    %1039 = vst [vmem:[#allocation3 + $0x898] sm:$0xff] %v975
    %1040 = vst [vmem:[#allocation3 + $0x8e0] sm:$0xff] %v976
    %1041 = vst [vmem:[#allocation3 + $0x928] sm:$0xff] %v977
    %1042 = vst [vmem:[#allocation3 + $0x970] sm:$0xff] %v978
    %1043 = vst [vmem:[#allocation3 + $0x9b8] sm:$0xff] %v979
    %1044 = vst [vmem:[#allocation3 + $0xa00] sm:$0xff] %v980
    %1045 = vst [vmem:[#allocation3 + $0xa48] sm:$0xff] %v981
    %1046 = vst [vmem:[#allocation3 + $0xa90] sm:$0xff] %v982
    %1047 = vst [vmem:[#allocation3 + $0xad8] sm:$0xff] %v983
    %1048 = vst [vmem:[#allocation3 + $0xb20] sm:$0xff] %v984
    %1049 = vst [vmem:[#allocation3 + $0xb68] sm:$0xff] %v985
    %1050 = vst [vmem:[#allocation3 + $0xbb0] sm:$0xff] %v986
    %1051 = vst [vmem:[#allocation3 + $0xbf8] sm:$0xff] %v987
    %1052 = vst [vmem:[#allocation3 + $0xc40] sm:$0xff] %v988
    %1053 = vst [vmem:[#allocation3 + $0xc88] sm:$0xff] %v989
    %1054 = vst [vmem:[#allocation3 + $0xcd0] sm:$0xff] %v990
    %1055 = vst [vmem:[#allocation3 + $0xd18] sm:$0xff] %v991
    %1056 = vst [vmem:[#allocation3 + $0xd60] sm:$0xff] %v992
    %1057 = vst [vmem:[#allocation3 + $0xda8] sm:$0xff] %v993
    %1058 = vst [vmem:[#allocation3 + $0xdf0] sm:$0xff] %v994
    %1059 = vst [vmem:[#allocation3 + $0xe38] sm:$0xff] %v995
    %1060 = vst [vmem:[#allocation3 + $0xe80] sm:$0xff] %v996
    %1061 = vst [vmem:[#allocation3 + $0xec8] sm:$0xff] %v997
    %1062 = vst [vmem:[#allocation3 + $0xf10] sm:$0xff] %v998
    %1063 = vst [vmem:[#allocation3 + $0xf58] sm:$0xff] %v999
    %1064 = vst [vmem:[#allocation3 + $0xfa0] sm:$0xff] %v1000
    %1065 = vst [vmem:[#allocation3 + $0xfe8] sm:$0xff] %v1001
    %1066 = vst [vmem:[#allocation3 + $0x1030] sm:$0xff] %v1002
    %1067 = vst [vmem:[#allocation3 + $0x1078] sm:$0xff] %v1003
    %1068 = vst [vmem:[#allocation3 + $0x10c0] sm:$0xff] %v1004
    %1069 = vst [vmem:[#allocation3 + $0x1108] sm:$0xff] %v1005
    %1070 = vst [vmem:[#allocation3 + $0x1150] sm:$0xff] %v1006
    %1071 = vst [vmem:[#allocation3 + $0x1198] sm:$0xff] %v1007
    %1072 = vst [vmem:[#allocation3 + $0x11e0] sm:$0xff] %v1008
    %s1073 = scalar_lea.vmem [#allocation2], 48
    %v1074 = vld [vmem:[%s1073] sm:$0xff]
    %v1075 = vld [vmem:[%s1073 + $0x8] sm:$0xff]
    %v1076 = vld [vmem:[%s1073 + $0x18] sm:$0xff]
    %v1077 = vld [vmem:[%s1073 + $0x20] sm:$0xff]
    %v1078 = vld [vmem:[%s1073 + $0x30] sm:$0xff]
    %v1079 = vld [vmem:[%s1073 + $0x38] sm:$0xff]
    %v1080 = vld [vmem:[%s1073 + $0x48] sm:$0xff]
    %v1081 = vld [vmem:[%s1073 + $0x50] sm:$0xff]
    %v1082 = vld [vmem:[%s1073 + $0x60] sm:$0xff]
    %v1083 = vld [vmem:[%s1073 + $0x68] sm:$0xff]
    %v1084 = vld [vmem:[%s1073 + $0x78] sm:$0xff]
    %v1085 = vld [vmem:[%s1073 + $0x80] sm:$0xff]
    %v1086 = vld [vmem:[%s1073 + $0x90] sm:$0xff]
    %v1087 = vld [vmem:[%s1073 + $0x98] sm:$0xff]
    %v1088 = vld [vmem:[%s1073 + $0xa8] sm:$0xff]
    %v1089 = vld [vmem:[%s1073 + $0xb0] sm:$0xff]
    %v1090 = vld [vmem:[%s1073 + $0xc0] sm:$0xff]
    %v1091 = vld [vmem:[%s1073 + $0xc8] sm:$0xff]
    %v1092 = vld [vmem:[%s1073 + $0xd8] sm:$0xff]
    %v1093 = vld [vmem:[%s1073 + $0xe0] sm:$0xff]
    %v1094 = vld [vmem:[%s1073 + $0xf0] sm:$0xff]
    %v1095 = vld [vmem:[%s1073 + $0xf8] sm:$0xff]
    %v1096 = vld [vmem:[%s1073 + $0x108] sm:$0xff]
    %v1097 = vld [vmem:[%s1073 + $0x110] sm:$0xff]
    %v1098 = vld [vmem:[%s1073 + $0x120] sm:$0xff]
    %v1099 = vld [vmem:[%s1073 + $0x128] sm:$0xff]
    %v1100 = vld [vmem:[%s1073 + $0x138] sm:$0xff]
    %v1101 = vld [vmem:[%s1073 + $0x140] sm:$0xff]
    %v1102 = vld [vmem:[%s1073 + $0x150] sm:$0xff]
    %v1103 = vld [vmem:[%s1073 + $0x158] sm:$0xff]
    %v1104 = vld [vmem:[%s1073 + $0x168] sm:$0xff]
    %v1105 = vld [vmem:[%s1073 + $0x170] sm:$0xff]
    %v1106 = vld [vmem:[%s1073 + $0x1b0] sm:$0xff]
    %v1107 = vld [vmem:[%s1073 + $0x1b8] sm:$0xff]
    %v1108 = vld [vmem:[%s1073 + $0x1c8] sm:$0xff]
    %v1109 = vld [vmem:[%s1073 + $0x1d0] sm:$0xff]
    %v1110 = vld [vmem:[%s1073 + $0x1e0] sm:$0xff]
    %v1111 = vld [vmem:[%s1073 + $0x1e8] sm:$0xff]
    %v1112 = vld [vmem:[%s1073 + $0x1f8] sm:$0xff]
    %v1113 = vld [vmem:[%s1073 + $0x200] sm:$0xff]
    %v1114 = vld [vmem:[%s1073 + $0x210] sm:$0xff]
    %v1115 = vld [vmem:[%s1073 + $0x218] sm:$0xff]
    %v1116 = vld [vmem:[%s1073 + $0x228] sm:$0xff]
    %v1117 = vld [vmem:[%s1073 + $0x230] sm:$0xff]
    %v1118 = vld [vmem:[%s1073 + $0x240] sm:$0xff]
    %v1119 = vld [vmem:[%s1073 + $0x248] sm:$0xff]
    %v1120 = vld [vmem:[%s1073 + $0x258] sm:$0xff]
    %v1121 = vld [vmem:[%s1073 + $0x260] sm:$0xff]
    %v1122 = vld [vmem:[%s1073 + $0x270] sm:$0xff]
    %v1123 = vld [vmem:[%s1073 + $0x278] sm:$0xff]
    %v1124 = vld [vmem:[%s1073 + $0x288] sm:$0xff]
    %v1125 = vld [vmem:[%s1073 + $0x290] sm:$0xff]
    %v1126 = vld [vmem:[%s1073 + $0x2a0] sm:$0xff]
    %v1127 = vld [vmem:[%s1073 + $0x2a8] sm:$0xff]
    %v1128 = vld [vmem:[%s1073 + $0x2b8] sm:$0xff]
    %v1129 = vld [vmem:[%s1073 + $0x2c0] sm:$0xff]
    %v1130 = vld [vmem:[%s1073 + $0x2d0] sm:$0xff]
    %v1131 = vld [vmem:[%s1073 + $0x2d8] sm:$0xff]
    %v1132 = vld [vmem:[%s1073 + $0x2e8] sm:$0xff]
    %v1133 = vld [vmem:[%s1073 + $0x2f0] sm:$0xff]
    %v1134 = vld [vmem:[%s1073 + $0x300] sm:$0xff]
    %v1135 = vld [vmem:[%s1073 + $0x308] sm:$0xff]
    %v1136 = vld [vmem:[%s1073 + $0x318] sm:$0xff]
    %v1137 = vld [vmem:[%s1073 + $0x320] sm:$0xff]
    %1138 = vst [vmem:[#allocation3 + $0x30] sm:$0xff] %v1074
    %1139 = vst [vmem:[#allocation3 + $0x78] sm:$0xff] %v1075
    %1140 = vst [vmem:[#allocation3 + $0xc0] sm:$0xff] %v1076
    %1141 = vst [vmem:[#allocation3 + $0x108] sm:$0xff] %v1077
    %1142 = vst [vmem:[#allocation3 + $0x150] sm:$0xff] %v1078
    %1143 = vst [vmem:[#allocation3 + $0x198] sm:$0xff] %v1079
    %1144 = vst [vmem:[#allocation3 + $0x1e0] sm:$0xff] %v1080
    %1145 = vst [vmem:[#allocation3 + $0x228] sm:$0xff] %v1081
    %1146 = vst [vmem:[#allocation3 + $0x270] sm:$0xff] %v1082
    %1147 = vst [vmem:[#allocation3 + $0x2b8] sm:$0xff] %v1083
    %1148 = vst [vmem:[#allocation3 + $0x300] sm:$0xff] %v1084
    %1149 = vst [vmem:[#allocation3 + $0x348] sm:$0xff] %v1085
    %1150 = vst [vmem:[#allocation3 + $0x390] sm:$0xff] %v1086
    %1151 = vst [vmem:[#allocation3 + $0x3d8] sm:$0xff] %v1087
    %1152 = vst [vmem:[#allocation3 + $0x420] sm:$0xff] %v1088
    %1153 = vst [vmem:[#allocation3 + $0x468] sm:$0xff] %v1089
    %1154 = vst [vmem:[#allocation3 + $0x4b0] sm:$0xff] %v1090
    %1155 = vst [vmem:[#allocation3 + $0x4f8] sm:$0xff] %v1091
    %1156 = vst [vmem:[#allocation3 + $0x540] sm:$0xff] %v1092
    %1157 = vst [vmem:[#allocation3 + $0x588] sm:$0xff] %v1093
    %1158 = vst [vmem:[#allocation3 + $0x5d0] sm:$0xff] %v1094
    %1159 = vst [vmem:[#allocation3 + $0x618] sm:$0xff] %v1095
    %1160 = vst [vmem:[#allocation3 + $0x660] sm:$0xff] %v1096
    %1161 = vst [vmem:[#allocation3 + $0x6a8] sm:$0xff] %v1097
    %1162 = vst [vmem:[#allocation3 + $0x6f0] sm:$0xff] %v1098
    %1163 = vst [vmem:[#allocation3 + $0x738] sm:$0xff] %v1099
    %1164 = vst [vmem:[#allocation3 + $0x780] sm:$0xff] %v1100
    %1165 = vst [vmem:[#allocation3 + $0x7c8] sm:$0xff] %v1101
    %1166 = vst [vmem:[#allocation3 + $0x810] sm:$0xff] %v1102
    %1167 = vst [vmem:[#allocation3 + $0x858] sm:$0xff] %v1103
    %1168 = vst [vmem:[#allocation3 + $0x8a0] sm:$0xff] %v1104
    %1169 = vst [vmem:[#allocation3 + $0x8e8] sm:$0xff] %v1105
    %1170 = vst [vmem:[#allocation3 + $0x930] sm:$0xff] %v1106
    %1171 = vst [vmem:[#allocation3 + $0x978] sm:$0xff] %v1107
    %1172 = vst [vmem:[#allocation3 + $0x9c0] sm:$0xff] %v1108
    %1173 = vst [vmem:[#allocation3 + $0xa08] sm:$0xff] %v1109
    %1174 = vst [vmem:[#allocation3 + $0xa50] sm:$0xff] %v1110
    %1175 = vst [vmem:[#allocation3 + $0xa98] sm:$0xff] %v1111
    %1176 = vst [vmem:[#allocation3 + $0xae0] sm:$0xff] %v1112
    %1177 = vst [vmem:[#allocation3 + $0xb28] sm:$0xff] %v1113
    %1178 = vst [vmem:[#allocation3 + $0xb70] sm:$0xff] %v1114
    %1179 = vst [vmem:[#allocation3 + $0xbb8] sm:$0xff] %v1115
    %1180 = vst [vmem:[#allocation3 + $0xc00] sm:$0xff] %v1116
    %1181 = vst [vmem:[#allocation3 + $0xc48] sm:$0xff] %v1117
    %1182 = vst [vmem:[#allocation3 + $0xc90] sm:$0xff] %v1118
    %1183 = vst [vmem:[#allocation3 + $0xcd8] sm:$0xff] %v1119
    %1184 = vst [vmem:[#allocation3 + $0xd20] sm:$0xff] %v1120
    %1185 = vst [vmem:[#allocation3 + $0xd68] sm:$0xff] %v1121
    %1186 = vst [vmem:[#allocation3 + $0xdb0] sm:$0xff] %v1122
    %1187 = vst [vmem:[#allocation3 + $0xdf8] sm:$0xff] %v1123
    %1188 = vst [vmem:[#allocation3 + $0xe40] sm:$0xff] %v1124
    %1189 = vst [vmem:[#allocation3 + $0xe88] sm:$0xff] %v1125
    %1190 = vst [vmem:[#allocation3 + $0xed0] sm:$0xff] %v1126
    %1191 = vst [vmem:[#allocation3 + $0xf18] sm:$0xff] %v1127
    %1192 = vst [vmem:[#allocation3 + $0xf60] sm:$0xff] %v1128
    %1193 = vst [vmem:[#allocation3 + $0xfa8] sm:$0xff] %v1129
    %1194 = vst [vmem:[#allocation3 + $0xff0] sm:$0xff] %v1130
    %1195 = vst [vmem:[#allocation3 + $0x1038] sm:$0xff] %v1131
    %1196 = vst [vmem:[#allocation3 + $0x1080] sm:$0xff] %v1132
    %1197 = vst [vmem:[#allocation3 + $0x10c8] sm:$0xff] %v1133
    %1198 = vst [vmem:[#allocation3 + $0x1110] sm:$0xff] %v1134
    %1199 = vst [vmem:[#allocation3 + $0x1158] sm:$0xff] %v1135
    %1200 = vst [vmem:[#allocation3 + $0x11a0] sm:$0xff] %v1136
    %1201 = vst [vmem:[#allocation3 + $0x11e8] sm:$0xff] %v1137
    %v1202 = vld [vmem:[%s1073 + $0x1] sm:$0xff]
    %v1203 = vld [vmem:[%s1073 + $0x9] sm:$0xff]
    %v1204 = vld [vmem:[%s1073 + $0x19] sm:$0xff]
    %v1205 = vld [vmem:[%s1073 + $0x21] sm:$0xff]
    %v1206 = vld [vmem:[%s1073 + $0x31] sm:$0xff]
    %v1207 = vld [vmem:[%s1073 + $0x39] sm:$0xff]
    %v1208 = vld [vmem:[%s1073 + $0x49] sm:$0xff]
    %v1209 = vld [vmem:[%s1073 + $0x51] sm:$0xff]
    %v1210 = vld [vmem:[%s1073 + $0x61] sm:$0xff]
    %v1211 = vld [vmem:[%s1073 + $0x69] sm:$0xff]
    %v1212 = vld [vmem:[%s1073 + $0x79] sm:$0xff]
    %v1213 = vld [vmem:[%s1073 + $0x81] sm:$0xff]
    %v1214 = vld [vmem:[%s1073 + $0x91] sm:$0xff]
    %v1215 = vld [vmem:[%s1073 + $0x99] sm:$0xff]
    %v1216 = vld [vmem:[%s1073 + $0xa9] sm:$0xff]
    %v1217 = vld [vmem:[%s1073 + $0xb1] sm:$0xff]
    %v1218 = vld [vmem:[%s1073 + $0xc1] sm:$0xff]
    %v1219 = vld [vmem:[%s1073 + $0xc9] sm:$0xff]
    %v1220 = vld [vmem:[%s1073 + $0xd9] sm:$0xff]
    %v1221 = vld [vmem:[%s1073 + $0xe1] sm:$0xff]
    %v1222 = vld [vmem:[%s1073 + $0xf1] sm:$0xff]
    %v1223 = vld [vmem:[%s1073 + $0xf9] sm:$0xff]
    %v1224 = vld [vmem:[%s1073 + $0x109] sm:$0xff]
    %v1225 = vld [vmem:[%s1073 + $0x111] sm:$0xff]
    %v1226 = vld [vmem:[%s1073 + $0x121] sm:$0xff]
    %v1227 = vld [vmem:[%s1073 + $0x129] sm:$0xff]
    %v1228 = vld [vmem:[%s1073 + $0x139] sm:$0xff]
    %v1229 = vld [vmem:[%s1073 + $0x141] sm:$0xff]
    %v1230 = vld [vmem:[%s1073 + $0x151] sm:$0xff]
    %v1231 = vld [vmem:[%s1073 + $0x159] sm:$0xff]
    %v1232 = vld [vmem:[%s1073 + $0x169] sm:$0xff]
    %v1233 = vld [vmem:[%s1073 + $0x171] sm:$0xff]
    %v1234 = vld [vmem:[%s1073 + $0x1b1] sm:$0xff]
    %v1235 = vld [vmem:[%s1073 + $0x1b9] sm:$0xff]
    %v1236 = vld [vmem:[%s1073 + $0x1c9] sm:$0xff]
    %v1237 = vld [vmem:[%s1073 + $0x1d1] sm:$0xff]
    %v1238 = vld [vmem:[%s1073 + $0x1e1] sm:$0xff]
    %v1239 = vld [vmem:[%s1073 + $0x1e9] sm:$0xff]
    %v1240 = vld [vmem:[%s1073 + $0x1f9] sm:$0xff]
    %v1241 = vld [vmem:[%s1073 + $0x201] sm:$0xff]
    %v1242 = vld [vmem:[%s1073 + $0x211] sm:$0xff]
    %v1243 = vld [vmem:[%s1073 + $0x219] sm:$0xff]
    %v1244 = vld [vmem:[%s1073 + $0x229] sm:$0xff]
    %v1245 = vld [vmem:[%s1073 + $0x231] sm:$0xff]
    %v1246 = vld [vmem:[%s1073 + $0x241] sm:$0xff]
    %v1247 = vld [vmem:[%s1073 + $0x249] sm:$0xff]
    %v1248 = vld [vmem:[%s1073 + $0x259] sm:$0xff]
    %v1249 = vld [vmem:[%s1073 + $0x261] sm:$0xff]
    %v1250 = vld [vmem:[%s1073 + $0x271] sm:$0xff]
    %v1251 = vld [vmem:[%s1073 + $0x279] sm:$0xff]
    %v1252 = vld [vmem:[%s1073 + $0x289] sm:$0xff]
    %v1253 = vld [vmem:[%s1073 + $0x291] sm:$0xff]
    %v1254 = vld [vmem:[%s1073 + $0x2a1] sm:$0xff]
    %v1255 = vld [vmem:[%s1073 + $0x2a9] sm:$0xff]
    %v1256 = vld [vmem:[%s1073 + $0x2b9] sm:$0xff]
    %v1257 = vld [vmem:[%s1073 + $0x2c1] sm:$0xff]
    %v1258 = vld [vmem:[%s1073 + $0x2d1] sm:$0xff]
    %v1259 = vld [vmem:[%s1073 + $0x2d9] sm:$0xff]
    %v1260 = vld [vmem:[%s1073 + $0x2e9] sm:$0xff]
    %v1261 = vld [vmem:[%s1073 + $0x2f1] sm:$0xff]
    %v1262 = vld [vmem:[%s1073 + $0x301] sm:$0xff]
    %v1263 = vld [vmem:[%s1073 + $0x309] sm:$0xff]
    %v1264 = vld [vmem:[%s1073 + $0x319] sm:$0xff]
    %v1265 = vld [vmem:[%s1073 + $0x321] sm:$0xff]
    %1266 = vst [vmem:[#allocation3 + $0x38] sm:$0xff] %v1202
    %1267 = vst [vmem:[#allocation3 + $0x80] sm:$0xff] %v1203
    %1268 = vst [vmem:[#allocation3 + $0xc8] sm:$0xff] %v1204
    %1269 = vst [vmem:[#allocation3 + $0x110] sm:$0xff] %v1205
    %1270 = vst [vmem:[#allocation3 + $0x158] sm:$0xff] %v1206
    %1271 = vst [vmem:[#allocation3 + $0x1a0] sm:$0xff] %v1207
    %1272 = vst [vmem:[#allocation3 + $0x1e8] sm:$0xff] %v1208
    %1273 = vst [vmem:[#allocation3 + $0x230] sm:$0xff] %v1209
    %1274 = vst [vmem:[#allocation3 + $0x278] sm:$0xff] %v1210
    %1275 = vst [vmem:[#allocation3 + $0x2c0] sm:$0xff] %v1211
    %1276 = vst [vmem:[#allocation3 + $0x308] sm:$0xff] %v1212
    %1277 = vst [vmem:[#allocation3 + $0x350] sm:$0xff] %v1213
    %1278 = vst [vmem:[#allocation3 + $0x398] sm:$0xff] %v1214
    %1279 = vst [vmem:[#allocation3 + $0x3e0] sm:$0xff] %v1215
    %1280 = vst [vmem:[#allocation3 + $0x428] sm:$0xff] %v1216
    %1281 = vst [vmem:[#allocation3 + $0x470] sm:$0xff] %v1217
    %1282 = vst [vmem:[#allocation3 + $0x4b8] sm:$0xff] %v1218
    %1283 = vst [vmem:[#allocation3 + $0x500] sm:$0xff] %v1219
    %1284 = vst [vmem:[#allocation3 + $0x548] sm:$0xff] %v1220
    %1285 = vst [vmem:[#allocation3 + $0x590] sm:$0xff] %v1221
    %1286 = vst [vmem:[#allocation3 + $0x5d8] sm:$0xff] %v1222
    %1287 = vst [vmem:[#allocation3 + $0x620] sm:$0xff] %v1223
    %1288 = vst [vmem:[#allocation3 + $0x668] sm:$0xff] %v1224
    %1289 = vst [vmem:[#allocation3 + $0x6b0] sm:$0xff] %v1225
    %1290 = vst [vmem:[#allocation3 + $0x6f8] sm:$0xff] %v1226
    %1291 = vst [vmem:[#allocation3 + $0x740] sm:$0xff] %v1227
    %1292 = vst [vmem:[#allocation3 + $0x788] sm:$0xff] %v1228
    %1293 = vst [vmem:[#allocation3 + $0x7d0] sm:$0xff] %v1229
    %1294 = vst [vmem:[#allocation3 + $0x818] sm:$0xff] %v1230
    %1295 = vst [vmem:[#allocation3 + $0x860] sm:$0xff] %v1231
    %1296 = vst [vmem:[#allocation3 + $0x8a8] sm:$0xff] %v1232
    %1297 = vst [vmem:[#allocation3 + $0x8f0] sm:$0xff] %v1233
    %1298 = vst [vmem:[#allocation3 + $0x938] sm:$0xff] %v1234
    %1299 = vst [vmem:[#allocation3 + $0x980] sm:$0xff] %v1235
    %1300 = vst [vmem:[#allocation3 + $0x9c8] sm:$0xff] %v1236
    %1301 = vst [vmem:[#allocation3 + $0xa10] sm:$0xff] %v1237
    %1302 = vst [vmem:[#allocation3 + $0xa58] sm:$0xff] %v1238
    %1303 = vst [vmem:[#allocation3 + $0xaa0] sm:$0xff] %v1239
    %1304 = vst [vmem:[#allocation3 + $0xae8] sm:$0xff] %v1240
    %1305 = vst [vmem:[#allocation3 + $0xb30] sm:$0xff] %v1241
    %1306 = vst [vmem:[#allocation3 + $0xb78] sm:$0xff] %v1242
    %1307 = vst [vmem:[#allocation3 + $0xbc0] sm:$0xff] %v1243
    %1308 = vst [vmem:[#allocation3 + $0xc08] sm:$0xff] %v1244
    %1309 = vst [vmem:[#allocation3 + $0xc50] sm:$0xff] %v1245
    %1310 = vst [vmem:[#allocation3 + $0xc98] sm:$0xff] %v1246
    %1311 = vst [vmem:[#allocation3 + $0xce0] sm:$0xff] %v1247
    %1312 = vst [vmem:[#allocation3 + $0xd28] sm:$0xff] %v1248
    %1313 = vst [vmem:[#allocation3 + $0xd70] sm:$0xff] %v1249
    %1314 = vst [vmem:[#allocation3 + $0xdb8] sm:$0xff] %v1250
    %1315 = vst [vmem:[#allocation3 + $0xe00] sm:$0xff] %v1251
    %1316 = vst [vmem:[#allocation3 + $0xe48] sm:$0xff] %v1252
    %1317 = vst [vmem:[#allocation3 + $0xe90] sm:$0xff] %v1253
    %1318 = vst [vmem:[#allocation3 + $0xed8] sm:$0xff] %v1254
    %1319 = vst [vmem:[#allocation3 + $0xf20] sm:$0xff] %v1255
    %1320 = vst [vmem:[#allocation3 + $0xf68] sm:$0xff] %v1256
    %1321 = vst [vmem:[#allocation3 + $0xfb0] sm:$0xff] %v1257
    %1322 = vst [vmem:[#allocation3 + $0xff8] sm:$0xff] %v1258
    %1323 = vst [vmem:[#allocation3 + $0x1040] sm:$0xff] %v1259
    %1324 = vst [vmem:[#allocation3 + $0x1088] sm:$0xff] %v1260
    %1325 = vst [vmem:[#allocation3 + $0x10d0] sm:$0xff] %v1261
    %1326 = vst [vmem:[#allocation3 + $0x1118] sm:$0xff] %v1262
    %1327 = vst [vmem:[#allocation3 + $0x1160] sm:$0xff] %v1263
    %1328 = vst [vmem:[#allocation3 + $0x11a8] sm:$0xff] %v1264
    %1329 = vst [vmem:[#allocation3 + $0x11f0] sm:$0xff] %v1265
    %v1330 = vld [vmem:[%s1073 + $0x2] sm:$0xff]
    %v1331 = vld [vmem:[%s1073 + $0xa] sm:$0xff]
    %v1332 = vld [vmem:[%s1073 + $0x1a] sm:$0xff]
    %v1333 = vld [vmem:[%s1073 + $0x22] sm:$0xff]
    %v1334 = vld [vmem:[%s1073 + $0x32] sm:$0xff]
    %v1335 = vld [vmem:[%s1073 + $0x3a] sm:$0xff]
    %v1336 = vld [vmem:[%s1073 + $0x4a] sm:$0xff]
    %v1337 = vld [vmem:[%s1073 + $0x52] sm:$0xff]
    %v1338 = vld [vmem:[%s1073 + $0x62] sm:$0xff]
    %v1339 = vld [vmem:[%s1073 + $0x6a] sm:$0xff]
    %v1340 = vld [vmem:[%s1073 + $0x7a] sm:$0xff]
    %v1341 = vld [vmem:[%s1073 + $0x82] sm:$0xff]
    %v1342 = vld [vmem:[%s1073 + $0x92] sm:$0xff]
    %v1343 = vld [vmem:[%s1073 + $0x9a] sm:$0xff]
    %v1344 = vld [vmem:[%s1073 + $0xaa] sm:$0xff]
    %v1345 = vld [vmem:[%s1073 + $0xb2] sm:$0xff]
    %v1346 = vld [vmem:[%s1073 + $0xc2] sm:$0xff]
    %v1347 = vld [vmem:[%s1073 + $0xca] sm:$0xff]
    %v1348 = vld [vmem:[%s1073 + $0xda] sm:$0xff]
    %v1349 = vld [vmem:[%s1073 + $0xe2] sm:$0xff]
    %v1350 = vld [vmem:[%s1073 + $0xf2] sm:$0xff]
    %v1351 = vld [vmem:[%s1073 + $0xfa] sm:$0xff]
    %v1352 = vld [vmem:[%s1073 + $0x10a] sm:$0xff]
    %v1353 = vld [vmem:[%s1073 + $0x112] sm:$0xff]
    %v1354 = vld [vmem:[%s1073 + $0x122] sm:$0xff]
    %v1355 = vld [vmem:[%s1073 + $0x12a] sm:$0xff]
    %v1356 = vld [vmem:[%s1073 + $0x13a] sm:$0xff]
    %v1357 = vld [vmem:[%s1073 + $0x142] sm:$0xff]
    %v1358 = vld [vmem:[%s1073 + $0x152] sm:$0xff]
    %v1359 = vld [vmem:[%s1073 + $0x15a] sm:$0xff]
    %v1360 = vld [vmem:[%s1073 + $0x16a] sm:$0xff]
    %v1361 = vld [vmem:[%s1073 + $0x172] sm:$0xff]
    %v1362 = vld [vmem:[%s1073 + $0x1b2] sm:$0xff]
    %v1363 = vld [vmem:[%s1073 + $0x1ba] sm:$0xff]
    %v1364 = vld [vmem:[%s1073 + $0x1ca] sm:$0xff]
    %v1365 = vld [vmem:[%s1073 + $0x1d2] sm:$0xff]
    %v1366 = vld [vmem:[%s1073 + $0x1e2] sm:$0xff]
    %v1367 = vld [vmem:[%s1073 + $0x1ea] sm:$0xff]
    %v1368 = vld [vmem:[%s1073 + $0x1fa] sm:$0xff]
    %v1369 = vld [vmem:[%s1073 + $0x202] sm:$0xff]
    %v1370 = vld [vmem:[%s1073 + $0x212] sm:$0xff]
    %v1371 = vld [vmem:[%s1073 + $0x21a] sm:$0xff]
    %v1372 = vld [vmem:[%s1073 + $0x22a] sm:$0xff]
    %v1373 = vld [vmem:[%s1073 + $0x232] sm:$0xff]
    %v1374 = vld [vmem:[%s1073 + $0x242] sm:$0xff]
    %v1375 = vld [vmem:[%s1073 + $0x24a] sm:$0xff]
    %v1376 = vld [vmem:[%s1073 + $0x25a] sm:$0xff]
    %v1377 = vld [vmem:[%s1073 + $0x262] sm:$0xff]
    %v1378 = vld [vmem:[%s1073 + $0x272] sm:$0xff]
    %v1379 = vld [vmem:[%s1073 + $0x27a] sm:$0xff]
    %v1380 = vld [vmem:[%s1073 + $0x28a] sm:$0xff]
    %v1381 = vld [vmem:[%s1073 + $0x292] sm:$0xff]
    %v1382 = vld [vmem:[%s1073 + $0x2a2] sm:$0xff]
    %v1383 = vld [vmem:[%s1073 + $0x2aa] sm:$0xff]
    %v1384 = vld [vmem:[%s1073 + $0x2ba] sm:$0xff]
    %v1385 = vld [vmem:[%s1073 + $0x2c2] sm:$0xff]
    %v1386 = vld [vmem:[%s1073 + $0x2d2] sm:$0xff]
    %v1387 = vld [vmem:[%s1073 + $0x2da] sm:$0xff]
    %v1388 = vld [vmem:[%s1073 + $0x2ea] sm:$0xff]
    %v1389 = vld [vmem:[%s1073 + $0x2f2] sm:$0xff]
    %v1390 = vld [vmem:[%s1073 + $0x302] sm:$0xff]
    %v1391 = vld [vmem:[%s1073 + $0x30a] sm:$0xff]
    %v1392 = vld [vmem:[%s1073 + $0x31a] sm:$0xff]
    %v1393 = vld [vmem:[%s1073 + $0x322] sm:$0xff]
    %1394 = vst [vmem:[#allocation3 + $0x40] sm:$0xff] %v1330
    %1395 = vst [vmem:[#allocation3 + $0x88] sm:$0xff] %v1331
    %1396 = vst [vmem:[#allocation3 + $0xd0] sm:$0xff] %v1332
    %1397 = vst [vmem:[#allocation3 + $0x118] sm:$0xff] %v1333
    %1398 = vst [vmem:[#allocation3 + $0x160] sm:$0xff] %v1334
    %1399 = vst [vmem:[#allocation3 + $0x1a8] sm:$0xff] %v1335
    %1400 = vst [vmem:[#allocation3 + $0x1f0] sm:$0xff] %v1336
    %1401 = vst [vmem:[#allocation3 + $0x238] sm:$0xff] %v1337
    %1402 = vst [vmem:[#allocation3 + $0x280] sm:$0xff] %v1338
    %1403 = vst [vmem:[#allocation3 + $0x2c8] sm:$0xff] %v1339
    %1404 = vst [vmem:[#allocation3 + $0x310] sm:$0xff] %v1340
    %1405 = vst [vmem:[#allocation3 + $0x358] sm:$0xff] %v1341
    %1406 = vst [vmem:[#allocation3 + $0x3a0] sm:$0xff] %v1342
    %1407 = vst [vmem:[#allocation3 + $0x3e8] sm:$0xff] %v1343
    %1408 = vst [vmem:[#allocation3 + $0x430] sm:$0xff] %v1344
    %1409 = vst [vmem:[#allocation3 + $0x478] sm:$0xff] %v1345
    %1410 = vst [vmem:[#allocation3 + $0x4c0] sm:$0xff] %v1346
    %1411 = vst [vmem:[#allocation3 + $0x508] sm:$0xff] %v1347
    %1412 = vst [vmem:[#allocation3 + $0x550] sm:$0xff] %v1348
    %1413 = vst [vmem:[#allocation3 + $0x598] sm:$0xff] %v1349
    %1414 = vst [vmem:[#allocation3 + $0x5e0] sm:$0xff] %v1350
    %1415 = vst [vmem:[#allocation3 + $0x628] sm:$0xff] %v1351
    %1416 = vst [vmem:[#allocation3 + $0x670] sm:$0xff] %v1352
    %1417 = vst [vmem:[#allocation3 + $0x6b8] sm:$0xff] %v1353
    %1418 = vst [vmem:[#allocation3 + $0x700] sm:$0xff] %v1354
    %1419 = vst [vmem:[#allocation3 + $0x748] sm:$0xff] %v1355
    %1420 = vst [vmem:[#allocation3 + $0x790] sm:$0xff] %v1356
    %1421 = vst [vmem:[#allocation3 + $0x7d8] sm:$0xff] %v1357
    %1422 = vst [vmem:[#allocation3 + $0x820] sm:$0xff] %v1358
    %1423 = vst [vmem:[#allocation3 + $0x868] sm:$0xff] %v1359
    %1424 = vst [vmem:[#allocation3 + $0x8b0] sm:$0xff] %v1360
    %1425 = vst [vmem:[#allocation3 + $0x8f8] sm:$0xff] %v1361
    %1426 = vst [vmem:[#allocation3 + $0x940] sm:$0xff] %v1362
    %1427 = vst [vmem:[#allocation3 + $0x988] sm:$0xff] %v1363
    %1428 = vst [vmem:[#allocation3 + $0x9d0] sm:$0xff] %v1364
    %1429 = vst [vmem:[#allocation3 + $0xa18] sm:$0xff] %v1365
    %1430 = vst [vmem:[#allocation3 + $0xa60] sm:$0xff] %v1366
    %1431 = vst [vmem:[#allocation3 + $0xaa8] sm:$0xff] %v1367
    %1432 = vst [vmem:[#allocation3 + $0xaf0] sm:$0xff] %v1368
    %1433 = vst [vmem:[#allocation3 + $0xb38] sm:$0xff] %v1369
    %1434 = vst [vmem:[#allocation3 + $0xb80] sm:$0xff] %v1370
    %1435 = vst [vmem:[#allocation3 + $0xbc8] sm:$0xff] %v1371
    %1436 = vst [vmem:[#allocation3 + $0xc10] sm:$0xff] %v1372
    %1437 = vst [vmem:[#allocation3 + $0xc58] sm:$0xff] %v1373
    %1438 = vst [vmem:[#allocation3 + $0xca0] sm:$0xff] %v1374
    %1439 = vst [vmem:[#allocation3 + $0xce8] sm:$0xff] %v1375
    %1440 = vst [vmem:[#allocation3 + $0xd30] sm:$0xff] %v1376
    %1441 = vst [vmem:[#allocation3 + $0xd78] sm:$0xff] %v1377
    %1442 = vst [vmem:[#allocation3 + $0xdc0] sm:$0xff] %v1378
    %1443 = vst [vmem:[#allocation3 + $0xe08] sm:$0xff] %v1379
    %1444 = vst [vmem:[#allocation3 + $0xe50] sm:$0xff] %v1380
    %1445 = vst [vmem:[#allocation3 + $0xe98] sm:$0xff] %v1381
    %1446 = vst [vmem:[#allocation3 + $0xee0] sm:$0xff] %v1382
    %1447 = vst [vmem:[#allocation3 + $0xf28] sm:$0xff] %v1383
    %1448 = vst [vmem:[#allocation3 + $0xf70] sm:$0xff] %v1384
    %1449 = vst [vmem:[#allocation3 + $0xfb8] sm:$0xff] %v1385
    %1450 = vst [vmem:[#allocation3 + $0x1000] sm:$0xff] %v1386
    %1451 = vst [vmem:[#allocation3 + $0x1048] sm:$0xff] %v1387
    %1452 = vst [vmem:[#allocation3 + $0x1090] sm:$0xff] %v1388
    %1453 = vst [vmem:[#allocation3 + $0x10d8] sm:$0xff] %v1389
    %1454 = vst [vmem:[#allocation3 + $0x1120] sm:$0xff] %v1390
    %1455 = vst [vmem:[#allocation3 + $0x1168] sm:$0xff] %v1391
    %1456 = vst [vmem:[#allocation3 + $0x11b0] sm:$0xff] %v1392
    %1457 = vst [vmem:[#allocation3 + $0x11f8] sm:$0xff] %v1393
    %v1458 = vld [vmem:[#allocation3] sm:$0xff]
    %v1459 = vld [vmem:[#allocation3 + $0x8] sm:$0xff]
    %v1460 = vld [vmem:[#allocation3 + $0x10] sm:$0xff]
    %v1461 = vld [vmem:[#allocation3 + $0x18] sm:$0xff]
    %v1462 = vld [vmem:[#allocation3 + $0x20] sm:$0xff]
    %v1463 = vld [vmem:[#allocation3 + $0x28] sm:$0xff]
    %v1464 = vld [vmem:[#allocation3 + $0x30] sm:$0xff]
    %v1465 = vld [vmem:[#allocation3 + $0x38] sm:$0xff]
    %v1466 = vld [vmem:[#allocation3 + $0x40] sm:$0xff]
    %v1467 = vld [vmem:[#allocation3 + $0x48] sm:$0xff]
    %v1468 = vld [vmem:[#allocation3 + $0x50] sm:$0xff]
    %v1469 = vld [vmem:[#allocation3 + $0x58] sm:$0xff]
    %v1470 = vld [vmem:[#allocation3 + $0x60] sm:$0xff]
    %v1471 = vld [vmem:[#allocation3 + $0x68] sm:$0xff]
    %v1472 = vld [vmem:[#allocation3 + $0x70] sm:$0xff]
    %v1473 = vld [vmem:[#allocation3 + $0x78] sm:$0xff]
    %v1474 = vld [vmem:[#allocation3 + $0x80] sm:$0xff]
    %v1475 = vld [vmem:[#allocation3 + $0x88] sm:$0xff]
    %v1476 = vld [vmem:[#allocation3 + $0x90] sm:$0xff]
    %v1477 = vld [vmem:[#allocation3 + $0x98] sm:$0xff]
    %v1478 = vld [vmem:[#allocation3 + $0xa0] sm:$0xff]
    %v1479 = vld [vmem:[#allocation3 + $0xa8] sm:$0xff]
    %v1480 = vld [vmem:[#allocation3 + $0xb0] sm:$0xff]
    %v1481 = vld [vmem:[#allocation3 + $0xb8] sm:$0xff]
    %v1482 = vld [vmem:[#allocation3 + $0xc0] sm:$0xff]
    %v1483 = vld [vmem:[#allocation3 + $0xc8] sm:$0xff]
    %v1484 = vld [vmem:[#allocation3 + $0xd0] sm:$0xff]
    %v1485 = vld [vmem:[#allocation3 + $0xd8] sm:$0xff]
    %v1486 = vld [vmem:[#allocation3 + $0xe0] sm:$0xff]
    %v1487 = vld [vmem:[#allocation3 + $0xe8] sm:$0xff]
    %v1488 = vld [vmem:[#allocation3 + $0xf0] sm:$0xff]
    %v1489 = vld [vmem:[#allocation3 + $0xf8] sm:$0xff]
    %v1490 = vld [vmem:[#allocation3 + $0x100] sm:$0xff]
    %v1491 = vld [vmem:[#allocation3 + $0x108] sm:$0xff]
    %v1492 = vld [vmem:[#allocation3 + $0x110] sm:$0xff]
    %v1493 = vld [vmem:[#allocation3 + $0x118] sm:$0xff]
    %v1494 = vld [vmem:[#allocation3 + $0x120] sm:$0xff]
    %v1495 = vld [vmem:[#allocation3 + $0x128] sm:$0xff]
    %v1496 = vld [vmem:[#allocation3 + $0x130] sm:$0xff]
    %v1497 = vld [vmem:[#allocation3 + $0x138] sm:$0xff]
    %v1498 = vld [vmem:[#allocation3 + $0x140] sm:$0xff]
    %v1499 = vld [vmem:[#allocation3 + $0x148] sm:$0xff]
    %v1500 = vld [vmem:[#allocation3 + $0x150] sm:$0xff]
    %v1501 = vld [vmem:[#allocation3 + $0x158] sm:$0xff]
    %v1502 = vld [vmem:[#allocation3 + $0x160] sm:$0xff]
    %v1503 = vld [vmem:[#allocation3 + $0x168] sm:$0xff]
    %v1504 = vld [vmem:[#allocation3 + $0x170] sm:$0xff]
    %v1505 = vld [vmem:[#allocation3 + $0x178] sm:$0xff]
    %v1506 = vld [vmem:[#allocation3 + $0x180] sm:$0xff]
    %v1507 = vld [vmem:[#allocation3 + $0x188] sm:$0xff]
    %v1508 = vld [vmem:[#allocation3 + $0x190] sm:$0xff]
    %v1509 = vld [vmem:[#allocation3 + $0x198] sm:$0xff]
    %v1510 = vld [vmem:[#allocation3 + $0x1a0] sm:$0xff]
    %v1511 = vld [vmem:[#allocation3 + $0x1a8] sm:$0xff]
    %v1512 = vld [vmem:[#allocation3 + $0x1b0] sm:$0xff]
    %v1513 = vld [vmem:[#allocation3 + $0x1b8] sm:$0xff]
    %v1514 = vld [vmem:[#allocation3 + $0x1c0] sm:$0xff]
    %v1515 = vld [vmem:[#allocation3 + $0x1c8] sm:$0xff]
    %v1516 = vld [vmem:[#allocation3 + $0x1d0] sm:$0xff]
    %v1517 = vld [vmem:[#allocation3 + $0x1d8] sm:$0xff]
    %v1518 = vld [vmem:[#allocation3 + $0x1e0] sm:$0xff]
    %v1519 = vld [vmem:[#allocation3 + $0x1e8] sm:$0xff]
    %v1520 = vld [vmem:[#allocation3 + $0x1f0] sm:$0xff]
    %v1521 = vld [vmem:[#allocation3 + $0x1f8] sm:$0xff]
    %v1522 = vld [vmem:[#allocation3 + $0x200] sm:$0xff]
    %v1523 = vld [vmem:[#allocation3 + $0x208] sm:$0xff]
    %v1524 = vld [vmem:[#allocation3 + $0x210] sm:$0xff]
    %v1525 = vld [vmem:[#allocation3 + $0x218] sm:$0xff]
    %v1526 = vld [vmem:[#allocation3 + $0x220] sm:$0xff]
    %v1527 = vld [vmem:[#allocation3 + $0x228] sm:$0xff]
    %v1528 = vld [vmem:[#allocation3 + $0x230] sm:$0xff]
    %v1529 = vld [vmem:[#allocation3 + $0x238] sm:$0xff]
    %v1530 = vld [vmem:[#allocation3 + $0x240] sm:$0xff]
    %v1531 = vld [vmem:[#allocation3 + $0x248] sm:$0xff]
    %v1532 = vld [vmem:[#allocation3 + $0x250] sm:$0xff]
    %v1533 = vld [vmem:[#allocation3 + $0x258] sm:$0xff]
    %v1534 = vld [vmem:[#allocation3 + $0x260] sm:$0xff]
    %v1535 = vld [vmem:[#allocation3 + $0x268] sm:$0xff]
    %v1536 = vld [vmem:[#allocation3 + $0x270] sm:$0xff]
    %v1537 = vld [vmem:[#allocation3 + $0x278] sm:$0xff]
    %v1538 = vld [vmem:[#allocation3 + $0x280] sm:$0xff]
    %v1539 = vld [vmem:[#allocation3 + $0x288] sm:$0xff]
    %v1540 = vld [vmem:[#allocation3 + $0x290] sm:$0xff]
    %v1541 = vld [vmem:[#allocation3 + $0x298] sm:$0xff]
    %v1542 = vld [vmem:[#allocation3 + $0x2a0] sm:$0xff]
    %v1543 = vld [vmem:[#allocation3 + $0x2a8] sm:$0xff]
    %v1544 = vld [vmem:[#allocation3 + $0x2b0] sm:$0xff]
    %v1545 = vld [vmem:[#allocation3 + $0x2b8] sm:$0xff]
    %v1546 = vld [vmem:[#allocation3 + $0x2c0] sm:$0xff]
    %v1547 = vld [vmem:[#allocation3 + $0x2c8] sm:$0xff]
    %v1548 = vld [vmem:[#allocation3 + $0x2d0] sm:$0xff]
    %v1549 = vld [vmem:[#allocation3 + $0x2d8] sm:$0xff]
    %v1550 = vld [vmem:[#allocation3 + $0x2e0] sm:$0xff]
    %v1551 = vld [vmem:[#allocation3 + $0x2e8] sm:$0xff]
    %v1552 = vld [vmem:[#allocation3 + $0x2f0] sm:$0xff]
    %v1553 = vld [vmem:[#allocation3 + $0x2f8] sm:$0xff]
    %v1554 = vld [vmem:[#allocation3 + $0x300] sm:$0xff]
    %v1555 = vld [vmem:[#allocation3 + $0x308] sm:$0xff]
    %v1556 = vld [vmem:[#allocation3 + $0x310] sm:$0xff]
    %v1557 = vld [vmem:[#allocation3 + $0x318] sm:$0xff]
    %v1558 = vld [vmem:[#allocation3 + $0x320] sm:$0xff]
    %v1559 = vld [vmem:[#allocation3 + $0x328] sm:$0xff]
    %v1560 = vld [vmem:[#allocation3 + $0x330] sm:$0xff]
    %v1561 = vld [vmem:[#allocation3 + $0x338] sm:$0xff]
    %v1562 = vld [vmem:[#allocation3 + $0x340] sm:$0xff]
    %v1563 = vld [vmem:[#allocation3 + $0x348] sm:$0xff]
    %v1564 = vld [vmem:[#allocation3 + $0x350] sm:$0xff]
    %v1565 = vld [vmem:[#allocation3 + $0x358] sm:$0xff]
    %v1566 = vld [vmem:[#allocation3 + $0x360] sm:$0xff]
    %v1567 = vld [vmem:[#allocation3 + $0x368] sm:$0xff]
    %v1568 = vld [vmem:[#allocation3 + $0x370] sm:$0xff]
    %v1569 = vld [vmem:[#allocation3 + $0x378] sm:$0xff]
    %v1570 = vld [vmem:[#allocation3 + $0x380] sm:$0xff]
    %v1571 = vld [vmem:[#allocation3 + $0x388] sm:$0xff]
    %v1572 = vld [vmem:[#allocation3 + $0x390] sm:$0xff]
    %v1573 = vld [vmem:[#allocation3 + $0x398] sm:$0xff]
    %v1574 = vld [vmem:[#allocation3 + $0x3a0] sm:$0xff]
    %v1575 = vld [vmem:[#allocation3 + $0x3a8] sm:$0xff]
    %v1576 = vld [vmem:[#allocation3 + $0x3b0] sm:$0xff]
    %v1577 = vld [vmem:[#allocation3 + $0x3b8] sm:$0xff]
    %v1578 = vld [vmem:[#allocation3 + $0x3c0] sm:$0xff]
    %v1579 = vld [vmem:[#allocation3 + $0x3c8] sm:$0xff]
    %v1580 = vld [vmem:[#allocation3 + $0x3d0] sm:$0xff]
    %v1581 = vld [vmem:[#allocation3 + $0x3d8] sm:$0xff]
    %v1582 = vld [vmem:[#allocation3 + $0x3e0] sm:$0xff]
    %v1583 = vld [vmem:[#allocation3 + $0x3e8] sm:$0xff]
    %v1584 = vld [vmem:[#allocation3 + $0x3f0] sm:$0xff]
    %v1585 = vld [vmem:[#allocation3 + $0x3f8] sm:$0xff]
    %v1586 = vld [vmem:[#allocation3 + $0x400] sm:$0xff]
    %v1587 = vld [vmem:[#allocation3 + $0x408] sm:$0xff]
    %v1588 = vld [vmem:[#allocation3 + $0x410] sm:$0xff]
    %v1589 = vld [vmem:[#allocation3 + $0x418] sm:$0xff]
    %v1590 = vld [vmem:[#allocation3 + $0x420] sm:$0xff]
    %v1591 = vld [vmem:[#allocation3 + $0x428] sm:$0xff]
    %v1592 = vld [vmem:[#allocation3 + $0x430] sm:$0xff]
    %v1593 = vld [vmem:[#allocation3 + $0x438] sm:$0xff]
    %v1594 = vld [vmem:[#allocation3 + $0x440] sm:$0xff]
    %v1595 = vld [vmem:[#allocation3 + $0x448] sm:$0xff]
    %v1596 = vld [vmem:[#allocation3 + $0x450] sm:$0xff]
    %v1597 = vld [vmem:[#allocation3 + $0x458] sm:$0xff]
    %v1598 = vld [vmem:[#allocation3 + $0x460] sm:$0xff]
    %v1599 = vld [vmem:[#allocation3 + $0x468] sm:$0xff]
    %v1600 = vld [vmem:[#allocation3 + $0x470] sm:$0xff]
    %v1601 = vld [vmem:[#allocation3 + $0x478] sm:$0xff]
    %v1602 = vld [vmem:[#allocation3 + $0x480] sm:$0xff]
    %v1603 = vld [vmem:[#allocation3 + $0x488] sm:$0xff]
    %v1604 = vld [vmem:[#allocation3 + $0x490] sm:$0xff]
    %v1605 = vld [vmem:[#allocation3 + $0x498] sm:$0xff]
    %v1606 = vld [vmem:[#allocation3 + $0x4a0] sm:$0xff]
    %v1607 = vld [vmem:[#allocation3 + $0x4a8] sm:$0xff]
    %v1608 = vld [vmem:[#allocation3 + $0x4b0] sm:$0xff]
    %v1609 = vld [vmem:[#allocation3 + $0x4b8] sm:$0xff]
    %v1610 = vld [vmem:[#allocation3 + $0x4c0] sm:$0xff]
    %v1611 = vld [vmem:[#allocation3 + $0x4c8] sm:$0xff]
    %v1612 = vld [vmem:[#allocation3 + $0x4d0] sm:$0xff]
    %v1613 = vld [vmem:[#allocation3 + $0x4d8] sm:$0xff]
    %v1614 = vld [vmem:[#allocation3 + $0x4e0] sm:$0xff]
    %v1615 = vld [vmem:[#allocation3 + $0x4e8] sm:$0xff]
    %v1616 = vld [vmem:[#allocation3 + $0x4f0] sm:$0xff]
    %v1617 = vld [vmem:[#allocation3 + $0x4f8] sm:$0xff]
    %v1618 = vld [vmem:[#allocation3 + $0x500] sm:$0xff]
    %v1619 = vld [vmem:[#allocation3 + $0x508] sm:$0xff]
    %v1620 = vld [vmem:[#allocation3 + $0x510] sm:$0xff]
    %v1621 = vld [vmem:[#allocation3 + $0x518] sm:$0xff]
    %v1622 = vld [vmem:[#allocation3 + $0x520] sm:$0xff]
    %v1623 = vld [vmem:[#allocation3 + $0x528] sm:$0xff]
    %v1624 = vld [vmem:[#allocation3 + $0x530] sm:$0xff]
    %v1625 = vld [vmem:[#allocation3 + $0x538] sm:$0xff]
    %v1626 = vld [vmem:[#allocation3 + $0x540] sm:$0xff]
    %v1627 = vld [vmem:[#allocation3 + $0x548] sm:$0xff]
    %v1628 = vld [vmem:[#allocation3 + $0x550] sm:$0xff]
    %v1629 = vld [vmem:[#allocation3 + $0x558] sm:$0xff]
    %v1630 = vld [vmem:[#allocation3 + $0x560] sm:$0xff]
    %v1631 = vld [vmem:[#allocation3 + $0x568] sm:$0xff]
    %v1632 = vld [vmem:[#allocation3 + $0x570] sm:$0xff]
    %v1633 = vld [vmem:[#allocation3 + $0x578] sm:$0xff]
    %v1634 = vld [vmem:[#allocation3 + $0x580] sm:$0xff]
    %v1635 = vld [vmem:[#allocation3 + $0x588] sm:$0xff]
    %v1636 = vld [vmem:[#allocation3 + $0x590] sm:$0xff]
    %v1637 = vld [vmem:[#allocation3 + $0x598] sm:$0xff]
    %v1638 = vld [vmem:[#allocation3 + $0x5a0] sm:$0xff]
    %v1639 = vld [vmem:[#allocation3 + $0x5a8] sm:$0xff]
    %v1640 = vld [vmem:[#allocation3 + $0x5b0] sm:$0xff]
    %v1641 = vld [vmem:[#allocation3 + $0x5b8] sm:$0xff]
    %v1642 = vld [vmem:[#allocation3 + $0x5c0] sm:$0xff]
    %v1643 = vld [vmem:[#allocation3 + $0x5c8] sm:$0xff]
    %v1644 = vld [vmem:[#allocation3 + $0x5d0] sm:$0xff]
    %v1645 = vld [vmem:[#allocation3 + $0x5d8] sm:$0xff]
    %v1646 = vld [vmem:[#allocation3 + $0x5e0] sm:$0xff]
    %v1647 = vld [vmem:[#allocation3 + $0x5e8] sm:$0xff]
    %v1648 = vld [vmem:[#allocation3 + $0x5f0] sm:$0xff]
    %v1649 = vld [vmem:[#allocation3 + $0x5f8] sm:$0xff]
    %v1650 = vld [vmem:[#allocation3 + $0x600] sm:$0xff]
    %v1651 = vld [vmem:[#allocation3 + $0x608] sm:$0xff]
    %v1652 = vld [vmem:[#allocation3 + $0x610] sm:$0xff]
    %v1653 = vld [vmem:[#allocation3 + $0x618] sm:$0xff]
    %v1654 = vld [vmem:[#allocation3 + $0x620] sm:$0xff]
    %v1655 = vld [vmem:[#allocation3 + $0x628] sm:$0xff]
    %v1656 = vld [vmem:[#allocation3 + $0x630] sm:$0xff]
    %v1657 = vld [vmem:[#allocation3 + $0x638] sm:$0xff]
    %v1658 = vld [vmem:[#allocation3 + $0x640] sm:$0xff]
    %v1659 = vld [vmem:[#allocation3 + $0x648] sm:$0xff]
    %v1660 = vld [vmem:[#allocation3 + $0x650] sm:$0xff]
    %v1661 = vld [vmem:[#allocation3 + $0x658] sm:$0xff]
    %v1662 = vld [vmem:[#allocation3 + $0x660] sm:$0xff]
    %v1663 = vld [vmem:[#allocation3 + $0x668] sm:$0xff]
    %v1664 = vld [vmem:[#allocation3 + $0x670] sm:$0xff]
    %v1665 = vld [vmem:[#allocation3 + $0x678] sm:$0xff]
    %v1666 = vld [vmem:[#allocation3 + $0x680] sm:$0xff]
    %v1667 = vld [vmem:[#allocation3 + $0x688] sm:$0xff]
    %v1668 = vld [vmem:[#allocation3 + $0x690] sm:$0xff]
    %v1669 = vld [vmem:[#allocation3 + $0x698] sm:$0xff]
    %v1670 = vld [vmem:[#allocation3 + $0x6a0] sm:$0xff]
    %v1671 = vld [vmem:[#allocation3 + $0x6a8] sm:$0xff]
    %v1672 = vld [vmem:[#allocation3 + $0x6b0] sm:$0xff]
    %v1673 = vld [vmem:[#allocation3 + $0x6b8] sm:$0xff]
    %v1674 = vld [vmem:[#allocation3 + $0x6c0] sm:$0xff]
    %v1675 = vld [vmem:[#allocation3 + $0x6c8] sm:$0xff]
    %v1676 = vld [vmem:[#allocation3 + $0x6d0] sm:$0xff]
    %v1677 = vld [vmem:[#allocation3 + $0x6d8] sm:$0xff]
    %v1678 = vld [vmem:[#allocation3 + $0x6e0] sm:$0xff]
    %v1679 = vld [vmem:[#allocation3 + $0x6e8] sm:$0xff]
    %v1680 = vld [vmem:[#allocation3 + $0x6f0] sm:$0xff]
    %v1681 = vld [vmem:[#allocation3 + $0x6f8] sm:$0xff]
    %v1682 = vld [vmem:[#allocation3 + $0x700] sm:$0xff]
    %v1683 = vld [vmem:[#allocation3 + $0x708] sm:$0xff]
    %v1684 = vld [vmem:[#allocation3 + $0x710] sm:$0xff]
    %v1685 = vld [vmem:[#allocation3 + $0x718] sm:$0xff]
    %v1686 = vld [vmem:[#allocation3 + $0x720] sm:$0xff]
    %v1687 = vld [vmem:[#allocation3 + $0x728] sm:$0xff]
    %v1688 = vld [vmem:[#allocation3 + $0x730] sm:$0xff]
    %v1689 = vld [vmem:[#allocation3 + $0x738] sm:$0xff]
    %v1690 = vld [vmem:[#allocation3 + $0x740] sm:$0xff]
    %v1691 = vld [vmem:[#allocation3 + $0x748] sm:$0xff]
    %v1692 = vld [vmem:[#allocation3 + $0x750] sm:$0xff]
    %v1693 = vld [vmem:[#allocation3 + $0x758] sm:$0xff]
    %v1694 = vld [vmem:[#allocation3 + $0x760] sm:$0xff]
    %v1695 = vld [vmem:[#allocation3 + $0x768] sm:$0xff]
    %v1696 = vld [vmem:[#allocation3 + $0x770] sm:$0xff]
    %v1697 = vld [vmem:[#allocation3 + $0x778] sm:$0xff]
    %v1698 = vld [vmem:[#allocation3 + $0x780] sm:$0xff]
    %v1699 = vld [vmem:[#allocation3 + $0x788] sm:$0xff]
    %v1700 = vld [vmem:[#allocation3 + $0x790] sm:$0xff]
    %v1701 = vld [vmem:[#allocation3 + $0x798] sm:$0xff]
    %v1702 = vld [vmem:[#allocation3 + $0x7a0] sm:$0xff]
    %v1703 = vld [vmem:[#allocation3 + $0x7a8] sm:$0xff]
    %v1704 = vld [vmem:[#allocation3 + $0x7b0] sm:$0xff]
    %v1705 = vld [vmem:[#allocation3 + $0x7b8] sm:$0xff]
    %v1706 = vld [vmem:[#allocation3 + $0x7c0] sm:$0xff]
    %v1707 = vld [vmem:[#allocation3 + $0x7c8] sm:$0xff]
    %v1708 = vld [vmem:[#allocation3 + $0x7d0] sm:$0xff]
    %v1709 = vld [vmem:[#allocation3 + $0x7d8] sm:$0xff]
    %v1710 = vld [vmem:[#allocation3 + $0x7e0] sm:$0xff]
    %v1711 = vld [vmem:[#allocation3 + $0x7e8] sm:$0xff]
    %v1712 = vld [vmem:[#allocation3 + $0x7f0] sm:$0xff]
    %v1713 = vld [vmem:[#allocation3 + $0x7f8] sm:$0xff]
    %v1714 = vld [vmem:[#allocation3 + $0x800] sm:$0xff]
    %v1715 = vld [vmem:[#allocation3 + $0x808] sm:$0xff]
    %v1716 = vld [vmem:[#allocation3 + $0x810] sm:$0xff]
    %v1717 = vld [vmem:[#allocation3 + $0x818] sm:$0xff]
    %v1718 = vld [vmem:[#allocation3 + $0x820] sm:$0xff]
    %v1719 = vld [vmem:[#allocation3 + $0x828] sm:$0xff]
    %v1720 = vld [vmem:[#allocation3 + $0x830] sm:$0xff]
    %v1721 = vld [vmem:[#allocation3 + $0x838] sm:$0xff]
    %v1722 = vld [vmem:[#allocation3 + $0x840] sm:$0xff]
    %v1723 = vld [vmem:[#allocation3 + $0x848] sm:$0xff]
    %v1724 = vld [vmem:[#allocation3 + $0x850] sm:$0xff]
    %v1725 = vld [vmem:[#allocation3 + $0x858] sm:$0xff]
    %v1726 = vld [vmem:[#allocation3 + $0x860] sm:$0xff]
    %v1727 = vld [vmem:[#allocation3 + $0x868] sm:$0xff]
    %v1728 = vld [vmem:[#allocation3 + $0x870] sm:$0xff]
    %v1729 = vld [vmem:[#allocation3 + $0x878] sm:$0xff]
    %v1730 = vld [vmem:[#allocation3 + $0x880] sm:$0xff]
    %v1731 = vld [vmem:[#allocation3 + $0x888] sm:$0xff]
    %v1732 = vld [vmem:[#allocation3 + $0x890] sm:$0xff]
    %v1733 = vld [vmem:[#allocation3 + $0x898] sm:$0xff]
    %v1734 = vld [vmem:[#allocation3 + $0x8a0] sm:$0xff]
    %v1735 = vld [vmem:[#allocation3 + $0x8a8] sm:$0xff]
    %v1736 = vld [vmem:[#allocation3 + $0x8b0] sm:$0xff]
    %v1737 = vld [vmem:[#allocation3 + $0x8b8] sm:$0xff]
    %v1738 = vld [vmem:[#allocation3 + $0x8c0] sm:$0xff]
    %v1739 = vld [vmem:[#allocation3 + $0x8c8] sm:$0xff]
    %v1740 = vld [vmem:[#allocation3 + $0x8d0] sm:$0xff]
    %v1741 = vld [vmem:[#allocation3 + $0x8d8] sm:$0xff]
    %v1742 = vld [vmem:[#allocation3 + $0x8e0] sm:$0xff]
    %v1743 = vld [vmem:[#allocation3 + $0x8e8] sm:$0xff]
    %v1744 = vld [vmem:[#allocation3 + $0x8f0] sm:$0xff]
    %v1745 = vld [vmem:[#allocation3 + $0x8f8] sm:$0xff]
    %v1746 = vld [vmem:[#allocation3 + $0x900] sm:$0xff]
    %v1747 = vld [vmem:[#allocation3 + $0x908] sm:$0xff]
    %v1748 = vld [vmem:[#allocation3 + $0x910] sm:$0xff]
    %v1749 = vld [vmem:[#allocation3 + $0x918] sm:$0xff]
    %v1750 = vld [vmem:[#allocation3 + $0x920] sm:$0xff]
    %v1751 = vld [vmem:[#allocation3 + $0x928] sm:$0xff]
    %v1752 = vld [vmem:[#allocation3 + $0x930] sm:$0xff]
    %v1753 = vld [vmem:[#allocation3 + $0x938] sm:$0xff]
    %v1754 = vld [vmem:[#allocation3 + $0x940] sm:$0xff]
    %v1755 = vld [vmem:[#allocation3 + $0x948] sm:$0xff]
    %v1756 = vld [vmem:[#allocation3 + $0x950] sm:$0xff]
    %v1757 = vld [vmem:[#allocation3 + $0x958] sm:$0xff]
    %v1758 = vld [vmem:[#allocation3 + $0x960] sm:$0xff]
    %v1759 = vld [vmem:[#allocation3 + $0x968] sm:$0xff]
    %v1760 = vld [vmem:[#allocation3 + $0x970] sm:$0xff]
    %v1761 = vld [vmem:[#allocation3 + $0x978] sm:$0xff]
    %v1762 = vld [vmem:[#allocation3 + $0x980] sm:$0xff]
    %v1763 = vld [vmem:[#allocation3 + $0x988] sm:$0xff]
    %v1764 = vld [vmem:[#allocation3 + $0x990] sm:$0xff]
    %v1765 = vld [vmem:[#allocation3 + $0x998] sm:$0xff]
    %v1766 = vld [vmem:[#allocation3 + $0x9a0] sm:$0xff]
    %v1767 = vld [vmem:[#allocation3 + $0x9a8] sm:$0xff]
    %v1768 = vld [vmem:[#allocation3 + $0x9b0] sm:$0xff]
    %v1769 = vld [vmem:[#allocation3 + $0x9b8] sm:$0xff]
    %v1770 = vld [vmem:[#allocation3 + $0x9c0] sm:$0xff]
    %v1771 = vld [vmem:[#allocation3 + $0x9c8] sm:$0xff]
    %v1772 = vld [vmem:[#allocation3 + $0x9d0] sm:$0xff]
    %v1773 = vld [vmem:[#allocation3 + $0x9d8] sm:$0xff]
    %v1774 = vld [vmem:[#allocation3 + $0x9e0] sm:$0xff]
    %v1775 = vld [vmem:[#allocation3 + $0x9e8] sm:$0xff]
    %v1776 = vld [vmem:[#allocation3 + $0x9f0] sm:$0xff]
    %v1777 = vld [vmem:[#allocation3 + $0x9f8] sm:$0xff]
    %v1778 = vld [vmem:[#allocation3 + $0xa00] sm:$0xff]
    %v1779 = vld [vmem:[#allocation3 + $0xa08] sm:$0xff]
    %v1780 = vld [vmem:[#allocation3 + $0xa10] sm:$0xff]
    %v1781 = vld [vmem:[#allocation3 + $0xa18] sm:$0xff]
    %v1782 = vld [vmem:[#allocation3 + $0xa20] sm:$0xff]
    %v1783 = vld [vmem:[#allocation3 + $0xa28] sm:$0xff]
    %v1784 = vld [vmem:[#allocation3 + $0xa30] sm:$0xff]
    %v1785 = vld [vmem:[#allocation3 + $0xa38] sm:$0xff]
    %v1786 = vld [vmem:[#allocation3 + $0xa40] sm:$0xff]
    %v1787 = vld [vmem:[#allocation3 + $0xa48] sm:$0xff]
    %v1788 = vld [vmem:[#allocation3 + $0xa50] sm:$0xff]
    %v1789 = vld [vmem:[#allocation3 + $0xa58] sm:$0xff]
    %v1790 = vld [vmem:[#allocation3 + $0xa60] sm:$0xff]
    %v1791 = vld [vmem:[#allocation3 + $0xa68] sm:$0xff]
    %v1792 = vld [vmem:[#allocation3 + $0xa70] sm:$0xff]
    %v1793 = vld [vmem:[#allocation3 + $0xa78] sm:$0xff]
    %v1794 = vld [vmem:[#allocation3 + $0xa80] sm:$0xff]
    %v1795 = vld [vmem:[#allocation3 + $0xa88] sm:$0xff]
    %v1796 = vld [vmem:[#allocation3 + $0xa90] sm:$0xff]
    %v1797 = vld [vmem:[#allocation3 + $0xa98] sm:$0xff]
    %v1798 = vld [vmem:[#allocation3 + $0xaa0] sm:$0xff]
    %v1799 = vld [vmem:[#allocation3 + $0xaa8] sm:$0xff]
    %v1800 = vld [vmem:[#allocation3 + $0xab0] sm:$0xff]
    %v1801 = vld [vmem:[#allocation3 + $0xab8] sm:$0xff]
    %v1802 = vld [vmem:[#allocation3 + $0xac0] sm:$0xff]
    %v1803 = vld [vmem:[#allocation3 + $0xac8] sm:$0xff]
    %v1804 = vld [vmem:[#allocation3 + $0xad0] sm:$0xff]
    %v1805 = vld [vmem:[#allocation3 + $0xad8] sm:$0xff]
    %v1806 = vld [vmem:[#allocation3 + $0xae0] sm:$0xff]
    %v1807 = vld [vmem:[#allocation3 + $0xae8] sm:$0xff]
    %v1808 = vld [vmem:[#allocation3 + $0xaf0] sm:$0xff]
    %v1809 = vld [vmem:[#allocation3 + $0xaf8] sm:$0xff]
    %v1810 = vld [vmem:[#allocation3 + $0xb00] sm:$0xff]
    %v1811 = vld [vmem:[#allocation3 + $0xb08] sm:$0xff]
    %v1812 = vld [vmem:[#allocation3 + $0xb10] sm:$0xff]
    %v1813 = vld [vmem:[#allocation3 + $0xb18] sm:$0xff]
    %v1814 = vld [vmem:[#allocation3 + $0xb20] sm:$0xff]
    %v1815 = vld [vmem:[#allocation3 + $0xb28] sm:$0xff]
    %v1816 = vld [vmem:[#allocation3 + $0xb30] sm:$0xff]
    %v1817 = vld [vmem:[#allocation3 + $0xb38] sm:$0xff]
    %v1818 = vld [vmem:[#allocation3 + $0xb40] sm:$0xff]
    %v1819 = vld [vmem:[#allocation3 + $0xb48] sm:$0xff]
    %v1820 = vld [vmem:[#allocation3 + $0xb50] sm:$0xff]
    %v1821 = vld [vmem:[#allocation3 + $0xb58] sm:$0xff]
    %v1822 = vld [vmem:[#allocation3 + $0xb60] sm:$0xff]
    %v1823 = vld [vmem:[#allocation3 + $0xb68] sm:$0xff]
    %v1824 = vld [vmem:[#allocation3 + $0xb70] sm:$0xff]
    %v1825 = vld [vmem:[#allocation3 + $0xb78] sm:$0xff]
    %v1826 = vld [vmem:[#allocation3 + $0xb80] sm:$0xff]
    %v1827 = vld [vmem:[#allocation3 + $0xb88] sm:$0xff]
    %v1828 = vld [vmem:[#allocation3 + $0xb90] sm:$0xff]
    %v1829 = vld [vmem:[#allocation3 + $0xb98] sm:$0xff]
    %v1830 = vld [vmem:[#allocation3 + $0xba0] sm:$0xff]
    %v1831 = vld [vmem:[#allocation3 + $0xba8] sm:$0xff]
    %v1832 = vld [vmem:[#allocation3 + $0xbb0] sm:$0xff]
    %v1833 = vld [vmem:[#allocation3 + $0xbb8] sm:$0xff]
    %v1834 = vld [vmem:[#allocation3 + $0xbc0] sm:$0xff]
    %v1835 = vld [vmem:[#allocation3 + $0xbc8] sm:$0xff]
    %v1836 = vld [vmem:[#allocation3 + $0xbd0] sm:$0xff]
    %v1837 = vld [vmem:[#allocation3 + $0xbd8] sm:$0xff]
    %v1838 = vld [vmem:[#allocation3 + $0xbe0] sm:$0xff]
    %v1839 = vld [vmem:[#allocation3 + $0xbe8] sm:$0xff]
    %v1840 = vld [vmem:[#allocation3 + $0xbf0] sm:$0xff]
    %v1841 = vld [vmem:[#allocation3 + $0xbf8] sm:$0xff]
    %v1842 = vld [vmem:[#allocation3 + $0xc00] sm:$0xff]
    %v1843 = vld [vmem:[#allocation3 + $0xc08] sm:$0xff]
    %v1844 = vld [vmem:[#allocation3 + $0xc10] sm:$0xff]
    %v1845 = vld [vmem:[#allocation3 + $0xc18] sm:$0xff]
    %v1846 = vld [vmem:[#allocation3 + $0xc20] sm:$0xff]
    %v1847 = vld [vmem:[#allocation3 + $0xc28] sm:$0xff]
    %v1848 = vld [vmem:[#allocation3 + $0xc30] sm:$0xff]
    %v1849 = vld [vmem:[#allocation3 + $0xc38] sm:$0xff]
    %v1850 = vld [vmem:[#allocation3 + $0xc40] sm:$0xff]
    %v1851 = vld [vmem:[#allocation3 + $0xc48] sm:$0xff]
    %v1852 = vld [vmem:[#allocation3 + $0xc50] sm:$0xff]
    %v1853 = vld [vmem:[#allocation3 + $0xc58] sm:$0xff]
    %v1854 = vld [vmem:[#allocation3 + $0xc60] sm:$0xff]
    %v1855 = vld [vmem:[#allocation3 + $0xc68] sm:$0xff]
    %v1856 = vld [vmem:[#allocation3 + $0xc70] sm:$0xff]
    %v1857 = vld [vmem:[#allocation3 + $0xc78] sm:$0xff]
    %v1858 = vld [vmem:[#allocation3 + $0xc80] sm:$0xff]
    %v1859 = vld [vmem:[#allocation3 + $0xc88] sm:$0xff]
    %v1860 = vld [vmem:[#allocation3 + $0xc90] sm:$0xff]
    %v1861 = vld [vmem:[#allocation3 + $0xc98] sm:$0xff]
    %v1862 = vld [vmem:[#allocation3 + $0xca0] sm:$0xff]
    %v1863 = vld [vmem:[#allocation3 + $0xca8] sm:$0xff]
    %v1864 = vld [vmem:[#allocation3 + $0xcb0] sm:$0xff]
    %v1865 = vld [vmem:[#allocation3 + $0xcb8] sm:$0xff]
    %v1866 = vld [vmem:[#allocation3 + $0xcc0] sm:$0xff]
    %v1867 = vld [vmem:[#allocation3 + $0xcc8] sm:$0xff]
    %v1868 = vld [vmem:[#allocation3 + $0xcd0] sm:$0xff]
    %v1869 = vld [vmem:[#allocation3 + $0xcd8] sm:$0xff]
    %v1870 = vld [vmem:[#allocation3 + $0xce0] sm:$0xff]
    %v1871 = vld [vmem:[#allocation3 + $0xce8] sm:$0xff]
    %v1872 = vld [vmem:[#allocation3 + $0xcf0] sm:$0xff]
    %v1873 = vld [vmem:[#allocation3 + $0xcf8] sm:$0xff]
    %v1874 = vld [vmem:[#allocation3 + $0xd00] sm:$0xff]
    %v1875 = vld [vmem:[#allocation3 + $0xd08] sm:$0xff]
    %v1876 = vld [vmem:[#allocation3 + $0xd10] sm:$0xff]
    %v1877 = vld [vmem:[#allocation3 + $0xd18] sm:$0xff]
    %v1878 = vld [vmem:[#allocation3 + $0xd20] sm:$0xff]
    %v1879 = vld [vmem:[#allocation3 + $0xd28] sm:$0xff]
    %v1880 = vld [vmem:[#allocation3 + $0xd30] sm:$0xff]
    %v1881 = vld [vmem:[#allocation3 + $0xd38] sm:$0xff]
    %v1882 = vld [vmem:[#allocation3 + $0xd40] sm:$0xff]
    %v1883 = vld [vmem:[#allocation3 + $0xd48] sm:$0xff]
    %v1884 = vld [vmem:[#allocation3 + $0xd50] sm:$0xff]
    %v1885 = vld [vmem:[#allocation3 + $0xd58] sm:$0xff]
    %v1886 = vld [vmem:[#allocation3 + $0xd60] sm:$0xff]
    %v1887 = vld [vmem:[#allocation3 + $0xd68] sm:$0xff]
    %v1888 = vld [vmem:[#allocation3 + $0xd70] sm:$0xff]
    %v1889 = vld [vmem:[#allocation3 + $0xd78] sm:$0xff]
    %v1890 = vld [vmem:[#allocation3 + $0xd80] sm:$0xff]
    %v1891 = vld [vmem:[#allocation3 + $0xd88] sm:$0xff]
    %v1892 = vld [vmem:[#allocation3 + $0xd90] sm:$0xff]
    %v1893 = vld [vmem:[#allocation3 + $0xd98] sm:$0xff]
    %v1894 = vld [vmem:[#allocation3 + $0xda0] sm:$0xff]
    %v1895 = vld [vmem:[#allocation3 + $0xda8] sm:$0xff]
    %v1896 = vld [vmem:[#allocation3 + $0xdb0] sm:$0xff]
    %v1897 = vld [vmem:[#allocation3 + $0xdb8] sm:$0xff]
    %v1898 = vld [vmem:[#allocation3 + $0xdc0] sm:$0xff]
    %v1899 = vld [vmem:[#allocation3 + $0xdc8] sm:$0xff]
    %v1900 = vld [vmem:[#allocation3 + $0xdd0] sm:$0xff]
    %v1901 = vld [vmem:[#allocation3 + $0xdd8] sm:$0xff]
    %v1902 = vld [vmem:[#allocation3 + $0xde0] sm:$0xff]
    %v1903 = vld [vmem:[#allocation3 + $0xde8] sm:$0xff]
    %v1904 = vld [vmem:[#allocation3 + $0xdf0] sm:$0xff]
    %v1905 = vld [vmem:[#allocation3 + $0xdf8] sm:$0xff]
    %v1906 = vld [vmem:[#allocation3 + $0xe00] sm:$0xff]
    %v1907 = vld [vmem:[#allocation3 + $0xe08] sm:$0xff]
    %v1908 = vld [vmem:[#allocation3 + $0xe10] sm:$0xff]
    %v1909 = vld [vmem:[#allocation3 + $0xe18] sm:$0xff]
    %v1910 = vld [vmem:[#allocation3 + $0xe20] sm:$0xff]
    %v1911 = vld [vmem:[#allocation3 + $0xe28] sm:$0xff]
    %v1912 = vld [vmem:[#allocation3 + $0xe30] sm:$0xff]
    %v1913 = vld [vmem:[#allocation3 + $0xe38] sm:$0xff]
    %v1914 = vld [vmem:[#allocation3 + $0xe40] sm:$0xff]
    %v1915 = vld [vmem:[#allocation3 + $0xe48] sm:$0xff]
    %v1916 = vld [vmem:[#allocation3 + $0xe50] sm:$0xff]
    %v1917 = vld [vmem:[#allocation3 + $0xe58] sm:$0xff]
    %v1918 = vld [vmem:[#allocation3 + $0xe60] sm:$0xff]
    %v1919 = vld [vmem:[#allocation3 + $0xe68] sm:$0xff]
    %v1920 = vld [vmem:[#allocation3 + $0xe70] sm:$0xff]
    %v1921 = vld [vmem:[#allocation3 + $0xe78] sm:$0xff]
    %v1922 = vld [vmem:[#allocation3 + $0xe80] sm:$0xff]
    %v1923 = vld [vmem:[#allocation3 + $0xe88] sm:$0xff]
    %v1924 = vld [vmem:[#allocation3 + $0xe90] sm:$0xff]
    %v1925 = vld [vmem:[#allocation3 + $0xe98] sm:$0xff]
    %v1926 = vld [vmem:[#allocation3 + $0xea0] sm:$0xff]
    %v1927 = vld [vmem:[#allocation3 + $0xea8] sm:$0xff]
    %v1928 = vld [vmem:[#allocation3 + $0xeb0] sm:$0xff]
    %v1929 = vld [vmem:[#allocation3 + $0xeb8] sm:$0xff]
    %v1930 = vld [vmem:[#allocation3 + $0xec0] sm:$0xff]
    %v1931 = vld [vmem:[#allocation3 + $0xec8] sm:$0xff]
    %v1932 = vld [vmem:[#allocation3 + $0xed0] sm:$0xff]
    %v1933 = vld [vmem:[#allocation3 + $0xed8] sm:$0xff]
    %v1934 = vld [vmem:[#allocation3 + $0xee0] sm:$0xff]
    %v1935 = vld [vmem:[#allocation3 + $0xee8] sm:$0xff]
    %v1936 = vld [vmem:[#allocation3 + $0xef0] sm:$0xff]
    %v1937 = vld [vmem:[#allocation3 + $0xef8] sm:$0xff]
    %v1938 = vld [vmem:[#allocation3 + $0xf00] sm:$0xff]
    %v1939 = vld [vmem:[#allocation3 + $0xf08] sm:$0xff]
    %v1940 = vld [vmem:[#allocation3 + $0xf10] sm:$0xff]
    %v1941 = vld [vmem:[#allocation3 + $0xf18] sm:$0xff]
    %v1942 = vld [vmem:[#allocation3 + $0xf20] sm:$0xff]
    %v1943 = vld [vmem:[#allocation3 + $0xf28] sm:$0xff]
    %v1944 = vld [vmem:[#allocation3 + $0xf30] sm:$0xff]
    %v1945 = vld [vmem:[#allocation3 + $0xf38] sm:$0xff]
    %v1946 = vld [vmem:[#allocation3 + $0xf40] sm:$0xff]
    %v1947 = vld [vmem:[#allocation3 + $0xf48] sm:$0xff]
    %v1948 = vld [vmem:[#allocation3 + $0xf50] sm:$0xff]
    %v1949 = vld [vmem:[#allocation3 + $0xf58] sm:$0xff]
    %v1950 = vld [vmem:[#allocation3 + $0xf60] sm:$0xff]
    %v1951 = vld [vmem:[#allocation3 + $0xf68] sm:$0xff]
    %v1952 = vld [vmem:[#allocation3 + $0xf70] sm:$0xff]
    %v1953 = vld [vmem:[#allocation3 + $0xf78] sm:$0xff]
    %v1954 = vld [vmem:[#allocation3 + $0xf80] sm:$0xff]
    %v1955 = vld [vmem:[#allocation3 + $0xf88] sm:$0xff]
    %v1956 = vld [vmem:[#allocation3 + $0xf90] sm:$0xff]
    %v1957 = vld [vmem:[#allocation3 + $0xf98] sm:$0xff]
    %v1958 = vld [vmem:[#allocation3 + $0xfa0] sm:$0xff]
    %v1959 = vld [vmem:[#allocation3 + $0xfa8] sm:$0xff]
    %v1960 = vld [vmem:[#allocation3 + $0xfb0] sm:$0xff]
    %v1961 = vld [vmem:[#allocation3 + $0xfb8] sm:$0xff]
    %v1962 = vld [vmem:[#allocation3 + $0xfc0] sm:$0xff]
    %v1963 = vld [vmem:[#allocation3 + $0xfc8] sm:$0xff]
    %v1964 = vld [vmem:[#allocation3 + $0xfd0] sm:$0xff]
    %v1965 = vld [vmem:[#allocation3 + $0xfd8] sm:$0xff]
    %v1966 = vld [vmem:[#allocation3 + $0xfe0] sm:$0xff]
    %v1967 = vld [vmem:[#allocation3 + $0xfe8] sm:$0xff]
    %v1968 = vld [vmem:[#allocation3 + $0xff0] sm:$0xff]
    %v1969 = vld [vmem:[#allocation3 + $0xff8] sm:$0xff]
    %v1970 = vld [vmem:[#allocation3 + $0x1000] sm:$0xff]
    %v1971 = vld [vmem:[#allocation3 + $0x1008] sm:$0xff]
    %v1972 = vld [vmem:[#allocation3 + $0x1010] sm:$0xff]
    %v1973 = vld [vmem:[#allocation3 + $0x1018] sm:$0xff]
    %v1974 = vld [vmem:[#allocation3 + $0x1020] sm:$0xff]
    %v1975 = vld [vmem:[#allocation3 + $0x1028] sm:$0xff]
    %v1976 = vld [vmem:[#allocation3 + $0x1030] sm:$0xff]
    %v1977 = vld [vmem:[#allocation3 + $0x1038] sm:$0xff]
    %v1978 = vld [vmem:[#allocation3 + $0x1040] sm:$0xff]
    %v1979 = vld [vmem:[#allocation3 + $0x1048] sm:$0xff]
    %v1980 = vld [vmem:[#allocation3 + $0x1050] sm:$0xff]
    %v1981 = vld [vmem:[#allocation3 + $0x1058] sm:$0xff]
    %v1982 = vld [vmem:[#allocation3 + $0x1060] sm:$0xff]
    %v1983 = vld [vmem:[#allocation3 + $0x1068] sm:$0xff]
    %v1984 = vld [vmem:[#allocation3 + $0x1070] sm:$0xff]
    %v1985 = vld [vmem:[#allocation3 + $0x1078] sm:$0xff]
    %v1986 = vld [vmem:[#allocation3 + $0x1080] sm:$0xff]
    %v1987 = vld [vmem:[#allocation3 + $0x1088] sm:$0xff]
    %v1988 = vld [vmem:[#allocation3 + $0x1090] sm:$0xff]
    %v1989 = vld [vmem:[#allocation3 + $0x1098] sm:$0xff]
    %v1990 = vld [vmem:[#allocation3 + $0x10a0] sm:$0xff]
    %v1991 = vld [vmem:[#allocation3 + $0x10a8] sm:$0xff]
    %v1992 = vld [vmem:[#allocation3 + $0x10b0] sm:$0xff]
    %v1993 = vld [vmem:[#allocation3 + $0x10b8] sm:$0xff]
    %v1994 = vld [vmem:[#allocation3 + $0x10c0] sm:$0xff]
    %v1995 = vld [vmem:[#allocation3 + $0x10c8] sm:$0xff]
    %v1996 = vld [vmem:[#allocation3 + $0x10d0] sm:$0xff]
    %v1997 = vld [vmem:[#allocation3 + $0x10d8] sm:$0xff]
    %v1998 = vld [vmem:[#allocation3 + $0x10e0] sm:$0xff]
    %v1999 = vld [vmem:[#allocation3 + $0x10e8] sm:$0xff]
    %v2000 = vld [vmem:[#allocation3 + $0x10f0] sm:$0xff]
    %v2001 = vld [vmem:[#allocation3 + $0x10f8] sm:$0xff]
    %v2002 = vld [vmem:[#allocation3 + $0x1100] sm:$0xff]
    %v2003 = vld [vmem:[#allocation3 + $0x1108] sm:$0xff]
    %v2004 = vld [vmem:[#allocation3 + $0x1110] sm:$0xff]
    %v2005 = vld [vmem:[#allocation3 + $0x1118] sm:$0xff]
    %v2006 = vld [vmem:[#allocation3 + $0x1120] sm:$0xff]
    %v2007 = vld [vmem:[#allocation3 + $0x1128] sm:$0xff]
    %v2008 = vld [vmem:[#allocation3 + $0x1130] sm:$0xff]
    %v2009 = vld [vmem:[#allocation3 + $0x1138] sm:$0xff]
    %v2010 = vld [vmem:[#allocation3 + $0x1140] sm:$0xff]
    %v2011 = vld [vmem:[#allocation3 + $0x1148] sm:$0xff]
    %v2012 = vld [vmem:[#allocation3 + $0x1150] sm:$0xff]
    %v2013 = vld [vmem:[#allocation3 + $0x1158] sm:$0xff]
    %v2014 = vld [vmem:[#allocation3 + $0x1160] sm:$0xff]
    %v2015 = vld [vmem:[#allocation3 + $0x1168] sm:$0xff]
    %v2016 = vld [vmem:[#allocation3 + $0x1170] sm:$0xff]
    %v2017 = vld [vmem:[#allocation3 + $0x1178] sm:$0xff]
    %v2018 = vld [vmem:[#allocation3 + $0x1180] sm:$0xff]
    %v2019 = vld [vmem:[#allocation3 + $0x1188] sm:$0xff]
    %v2020 = vld [vmem:[#allocation3 + $0x1190] sm:$0xff]
    %v2021 = vld [vmem:[#allocation3 + $0x1198] sm:$0xff]
    %v2022 = vld [vmem:[#allocation3 + $0x11a0] sm:$0xff]
    %v2023 = vld [vmem:[#allocation3 + $0x11a8] sm:$0xff]
    %v2024 = vld [vmem:[#allocation3 + $0x11b0] sm:$0xff]
    %v2025 = vld [vmem:[#allocation3 + $0x11b8] sm:$0xff]
    %v2026 = vld [vmem:[#allocation3 + $0x11c0] sm:$0xff]
    %v2027 = vld [vmem:[#allocation3 + $0x11c8] sm:$0xff]
    %v2028 = vld [vmem:[#allocation3 + $0x11d0] sm:$0xff]
    %v2029 = vld [vmem:[#allocation3 + $0x11d8] sm:$0xff]
    %v2030 = vld [vmem:[#allocation3 + $0x11e0] sm:$0xff]
    %v2031 = vld [vmem:[#allocation3 + $0x11e8] sm:$0xff]
    %v2032 = vld [vmem:[#allocation3 + $0x11f0] sm:$0xff]
    %v2033 = vld [vmem:[#allocation3 + $0x11f8] sm:$0xff]
    %v2034 = vld [vmem:[#allocation7] sm:$0xff]
    %v2035 = vld [vmem:[#allocation7 + $0x8] sm:$0xff]
    %v2036 = vld [vmem:[#allocation7 + $0x10] sm:$0xff]
    %v2037 = vld [vmem:[#allocation7 + $0x18] sm:$0xff]
    %v2038 = vld [vmem:[#allocation7 + $0x20] sm:$0xff]
    %v2039 = vld [vmem:[#allocation7 + $0x28] sm:$0xff]
    %v2040 = vld [vmem:[#allocation7 + $0x30] sm:$0xff]
    %v2041 = vld [vmem:[#allocation7 + $0x38] sm:$0xff]
    %v2042 = vld [vmem:[#allocation7 + $0x40] sm:$0xff]
    %v2043 = vld [vmem:[#allocation7 + $0x48] sm:$0xff]
    %v2044 = vld [vmem:[#allocation7 + $0x50] sm:$0xff]
    %v2045 = vld [vmem:[#allocation7 + $0x58] sm:$0xff]
    %v2046 = vld [vmem:[#allocation7 + $0x60] sm:$0xff]
    %v2047 = vld [vmem:[#allocation7 + $0x68] sm:$0xff]
    %v2048 = vld [vmem:[#allocation7 + $0x70] sm:$0xff]
    %v2049 = vld [vmem:[#allocation7 + $0x78] sm:$0xff]
    %v2050 = vld [vmem:[#allocation7 + $0x80] sm:$0xff]
    %v2051 = vld [vmem:[#allocation7 + $0x88] sm:$0xff]
    %v2052 = vld [vmem:[#allocation7 + $0x90] sm:$0xff]
    %v2053 = vld [vmem:[#allocation7 + $0x98] sm:$0xff]
    %v2054 = vld [vmem:[#allocation7 + $0xa0] sm:$0xff]
    %v2055 = vld [vmem:[#allocation7 + $0xa8] sm:$0xff]
    %v2056 = vld [vmem:[#allocation7 + $0xb0] sm:$0xff]
    %v2057 = vld [vmem:[#allocation7 + $0xb8] sm:$0xff]
    %v2058 = vld [vmem:[#allocation7 + $0xc0] sm:$0xff]
    %v2059 = vld [vmem:[#allocation7 + $0xc8] sm:$0xff]
    %v2060 = vld [vmem:[#allocation7 + $0xd0] sm:$0xff]
    %v2061 = vld [vmem:[#allocation7 + $0xd8] sm:$0xff]
    %v2062 = vld [vmem:[#allocation7 + $0xe0] sm:$0xff]
    %v2063 = vld [vmem:[#allocation7 + $0xe8] sm:$0xff]
    %v2064 = vld [vmem:[#allocation7 + $0xf0] sm:$0xff]
    %v2065 = vld [vmem:[#allocation7 + $0xf8] sm:$0xff]
    %v2066 = vld [vmem:[#allocation7 + $0x100] sm:$0xff]
    %v2067 = vld [vmem:[#allocation7 + $0x108] sm:$0xff]
    %v2068 = vld [vmem:[#allocation7 + $0x110] sm:$0xff]
    %v2069 = vld [vmem:[#allocation7 + $0x118] sm:$0xff]
    %v2070 = vld [vmem:[#allocation7 + $0x120] sm:$0xff]
    %v2071 = vld [vmem:[#allocation7 + $0x128] sm:$0xff]
    %v2072 = vld [vmem:[#allocation7 + $0x130] sm:$0xff]
    %v2073 = vld [vmem:[#allocation7 + $0x138] sm:$0xff]
    %v2074 = vld [vmem:[#allocation7 + $0x140] sm:$0xff]
    %v2075 = vld [vmem:[#allocation7 + $0x148] sm:$0xff]
    %v2076 = vld [vmem:[#allocation7 + $0x150] sm:$0xff]
    %v2077 = vld [vmem:[#allocation7 + $0x158] sm:$0xff]
    %v2078 = vld [vmem:[#allocation7 + $0x160] sm:$0xff]
    %v2079 = vld [vmem:[#allocation7 + $0x168] sm:$0xff]
    %v2080 = vld [vmem:[#allocation7 + $0x170] sm:$0xff]
    %v2081 = vld [vmem:[#allocation7 + $0x178] sm:$0xff]
    %v2082 = vld [vmem:[#allocation7 + $0x180] sm:$0xff]
    %v2083 = vld [vmem:[#allocation7 + $0x188] sm:$0xff]
    %v2084 = vld [vmem:[#allocation7 + $0x190] sm:$0xff]
    %v2085 = vld [vmem:[#allocation7 + $0x198] sm:$0xff]
    %v2086 = vld [vmem:[#allocation7 + $0x1a0] sm:$0xff]
    %v2087 = vld [vmem:[#allocation7 + $0x1a8] sm:$0xff]
    %v2088 = vld [vmem:[#allocation7 + $0x1b0] sm:$0xff]
    %v2089 = vld [vmem:[#allocation7 + $0x1b8] sm:$0xff]
    %v2090 = vld [vmem:[#allocation7 + $0x1c0] sm:$0xff]
    %v2091 = vld [vmem:[#allocation7 + $0x1c8] sm:$0xff]
    %v2092 = vld [vmem:[#allocation7 + $0x1d0] sm:$0xff]
    %v2093 = vld [vmem:[#allocation7 + $0x1d8] sm:$0xff]
    %v2094 = vld [vmem:[#allocation7 + $0x1e0] sm:$0xff]
    %v2095 = vld [vmem:[#allocation7 + $0x1e8] sm:$0xff]
    %v2096 = vld [vmem:[#allocation7 + $0x1f0] sm:$0xff]
    %v2097 = vld [vmem:[#allocation7 + $0x1f8] sm:$0xff]
    %v2098 = vld [vmem:[#allocation7 + $0x200] sm:$0xff]
    %v2099 = vld [vmem:[#allocation7 + $0x208] sm:$0xff]
    %v2100 = vld [vmem:[#allocation7 + $0x210] sm:$0xff]
    %v2101 = vld [vmem:[#allocation7 + $0x218] sm:$0xff]
    %v2102 = vld [vmem:[#allocation7 + $0x220] sm:$0xff]
    %v2103 = vld [vmem:[#allocation7 + $0x228] sm:$0xff]
    %v2104 = vld [vmem:[#allocation7 + $0x230] sm:$0xff]
    %v2105 = vld [vmem:[#allocation7 + $0x238] sm:$0xff]
    %v2106 = vld [vmem:[#allocation7 + $0x240] sm:$0xff]
    %v2107 = vld [vmem:[#allocation7 + $0x248] sm:$0xff]
    %v2108 = vld [vmem:[#allocation7 + $0x250] sm:$0xff]
    %v2109 = vld [vmem:[#allocation7 + $0x258] sm:$0xff]
    %v2110 = vld [vmem:[#allocation7 + $0x260] sm:$0xff]
    %v2111 = vld [vmem:[#allocation7 + $0x268] sm:$0xff]
    %v2112 = vld [vmem:[#allocation7 + $0x270] sm:$0xff]
    %v2113 = vld [vmem:[#allocation7 + $0x278] sm:$0xff]
    %v2114 = vld [vmem:[#allocation7 + $0x280] sm:$0xff]
    %v2115 = vld [vmem:[#allocation7 + $0x288] sm:$0xff]
    %v2116 = vld [vmem:[#allocation7 + $0x290] sm:$0xff]
    %v2117 = vld [vmem:[#allocation7 + $0x298] sm:$0xff]
    %v2118 = vld [vmem:[#allocation7 + $0x2a0] sm:$0xff]
    %v2119 = vld [vmem:[#allocation7 + $0x2a8] sm:$0xff]
    %v2120 = vld [vmem:[#allocation7 + $0x2b0] sm:$0xff]
    %v2121 = vld [vmem:[#allocation7 + $0x2b8] sm:$0xff]
    %v2122 = vld [vmem:[#allocation7 + $0x2c0] sm:$0xff]
    %v2123 = vld [vmem:[#allocation7 + $0x2c8] sm:$0xff]
    %v2124 = vld [vmem:[#allocation7 + $0x2d0] sm:$0xff]
    %v2125 = vld [vmem:[#allocation7 + $0x2d8] sm:$0xff]
    %v2126 = vld [vmem:[#allocation7 + $0x2e0] sm:$0xff]
    %v2127 = vld [vmem:[#allocation7 + $0x2e8] sm:$0xff]
    %v2128 = vld [vmem:[#allocation7 + $0x2f0] sm:$0xff]
    %v2129 = vld [vmem:[#allocation7 + $0x2f8] sm:$0xff]
    %v2130 = vld [vmem:[#allocation7 + $0x300] sm:$0xff]
    %v2131 = vld [vmem:[#allocation7 + $0x308] sm:$0xff]
    %v2132 = vld [vmem:[#allocation7 + $0x310] sm:$0xff]
    %v2133 = vld [vmem:[#allocation7 + $0x318] sm:$0xff]
    %v2134 = vld [vmem:[#allocation7 + $0x320] sm:$0xff]
    %v2135 = vld [vmem:[#allocation7 + $0x328] sm:$0xff]
    %v2136 = vld [vmem:[#allocation7 + $0x330] sm:$0xff]
    %v2137 = vld [vmem:[#allocation7 + $0x338] sm:$0xff]
    %v2138 = vld [vmem:[#allocation7 + $0x340] sm:$0xff]
    %v2139 = vld [vmem:[#allocation7 + $0x348] sm:$0xff]
    %v2140 = vld [vmem:[#allocation7 + $0x350] sm:$0xff]
    %v2141 = vld [vmem:[#allocation7 + $0x358] sm:$0xff]
    %v2142 = vld [vmem:[#allocation7 + $0x360] sm:$0xff]
    %v2143 = vld [vmem:[#allocation7 + $0x368] sm:$0xff]
    %v2144 = vld [vmem:[#allocation7 + $0x370] sm:$0xff]
    %v2145 = vld [vmem:[#allocation7 + $0x378] sm:$0xff]
    %v2146 = vld [vmem:[#allocation7 + $0x380] sm:$0xff]
    %v2147 = vld [vmem:[#allocation7 + $0x388] sm:$0xff]
    %v2148 = vld [vmem:[#allocation7 + $0x390] sm:$0xff]
    %v2149 = vld [vmem:[#allocation7 + $0x398] sm:$0xff]
    %v2150 = vld [vmem:[#allocation7 + $0x3a0] sm:$0xff]
    %v2151 = vld [vmem:[#allocation7 + $0x3a8] sm:$0xff]
    %v2152 = vld [vmem:[#allocation7 + $0x3b0] sm:$0xff]
    %v2153 = vld [vmem:[#allocation7 + $0x3b8] sm:$0xff]
    %v2154 = vld [vmem:[#allocation7 + $0x3c0] sm:$0xff]
    %v2155 = vld [vmem:[#allocation7 + $0x3c8] sm:$0xff]
    %v2156 = vld [vmem:[#allocation7 + $0x3d0] sm:$0xff]
    %v2157 = vld [vmem:[#allocation7 + $0x3d8] sm:$0xff]
    %v2158 = vld [vmem:[#allocation7 + $0x3e0] sm:$0xff]
    %v2159 = vld [vmem:[#allocation7 + $0x3e8] sm:$0xff]
    %v2160 = vld [vmem:[#allocation7 + $0x3f0] sm:$0xff]
    %v2161 = vld [vmem:[#allocation7 + $0x3f8] sm:$0xff]
    %v2162 = vld [vmem:[#allocation7 + $0x400] sm:$0xff]
    %v2163 = vld [vmem:[#allocation7 + $0x408] sm:$0xff]
    %v2164 = vld [vmem:[#allocation7 + $0x410] sm:$0xff]
    %v2165 = vld [vmem:[#allocation7 + $0x418] sm:$0xff]
    %v2166 = vld [vmem:[#allocation7 + $0x420] sm:$0xff]
    %v2167 = vld [vmem:[#allocation7 + $0x428] sm:$0xff]
    %v2168 = vld [vmem:[#allocation7 + $0x430] sm:$0xff]
    %v2169 = vld [vmem:[#allocation7 + $0x438] sm:$0xff]
    %v2170 = vld [vmem:[#allocation7 + $0x440] sm:$0xff]
    %v2171 = vld [vmem:[#allocation7 + $0x448] sm:$0xff]
    %v2172 = vld [vmem:[#allocation7 + $0x450] sm:$0xff]
    %v2173 = vld [vmem:[#allocation7 + $0x458] sm:$0xff]
    %v2174 = vld [vmem:[#allocation7 + $0x460] sm:$0xff]
    %v2175 = vld [vmem:[#allocation7 + $0x468] sm:$0xff]
    %v2176 = vld [vmem:[#allocation7 + $0x470] sm:$0xff]
    %v2177 = vld [vmem:[#allocation7 + $0x478] sm:$0xff]
    %2178 = vmatprep.subr.mxu0 0.0
    %2179 = vmatpush1.msra.mxu0 %v2034
    %2180 = vmatprep.subr.mxu0 0.0
    %2181 = vmatpush1.msra.mxu0 %v2035
    %2182 = vmatprep.subr.mxu0 0.0
    %2183 = vmatpush1.msra.mxu0 %v2036
    %2184 = vmatprep.subr.mxu0 0.0
    %2185 = vmatpush1.msra.mxu0 %v2037
    %2186 = vmatprep.subr.mxu0 0.0
    %2187 = vmatpush1.msra.mxu0 %v2038
    %2188 = vmatprep.subr.mxu0 0.0
    %2189 = vmatpush1.msra.mxu0 %v2039
    %2190 = vmatprep.subr.mxu0 0.0
    %2191 = vmatpush1.msra.mxu0 %v2040
    %2192 = vmatprep.subr.mxu0 0.0
    %2193 = vmatpush1.msra.mxu0 %v2041
    %2194 = vmatprep.subr.mxu0 0.0
    %2195 = vmatpush1.msra.mxu0 %v2042
    %2196 = vmatprep.subr.mxu0 0.0
    %2197 = vmatpush1.msra.mxu0 %v2043
    %2198 = vmatprep.subr.mxu0 0.0
    %2199 = vmatpush1.msra.mxu0 %v2044
    %2200 = vmatprep.subr.mxu0 0.0
    %2201 = vmatpush1.msra.mxu0 %v2045
    %2202 = vmatprep.subr.mxu0 0.0
    %2203 = vmatpush1.msra.mxu0 %v2046
    %2204 = vmatprep.subr.mxu0 0.0
    %2205 = vmatpush1.msra.mxu0 %v2047
    %2206 = vmatprep.subr.mxu0 0.0
    %2207 = vmatpush1.msra.mxu0 %v2048
    %2208 = vmatprep.subr.mxu0 0.0
    %2209 = vmatpush1.msra.mxu0 %v2049
    %2210 = vmatprep.subr.mxu0 0.0
    %2211 = vmatpush1.msra.mxu0 %v2050
    %2212 = vmatprep.subr.mxu0 0.0
    %2213 = vmatpush1.msra.mxu0 %v2051
    %2214 = vmatprep.subr.mxu0 0.0
    %2215 = vmatpush1.msra.mxu0 %v2052
    %2216 = vmatprep.subr.mxu0 0.0
    %2217 = vmatpush1.msra.mxu0 %v2053
    %2218 = vmatprep.subr.mxu0 0.0
    %2219 = vmatpush1.msra.mxu0 %v2054
    %2220 = vmatprep.subr.mxu0 0.0
    %2221 = vmatpush1.msra.mxu0 %v2055
    %2222 = vmatprep.subr.mxu0 0.0
    %2223 = vmatpush1.msra.mxu0 %v2056
    %2224 = vmatprep.subr.mxu0 0.0
    %2225 = vmatpush1.msra.mxu0 %v2057
    %2226 = vmatprep.subr.mxu0 0.0
    %2227 = vmatpush1.msra.mxu0 %v2058
    %2228 = vmatprep.subr.mxu0 0.0
    %2229 = vmatpush1.msra.mxu0 %v2059
    %2230 = vmatprep.subr.mxu0 0.0
    %2231 = vmatpush1.msra.mxu0 %v2060
    %2232 = vmatprep.subr.mxu0 0.0
    %2233 = vmatpush1.msra.mxu0 %v2061
    %2234 = vmatprep.subr.mxu0 0.0
    %2235 = vmatpush1.msra.mxu0 %v2062
    %2236 = vmatprep.subr.mxu0 0.0
    %2237 = vmatpush1.msra.mxu0 %v2063
    %2238 = vmatprep.subr.mxu0 0.0
    %2239 = vmatpush1.msra.mxu0 %v2064
    %2240 = vmatprep.subr.mxu0 0.0
    %2241 = vmatpush1.msra.mxu0 %v2065
    %2242 = vmatprep.mubr.f32.mxu0 %v1459
    %2243 = vmatmul.mubr.f32.gmra.mrb[0].mxu0 %v1458
    %v2244 = vpop.f32.mrb[0].mxu0
    %v2245 = vadd.f32 0.0, %v2244
    %v2246 = vpop.f32.mrb[0].mxu0
    %2247 = vmatprep.mubr.f32.mxu0 %v1468
    %2248 = vmatmul.mubr.f32.gmra.mrb[0].mxu0 %v1467
    %v2249 = vpop.f32.mrb[0].mxu0
    %v2250 = vadd.f32 0.0, %v2249
    %v2251 = vpop.f32.mrb[0].mxu0
    %2252 = vmatprep.mubr.f32.mxu0 %v1477
    %2253 = vmatmul.mubr.f32.gmra.mrb[0].mxu0 %v1476
    %v2254 = vpop.f32.mrb[0].mxu0
    %v2255 = vadd.f32 0.0, %v2254
    %v2256 = vpop.f32.mrb[0].mxu0
    %2257 = vmatprep.mubr.f32.mxu0 %v1486
    %2258 = vmatmul.mubr.f32.gmra.mrb[0].mxu0 %v1485
    %v2259 = vpop.f32.mrb[0].mxu0
    %v2260 = vadd.f32 0.0, %v2259
    %v2261 = vpop.f32.mrb[0].mxu0
    %2262 = vmatprep.mubr.f32.mxu0 %v1495
    %2263 = vmatmul.mubr.f32.gmra.mrb[0].mxu0 %v1494
    %v2264 = vpop.f32.mrb[0].mxu0
    %v2265 = vadd.f32 0.0, %v2264
    %v2266 = vpop.f32.mrb[0].mxu0
    %2267 = vmatprep.mubr.f32.mxu0 %v1504
    %2268 = vmatmul.mubr.f32.gmra.mrb[0].mxu0 %v1503
    %v2269 = vpop.f32.mrb[0].mxu0
    %v2270 = vadd.f32 0.0, %v2269
    %v2271 = vpop.f32.mrb[0].mxu0
    %2272 = vmatprep.mubr.f32.mxu0 %v1513
    %2273 = vmatmul.mubr.f32.gmra.mrb[0].mxu0 %v1512
    %v2274 = vpop.f32.mrb[0].mxu0
    %v2275 = vadd.f32 0.0, %v2274
    %v2276 = vpop.f32.mrb[0].mxu0
    %2277 = vmatprep.mubr.f32.mxu0 %v1522
    %2278 = vmatmul.mubr.f32.gmra.mrb[0].mxu0 %v1521
    %v2279 = vpop.f32.mrb[0].mxu0
    %v2280 = vadd.f32 0.0, %v2279
    %v2281 = vpop.f32.mrb[0].mxu0
    %2282 = vmatprep.mubr.f32.mxu0 %v1531
    %2283 = vmatmul.mubr.f32.gmra.mrb[0].mxu0 %v1530
    %v2284 = vpop.f32.mrb[0].mxu0
    %v2285 = vadd.f32 0.0, %v2284
    %v2286 = vpop.f32.mrb[0].mxu0
    %2287 = vmatprep.mubr.f32.mxu0 %v1540
    %2288 = vmatmul.mubr.f32.gmra.mrb[0].mxu0 %v1539
    %v2289 = vpop.f32.mrb[0].mxu0
    %v2290 = vadd.f32 0.0, %v2289
    %v2291 = vpop.f32.mrb[0].mxu0
    %2292 = vmatprep.mubr.f32.mxu0 %v1549
    %2293 = vmatmul.mubr.f32.gmra.mrb[0].mxu0 %v1548
    %v2294 = vpop.f32.mrb[0].mxu0
    %v2295 = vadd.f32 0.0, %v2294
    %v2296 = vpop.f32.mrb[0].mxu0
    %2297 = vmatprep.mubr.f32.mxu0 %v1558
    %2298 = vmatmul.mubr.f32.gmra.mrb[0].mxu0 %v1557
    %v2299 = vpop.f32.mrb[0].mxu0
    %v2300 = vadd.f32 0.0, %v2299
    %v2301 = vpop.f32.mrb[0].mxu0
    %2302 = vmatprep.mubr.f32.mxu0 %v1567
    %2303 = vmatmul.mubr.f32.gmra.mrb[0].mxu0 %v1566
    %v2304 = vpop.f32.mrb[0].mxu0
    %v2305 = vadd.f32 0.0, %v2304
    %v2306 = vpop.f32.mrb[0].mxu0
    %2307 = vmatprep.mubr.f32.mxu0 %v1576
    %2308 = vmatmul.mubr.f32.gmra.mrb[0].mxu0 %v1575
    %v2309 = vpop.f32.mrb[0].mxu0
    %v2310 = vadd.f32 0.0, %v2309
    %v2311 = vpop.f32.mrb[0].mxu0
    %2312 = vmatprep.mubr.f32.mxu0 %v1585
    %2313 = vmatmul.mubr.f32.gmra.mrb[0].mxu0 %v1584
    %v2314 = vpop.f32.mrb[0].mxu0
    %v2315 = vadd.f32 0.0, %v2314
    %v2316 = vpop.f32.mrb[0].mxu0
    %2317 = vmatprep.mubr.f32.mxu0 %v1594
    %2318 = vmatmul.mubr.f32.gmra.mrb[0].mxu0 %v1593
    %v2319 = vpop.f32.mrb[0].mxu0
    %v2320 = vadd.f32 0.0, %v2319
    %v2321 = vpop.f32.mrb[0].mxu0
    %2322 = vmatprep.mubr.f32.mxu0 %v1603
    %2323 = vmatmul.mubr.f32.gmra.mrb[0].mxu0 %v1602
    %v2324 = vpop.f32.mrb[0].mxu0
    %v2325 = vadd.f32 0.0, %v2324
    %v2326 = vpop.f32.mrb[0].mxu0
    %2327 = vmatprep.mubr.f32.mxu0 %v1612
    %2328 = vmatmul.mubr.f32.gmra.mrb[0].mxu0 %v1611
    %v2329 = vpop.f32.mrb[0].mxu0
    %v2330 = vadd.f32 0.0, %v2329
    %v2331 = vpop.f32.mrb[0].mxu0
    %2332 = vmatprep.mubr.f32.mxu0 %v1621
    %2333 = vmatmul.mubr.f32.gmra.mrb[0].mxu0 %v1620
    %v2334 = vpop.f32.mrb[0].mxu0
    %v2335 = vadd.f32 0.0, %v2334
    %v2336 = vpop.f32.mrb[0].mxu0
    %2337 = vmatprep.mubr.f32.mxu0 %v1630
    %2338 = vmatmul.mubr.f32.gmra.mrb[0].mxu0 %v1629
    %v2339 = vpop.f32.mrb[0].mxu0
    %v2340 = vadd.f32 0.0, %v2339
    %v2341 = vpop.f32.mrb[0].mxu0
    %2342 = vmatprep.mubr.f32.mxu0 %v1639
    %2343 = vmatmul.mubr.f32.gmra.mrb[0].mxu0 %v1638
    %v2344 = vpop.f32.mrb[0].mxu0
    %v2345 = vadd.f32 0.0, %v2344
    %v2346 = vpop.f32.mrb[0].mxu0
    %2347 = vmatprep.mubr.f32.mxu0 %v1648
    %2348 = vmatmul.mubr.f32.gmra.mrb[0].mxu0 %v1647
    %v2349 = vpop.f32.mrb[0].mxu0
    %v2350 = vadd.f32 0.0, %v2349
    %v2351 = vpop.f32.mrb[0].mxu0
    %2352 = vmatprep.mubr.f32.mxu0 %v1657
    %2353 = vmatmul.mubr.f32.gmra.mrb[0].mxu0 %v1656
    %v2354 = vpop.f32.mrb[0].mxu0
    %v2355 = vadd.f32 0.0, %v2354
    %v2356 = vpop.f32.mrb[0].mxu0
    %2357 = vmatprep.mubr.f32.mxu0 %v1666
    %2358 = vmatmul.mubr.f32.gmra.mrb[0].mxu0 %v1665
    %v2359 = vpop.f32.mrb[0].mxu0
    %v2360 = vadd.f32 0.0, %v2359
    %v2361 = vpop.f32.mrb[0].mxu0
    %2362 = vmatprep.mubr.f32.mxu0 %v1675
    %2363 = vmatmul.mubr.f32.gmra.mrb[0].mxu0 %v1674
    %v2364 = vpop.f32.mrb[0].mxu0
    %v2365 = vadd.f32 0.0, %v2364
    %v2366 = vpop.f32.mrb[0].mxu0
    %2367 = vmatprep.mubr.f32.mxu0 %v1684
    %2368 = vmatmul.mubr.f32.gmra.mrb[0].mxu0 %v1683
    %v2369 = vpop.f32.mrb[0].mxu0
    %v2370 = vadd.f32 0.0, %v2369
    %v2371 = vpop.f32.mrb[0].mxu0
    %2372 = vmatprep.mubr.f32.mxu0 %v1693
    %2373 = vmatmul.mubr.f32.gmra.mrb[0].mxu0 %v1692
    %v2374 = vpop.f32.mrb[0].mxu0
    %v2375 = vadd.f32 0.0, %v2374
    %v2376 = vpop.f32.mrb[0].mxu0
    %2377 = vmatprep.mubr.f32.mxu0 %v1702
    %2378 = vmatmul.mubr.f32.gmra.mrb[0].mxu0 %v1701
    %v2379 = vpop.f32.mrb[0].mxu0
    %v2380 = vadd.f32 0.0, %v2379
    %v2381 = vpop.f32.mrb[0].mxu0
    %2382 = vmatprep.mubr.f32.mxu0 %v1711
    %2383 = vmatmul.mubr.f32.gmra.mrb[0].mxu0 %v1710
    %v2384 = vpop.f32.mrb[0].mxu0
    %v2385 = vadd.f32 0.0, %v2384
    %v2386 = vpop.f32.mrb[0].mxu0
    %2387 = vmatprep.mubr.f32.mxu0 %v1720
    %2388 = vmatmul.mubr.f32.gmra.mrb[0].mxu0 %v1719
    %v2389 = vpop.f32.mrb[0].mxu0
    %v2390 = vadd.f32 0.0, %v2389
    %v2391 = vpop.f32.mrb[0].mxu0
    %2392 = vmatprep.mubr.f32.mxu0 %v1729
    %2393 = vmatmul.mubr.f32.gmra.mrb[0].mxu0 %v1728
    %v2394 = vpop.f32.mrb[0].mxu0
    %v2395 = vadd.f32 0.0, %v2394
    %v2396 = vpop.f32.mrb[0].mxu0
    %2397 = vmatprep.mubr.f32.mxu0 %v1738
    %2398 = vmatmul.mubr.f32.gmra.mrb[0].mxu0 %v1737
    %v2399 = vpop.f32.mrb[0].mxu0
    %v2400 = vadd.f32 0.0, %v2399
    %v2401 = vpop.f32.mrb[0].mxu0
    %2402 = vmatprep.mubr.f32.mxu0 %v1747
    %2403 = vmatmul.mubr.f32.gmra.mrb[0].mxu0 %v1746
    %v2404 = vpop.f32.mrb[0].mxu0
    %v2405 = vadd.f32 0.0, %v2404
    %v2406 = vpop.f32.mrb[0].mxu0
    %2407 = vmatprep.mubr.f32.mxu0 %v1756
    %2408 = vmatmul.mubr.f32.gmra.mrb[0].mxu0 %v1755
    %v2409 = vpop.f32.mrb[0].mxu0
    %v2410 = vadd.f32 0.0, %v2409
    %v2411 = vpop.f32.mrb[0].mxu0
    %2412 = vmatprep.mubr.f32.mxu0 %v1765
    %2413 = vmatmul.mubr.f32.gmra.mrb[0].mxu0 %v1764
    %v2414 = vpop.f32.mrb[0].mxu0
    %v2415 = vadd.f32 0.0, %v2414
    %v2416 = vpop.f32.mrb[0].mxu0
    %2417 = vmatprep.mubr.f32.mxu0 %v1774
    %2418 = vmatmul.mubr.f32.gmra.mrb[0].mxu0 %v1773
    %v2419 = vpop.f32.mrb[0].mxu0
    %v2420 = vadd.f32 0.0, %v2419
    %v2421 = vpop.f32.mrb[0].mxu0
    %2422 = vmatprep.mubr.f32.mxu0 %v1783
    %2423 = vmatmul.mubr.f32.gmra.mrb[0].mxu0 %v1782
    %v2424 = vpop.f32.mrb[0].mxu0
    %v2425 = vadd.f32 0.0, %v2424
    %v2426 = vpop.f32.mrb[0].mxu0
    %2427 = vmatprep.mubr.f32.mxu0 %v1792
    %2428 = vmatmul.mubr.f32.gmra.mrb[0].mxu0 %v1791
    %v2429 = vpop.f32.mrb[0].mxu0
    %v2430 = vadd.f32 0.0, %v2429
    %v2431 = vpop.f32.mrb[0].mxu0
    %2432 = vmatprep.mubr.f32.mxu0 %v1801
    %2433 = vmatmul.mubr.f32.gmra.mrb[0].mxu0 %v1800
    %v2434 = vpop.f32.mrb[0].mxu0
    %v2435 = vadd.f32 0.0, %v2434
    %v2436 = vpop.f32.mrb[0].mxu0
    %2437 = vmatprep.mubr.f32.mxu0 %v1810
    %2438 = vmatmul.mubr.f32.gmra.mrb[0].mxu0 %v1809
    %v2439 = vpop.f32.mrb[0].mxu0
    %v2440 = vadd.f32 0.0, %v2439
    %v2441 = vpop.f32.mrb[0].mxu0
    %2442 = vmatprep.mubr.f32.mxu0 %v1819
    %2443 = vmatmul.mubr.f32.gmra.mrb[0].mxu0 %v1818
    %v2444 = vpop.f32.mrb[0].mxu0
    %v2445 = vadd.f32 0.0, %v2444
    %v2446 = vpop.f32.mrb[0].mxu0
    %2447 = vmatprep.mubr.f32.mxu0 %v1828
    %2448 = vmatmul.mubr.f32.gmra.mrb[0].mxu0 %v1827
    %v2449 = vpop.f32.mrb[0].mxu0
    %v2450 = vadd.f32 0.0, %v2449
    %v2451 = vpop.f32.mrb[0].mxu0
    %2452 = vmatprep.mubr.f32.mxu0 %v1837
    %2453 = vmatmul.mubr.f32.gmra.mrb[0].mxu0 %v1836
    %v2454 = vpop.f32.mrb[0].mxu0
    %v2455 = vadd.f32 0.0, %v2454
    %v2456 = vpop.f32.mrb[0].mxu0
    %2457 = vmatprep.mubr.f32.mxu0 %v1846
    %2458 = vmatmul.mubr.f32.gmra.mrb[0].mxu0 %v1845
    %v2459 = vpop.f32.mrb[0].mxu0
    %v2460 = vadd.f32 0.0, %v2459
    %v2461 = vpop.f32.mrb[0].mxu0
    %2462 = vmatprep.mubr.f32.mxu0 %v1855
    %2463 = vmatmul.mubr.f32.gmra.mrb[0].mxu0 %v1854
    %v2464 = vpop.f32.mrb[0].mxu0
    %v2465 = vadd.f32 0.0, %v2464
    %v2466 = vpop.f32.mrb[0].mxu0
    %2467 = vmatprep.mubr.f32.mxu0 %v1864
    %2468 = vmatmul.mubr.f32.gmra.mrb[0].mxu0 %v1863
    %v2469 = vpop.f32.mrb[0].mxu0
    %v2470 = vadd.f32 0.0, %v2469
    %v2471 = vpop.f32.mrb[0].mxu0
    %2472 = vmatprep.mubr.f32.mxu0 %v1873
    %2473 = vmatmul.mubr.f32.gmra.mrb[0].mxu0 %v1872
    %v2474 = vpop.f32.mrb[0].mxu0
    %v2475 = vadd.f32 0.0, %v2474
    %v2476 = vpop.f32.mrb[0].mxu0
    %2477 = vmatprep.mubr.f32.mxu0 %v1882
    %2478 = vmatmul.mubr.f32.gmra.mrb[0].mxu0 %v1881
    %v2479 = vpop.f32.mrb[0].mxu0
    %v2480 = vadd.f32 0.0, %v2479
    %v2481 = vpop.f32.mrb[0].mxu0
    %2482 = vmatprep.mubr.f32.mxu0 %v1891
    %2483 = vmatmul.mubr.f32.gmra.mrb[0].mxu0 %v1890
    %v2484 = vpop.f32.mrb[0].mxu0
    %v2485 = vadd.f32 0.0, %v2484
    %v2486 = vpop.f32.mrb[0].mxu0
    %2487 = vmatprep.mubr.f32.mxu0 %v1900
    %2488 = vmatmul.mubr.f32.gmra.mrb[0].mxu0 %v1899
    %v2489 = vpop.f32.mrb[0].mxu0
    %v2490 = vadd.f32 0.0, %v2489
    %v2491 = vpop.f32.mrb[0].mxu0
    %2492 = vmatprep.mubr.f32.mxu0 %v1909
    %2493 = vmatmul.mubr.f32.gmra.mrb[0].mxu0 %v1908
    %v2494 = vpop.f32.mrb[0].mxu0
    %v2495 = vadd.f32 0.0, %v2494
    %v2496 = vpop.f32.mrb[0].mxu0
    %2497 = vmatprep.mubr.f32.mxu0 %v1918
    %2498 = vmatmul.mubr.f32.gmra.mrb[0].mxu0 %v1917
    %v2499 = vpop.f32.mrb[0].mxu0
    %v2500 = vadd.f32 0.0, %v2499
    %v2501 = vpop.f32.mrb[0].mxu0
    %2502 = vmatprep.mubr.f32.mxu0 %v1927
    %2503 = vmatmul.mubr.f32.gmra.mrb[0].mxu0 %v1926
    %v2504 = vpop.f32.mrb[0].mxu0
    %v2505 = vadd.f32 0.0, %v2504
    %v2506 = vpop.f32.mrb[0].mxu0
    %2507 = vmatprep.mubr.f32.mxu0 %v1936
    %2508 = vmatmul.mubr.f32.gmra.mrb[0].mxu0 %v1935
    %v2509 = vpop.f32.mrb[0].mxu0
    %v2510 = vadd.f32 0.0, %v2509
    %v2511 = vpop.f32.mrb[0].mxu0
    %2512 = vmatprep.mubr.f32.mxu0 %v1945
    %2513 = vmatmul.mubr.f32.gmra.mrb[0].mxu0 %v1944
    %v2514 = vpop.f32.mrb[0].mxu0
    %v2515 = vadd.f32 0.0, %v2514
    %v2516 = vpop.f32.mrb[0].mxu0
    %2517 = vmatprep.mubr.f32.mxu0 %v1954
    %2518 = vmatmul.mubr.f32.gmra.mrb[0].mxu0 %v1953
    %v2519 = vpop.f32.mrb[0].mxu0
    %v2520 = vadd.f32 0.0, %v2519
    %v2521 = vpop.f32.mrb[0].mxu0
    %2522 = vmatprep.mubr.f32.mxu0 %v1963
    %2523 = vmatmul.mubr.f32.gmra.mrb[0].mxu0 %v1962
    %v2524 = vpop.f32.mrb[0].mxu0
    %v2525 = vadd.f32 0.0, %v2524
    %v2526 = vpop.f32.mrb[0].mxu0
    %2527 = vmatprep.mubr.f32.mxu0 %v1972
    %2528 = vmatmul.mubr.f32.gmra.mrb[0].mxu0 %v1971
    %v2529 = vpop.f32.mrb[0].mxu0
    %v2530 = vadd.f32 0.0, %v2529
    %v2531 = vpop.f32.mrb[0].mxu0
    %2532 = vmatprep.mubr.f32.mxu0 %v1981
    %2533 = vmatmul.mubr.f32.gmra.mrb[0].mxu0 %v1980
    %v2534 = vpop.f32.mrb[0].mxu0
    %v2535 = vadd.f32 0.0, %v2534
    %v2536 = vpop.f32.mrb[0].mxu0
    %2537 = vmatprep.mubr.f32.mxu0 %v1990
    %2538 = vmatmul.mubr.f32.gmra.mrb[0].mxu0 %v1989
    %v2539 = vpop.f32.mrb[0].mxu0
    %v2540 = vadd.f32 0.0, %v2539
    %v2541 = vpop.f32.mrb[0].mxu0
    %2542 = vmatprep.mubr.f32.mxu0 %v1999
    %2543 = vmatmul.mubr.f32.gmra.mrb[0].mxu0 %v1998
    %v2544 = vpop.f32.mrb[0].mxu0
    %v2545 = vadd.f32 0.0, %v2544
    %v2546 = vpop.f32.mrb[0].mxu0
    %2547 = vmatprep.mubr.f32.mxu0 %v2008
    %2548 = vmatmul.mubr.f32.gmra.mrb[0].mxu0 %v2007
    %v2549 = vpop.f32.mrb[0].mxu0
    %v2550 = vadd.f32 0.0, %v2549
    %v2551 = vpop.f32.mrb[0].mxu0
    %2552 = vmatprep.mubr.f32.mxu0 %v2017
    %2553 = vmatmul.mubr.f32.gmra.mrb[0].mxu0 %v2016
    %v2554 = vpop.f32.mrb[0].mxu0
    %v2555 = vadd.f32 0.0, %v2554
    %v2556 = vpop.f32.mrb[0].mxu0
    %2557 = vmatprep.mubr.f32.mxu0 %v2026
    %2558 = vmatmul.mubr.f32.gmra.mrb[0].mxu0 %v2025
    %v2559 = vpop.f32.mrb[0].mxu0
    %v2560 = vadd.f32 0.0, %v2559
    %v2561 = vpop.f32.mrb[0].mxu0
    %2562 = vdwg.mxu0
    %2563 = vmatprep.subr.mxu0 0.0
    %2564 = vmatpush1.msra.mxu0 %v2066
    %2565 = vmatprep.subr.mxu0 0.0
    %2566 = vmatpush1.msra.mxu0 %v2067
    %2567 = vmatprep.subr.mxu0 0.0
    %2568 = vmatpush1.msra.mxu0 %v2068
    %2569 = vmatprep.subr.mxu0 0.0
    %2570 = vmatpush1.msra.mxu0 %v2069
    %2571 = vmatprep.subr.mxu0 0.0
    %2572 = vmatpush1.msra.mxu0 %v2070
    %2573 = vmatprep.subr.mxu0 0.0
    %2574 = vmatpush1.msra.mxu0 %v2071
    %2575 = vmatprep.subr.mxu0 0.0
    %2576 = vmatpush1.msra.mxu0 %v2072
    %2577 = vmatprep.subr.mxu0 0.0
    %2578 = vmatpush1.msra.mxu0 %v2073
    %2579 = vmatprep.subr.mxu0 0.0
    %2580 = vmatpush1.msra.mxu0 %v2074
    %2581 = vmatprep.subr.mxu0 0.0
    %2582 = vmatpush1.msra.mxu0 %v2075
    %2583 = vmatprep.subr.mxu0 0.0
    %2584 = vmatpush1.msra.mxu0 %v2076
    %2585 = vmatprep.subr.mxu0 0.0
    %2586 = vmatpush1.msra.mxu0 %v2077
    %2587 = vmatprep.subr.mxu0 0.0
    %2588 = vmatpush1.msra.mxu0 %v2078
    %2589 = vmatprep.subr.mxu0 0.0
    %2590 = vmatpush1.msra.mxu0 %v2079
    %2591 = vmatprep.subr.mxu0 0.0
    %2592 = vmatpush1.msra.mxu0 %v2080
    %2593 = vmatprep.subr.mxu0 0.0
    %2594 = vmatpush1.msra.mxu0 %v2081
    %2595 = vmatprep.subr.mxu0 0.0
    %2596 = vmatpush1.msra.mxu0 %v2082
    %2597 = vmatprep.subr.mxu0 0.0
    %2598 = vmatpush1.msra.mxu0 %v2083
    %2599 = vmatprep.subr.mxu0 0.0
    %2600 = vmatpush1.msra.mxu0 %v2084
    %2601 = vmatprep.subr.mxu0 0.0
    %2602 = vmatpush1.msra.mxu0 %v2085
    %2603 = vmatprep.subr.mxu0 0.0
    %2604 = vmatpush1.msra.mxu0 %v2086
    %2605 = vmatprep.subr.mxu0 0.0
    %2606 = vmatpush1.msra.mxu0 %v2087
    %2607 = vmatprep.subr.mxu0 0.0
    %2608 = vmatpush1.msra.mxu0 %v2088
    %2609 = vmatprep.subr.mxu0 0.0
    %2610 = vmatpush1.msra.mxu0 %v2089
    %2611 = vmatprep.subr.mxu0 0.0
    %2612 = vmatpush1.msra.mxu0 %v2090
    %2613 = vmatprep.subr.mxu0 0.0
    %2614 = vmatpush1.msra.mxu0 %v2091
    %2615 = vmatprep.subr.mxu0 0.0
    %2616 = vmatpush1.msra.mxu0 %v2092
    %2617 = vmatprep.subr.mxu0 0.0
    %2618 = vmatpush1.msra.mxu0 %v2093
    %2619 = vmatprep.subr.mxu0 0.0
    %2620 = vmatpush1.msra.mxu0 %v2094
    %2621 = vmatprep.subr.mxu0 0.0
    %2622 = vmatpush1.msra.mxu0 %v2095
    %2623 = vmatprep.subr.mxu0 0.0
    %2624 = vmatpush1.msra.mxu0 %v2096
    %2625 = vmatprep.subr.mxu0 0.0
    %2626 = vmatpush1.msra.mxu0 %v2097
    %2627 = vmatprep.mubr.f32.mxu0 %v1461
    %2628 = vmatmul.mubr.f32.gmra.mrb[0].mxu0 %v1460
    %v2629 = vpop.f32.mrb[0].mxu0
    %v2630 = vadd.f32 %v2245, %v2629
    %v2631 = vpop.f32.mrb[0].mxu0
    %2632 = vmatprep.mubr.f32.mxu0 %v1470
    %2633 = vmatmul.mubr.f32.gmra.mrb[0].mxu0 %v1469
    %v2634 = vpop.f32.mrb[0].mxu0
    %v2635 = vadd.f32 %v2250, %v2634
    %v2636 = vpop.f32.mrb[0].mxu0
    %2637 = vmatprep.mubr.f32.mxu0 %v1479
    %2638 = vmatmul.mubr.f32.gmra.mrb[0].mxu0 %v1478
    %v2639 = vpop.f32.mrb[0].mxu0
    %v2640 = vadd.f32 %v2255, %v2639
    %v2641 = vpop.f32.mrb[0].mxu0
    %2642 = vmatprep.mubr.f32.mxu0 %v1488
    %2643 = vmatmul.mubr.f32.gmra.mrb[0].mxu0 %v1487
    %v2644 = vpop.f32.mrb[0].mxu0
    %v2645 = vadd.f32 %v2260, %v2644
    %v2646 = vpop.f32.mrb[0].mxu0
    %2647 = vmatprep.mubr.f32.mxu0 %v1497
    %2648 = vmatmul.mubr.f32.gmra.mrb[0].mxu0 %v1496
    %v2649 = vpop.f32.mrb[0].mxu0
    %v2650 = vadd.f32 %v2265, %v2649
    %v2651 = vpop.f32.mrb[0].mxu0
    %2652 = vmatprep.mubr.f32.mxu0 %v1506
    %2653 = vmatmul.mubr.f32.gmra.mrb[0].mxu0 %v1505
    %v2654 = vpop.f32.mrb[0].mxu0
    %v2655 = vadd.f32 %v2270, %v2654
    %v2656 = vpop.f32.mrb[0].mxu0
    %2657 = vmatprep.mubr.f32.mxu0 %v1515
    %2658 = vmatmul.mubr.f32.gmra.mrb[0].mxu0 %v1514
    %v2659 = vpop.f32.mrb[0].mxu0
    %v2660 = vadd.f32 %v2275, %v2659
    %v2661 = vpop.f32.mrb[0].mxu0
    %2662 = vmatprep.mubr.f32.mxu0 %v1524
    %2663 = vmatmul.mubr.f32.gmra.mrb[0].mxu0 %v1523
    %v2664 = vpop.f32.mrb[0].mxu0
    %v2665 = vadd.f32 %v2280, %v2664
    %v2666 = vpop.f32.mrb[0].mxu0
    %2667 = vmatprep.mubr.f32.mxu0 %v1533
    %2668 = vmatmul.mubr.f32.gmra.mrb[0].mxu0 %v1532
    %v2669 = vpop.f32.mrb[0].mxu0
    %v2670 = vadd.f32 %v2285, %v2669
    %v2671 = vpop.f32.mrb[0].mxu0
    %2672 = vmatprep.mubr.f32.mxu0 %v1542
    %2673 = vmatmul.mubr.f32.gmra.mrb[0].mxu0 %v1541
    %v2674 = vpop.f32.mrb[0].mxu0
    %v2675 = vadd.f32 %v2290, %v2674
    %v2676 = vpop.f32.mrb[0].mxu0
    %2677 = vmatprep.mubr.f32.mxu0 %v1551
    %2678 = vmatmul.mubr.f32.gmra.mrb[0].mxu0 %v1550
    %v2679 = vpop.f32.mrb[0].mxu0
    %v2680 = vadd.f32 %v2295, %v2679
    %v2681 = vpop.f32.mrb[0].mxu0
    %2682 = vmatprep.mubr.f32.mxu0 %v1560
    %2683 = vmatmul.mubr.f32.gmra.mrb[0].mxu0 %v1559
    %v2684 = vpop.f32.mrb[0].mxu0
    %v2685 = vadd.f32 %v2300, %v2684
    %v2686 = vpop.f32.mrb[0].mxu0
    %2687 = vmatprep.mubr.f32.mxu0 %v1569
    %2688 = vmatmul.mubr.f32.gmra.mrb[0].mxu0 %v1568
    %v2689 = vpop.f32.mrb[0].mxu0
    %v2690 = vadd.f32 %v2305, %v2689
    %v2691 = vpop.f32.mrb[0].mxu0
    %2692 = vmatprep.mubr.f32.mxu0 %v1578
    %2693 = vmatmul.mubr.f32.gmra.mrb[0].mxu0 %v1577
    %v2694 = vpop.f32.mrb[0].mxu0
    %v2695 = vadd.f32 %v2310, %v2694
    %v2696 = vpop.f32.mrb[0].mxu0
    %2697 = vmatprep.mubr.f32.mxu0 %v1587
    %2698 = vmatmul.mubr.f32.gmra.mrb[0].mxu0 %v1586
    %v2699 = vpop.f32.mrb[0].mxu0
    %v2700 = vadd.f32 %v2315, %v2699
    %v2701 = vpop.f32.mrb[0].mxu0
    %2702 = vmatprep.mubr.f32.mxu0 %v1596
    %2703 = vmatmul.mubr.f32.gmra.mrb[0].mxu0 %v1595
    %v2704 = vpop.f32.mrb[0].mxu0
    %v2705 = vadd.f32 %v2320, %v2704
    %v2706 = vpop.f32.mrb[0].mxu0
    %2707 = vmatprep.mubr.f32.mxu0 %v1605
    %2708 = vmatmul.mubr.f32.gmra.mrb[0].mxu0 %v1604
    %v2709 = vpop.f32.mrb[0].mxu0
    %v2710 = vadd.f32 %v2325, %v2709
    %v2711 = vpop.f32.mrb[0].mxu0
    %2712 = vmatprep.mubr.f32.mxu0 %v1614
    %2713 = vmatmul.mubr.f32.gmra.mrb[0].mxu0 %v1613
    %v2714 = vpop.f32.mrb[0].mxu0
    %v2715 = vadd.f32 %v2330, %v2714
    %v2716 = vpop.f32.mrb[0].mxu0
    %2717 = vmatprep.mubr.f32.mxu0 %v1623
    %2718 = vmatmul.mubr.f32.gmra.mrb[0].mxu0 %v1622
    %v2719 = vpop.f32.mrb[0].mxu0
    %v2720 = vadd.f32 %v2335, %v2719
    %v2721 = vpop.f32.mrb[0].mxu0
    %2722 = vmatprep.mubr.f32.mxu0 %v1632
    %2723 = vmatmul.mubr.f32.gmra.mrb[0].mxu0 %v1631
    %v2724 = vpop.f32.mrb[0].mxu0
    %v2725 = vadd.f32 %v2340, %v2724
    %v2726 = vpop.f32.mrb[0].mxu0
    %2727 = vmatprep.mubr.f32.mxu0 %v1641
    %2728 = vmatmul.mubr.f32.gmra.mrb[0].mxu0 %v1640
    %v2729 = vpop.f32.mrb[0].mxu0
    %v2730 = vadd.f32 %v2345, %v2729
    %v2731 = vpop.f32.mrb[0].mxu0
    %2732 = vmatprep.mubr.f32.mxu0 %v1650
    %2733 = vmatmul.mubr.f32.gmra.mrb[0].mxu0 %v1649
    %v2734 = vpop.f32.mrb[0].mxu0
    %v2735 = vadd.f32 %v2350, %v2734
    %v2736 = vpop.f32.mrb[0].mxu0
    %2737 = vmatprep.mubr.f32.mxu0 %v1659
    %2738 = vmatmul.mubr.f32.gmra.mrb[0].mxu0 %v1658
    %v2739 = vpop.f32.mrb[0].mxu0
    %v2740 = vadd.f32 %v2355, %v2739
    %v2741 = vpop.f32.mrb[0].mxu0
    %2742 = vmatprep.mubr.f32.mxu0 %v1668
    %2743 = vmatmul.mubr.f32.gmra.mrb[0].mxu0 %v1667
    %v2744 = vpop.f32.mrb[0].mxu0
    %v2745 = vadd.f32 %v2360, %v2744
    %v2746 = vpop.f32.mrb[0].mxu0
    %2747 = vmatprep.mubr.f32.mxu0 %v1677
    %2748 = vmatmul.mubr.f32.gmra.mrb[0].mxu0 %v1676
    %v2749 = vpop.f32.mrb[0].mxu0
    %v2750 = vadd.f32 %v2365, %v2749
    %v2751 = vpop.f32.mrb[0].mxu0
    %2752 = vmatprep.mubr.f32.mxu0 %v1686
    %2753 = vmatmul.mubr.f32.gmra.mrb[0].mxu0 %v1685
    %v2754 = vpop.f32.mrb[0].mxu0
    %v2755 = vadd.f32 %v2370, %v2754
    %v2756 = vpop.f32.mrb[0].mxu0
    %2757 = vmatprep.mubr.f32.mxu0 %v1695
    %2758 = vmatmul.mubr.f32.gmra.mrb[0].mxu0 %v1694
    %v2759 = vpop.f32.mrb[0].mxu0
    %v2760 = vadd.f32 %v2375, %v2759
    %v2761 = vpop.f32.mrb[0].mxu0
    %2762 = vmatprep.mubr.f32.mxu0 %v1704
    %2763 = vmatmul.mubr.f32.gmra.mrb[0].mxu0 %v1703
    %v2764 = vpop.f32.mrb[0].mxu0
    %v2765 = vadd.f32 %v2380, %v2764
    %v2766 = vpop.f32.mrb[0].mxu0
    %2767 = vmatprep.mubr.f32.mxu0 %v1713
    %2768 = vmatmul.mubr.f32.gmra.mrb[0].mxu0 %v1712
    %v2769 = vpop.f32.mrb[0].mxu0
    %v2770 = vadd.f32 %v2385, %v2769
    %v2771 = vpop.f32.mrb[0].mxu0
    %2772 = vmatprep.mubr.f32.mxu0 %v1722
    %2773 = vmatmul.mubr.f32.gmra.mrb[0].mxu0 %v1721
    %v2774 = vpop.f32.mrb[0].mxu0
    %v2775 = vadd.f32 %v2390, %v2774
    %v2776 = vpop.f32.mrb[0].mxu0
    %2777 = vmatprep.mubr.f32.mxu0 %v1731
    %2778 = vmatmul.mubr.f32.gmra.mrb[0].mxu0 %v1730
    %v2779 = vpop.f32.mrb[0].mxu0
    %v2780 = vadd.f32 %v2395, %v2779
    %v2781 = vpop.f32.mrb[0].mxu0
    %2782 = vmatprep.mubr.f32.mxu0 %v1740
    %2783 = vmatmul.mubr.f32.gmra.mrb[0].mxu0 %v1739
    %v2784 = vpop.f32.mrb[0].mxu0
    %v2785 = vadd.f32 %v2400, %v2784
    %v2786 = vpop.f32.mrb[0].mxu0
    %2787 = vmatprep.mubr.f32.mxu0 %v1749
    %2788 = vmatmul.mubr.f32.gmra.mrb[0].mxu0 %v1748
    %v2789 = vpop.f32.mrb[0].mxu0
    %v2790 = vadd.f32 %v2405, %v2789
    %v2791 = vpop.f32.mrb[0].mxu0
    %2792 = vmatprep.mubr.f32.mxu0 %v1758
    %2793 = vmatmul.mubr.f32.gmra.mrb[0].mxu0 %v1757
    %v2794 = vpop.f32.mrb[0].mxu0
    %v2795 = vadd.f32 %v2410, %v2794
    %v2796 = vpop.f32.mrb[0].mxu0
    %2797 = vmatprep.mubr.f32.mxu0 %v1767
    %2798 = vmatmul.mubr.f32.gmra.mrb[0].mxu0 %v1766
    %v2799 = vpop.f32.mrb[0].mxu0
    %v2800 = vadd.f32 %v2415, %v2799
    %v2801 = vpop.f32.mrb[0].mxu0
    %2802 = vmatprep.mubr.f32.mxu0 %v1776
    %2803 = vmatmul.mubr.f32.gmra.mrb[0].mxu0 %v1775
    %v2804 = vpop.f32.mrb[0].mxu0
    %v2805 = vadd.f32 %v2420, %v2804
    %v2806 = vpop.f32.mrb[0].mxu0
    %2807 = vmatprep.mubr.f32.mxu0 %v1785
    %2808 = vmatmul.mubr.f32.gmra.mrb[0].mxu0 %v1784
    %v2809 = vpop.f32.mrb[0].mxu0
    %v2810 = vadd.f32 %v2425, %v2809
    %v2811 = vpop.f32.mrb[0].mxu0
    %2812 = vmatprep.mubr.f32.mxu0 %v1794
    %2813 = vmatmul.mubr.f32.gmra.mrb[0].mxu0 %v1793
    %v2814 = vpop.f32.mrb[0].mxu0
    %v2815 = vadd.f32 %v2430, %v2814
    %v2816 = vpop.f32.mrb[0].mxu0
    %2817 = vmatprep.mubr.f32.mxu0 %v1803
    %2818 = vmatmul.mubr.f32.gmra.mrb[0].mxu0 %v1802
    %v2819 = vpop.f32.mrb[0].mxu0
    %v2820 = vadd.f32 %v2435, %v2819
    %v2821 = vpop.f32.mrb[0].mxu0
    %2822 = vmatprep.mubr.f32.mxu0 %v1812
    %2823 = vmatmul.mubr.f32.gmra.mrb[0].mxu0 %v1811
    %v2824 = vpop.f32.mrb[0].mxu0
    %v2825 = vadd.f32 %v2440, %v2824
    %v2826 = vpop.f32.mrb[0].mxu0
    %2827 = vmatprep.mubr.f32.mxu0 %v1821
    %2828 = vmatmul.mubr.f32.gmra.mrb[0].mxu0 %v1820
    %v2829 = vpop.f32.mrb[0].mxu0
    %v2830 = vadd.f32 %v2445, %v2829
    %v2831 = vpop.f32.mrb[0].mxu0
    %2832 = vmatprep.mubr.f32.mxu0 %v1830
    %2833 = vmatmul.mubr.f32.gmra.mrb[0].mxu0 %v1829
    %v2834 = vpop.f32.mrb[0].mxu0
    %v2835 = vadd.f32 %v2450, %v2834
    %v2836 = vpop.f32.mrb[0].mxu0
    %2837 = vmatprep.mubr.f32.mxu0 %v1839
    %2838 = vmatmul.mubr.f32.gmra.mrb[0].mxu0 %v1838
    %v2839 = vpop.f32.mrb[0].mxu0
    %v2840 = vadd.f32 %v2455, %v2839
    %v2841 = vpop.f32.mrb[0].mxu0
    %2842 = vmatprep.mubr.f32.mxu0 %v1848
    %2843 = vmatmul.mubr.f32.gmra.mrb[0].mxu0 %v1847
    %v2844 = vpop.f32.mrb[0].mxu0
    %v2845 = vadd.f32 %v2460, %v2844
    %v2846 = vpop.f32.mrb[0].mxu0
    %2847 = vmatprep.mubr.f32.mxu0 %v1857
    %2848 = vmatmul.mubr.f32.gmra.mrb[0].mxu0 %v1856
    %v2849 = vpop.f32.mrb[0].mxu0
    %v2850 = vadd.f32 %v2465, %v2849
    %v2851 = vpop.f32.mrb[0].mxu0
    %2852 = vmatprep.mubr.f32.mxu0 %v1866
    %2853 = vmatmul.mubr.f32.gmra.mrb[0].mxu0 %v1865
    %v2854 = vpop.f32.mrb[0].mxu0
    %v2855 = vadd.f32 %v2470, %v2854
    %v2856 = vpop.f32.mrb[0].mxu0
    %2857 = vmatprep.mubr.f32.mxu0 %v1875
    %2858 = vmatmul.mubr.f32.gmra.mrb[0].mxu0 %v1874
    %v2859 = vpop.f32.mrb[0].mxu0
    %v2860 = vadd.f32 %v2475, %v2859
    %v2861 = vpop.f32.mrb[0].mxu0
    %2862 = vmatprep.mubr.f32.mxu0 %v1884
    %2863 = vmatmul.mubr.f32.gmra.mrb[0].mxu0 %v1883
    %v2864 = vpop.f32.mrb[0].mxu0
    %v2865 = vadd.f32 %v2480, %v2864
    %v2866 = vpop.f32.mrb[0].mxu0
    %2867 = vmatprep.mubr.f32.mxu0 %v1893
    %2868 = vmatmul.mubr.f32.gmra.mrb[0].mxu0 %v1892
    %v2869 = vpop.f32.mrb[0].mxu0
    %v2870 = vadd.f32 %v2485, %v2869
    %v2871 = vpop.f32.mrb[0].mxu0
    %2872 = vmatprep.mubr.f32.mxu0 %v1902
    %2873 = vmatmul.mubr.f32.gmra.mrb[0].mxu0 %v1901
    %v2874 = vpop.f32.mrb[0].mxu0
    %v2875 = vadd.f32 %v2490, %v2874
    %v2876 = vpop.f32.mrb[0].mxu0
    %2877 = vmatprep.mubr.f32.mxu0 %v1911
    %2878 = vmatmul.mubr.f32.gmra.mrb[0].mxu0 %v1910
    %v2879 = vpop.f32.mrb[0].mxu0
    %v2880 = vadd.f32 %v2495, %v2879
    %v2881 = vpop.f32.mrb[0].mxu0
    %2882 = vmatprep.mubr.f32.mxu0 %v1920
    %2883 = vmatmul.mubr.f32.gmra.mrb[0].mxu0 %v1919
    %v2884 = vpop.f32.mrb[0].mxu0
    %v2885 = vadd.f32 %v2500, %v2884
    %v2886 = vpop.f32.mrb[0].mxu0
    %2887 = vmatprep.mubr.f32.mxu0 %v1929
    %2888 = vmatmul.mubr.f32.gmra.mrb[0].mxu0 %v1928
    %v2889 = vpop.f32.mrb[0].mxu0
    %v2890 = vadd.f32 %v2505, %v2889
    %v2891 = vpop.f32.mrb[0].mxu0
    %2892 = vmatprep.mubr.f32.mxu0 %v1938
    %2893 = vmatmul.mubr.f32.gmra.mrb[0].mxu0 %v1937
    %v2894 = vpop.f32.mrb[0].mxu0
    %v2895 = vadd.f32 %v2510, %v2894
    %v2896 = vpop.f32.mrb[0].mxu0
    %2897 = vmatprep.mubr.f32.mxu0 %v1947
    %2898 = vmatmul.mubr.f32.gmra.mrb[0].mxu0 %v1946
    %v2899 = vpop.f32.mrb[0].mxu0
    %v2900 = vadd.f32 %v2515, %v2899
    %v2901 = vpop.f32.mrb[0].mxu0
    %2902 = vmatprep.mubr.f32.mxu0 %v1956
    %2903 = vmatmul.mubr.f32.gmra.mrb[0].mxu0 %v1955
    %v2904 = vpop.f32.mrb[0].mxu0
    %v2905 = vadd.f32 %v2520, %v2904
    %v2906 = vpop.f32.mrb[0].mxu0
    %2907 = vmatprep.mubr.f32.mxu0 %v1965
    %2908 = vmatmul.mubr.f32.gmra.mrb[0].mxu0 %v1964
    %v2909 = vpop.f32.mrb[0].mxu0
    %v2910 = vadd.f32 %v2525, %v2909
    %v2911 = vpop.f32.mrb[0].mxu0
    %2912 = vmatprep.mubr.f32.mxu0 %v1974
    %2913 = vmatmul.mubr.f32.gmra.mrb[0].mxu0 %v1973
    %v2914 = vpop.f32.mrb[0].mxu0
    %v2915 = vadd.f32 %v2530, %v2914
    %v2916 = vpop.f32.mrb[0].mxu0
    %2917 = vmatprep.mubr.f32.mxu0 %v1983
    %2918 = vmatmul.mubr.f32.gmra.mrb[0].mxu0 %v1982
    %v2919 = vpop.f32.mrb[0].mxu0
    %v2920 = vadd.f32 %v2535, %v2919
    %v2921 = vpop.f32.mrb[0].mxu0
    %2922 = vmatprep.mubr.f32.mxu0 %v1992
    %2923 = vmatmul.mubr.f32.gmra.mrb[0].mxu0 %v1991
    %v2924 = vpop.f32.mrb[0].mxu0
    %v2925 = vadd.f32 %v2540, %v2924
    %v2926 = vpop.f32.mrb[0].mxu0
    %2927 = vmatprep.mubr.f32.mxu0 %v2001
    %2928 = vmatmul.mubr.f32.gmra.mrb[0].mxu0 %v2000
    %v2929 = vpop.f32.mrb[0].mxu0
    %v2930 = vadd.f32 %v2545, %v2929
    %v2931 = vpop.f32.mrb[0].mxu0
    %2932 = vmatprep.mubr.f32.mxu0 %v2010
    %2933 = vmatmul.mubr.f32.gmra.mrb[0].mxu0 %v2009
    %v2934 = vpop.f32.mrb[0].mxu0
    %v2935 = vadd.f32 %v2550, %v2934
    %v2936 = vpop.f32.mrb[0].mxu0
    %2937 = vmatprep.mubr.f32.mxu0 %v2019
    %2938 = vmatmul.mubr.f32.gmra.mrb[0].mxu0 %v2018
    %v2939 = vpop.f32.mrb[0].mxu0
    %v2940 = vadd.f32 %v2555, %v2939
    %v2941 = vpop.f32.mrb[0].mxu0
    %2942 = vmatprep.mubr.f32.mxu0 %v2028
    %2943 = vmatmul.mubr.f32.gmra.mrb[0].mxu0 %v2027
    %v2944 = vpop.f32.mrb[0].mxu0
    %v2945 = vadd.f32 %v2560, %v2944
    %v2946 = vpop.f32.mrb[0].mxu0
    %2947 = vdwg.mxu0
    %2948 = vmatprep.subr.mxu0 0.0
    %2949 = vmatpush1.msra.mxu0 %v2098
    %2950 = vmatprep.subr.mxu0 0.0
    %2951 = vmatpush1.msra.mxu0 %v2099
    %2952 = vmatprep.subr.mxu0 0.0
    %2953 = vmatpush1.msra.mxu0 %v2100
    %2954 = vmatprep.subr.mxu0 0.0
    %2955 = vmatpush1.msra.mxu0 %v2101
    %2956 = vmatprep.subr.mxu0 0.0
    %2957 = vmatpush1.msra.mxu0 %v2102
    %2958 = vmatprep.subr.mxu0 0.0
    %2959 = vmatpush1.msra.mxu0 %v2103
    %2960 = vmatprep.subr.mxu0 0.0
    %2961 = vmatpush1.msra.mxu0 %v2104
    %2962 = vmatprep.subr.mxu0 0.0
    %2963 = vmatpush1.msra.mxu0 %v2105
    %2964 = vmatprep.subr.mxu0 0.0
    %2965 = vmatpush1.msra.mxu0 %v2106
    %2966 = vmatprep.subr.mxu0 0.0
    %2967 = vmatpush1.msra.mxu0 %v2107
    %2968 = vmatprep.subr.mxu0 0.0
    %2969 = vmatpush1.msra.mxu0 %v2108
    %2970 = vmatprep.subr.mxu0 0.0
    %2971 = vmatpush1.msra.mxu0 %v2109
    %2972 = vmatprep.subr.mxu0 0.0
    %2973 = vmatpush1.msra.mxu0 %v2110
    %2974 = vmatprep.subr.mxu0 0.0
    %2975 = vmatpush1.msra.mxu0 %v2111
    %2976 = vmatprep.subr.mxu0 0.0
    %2977 = vmatpush1.msra.mxu0 %v2112
    %2978 = vmatprep.subr.mxu0 0.0
    %2979 = vmatpush1.msra.mxu0 %v2113
    %2980 = vmatprep.subr.mxu0 0.0
    %2981 = vmatpush1.msra.mxu0 %v2114
    %2982 = vmatprep.subr.mxu0 0.0
    %2983 = vmatpush1.msra.mxu0 %v2115
    %2984 = vmatprep.subr.mxu0 0.0
    %2985 = vmatpush1.msra.mxu0 %v2116
    %2986 = vmatprep.subr.mxu0 0.0
    %2987 = vmatpush1.msra.mxu0 %v2117
    %2988 = vmatprep.subr.mxu0 0.0
    %2989 = vmatpush1.msra.mxu0 %v2118
    %2990 = vmatprep.subr.mxu0 0.0
    %2991 = vmatpush1.msra.mxu0 %v2119
    %2992 = vmatprep.subr.mxu0 0.0
    %2993 = vmatpush1.msra.mxu0 %v2120
    %2994 = vmatprep.subr.mxu0 0.0
    %2995 = vmatpush1.msra.mxu0 %v2121
    %2996 = vmatprep.subr.mxu0 0.0
    %2997 = vmatpush1.msra.mxu0 %v2122
    %2998 = vmatprep.subr.mxu0 0.0
    %2999 = vmatpush1.msra.mxu0 %v2123
    %3000 = vmatprep.subr.mxu0 0.0
    %3001 = vmatpush1.msra.mxu0 %v2124
    %3002 = vmatprep.subr.mxu0 0.0
    %3003 = vmatpush1.msra.mxu0 %v2125
    %3004 = vmatprep.subr.mxu0 0.0
    %3005 = vmatpush1.msra.mxu0 %v2126
    %3006 = vmatprep.subr.mxu0 0.0
    %3007 = vmatpush1.msra.mxu0 %v2127
    %3008 = vmatprep.subr.mxu0 0.0
    %3009 = vmatpush1.msra.mxu0 %v2128
    %3010 = vmatprep.subr.mxu0 0.0
    %3011 = vmatpush1.msra.mxu0 %v2129
    %3012 = vmatprep.mubr.f32.mxu0 %v1463
    %3013 = vmatmul.mubr.f32.gmra.mrb[0].mxu0 %v1462
    %v3014 = vpop.f32.mrb[0].mxu0
    %v3015 = vadd.f32 %v2630, %v3014
    %v3016 = vpop.f32.mrb[0].mxu0
    %3017 = vmatprep.mubr.f32.mxu0 %v1472
    %3018 = vmatmul.mubr.f32.gmra.mrb[0].mxu0 %v1471
    %v3019 = vpop.f32.mrb[0].mxu0
    %v3020 = vadd.f32 %v2635, %v3019
    %v3021 = vpop.f32.mrb[0].mxu0
    %3022 = vmatprep.mubr.f32.mxu0 %v1481
    %3023 = vmatmul.mubr.f32.gmra.mrb[0].mxu0 %v1480
    %v3024 = vpop.f32.mrb[0].mxu0
    %v3025 = vadd.f32 %v2640, %v3024
    %v3026 = vpop.f32.mrb[0].mxu0
    %3027 = vmatprep.mubr.f32.mxu0 %v1490
    %3028 = vmatmul.mubr.f32.gmra.mrb[0].mxu0 %v1489
    %v3029 = vpop.f32.mrb[0].mxu0
    %v3030 = vadd.f32 %v2645, %v3029
    %v3031 = vpop.f32.mrb[0].mxu0
    %3032 = vmatprep.mubr.f32.mxu0 %v1499
    %3033 = vmatmul.mubr.f32.gmra.mrb[0].mxu0 %v1498
    %v3034 = vpop.f32.mrb[0].mxu0
    %v3035 = vadd.f32 %v2650, %v3034
    %v3036 = vpop.f32.mrb[0].mxu0
    %3037 = vmatprep.mubr.f32.mxu0 %v1508
    %3038 = vmatmul.mubr.f32.gmra.mrb[0].mxu0 %v1507
    %v3039 = vpop.f32.mrb[0].mxu0
    %v3040 = vadd.f32 %v2655, %v3039
    %v3041 = vpop.f32.mrb[0].mxu0
    %3042 = vmatprep.mubr.f32.mxu0 %v1517
    %3043 = vmatmul.mubr.f32.gmra.mrb[0].mxu0 %v1516
    %v3044 = vpop.f32.mrb[0].mxu0
    %v3045 = vadd.f32 %v2660, %v3044
    %v3046 = vpop.f32.mrb[0].mxu0
    %3047 = vmatprep.mubr.f32.mxu0 %v1526
    %3048 = vmatmul.mubr.f32.gmra.mrb[0].mxu0 %v1525
    %v3049 = vpop.f32.mrb[0].mxu0
    %v3050 = vadd.f32 %v2665, %v3049
    %v3051 = vpop.f32.mrb[0].mxu0
    %3052 = vmatprep.mubr.f32.mxu0 %v1535
    %3053 = vmatmul.mubr.f32.gmra.mrb[0].mxu0 %v1534
    %v3054 = vpop.f32.mrb[0].mxu0
    %v3055 = vadd.f32 %v2670, %v3054
    %v3056 = vpop.f32.mrb[0].mxu0
    %3057 = vmatprep.mubr.f32.mxu0 %v1544
    %3058 = vmatmul.mubr.f32.gmra.mrb[0].mxu0 %v1543
    %v3059 = vpop.f32.mrb[0].mxu0
    %v3060 = vadd.f32 %v2675, %v3059
    %v3061 = vpop.f32.mrb[0].mxu0
    %3062 = vmatprep.mubr.f32.mxu0 %v1553
    %3063 = vmatmul.mubr.f32.gmra.mrb[0].mxu0 %v1552
    %v3064 = vpop.f32.mrb[0].mxu0
    %v3065 = vadd.f32 %v2680, %v3064
    %v3066 = vpop.f32.mrb[0].mxu0
    %3067 = vmatprep.mubr.f32.mxu0 %v1562
    %3068 = vmatmul.mubr.f32.gmra.mrb[0].mxu0 %v1561
    %v3069 = vpop.f32.mrb[0].mxu0
    %v3070 = vadd.f32 %v2685, %v3069
    %v3071 = vpop.f32.mrb[0].mxu0
    %3072 = vmatprep.mubr.f32.mxu0 %v1571
    %3073 = vmatmul.mubr.f32.gmra.mrb[0].mxu0 %v1570
    %v3074 = vpop.f32.mrb[0].mxu0
    %v3075 = vadd.f32 %v2690, %v3074
    %v3076 = vpop.f32.mrb[0].mxu0
    %3077 = vmatprep.mubr.f32.mxu0 %v1580
    %3078 = vmatmul.mubr.f32.gmra.mrb[0].mxu0 %v1579
    %v3079 = vpop.f32.mrb[0].mxu0
    %v3080 = vadd.f32 %v2695, %v3079
    %v3081 = vpop.f32.mrb[0].mxu0
    %3082 = vmatprep.mubr.f32.mxu0 %v1589
    %3083 = vmatmul.mubr.f32.gmra.mrb[0].mxu0 %v1588
    %v3084 = vpop.f32.mrb[0].mxu0
    %v3085 = vadd.f32 %v2700, %v3084
    %v3086 = vpop.f32.mrb[0].mxu0
    %3087 = vmatprep.mubr.f32.mxu0 %v1598
    %3088 = vmatmul.mubr.f32.gmra.mrb[0].mxu0 %v1597
    %v3089 = vpop.f32.mrb[0].mxu0
    %v3090 = vadd.f32 %v2705, %v3089
    %v3091 = vpop.f32.mrb[0].mxu0
    %3092 = vmatprep.mubr.f32.mxu0 %v1607
    %3093 = vmatmul.mubr.f32.gmra.mrb[0].mxu0 %v1606
    %v3094 = vpop.f32.mrb[0].mxu0
    %v3095 = vadd.f32 %v2710, %v3094
    %v3096 = vpop.f32.mrb[0].mxu0
    %3097 = vmatprep.mubr.f32.mxu0 %v1616
    %3098 = vmatmul.mubr.f32.gmra.mrb[0].mxu0 %v1615
    %v3099 = vpop.f32.mrb[0].mxu0
    %v3100 = vadd.f32 %v2715, %v3099
    %v3101 = vpop.f32.mrb[0].mxu0
    %3102 = vmatprep.mubr.f32.mxu0 %v1625
    %3103 = vmatmul.mubr.f32.gmra.mrb[0].mxu0 %v1624
    %v3104 = vpop.f32.mrb[0].mxu0
    %v3105 = vadd.f32 %v2720, %v3104
    %v3106 = vpop.f32.mrb[0].mxu0
    %3107 = vmatprep.mubr.f32.mxu0 %v1634
    %3108 = vmatmul.mubr.f32.gmra.mrb[0].mxu0 %v1633
    %v3109 = vpop.f32.mrb[0].mxu0
    %v3110 = vadd.f32 %v2725, %v3109
    %v3111 = vpop.f32.mrb[0].mxu0
    %3112 = vmatprep.mubr.f32.mxu0 %v1643
    %3113 = vmatmul.mubr.f32.gmra.mrb[0].mxu0 %v1642
    %v3114 = vpop.f32.mrb[0].mxu0
    %v3115 = vadd.f32 %v2730, %v3114
    %v3116 = vpop.f32.mrb[0].mxu0
    %3117 = vmatprep.mubr.f32.mxu0 %v1652
    %3118 = vmatmul.mubr.f32.gmra.mrb[0].mxu0 %v1651
    %v3119 = vpop.f32.mrb[0].mxu0
    %v3120 = vadd.f32 %v2735, %v3119
    %v3121 = vpop.f32.mrb[0].mxu0
    %3122 = vmatprep.mubr.f32.mxu0 %v1661
    %3123 = vmatmul.mubr.f32.gmra.mrb[0].mxu0 %v1660
    %v3124 = vpop.f32.mrb[0].mxu0
    %v3125 = vadd.f32 %v2740, %v3124
    %v3126 = vpop.f32.mrb[0].mxu0
    %3127 = vmatprep.mubr.f32.mxu0 %v1670
    %3128 = vmatmul.mubr.f32.gmra.mrb[0].mxu0 %v1669
    %v3129 = vpop.f32.mrb[0].mxu0
    %v3130 = vadd.f32 %v2745, %v3129
    %v3131 = vpop.f32.mrb[0].mxu0
    %3132 = vmatprep.mubr.f32.mxu0 %v1679
    %3133 = vmatmul.mubr.f32.gmra.mrb[0].mxu0 %v1678
    %v3134 = vpop.f32.mrb[0].mxu0
    %v3135 = vadd.f32 %v2750, %v3134
    %v3136 = vpop.f32.mrb[0].mxu0
    %3137 = vmatprep.mubr.f32.mxu0 %v1688
    %3138 = vmatmul.mubr.f32.gmra.mrb[0].mxu0 %v1687
    %v3139 = vpop.f32.mrb[0].mxu0
    %v3140 = vadd.f32 %v2755, %v3139
    %v3141 = vpop.f32.mrb[0].mxu0
    %3142 = vmatprep.mubr.f32.mxu0 %v1697
    %3143 = vmatmul.mubr.f32.gmra.mrb[0].mxu0 %v1696
    %v3144 = vpop.f32.mrb[0].mxu0
    %v3145 = vadd.f32 %v2760, %v3144
    %v3146 = vpop.f32.mrb[0].mxu0
    %3147 = vmatprep.mubr.f32.mxu0 %v1706
    %3148 = vmatmul.mubr.f32.gmra.mrb[0].mxu0 %v1705
    %v3149 = vpop.f32.mrb[0].mxu0
    %v3150 = vadd.f32 %v2765, %v3149
    %v3151 = vpop.f32.mrb[0].mxu0
    %3152 = vmatprep.mubr.f32.mxu0 %v1715
    %3153 = vmatmul.mubr.f32.gmra.mrb[0].mxu0 %v1714
    %v3154 = vpop.f32.mrb[0].mxu0
    %v3155 = vadd.f32 %v2770, %v3154
    %v3156 = vpop.f32.mrb[0].mxu0
    %3157 = vmatprep.mubr.f32.mxu0 %v1724
    %3158 = vmatmul.mubr.f32.gmra.mrb[0].mxu0 %v1723
    %v3159 = vpop.f32.mrb[0].mxu0
    %v3160 = vadd.f32 %v2775, %v3159
    %v3161 = vpop.f32.mrb[0].mxu0
    %3162 = vmatprep.mubr.f32.mxu0 %v1733
    %3163 = vmatmul.mubr.f32.gmra.mrb[0].mxu0 %v1732
    %v3164 = vpop.f32.mrb[0].mxu0
    %v3165 = vadd.f32 %v2780, %v3164
    %v3166 = vpop.f32.mrb[0].mxu0
    %3167 = vmatprep.mubr.f32.mxu0 %v1742
    %3168 = vmatmul.mubr.f32.gmra.mrb[0].mxu0 %v1741
    %v3169 = vpop.f32.mrb[0].mxu0
    %v3170 = vadd.f32 %v2785, %v3169
    %v3171 = vpop.f32.mrb[0].mxu0
    %3172 = vmatprep.mubr.f32.mxu0 %v1751
    %3173 = vmatmul.mubr.f32.gmra.mrb[0].mxu0 %v1750
    %v3174 = vpop.f32.mrb[0].mxu0
    %v3175 = vadd.f32 %v2790, %v3174
    %v3176 = vpop.f32.mrb[0].mxu0
    %3177 = vmatprep.mubr.f32.mxu0 %v1760
    %3178 = vmatmul.mubr.f32.gmra.mrb[0].mxu0 %v1759
    %v3179 = vpop.f32.mrb[0].mxu0
    %v3180 = vadd.f32 %v2795, %v3179
    %v3181 = vpop.f32.mrb[0].mxu0
    %3182 = vmatprep.mubr.f32.mxu0 %v1769
    %3183 = vmatmul.mubr.f32.gmra.mrb[0].mxu0 %v1768
    %v3184 = vpop.f32.mrb[0].mxu0
    %v3185 = vadd.f32 %v2800, %v3184
    %v3186 = vpop.f32.mrb[0].mxu0
    %3187 = vmatprep.mubr.f32.mxu0 %v1778
    %3188 = vmatmul.mubr.f32.gmra.mrb[0].mxu0 %v1777
    %v3189 = vpop.f32.mrb[0].mxu0
    %v3190 = vadd.f32 %v2805, %v3189
    %v3191 = vpop.f32.mrb[0].mxu0
    %3192 = vmatprep.mubr.f32.mxu0 %v1787
    %3193 = vmatmul.mubr.f32.gmra.mrb[0].mxu0 %v1786
    %v3194 = vpop.f32.mrb[0].mxu0
    %v3195 = vadd.f32 %v2810, %v3194
    %v3196 = vpop.f32.mrb[0].mxu0
    %3197 = vmatprep.mubr.f32.mxu0 %v1796
    %3198 = vmatmul.mubr.f32.gmra.mrb[0].mxu0 %v1795
    %v3199 = vpop.f32.mrb[0].mxu0
    %v3200 = vadd.f32 %v2815, %v3199
    %v3201 = vpop.f32.mrb[0].mxu0
    %3202 = vmatprep.mubr.f32.mxu0 %v1805
    %3203 = vmatmul.mubr.f32.gmra.mrb[0].mxu0 %v1804
    %v3204 = vpop.f32.mrb[0].mxu0
    %v3205 = vadd.f32 %v2820, %v3204
    %v3206 = vpop.f32.mrb[0].mxu0
    %3207 = vmatprep.mubr.f32.mxu0 %v1814
    %3208 = vmatmul.mubr.f32.gmra.mrb[0].mxu0 %v1813
    %v3209 = vpop.f32.mrb[0].mxu0
    %v3210 = vadd.f32 %v2825, %v3209
    %v3211 = vpop.f32.mrb[0].mxu0
    %3212 = vmatprep.mubr.f32.mxu0 %v1823
    %3213 = vmatmul.mubr.f32.gmra.mrb[0].mxu0 %v1822
    %v3214 = vpop.f32.mrb[0].mxu0
    %v3215 = vadd.f32 %v2830, %v3214
    %v3216 = vpop.f32.mrb[0].mxu0
    %3217 = vmatprep.mubr.f32.mxu0 %v1832
    %3218 = vmatmul.mubr.f32.gmra.mrb[0].mxu0 %v1831
    %v3219 = vpop.f32.mrb[0].mxu0
    %v3220 = vadd.f32 %v2835, %v3219
    %v3221 = vpop.f32.mrb[0].mxu0
    %3222 = vmatprep.mubr.f32.mxu0 %v1841
    %3223 = vmatmul.mubr.f32.gmra.mrb[0].mxu0 %v1840
    %v3224 = vpop.f32.mrb[0].mxu0
    %v3225 = vadd.f32 %v2840, %v3224
    %v3226 = vpop.f32.mrb[0].mxu0
    %3227 = vmatprep.mubr.f32.mxu0 %v1850
    %3228 = vmatmul.mubr.f32.gmra.mrb[0].mxu0 %v1849
    %v3229 = vpop.f32.mrb[0].mxu0
    %v3230 = vadd.f32 %v2845, %v3229
    %v3231 = vpop.f32.mrb[0].mxu0
    %3232 = vmatprep.mubr.f32.mxu0 %v1859
    %3233 = vmatmul.mubr.f32.gmra.mrb[0].mxu0 %v1858
    %v3234 = vpop.f32.mrb[0].mxu0
    %v3235 = vadd.f32 %v2850, %v3234
    %v3236 = vpop.f32.mrb[0].mxu0
    %3237 = vmatprep.mubr.f32.mxu0 %v1868
    %3238 = vmatmul.mubr.f32.gmra.mrb[0].mxu0 %v1867
    %v3239 = vpop.f32.mrb[0].mxu0
    %v3240 = vadd.f32 %v2855, %v3239
    %v3241 = vpop.f32.mrb[0].mxu0
    %3242 = vmatprep.mubr.f32.mxu0 %v1877
    %3243 = vmatmul.mubr.f32.gmra.mrb[0].mxu0 %v1876
    %v3244 = vpop.f32.mrb[0].mxu0
    %v3245 = vadd.f32 %v2860, %v3244
    %v3246 = vpop.f32.mrb[0].mxu0
    %3247 = vmatprep.mubr.f32.mxu0 %v1886
    %3248 = vmatmul.mubr.f32.gmra.mrb[0].mxu0 %v1885
    %v3249 = vpop.f32.mrb[0].mxu0
    %v3250 = vadd.f32 %v2865, %v3249
    %v3251 = vpop.f32.mrb[0].mxu0
    %3252 = vmatprep.mubr.f32.mxu0 %v1895
    %3253 = vmatmul.mubr.f32.gmra.mrb[0].mxu0 %v1894
    %v3254 = vpop.f32.mrb[0].mxu0
    %v3255 = vadd.f32 %v2870, %v3254
    %v3256 = vpop.f32.mrb[0].mxu0
    %3257 = vmatprep.mubr.f32.mxu0 %v1904
    %3258 = vmatmul.mubr.f32.gmra.mrb[0].mxu0 %v1903
    %v3259 = vpop.f32.mrb[0].mxu0
    %v3260 = vadd.f32 %v2875, %v3259
    %v3261 = vpop.f32.mrb[0].mxu0
    %3262 = vmatprep.mubr.f32.mxu0 %v1913
    %3263 = vmatmul.mubr.f32.gmra.mrb[0].mxu0 %v1912
    %v3264 = vpop.f32.mrb[0].mxu0
    %v3265 = vadd.f32 %v2880, %v3264
    %v3266 = vpop.f32.mrb[0].mxu0
    %3267 = vmatprep.mubr.f32.mxu0 %v1922
    %3268 = vmatmul.mubr.f32.gmra.mrb[0].mxu0 %v1921
    %v3269 = vpop.f32.mrb[0].mxu0
    %v3270 = vadd.f32 %v2885, %v3269
    %v3271 = vpop.f32.mrb[0].mxu0
    %3272 = vmatprep.mubr.f32.mxu0 %v1931
    %3273 = vmatmul.mubr.f32.gmra.mrb[0].mxu0 %v1930
    %v3274 = vpop.f32.mrb[0].mxu0
    %v3275 = vadd.f32 %v2890, %v3274
    %v3276 = vpop.f32.mrb[0].mxu0
    %3277 = vmatprep.mubr.f32.mxu0 %v1940
    %3278 = vmatmul.mubr.f32.gmra.mrb[0].mxu0 %v1939
    %v3279 = vpop.f32.mrb[0].mxu0
    %v3280 = vadd.f32 %v2895, %v3279
    %v3281 = vpop.f32.mrb[0].mxu0
    %3282 = vmatprep.mubr.f32.mxu0 %v1949
    %3283 = vmatmul.mubr.f32.gmra.mrb[0].mxu0 %v1948
    %v3284 = vpop.f32.mrb[0].mxu0
    %v3285 = vadd.f32 %v2900, %v3284
    %v3286 = vpop.f32.mrb[0].mxu0
    %3287 = vmatprep.mubr.f32.mxu0 %v1958
    %3288 = vmatmul.mubr.f32.gmra.mrb[0].mxu0 %v1957
    %v3289 = vpop.f32.mrb[0].mxu0
    %v3290 = vadd.f32 %v2905, %v3289
    %v3291 = vpop.f32.mrb[0].mxu0
    %3292 = vmatprep.mubr.f32.mxu0 %v1967
    %3293 = vmatmul.mubr.f32.gmra.mrb[0].mxu0 %v1966
    %v3294 = vpop.f32.mrb[0].mxu0
    %v3295 = vadd.f32 %v2910, %v3294
    %v3296 = vpop.f32.mrb[0].mxu0
    %3297 = vmatprep.mubr.f32.mxu0 %v1976
    %3298 = vmatmul.mubr.f32.gmra.mrb[0].mxu0 %v1975
    %v3299 = vpop.f32.mrb[0].mxu0
    %v3300 = vadd.f32 %v2915, %v3299
    %v3301 = vpop.f32.mrb[0].mxu0
    %3302 = vmatprep.mubr.f32.mxu0 %v1985
    %3303 = vmatmul.mubr.f32.gmra.mrb[0].mxu0 %v1984
    %v3304 = vpop.f32.mrb[0].mxu0
    %v3305 = vadd.f32 %v2920, %v3304
    %v3306 = vpop.f32.mrb[0].mxu0
    %3307 = vmatprep.mubr.f32.mxu0 %v1994
    %3308 = vmatmul.mubr.f32.gmra.mrb[0].mxu0 %v1993
    %v3309 = vpop.f32.mrb[0].mxu0
    %v3310 = vadd.f32 %v2925, %v3309
    %v3311 = vpop.f32.mrb[0].mxu0
    %3312 = vmatprep.mubr.f32.mxu0 %v2003
    %3313 = vmatmul.mubr.f32.gmra.mrb[0].mxu0 %v2002
    %v3314 = vpop.f32.mrb[0].mxu0
    %v3315 = vadd.f32 %v2930, %v3314
    %v3316 = vpop.f32.mrb[0].mxu0
    %3317 = vmatprep.mubr.f32.mxu0 %v2012
    %3318 = vmatmul.mubr.f32.gmra.mrb[0].mxu0 %v2011
    %v3319 = vpop.f32.mrb[0].mxu0
    %v3320 = vadd.f32 %v2935, %v3319
    %v3321 = vpop.f32.mrb[0].mxu0
    %3322 = vmatprep.mubr.f32.mxu0 %v2021
    %3323 = vmatmul.mubr.f32.gmra.mrb[0].mxu0 %v2020
    %v3324 = vpop.f32.mrb[0].mxu0
    %v3325 = vadd.f32 %v2940, %v3324
    %v3326 = vpop.f32.mrb[0].mxu0
    %3327 = vmatprep.mubr.f32.mxu0 %v2030
    %3328 = vmatmul.mubr.f32.gmra.mrb[0].mxu0 %v2029
    %v3329 = vpop.f32.mrb[0].mxu0
    %v3330 = vadd.f32 %v2945, %v3329
    %v3331 = vpop.f32.mrb[0].mxu0
    %3332 = vdwg.mxu0
    %3333 = vmatprep.subr.mxu0 0.0
    %3334 = vmatpush1.msra.mxu0 %v2130
    %3335 = vmatprep.subr.mxu0 0.0
    %3336 = vmatpush1.msra.mxu0 %v2131
    %3337 = vmatprep.subr.mxu0 0.0
    %3338 = vmatpush1.msra.mxu0 %v2132
    %3339 = vmatprep.subr.mxu0 0.0
    %3340 = vmatpush1.msra.mxu0 %v2133
    %3341 = vmatprep.subr.mxu0 0.0
    %3342 = vmatpush1.msra.mxu0 %v2134
    %3343 = vmatprep.subr.mxu0 0.0
    %3344 = vmatpush1.msra.mxu0 %v2135
    %3345 = vmatprep.subr.mxu0 0.0
    %3346 = vmatpush1.msra.mxu0 %v2136
    %3347 = vmatprep.subr.mxu0 0.0
    %3348 = vmatpush1.msra.mxu0 %v2137
    %3349 = vmatprep.subr.mxu0 0.0
    %3350 = vmatpush1.msra.mxu0 %v2138
    %3351 = vmatprep.subr.mxu0 0.0
    %3352 = vmatpush1.msra.mxu0 %v2139
    %3353 = vmatprep.subr.mxu0 0.0
    %3354 = vmatpush1.msra.mxu0 %v2140
    %3355 = vmatprep.subr.mxu0 0.0
    %3356 = vmatpush1.msra.mxu0 %v2141
    %3357 = vmatprep.subr.mxu0 0.0
    %3358 = vmatpush1.msra.mxu0 %v2142
    %3359 = vmatprep.subr.mxu0 0.0
    %3360 = vmatpush1.msra.mxu0 %v2143
    %3361 = vmatprep.subr.mxu0 0.0
    %3362 = vmatpush1.msra.mxu0 %v2144
    %3363 = vmatprep.subr.mxu0 0.0
    %3364 = vmatpush1.msra.mxu0 %v2145
    %3365 = vmatprep.subr.mxu0 0.0
    %3366 = vmatpush1.msra.mxu0 %v2146
    %3367 = vmatprep.subr.mxu0 0.0
    %3368 = vmatpush1.msra.mxu0 %v2147
    %3369 = vmatprep.subr.mxu0 0.0
    %3370 = vmatpush1.msra.mxu0 %v2148
    %3371 = vmatprep.subr.mxu0 0.0
    %3372 = vmatpush1.msra.mxu0 %v2149
    %3373 = vmatprep.subr.mxu0 0.0
    %3374 = vmatpush1.msra.mxu0 %v2150
    %3375 = vmatprep.subr.mxu0 0.0
    %3376 = vmatpush1.msra.mxu0 %v2151
    %3377 = vmatprep.subr.mxu0 0.0
    %3378 = vmatpush1.msra.mxu0 %v2152
    %3379 = vmatprep.subr.mxu0 0.0
    %3380 = vmatpush1.msra.mxu0 %v2153
    %3381 = vmatprep.subr.mxu0 0.0
    %3382 = vmatpush1.msra.mxu0 %v2154
    %3383 = vmatprep.subr.mxu0 0.0
    %3384 = vmatpush1.msra.mxu0 %v2155
    %3385 = vmatprep.subr.mxu0 0.0
    %3386 = vmatpush1.msra.mxu0 %v2156
    %3387 = vmatprep.subr.mxu0 0.0
    %3388 = vmatpush1.msra.mxu0 %v2157
    %3389 = vmatprep.subr.mxu0 0.0
    %3390 = vmatpush1.msra.mxu0 %v2158
    %3391 = vmatprep.subr.mxu0 0.0
    %3392 = vmatpush1.msra.mxu0 %v2159
    %3393 = vmatprep.subr.mxu0 0.0
    %3394 = vmatpush1.msra.mxu0 %v2160
    %3395 = vmatprep.subr.mxu0 0.0
    %3396 = vmatpush1.msra.mxu0 %v2161
    %3397 = vmatprep.mubr.f32.mxu0 %v1465
    %3398 = vmatmul.mubr.f32.gmra.mrb[0].mxu0 %v1464
    %v3399 = vpop.f32.mrb[0].mxu0
    %v3400 = vadd.f32 %v3015, %v3399
    %v3401 = vpop.f32.mrb[0].mxu0
    %3402 = vmatprep.mubr.f32.mxu0 %v1474
    %3403 = vmatmul.mubr.f32.gmra.mrb[0].mxu0 %v1473
    %v3404 = vpop.f32.mrb[0].mxu0
    %v3405 = vadd.f32 %v3020, %v3404
    %v3406 = vpop.f32.mrb[0].mxu0
    %3407 = vmatprep.mubr.f32.mxu0 %v1483
    %3408 = vmatmul.mubr.f32.gmra.mrb[0].mxu0 %v1482
    %v3409 = vpop.f32.mrb[0].mxu0
    %v3410 = vadd.f32 %v3025, %v3409
    %v3411 = vpop.f32.mrb[0].mxu0
    %3412 = vmatprep.mubr.f32.mxu0 %v1492
    %3413 = vmatmul.mubr.f32.gmra.mrb[0].mxu0 %v1491
    %v3414 = vpop.f32.mrb[0].mxu0
    %v3415 = vadd.f32 %v3030, %v3414
    %v3416 = vpop.f32.mrb[0].mxu0
    %3417 = vmatprep.mubr.f32.mxu0 %v1501
    %3418 = vmatmul.mubr.f32.gmra.mrb[0].mxu0 %v1500
    %v3419 = vpop.f32.mrb[0].mxu0
    %v3420 = vadd.f32 %v3035, %v3419
    %v3421 = vpop.f32.mrb[0].mxu0
    %3422 = vmatprep.mubr.f32.mxu0 %v1510
    %3423 = vmatmul.mubr.f32.gmra.mrb[0].mxu0 %v1509
    %v3424 = vpop.f32.mrb[0].mxu0
    %v3425 = vadd.f32 %v3040, %v3424
    %v3426 = vpop.f32.mrb[0].mxu0
    %3427 = vmatprep.mubr.f32.mxu0 %v1519
    %3428 = vmatmul.mubr.f32.gmra.mrb[0].mxu0 %v1518
    %v3429 = vpop.f32.mrb[0].mxu0
    %v3430 = vadd.f32 %v3045, %v3429
    %v3431 = vpop.f32.mrb[0].mxu0
    %3432 = vmatprep.mubr.f32.mxu0 %v1528
    %3433 = vmatmul.mubr.f32.gmra.mrb[0].mxu0 %v1527
    %v3434 = vpop.f32.mrb[0].mxu0
    %v3435 = vadd.f32 %v3050, %v3434
    %v3436 = vpop.f32.mrb[0].mxu0
    %3437 = vmatprep.mubr.f32.mxu0 %v1537
    %3438 = vmatmul.mubr.f32.gmra.mrb[0].mxu0 %v1536
    %v3439 = vpop.f32.mrb[0].mxu0
    %v3440 = vadd.f32 %v3055, %v3439
    %v3441 = vpop.f32.mrb[0].mxu0
    %3442 = vmatprep.mubr.f32.mxu0 %v1546
    %3443 = vmatmul.mubr.f32.gmra.mrb[0].mxu0 %v1545
    %v3444 = vpop.f32.mrb[0].mxu0
    %v3445 = vadd.f32 %v3060, %v3444
    %v3446 = vpop.f32.mrb[0].mxu0
    %3447 = vmatprep.mubr.f32.mxu0 %v1555
    %3448 = vmatmul.mubr.f32.gmra.mrb[0].mxu0 %v1554
    %v3449 = vpop.f32.mrb[0].mxu0
    %v3450 = vadd.f32 %v3065, %v3449
    %v3451 = vpop.f32.mrb[0].mxu0
    %3452 = vmatprep.mubr.f32.mxu0 %v1564
    %3453 = vmatmul.mubr.f32.gmra.mrb[0].mxu0 %v1563
    %v3454 = vpop.f32.mrb[0].mxu0
    %v3455 = vadd.f32 %v3070, %v3454
    %v3456 = vpop.f32.mrb[0].mxu0
    %3457 = vmatprep.mubr.f32.mxu0 %v1573
    %3458 = vmatmul.mubr.f32.gmra.mrb[0].mxu0 %v1572
    %v3459 = vpop.f32.mrb[0].mxu0
    %v3460 = vadd.f32 %v3075, %v3459
    %v3461 = vpop.f32.mrb[0].mxu0
    %3462 = vmatprep.mubr.f32.mxu0 %v1582
    %3463 = vmatmul.mubr.f32.gmra.mrb[0].mxu0 %v1581
    %v3464 = vpop.f32.mrb[0].mxu0
    %v3465 = vadd.f32 %v3080, %v3464
    %v3466 = vpop.f32.mrb[0].mxu0
    %3467 = vmatprep.mubr.f32.mxu0 %v1591
    %3468 = vmatmul.mubr.f32.gmra.mrb[0].mxu0 %v1590
    %v3469 = vpop.f32.mrb[0].mxu0
    %v3470 = vadd.f32 %v3085, %v3469
    %v3471 = vpop.f32.mrb[0].mxu0
    %3472 = vmatprep.mubr.f32.mxu0 %v1600
    %3473 = vmatmul.mubr.f32.gmra.mrb[0].mxu0 %v1599
    %v3474 = vpop.f32.mrb[0].mxu0
    %v3475 = vadd.f32 %v3090, %v3474
    %v3476 = vpop.f32.mrb[0].mxu0
    %3477 = vmatprep.mubr.f32.mxu0 %v1609
    %3478 = vmatmul.mubr.f32.gmra.mrb[0].mxu0 %v1608
    %v3479 = vpop.f32.mrb[0].mxu0
    %v3480 = vadd.f32 %v3095, %v3479
    %v3481 = vpop.f32.mrb[0].mxu0
    %3482 = vmatprep.mubr.f32.mxu0 %v1618
    %3483 = vmatmul.mubr.f32.gmra.mrb[0].mxu0 %v1617
    %v3484 = vpop.f32.mrb[0].mxu0
    %v3485 = vadd.f32 %v3100, %v3484
    %v3486 = vpop.f32.mrb[0].mxu0
    %3487 = vmatprep.mubr.f32.mxu0 %v1627
    %3488 = vmatmul.mubr.f32.gmra.mrb[0].mxu0 %v1626
    %v3489 = vpop.f32.mrb[0].mxu0
    %v3490 = vadd.f32 %v3105, %v3489
    %v3491 = vpop.f32.mrb[0].mxu0
    %3492 = vmatprep.mubr.f32.mxu0 %v1636
    %3493 = vmatmul.mubr.f32.gmra.mrb[0].mxu0 %v1635
    %v3494 = vpop.f32.mrb[0].mxu0
    %v3495 = vadd.f32 %v3110, %v3494
    %v3496 = vpop.f32.mrb[0].mxu0
    %3497 = vmatprep.mubr.f32.mxu0 %v1645
    %3498 = vmatmul.mubr.f32.gmra.mrb[0].mxu0 %v1644
    %v3499 = vpop.f32.mrb[0].mxu0
    %v3500 = vadd.f32 %v3115, %v3499
    %v3501 = vpop.f32.mrb[0].mxu0
    %3502 = vmatprep.mubr.f32.mxu0 %v1654
    %3503 = vmatmul.mubr.f32.gmra.mrb[0].mxu0 %v1653
    %v3504 = vpop.f32.mrb[0].mxu0
    %v3505 = vadd.f32 %v3120, %v3504
    %v3506 = vpop.f32.mrb[0].mxu0
    %3507 = vmatprep.mubr.f32.mxu0 %v1663
    %3508 = vmatmul.mubr.f32.gmra.mrb[0].mxu0 %v1662
    %v3509 = vpop.f32.mrb[0].mxu0
    %v3510 = vadd.f32 %v3125, %v3509
    %v3511 = vpop.f32.mrb[0].mxu0
    %3512 = vmatprep.mubr.f32.mxu0 %v1672
    %3513 = vmatmul.mubr.f32.gmra.mrb[0].mxu0 %v1671
    %v3514 = vpop.f32.mrb[0].mxu0
    %v3515 = vadd.f32 %v3130, %v3514
    %v3516 = vpop.f32.mrb[0].mxu0
    %3517 = vmatprep.mubr.f32.mxu0 %v1681
    %3518 = vmatmul.mubr.f32.gmra.mrb[0].mxu0 %v1680
    %v3519 = vpop.f32.mrb[0].mxu0
    %v3520 = vadd.f32 %v3135, %v3519
    %v3521 = vpop.f32.mrb[0].mxu0
    %3522 = vmatprep.mubr.f32.mxu0 %v1690
    %3523 = vmatmul.mubr.f32.gmra.mrb[0].mxu0 %v1689
    %v3524 = vpop.f32.mrb[0].mxu0
    %v3525 = vadd.f32 %v3140, %v3524
    %v3526 = vpop.f32.mrb[0].mxu0
    %3527 = vmatprep.mubr.f32.mxu0 %v1699
    %3528 = vmatmul.mubr.f32.gmra.mrb[0].mxu0 %v1698
    %v3529 = vpop.f32.mrb[0].mxu0
    %v3530 = vadd.f32 %v3145, %v3529
    %v3531 = vpop.f32.mrb[0].mxu0
    %3532 = vmatprep.mubr.f32.mxu0 %v1708
    %3533 = vmatmul.mubr.f32.gmra.mrb[0].mxu0 %v1707
    %v3534 = vpop.f32.mrb[0].mxu0
    %v3535 = vadd.f32 %v3150, %v3534
    %v3536 = vpop.f32.mrb[0].mxu0
    %3537 = vmatprep.mubr.f32.mxu0 %v1717
    %3538 = vmatmul.mubr.f32.gmra.mrb[0].mxu0 %v1716
    %v3539 = vpop.f32.mrb[0].mxu0
    %v3540 = vadd.f32 %v3155, %v3539
    %v3541 = vpop.f32.mrb[0].mxu0
    %3542 = vmatprep.mubr.f32.mxu0 %v1726
    %3543 = vmatmul.mubr.f32.gmra.mrb[0].mxu0 %v1725
    %v3544 = vpop.f32.mrb[0].mxu0
    %v3545 = vadd.f32 %v3160, %v3544
    %v3546 = vpop.f32.mrb[0].mxu0
    %3547 = vmatprep.mubr.f32.mxu0 %v1735
    %3548 = vmatmul.mubr.f32.gmra.mrb[0].mxu0 %v1734
    %v3549 = vpop.f32.mrb[0].mxu0
    %v3550 = vadd.f32 %v3165, %v3549
    %v3551 = vpop.f32.mrb[0].mxu0
    %3552 = vmatprep.mubr.f32.mxu0 %v1744
    %3553 = vmatmul.mubr.f32.gmra.mrb[0].mxu0 %v1743
    %v3554 = vpop.f32.mrb[0].mxu0
    %v3555 = vadd.f32 %v3170, %v3554
    %v3556 = vpop.f32.mrb[0].mxu0
    %3557 = vmatprep.mubr.f32.mxu0 %v1753
    %3558 = vmatmul.mubr.f32.gmra.mrb[0].mxu0 %v1752
    %v3559 = vpop.f32.mrb[0].mxu0
    %v3560 = vadd.f32 %v3175, %v3559
    %v3561 = vpop.f32.mrb[0].mxu0
    %3562 = vmatprep.mubr.f32.mxu0 %v1762
    %3563 = vmatmul.mubr.f32.gmra.mrb[0].mxu0 %v1761
    %v3564 = vpop.f32.mrb[0].mxu0
    %v3565 = vadd.f32 %v3180, %v3564
    %v3566 = vpop.f32.mrb[0].mxu0
    %3567 = vmatprep.mubr.f32.mxu0 %v1771
    %3568 = vmatmul.mubr.f32.gmra.mrb[0].mxu0 %v1770
    %v3569 = vpop.f32.mrb[0].mxu0
    %v3570 = vadd.f32 %v3185, %v3569
    %v3571 = vpop.f32.mrb[0].mxu0
    %3572 = vmatprep.mubr.f32.mxu0 %v1780
    %3573 = vmatmul.mubr.f32.gmra.mrb[0].mxu0 %v1779
    %v3574 = vpop.f32.mrb[0].mxu0
    %v3575 = vadd.f32 %v3190, %v3574
    %v3576 = vpop.f32.mrb[0].mxu0
    %3577 = vmatprep.mubr.f32.mxu0 %v1789
    %3578 = vmatmul.mubr.f32.gmra.mrb[0].mxu0 %v1788
    %v3579 = vpop.f32.mrb[0].mxu0
    %v3580 = vadd.f32 %v3195, %v3579
    %v3581 = vpop.f32.mrb[0].mxu0
    %3582 = vmatprep.mubr.f32.mxu0 %v1798
    %3583 = vmatmul.mubr.f32.gmra.mrb[0].mxu0 %v1797
    %v3584 = vpop.f32.mrb[0].mxu0
    %v3585 = vadd.f32 %v3200, %v3584
    %v3586 = vpop.f32.mrb[0].mxu0
    %3587 = vmatprep.mubr.f32.mxu0 %v1807
    %3588 = vmatmul.mubr.f32.gmra.mrb[0].mxu0 %v1806
    %v3589 = vpop.f32.mrb[0].mxu0
    %v3590 = vadd.f32 %v3205, %v3589
    %v3591 = vpop.f32.mrb[0].mxu0
    %3592 = vmatprep.mubr.f32.mxu0 %v1816
    %3593 = vmatmul.mubr.f32.gmra.mrb[0].mxu0 %v1815
    %v3594 = vpop.f32.mrb[0].mxu0
    %v3595 = vadd.f32 %v3210, %v3594
    %v3596 = vpop.f32.mrb[0].mxu0
    %3597 = vmatprep.mubr.f32.mxu0 %v1825
    %3598 = vmatmul.mubr.f32.gmra.mrb[0].mxu0 %v1824
    %v3599 = vpop.f32.mrb[0].mxu0
    %v3600 = vadd.f32 %v3215, %v3599
    %v3601 = vpop.f32.mrb[0].mxu0
    %3602 = vmatprep.mubr.f32.mxu0 %v1834
    %3603 = vmatmul.mubr.f32.gmra.mrb[0].mxu0 %v1833
    %v3604 = vpop.f32.mrb[0].mxu0
    %v3605 = vadd.f32 %v3220, %v3604
    %v3606 = vpop.f32.mrb[0].mxu0
    %3607 = vmatprep.mubr.f32.mxu0 %v1843
    %3608 = vmatmul.mubr.f32.gmra.mrb[0].mxu0 %v1842
    %v3609 = vpop.f32.mrb[0].mxu0
    %v3610 = vadd.f32 %v3225, %v3609
    %v3611 = vpop.f32.mrb[0].mxu0
    %3612 = vmatprep.mubr.f32.mxu0 %v1852
    %3613 = vmatmul.mubr.f32.gmra.mrb[0].mxu0 %v1851
    %v3614 = vpop.f32.mrb[0].mxu0
    %v3615 = vadd.f32 %v3230, %v3614
    %v3616 = vpop.f32.mrb[0].mxu0
    %3617 = vmatprep.mubr.f32.mxu0 %v1861
    %3618 = vmatmul.mubr.f32.gmra.mrb[0].mxu0 %v1860
    %v3619 = vpop.f32.mrb[0].mxu0
    %v3620 = vadd.f32 %v3235, %v3619
    %v3621 = vpop.f32.mrb[0].mxu0
    %3622 = vmatprep.mubr.f32.mxu0 %v1870
    %3623 = vmatmul.mubr.f32.gmra.mrb[0].mxu0 %v1869
    %v3624 = vpop.f32.mrb[0].mxu0
    %v3625 = vadd.f32 %v3240, %v3624
    %v3626 = vpop.f32.mrb[0].mxu0
    %3627 = vmatprep.mubr.f32.mxu0 %v1879
    %3628 = vmatmul.mubr.f32.gmra.mrb[0].mxu0 %v1878
    %v3629 = vpop.f32.mrb[0].mxu0
    %v3630 = vadd.f32 %v3245, %v3629
    %v3631 = vpop.f32.mrb[0].mxu0
    %3632 = vmatprep.mubr.f32.mxu0 %v1888
    %3633 = vmatmul.mubr.f32.gmra.mrb[0].mxu0 %v1887
    %v3634 = vpop.f32.mrb[0].mxu0
    %v3635 = vadd.f32 %v3250, %v3634
    %v3636 = vpop.f32.mrb[0].mxu0
    %3637 = vmatprep.mubr.f32.mxu0 %v1897
    %3638 = vmatmul.mubr.f32.gmra.mrb[0].mxu0 %v1896
    %v3639 = vpop.f32.mrb[0].mxu0
    %v3640 = vadd.f32 %v3255, %v3639
    %v3641 = vpop.f32.mrb[0].mxu0
    %3642 = vmatprep.mubr.f32.mxu0 %v1906
    %3643 = vmatmul.mubr.f32.gmra.mrb[0].mxu0 %v1905
    %v3644 = vpop.f32.mrb[0].mxu0
    %v3645 = vadd.f32 %v3260, %v3644
    %v3646 = vpop.f32.mrb[0].mxu0
    %3647 = vmatprep.mubr.f32.mxu0 %v1915
    %3648 = vmatmul.mubr.f32.gmra.mrb[0].mxu0 %v1914
    %v3649 = vpop.f32.mrb[0].mxu0
    %v3650 = vadd.f32 %v3265, %v3649
    %v3651 = vpop.f32.mrb[0].mxu0
    %3652 = vmatprep.mubr.f32.mxu0 %v1924
    %3653 = vmatmul.mubr.f32.gmra.mrb[0].mxu0 %v1923
    %v3654 = vpop.f32.mrb[0].mxu0
    %v3655 = vadd.f32 %v3270, %v3654
    %v3656 = vpop.f32.mrb[0].mxu0
    %3657 = vmatprep.mubr.f32.mxu0 %v1933
    %3658 = vmatmul.mubr.f32.gmra.mrb[0].mxu0 %v1932
    %v3659 = vpop.f32.mrb[0].mxu0
    %v3660 = vadd.f32 %v3275, %v3659
    %v3661 = vpop.f32.mrb[0].mxu0
    %3662 = vmatprep.mubr.f32.mxu0 %v1942
    %3663 = vmatmul.mubr.f32.gmra.mrb[0].mxu0 %v1941
    %v3664 = vpop.f32.mrb[0].mxu0
    %v3665 = vadd.f32 %v3280, %v3664
    %v3666 = vpop.f32.mrb[0].mxu0
    %3667 = vmatprep.mubr.f32.mxu0 %v1951
    %3668 = vmatmul.mubr.f32.gmra.mrb[0].mxu0 %v1950
    %v3669 = vpop.f32.mrb[0].mxu0
    %v3670 = vadd.f32 %v3285, %v3669
    %v3671 = vpop.f32.mrb[0].mxu0
    %3672 = vmatprep.mubr.f32.mxu0 %v1960
    %3673 = vmatmul.mubr.f32.gmra.mrb[0].mxu0 %v1959
    %v3674 = vpop.f32.mrb[0].mxu0
    %v3675 = vadd.f32 %v3290, %v3674
    %v3676 = vpop.f32.mrb[0].mxu0
    %3677 = vmatprep.mubr.f32.mxu0 %v1969
    %3678 = vmatmul.mubr.f32.gmra.mrb[0].mxu0 %v1968
    %v3679 = vpop.f32.mrb[0].mxu0
    %v3680 = vadd.f32 %v3295, %v3679
    %v3681 = vpop.f32.mrb[0].mxu0
    %3682 = vmatprep.mubr.f32.mxu0 %v1978
    %3683 = vmatmul.mubr.f32.gmra.mrb[0].mxu0 %v1977
    %v3684 = vpop.f32.mrb[0].mxu0
    %v3685 = vadd.f32 %v3300, %v3684
    %v3686 = vpop.f32.mrb[0].mxu0
    %3687 = vmatprep.mubr.f32.mxu0 %v1987
    %3688 = vmatmul.mubr.f32.gmra.mrb[0].mxu0 %v1986
    %v3689 = vpop.f32.mrb[0].mxu0
    %v3690 = vadd.f32 %v3305, %v3689
    %v3691 = vpop.f32.mrb[0].mxu0
    %3692 = vmatprep.mubr.f32.mxu0 %v1996
    %3693 = vmatmul.mubr.f32.gmra.mrb[0].mxu0 %v1995
    %v3694 = vpop.f32.mrb[0].mxu0
    %v3695 = vadd.f32 %v3310, %v3694
    %v3696 = vpop.f32.mrb[0].mxu0
    %3697 = vmatprep.mubr.f32.mxu0 %v2005
    %3698 = vmatmul.mubr.f32.gmra.mrb[0].mxu0 %v2004
    %v3699 = vpop.f32.mrb[0].mxu0
    %v3700 = vadd.f32 %v3315, %v3699
    %v3701 = vpop.f32.mrb[0].mxu0
    %3702 = vmatprep.mubr.f32.mxu0 %v2014
    %3703 = vmatmul.mubr.f32.gmra.mrb[0].mxu0 %v2013
    %v3704 = vpop.f32.mrb[0].mxu0
    %v3705 = vadd.f32 %v3320, %v3704
    %v3706 = vpop.f32.mrb[0].mxu0
    %3707 = vmatprep.mubr.f32.mxu0 %v2023
    %3708 = vmatmul.mubr.f32.gmra.mrb[0].mxu0 %v2022
    %v3709 = vpop.f32.mrb[0].mxu0
    %v3710 = vadd.f32 %v3325, %v3709
    %v3711 = vpop.f32.mrb[0].mxu0
    %3712 = vmatprep.mubr.f32.mxu0 %v2032
    %3713 = vmatmul.mubr.f32.gmra.mrb[0].mxu0 %v2031
    %v3714 = vpop.f32.mrb[0].mxu0
    %v3715 = vadd.f32 %v3330, %v3714
    %v3716 = vpop.f32.mrb[0].mxu0
    %3717 = vdwg.mxu0
    %3718 = vmatprep.subr.mxu0 0.0
    %3719 = vmatpush1.msra.mxu0 %v2162
    %3720 = vmatprep.subr.mxu0 0.0
    %3721 = vmatpush1.msra.mxu0 %v2163
    %3722 = vmatprep.subr.mxu0 0.0
    %3723 = vmatpush1.msra.mxu0 %v2164
    %3724 = vmatprep.subr.mxu0 0.0
    %3725 = vmatpush1.msra.mxu0 %v2165
    %3726 = vmatprep.subr.mxu0 0.0
    %3727 = vmatpush1.msra.mxu0 %v2166
    %3728 = vmatprep.subr.mxu0 0.0
    %3729 = vmatpush1.msra.mxu0 %v2167
    %3730 = vmatprep.subr.mxu0 0.0
    %3731 = vmatpush1.msra.mxu0 %v2168
    %3732 = vmatprep.subr.mxu0 0.0
    %3733 = vmatpush1.msra.mxu0 %v2169
    %3734 = vmatprep.subr.mxu0 0.0
    %3735 = vmatpush1.msra.mxu0 %v2170
    %3736 = vmatprep.subr.mxu0 0.0
    %3737 = vmatpush1.msra.mxu0 %v2171
    %3738 = vmatprep.subr.mxu0 0.0
    %3739 = vmatpush1.msra.mxu0 %v2172
    %3740 = vmatprep.subr.mxu0 0.0
    %3741 = vmatpush1.msra.mxu0 %v2173
    %3742 = vmatprep.subr.mxu0 0.0
    %3743 = vmatpush1.msra.mxu0 %v2174
    %3744 = vmatprep.subr.mxu0 0.0
    %3745 = vmatpush1.msra.mxu0 %v2175
    %3746 = vmatprep.subr.mxu0 0.0
    %3747 = vmatpush1.msra.mxu0 %v2176
    %3748 = vmatprep.subr.mxu0 0.0
    %3749 = vmatpush1.msra.mxu0 %v2177
    %3750 = vmatprep.subr.mxu0 0.0
    %3751 = vmatpush1.msra.mxu0 0.0
    %3752 = vmatprep.subr.mxu0 0.0
    %3753 = vmatpush1.msra.mxu0 0.0
    %3754 = vmatprep.subr.mxu0 0.0
    %3755 = vmatpush1.msra.mxu0 0.0
    %3756 = vmatprep.subr.mxu0 0.0
    %3757 = vmatpush1.msra.mxu0 0.0
    %3758 = vmatprep.subr.mxu0 0.0
    %3759 = vmatpush1.msra.mxu0 0.0
    %3760 = vmatprep.subr.mxu0 0.0
    %3761 = vmatpush1.msra.mxu0 0.0
    %3762 = vmatprep.subr.mxu0 0.0
    %3763 = vmatpush1.msra.mxu0 0.0
    %3764 = vmatprep.subr.mxu0 0.0
    %3765 = vmatpush1.msra.mxu0 0.0
    %3766 = vmatprep.subr.mxu0 0.0
    %3767 = vmatpush1.msra.mxu0 0.0
    %3768 = vmatprep.subr.mxu0 0.0
    %3769 = vmatpush1.msra.mxu0 0.0
    %3770 = vmatprep.subr.mxu0 0.0
    %3771 = vmatpush1.msra.mxu0 0.0
    %3772 = vmatprep.subr.mxu0 0.0
    %3773 = vmatpush1.msra.mxu0 0.0
    %3774 = vmatprep.subr.mxu0 0.0
    %3775 = vmatpush1.msra.mxu0 0.0
    %3776 = vmatprep.subr.mxu0 0.0
    %3777 = vmatpush1.msra.mxu0 0.0
    %3778 = vmatprep.subr.mxu0 0.0
    %3779 = vmatpush1.msra.mxu0 0.0
    %3780 = vmatprep.subr.mxu0 0.0
    %3781 = vmatpush1.msra.mxu0 0.0
    %3782 = vmatprep.mubr.f32.mxu0 0.0
    %3783 = vmatmul.mubr.f32.gmra.mrb[0].mxu0 %v1466
    %v3784 = vpop.f32.mrb[0].mxu0
    %v3785 = vadd.f32 %v3400, %v3784
    %v3786 = vpop.f32.mrb[0].mxu0
    %3787 = vmatprep.mubr.f32.mxu0 0.0
    %3788 = vmatmul.mubr.f32.gmra.mrb[0].mxu0 %v1475
    %v3789 = vpop.f32.mrb[0].mxu0
    %v3790 = vadd.f32 %v3405, %v3789
    %v3791 = vpop.f32.mrb[0].mxu0
    %3792 = vmatprep.mubr.f32.mxu0 0.0
    %3793 = vmatmul.mubr.f32.gmra.mrb[0].mxu0 %v1484
    %v3794 = vpop.f32.mrb[0].mxu0
    %v3795 = vadd.f32 %v3410, %v3794
    %v3796 = vpop.f32.mrb[0].mxu0
    %3797 = vmatprep.mubr.f32.mxu0 0.0
    %3798 = vmatmul.mubr.f32.gmra.mrb[0].mxu0 %v1493
    %v3799 = vpop.f32.mrb[0].mxu0
    %v3800 = vadd.f32 %v3415, %v3799
    %v3801 = vpop.f32.mrb[0].mxu0
    %3802 = vmatprep.mubr.f32.mxu0 0.0
    %3803 = vmatmul.mubr.f32.gmra.mrb[0].mxu0 %v1502
    %v3804 = vpop.f32.mrb[0].mxu0
    %v3805 = vadd.f32 %v3420, %v3804
    %v3806 = vpop.f32.mrb[0].mxu0
    %3807 = vmatprep.mubr.f32.mxu0 0.0
    %3808 = vmatmul.mubr.f32.gmra.mrb[0].mxu0 %v1511
    %v3809 = vpop.f32.mrb[0].mxu0
    %v3810 = vadd.f32 %v3425, %v3809
    %v3811 = vpop.f32.mrb[0].mxu0
    %3812 = vmatprep.mubr.f32.mxu0 0.0
    %3813 = vmatmul.mubr.f32.gmra.mrb[0].mxu0 %v1520
    %v3814 = vpop.f32.mrb[0].mxu0
    %v3815 = vadd.f32 %v3430, %v3814
    %v3816 = vpop.f32.mrb[0].mxu0
    %3817 = vmatprep.mubr.f32.mxu0 0.0
    %3818 = vmatmul.mubr.f32.gmra.mrb[0].mxu0 %v1529
    %v3819 = vpop.f32.mrb[0].mxu0
    %v3820 = vadd.f32 %v3435, %v3819
    %v3821 = vpop.f32.mrb[0].mxu0
    %3822 = vmatprep.mubr.f32.mxu0 0.0
    %3823 = vmatmul.mubr.f32.gmra.mrb[0].mxu0 %v1538
    %v3824 = vpop.f32.mrb[0].mxu0
    %v3825 = vadd.f32 %v3440, %v3824
    %v3826 = vpop.f32.mrb[0].mxu0
    %3827 = vmatprep.mubr.f32.mxu0 0.0
    %3828 = vmatmul.mubr.f32.gmra.mrb[0].mxu0 %v1547
    %v3829 = vpop.f32.mrb[0].mxu0
    %v3830 = vadd.f32 %v3445, %v3829
    %v3831 = vpop.f32.mrb[0].mxu0
    %3832 = vmatprep.mubr.f32.mxu0 0.0
    %3833 = vmatmul.mubr.f32.gmra.mrb[0].mxu0 %v1556
    %v3834 = vpop.f32.mrb[0].mxu0
    %v3835 = vadd.f32 %v3450, %v3834
    %v3836 = vpop.f32.mrb[0].mxu0
    %3837 = vmatprep.mubr.f32.mxu0 0.0
    %3838 = vmatmul.mubr.f32.gmra.mrb[0].mxu0 %v1565
    %v3839 = vpop.f32.mrb[0].mxu0
    %v3840 = vadd.f32 %v3455, %v3839
    %v3841 = vpop.f32.mrb[0].mxu0
    %3842 = vmatprep.mubr.f32.mxu0 0.0
    %3843 = vmatmul.mubr.f32.gmra.mrb[0].mxu0 %v1574
    %v3844 = vpop.f32.mrb[0].mxu0
    %v3845 = vadd.f32 %v3460, %v3844
    %v3846 = vpop.f32.mrb[0].mxu0
    %3847 = vmatprep.mubr.f32.mxu0 0.0
    %3848 = vmatmul.mubr.f32.gmra.mrb[0].mxu0 %v1583
    %v3849 = vpop.f32.mrb[0].mxu0
    %v3850 = vadd.f32 %v3465, %v3849
    %v3851 = vpop.f32.mrb[0].mxu0
    %3852 = vmatprep.mubr.f32.mxu0 0.0
    %3853 = vmatmul.mubr.f32.gmra.mrb[0].mxu0 %v1592
    %v3854 = vpop.f32.mrb[0].mxu0
    %v3855 = vadd.f32 %v3470, %v3854
    %v3856 = vpop.f32.mrb[0].mxu0
    %3857 = vmatprep.mubr.f32.mxu0 0.0
    %3858 = vmatmul.mubr.f32.gmra.mrb[0].mxu0 %v1601
    %v3859 = vpop.f32.mrb[0].mxu0
    %v3860 = vadd.f32 %v3475, %v3859
    %v3861 = vpop.f32.mrb[0].mxu0
    %3862 = vmatprep.mubr.f32.mxu0 0.0
    %3863 = vmatmul.mubr.f32.gmra.mrb[0].mxu0 %v1610
    %v3864 = vpop.f32.mrb[0].mxu0
    %v3865 = vadd.f32 %v3480, %v3864
    %v3866 = vpop.f32.mrb[0].mxu0
    %3867 = vmatprep.mubr.f32.mxu0 0.0
    %3868 = vmatmul.mubr.f32.gmra.mrb[0].mxu0 %v1619
    %v3869 = vpop.f32.mrb[0].mxu0
    %v3870 = vadd.f32 %v3485, %v3869
    %v3871 = vpop.f32.mrb[0].mxu0
    %3872 = vmatprep.mubr.f32.mxu0 0.0
    %3873 = vmatmul.mubr.f32.gmra.mrb[0].mxu0 %v1628
    %v3874 = vpop.f32.mrb[0].mxu0
    %v3875 = vadd.f32 %v3490, %v3874
    %v3876 = vpop.f32.mrb[0].mxu0
    %3877 = vmatprep.mubr.f32.mxu0 0.0
    %3878 = vmatmul.mubr.f32.gmra.mrb[0].mxu0 %v1637
    %v3879 = vpop.f32.mrb[0].mxu0
    %v3880 = vadd.f32 %v3495, %v3879
    %v3881 = vpop.f32.mrb[0].mxu0
    %3882 = vmatprep.mubr.f32.mxu0 0.0
    %3883 = vmatmul.mubr.f32.gmra.mrb[0].mxu0 %v1646
    %v3884 = vpop.f32.mrb[0].mxu0
    %v3885 = vadd.f32 %v3500, %v3884
    %v3886 = vpop.f32.mrb[0].mxu0
    %3887 = vmatprep.mubr.f32.mxu0 0.0
    %3888 = vmatmul.mubr.f32.gmra.mrb[0].mxu0 %v1655
    %v3889 = vpop.f32.mrb[0].mxu0
    %v3890 = vadd.f32 %v3505, %v3889
    %v3891 = vpop.f32.mrb[0].mxu0
    %3892 = vmatprep.mubr.f32.mxu0 0.0
    %3893 = vmatmul.mubr.f32.gmra.mrb[0].mxu0 %v1664
    %v3894 = vpop.f32.mrb[0].mxu0
    %v3895 = vadd.f32 %v3510, %v3894
    %v3896 = vpop.f32.mrb[0].mxu0
    %3897 = vmatprep.mubr.f32.mxu0 0.0
    %3898 = vmatmul.mubr.f32.gmra.mrb[0].mxu0 %v1673
    %v3899 = vpop.f32.mrb[0].mxu0
    %v3900 = vadd.f32 %v3515, %v3899
    %v3901 = vpop.f32.mrb[0].mxu0
    %3902 = vmatprep.mubr.f32.mxu0 0.0
    %3903 = vmatmul.mubr.f32.gmra.mrb[0].mxu0 %v1682
    %v3904 = vpop.f32.mrb[0].mxu0
    %v3905 = vadd.f32 %v3520, %v3904
    %v3906 = vpop.f32.mrb[0].mxu0
    %3907 = vmatprep.mubr.f32.mxu0 0.0
    %3908 = vmatmul.mubr.f32.gmra.mrb[0].mxu0 %v1691
    %v3909 = vpop.f32.mrb[0].mxu0
    %v3910 = vadd.f32 %v3525, %v3909
    %v3911 = vpop.f32.mrb[0].mxu0
    %3912 = vmatprep.mubr.f32.mxu0 0.0
    %3913 = vmatmul.mubr.f32.gmra.mrb[0].mxu0 %v1700
    %v3914 = vpop.f32.mrb[0].mxu0
    %v3915 = vadd.f32 %v3530, %v3914
    %v3916 = vpop.f32.mrb[0].mxu0
    %3917 = vmatprep.mubr.f32.mxu0 0.0
    %3918 = vmatmul.mubr.f32.gmra.mrb[0].mxu0 %v1709
    %v3919 = vpop.f32.mrb[0].mxu0
    %v3920 = vadd.f32 %v3535, %v3919
    %v3921 = vpop.f32.mrb[0].mxu0
    %3922 = vmatprep.mubr.f32.mxu0 0.0
    %3923 = vmatmul.mubr.f32.gmra.mrb[0].mxu0 %v1718
    %v3924 = vpop.f32.mrb[0].mxu0
    %v3925 = vadd.f32 %v3540, %v3924
    %v3926 = vpop.f32.mrb[0].mxu0
    %3927 = vmatprep.mubr.f32.mxu0 0.0
    %3928 = vmatmul.mubr.f32.gmra.mrb[0].mxu0 %v1727
    %v3929 = vpop.f32.mrb[0].mxu0
    %v3930 = vadd.f32 %v3545, %v3929
    %v3931 = vpop.f32.mrb[0].mxu0
    %3932 = vmatprep.mubr.f32.mxu0 0.0
    %3933 = vmatmul.mubr.f32.gmra.mrb[0].mxu0 %v1736
    %v3934 = vpop.f32.mrb[0].mxu0
    %v3935 = vadd.f32 %v3550, %v3934
    %v3936 = vpop.f32.mrb[0].mxu0
    %3937 = vmatprep.mubr.f32.mxu0 0.0
    %3938 = vmatmul.mubr.f32.gmra.mrb[0].mxu0 %v1745
    %v3939 = vpop.f32.mrb[0].mxu0
    %v3940 = vadd.f32 %v3555, %v3939
    %v3941 = vpop.f32.mrb[0].mxu0
    %3942 = vmatprep.mubr.f32.mxu0 0.0
    %3943 = vmatmul.mubr.f32.gmra.mrb[0].mxu0 %v1754
    %v3944 = vpop.f32.mrb[0].mxu0
    %v3945 = vadd.f32 %v3560, %v3944
    %v3946 = vpop.f32.mrb[0].mxu0
    %3947 = vmatprep.mubr.f32.mxu0 0.0
    %3948 = vmatmul.mubr.f32.gmra.mrb[0].mxu0 %v1763
    %v3949 = vpop.f32.mrb[0].mxu0
    %v3950 = vadd.f32 %v3565, %v3949
    %v3951 = vpop.f32.mrb[0].mxu0
    %3952 = vmatprep.mubr.f32.mxu0 0.0
    %3953 = vmatmul.mubr.f32.gmra.mrb[0].mxu0 %v1772
    %v3954 = vpop.f32.mrb[0].mxu0
    %v3955 = vadd.f32 %v3570, %v3954
    %v3956 = vpop.f32.mrb[0].mxu0
    %3957 = vmatprep.mubr.f32.mxu0 0.0
    %3958 = vmatmul.mubr.f32.gmra.mrb[0].mxu0 %v1781
    %v3959 = vpop.f32.mrb[0].mxu0
    %v3960 = vadd.f32 %v3575, %v3959
    %v3961 = vpop.f32.mrb[0].mxu0
    %3962 = vmatprep.mubr.f32.mxu0 0.0
    %3963 = vmatmul.mubr.f32.gmra.mrb[0].mxu0 %v1790
    %v3964 = vpop.f32.mrb[0].mxu0
    %v3965 = vadd.f32 %v3580, %v3964
    %v3966 = vpop.f32.mrb[0].mxu0
    %3967 = vmatprep.mubr.f32.mxu0 0.0
    %3968 = vmatmul.mubr.f32.gmra.mrb[0].mxu0 %v1799
    %v3969 = vpop.f32.mrb[0].mxu0
    %v3970 = vadd.f32 %v3585, %v3969
    %v3971 = vpop.f32.mrb[0].mxu0
    %3972 = vmatprep.mubr.f32.mxu0 0.0
    %3973 = vmatmul.mubr.f32.gmra.mrb[0].mxu0 %v1808
    %v3974 = vpop.f32.mrb[0].mxu0
    %v3975 = vadd.f32 %v3590, %v3974
    %v3976 = vpop.f32.mrb[0].mxu0
    %3977 = vmatprep.mubr.f32.mxu0 0.0
    %3978 = vmatmul.mubr.f32.gmra.mrb[0].mxu0 %v1817
    %v3979 = vpop.f32.mrb[0].mxu0
    %v3980 = vadd.f32 %v3595, %v3979
    %v3981 = vpop.f32.mrb[0].mxu0
    %3982 = vmatprep.mubr.f32.mxu0 0.0
    %3983 = vmatmul.mubr.f32.gmra.mrb[0].mxu0 %v1826
    %v3984 = vpop.f32.mrb[0].mxu0
    %v3985 = vadd.f32 %v3600, %v3984
    %v3986 = vpop.f32.mrb[0].mxu0
    %3987 = vmatprep.mubr.f32.mxu0 0.0
    %3988 = vmatmul.mubr.f32.gmra.mrb[0].mxu0 %v1835
    %v3989 = vpop.f32.mrb[0].mxu0
    %v3990 = vadd.f32 %v3605, %v3989
    %v3991 = vpop.f32.mrb[0].mxu0
    %3992 = vmatprep.mubr.f32.mxu0 0.0
    %3993 = vmatmul.mubr.f32.gmra.mrb[0].mxu0 %v1844
    %v3994 = vpop.f32.mrb[0].mxu0
    %v3995 = vadd.f32 %v3610, %v3994
    %v3996 = vpop.f32.mrb[0].mxu0
    %3997 = vmatprep.mubr.f32.mxu0 0.0
    %3998 = vmatmul.mubr.f32.gmra.mrb[0].mxu0 %v1853
    %v3999 = vpop.f32.mrb[0].mxu0
    %v4000 = vadd.f32 %v3615, %v3999
    %v4001 = vpop.f32.mrb[0].mxu0
    %4002 = vmatprep.mubr.f32.mxu0 0.0
    %4003 = vmatmul.mubr.f32.gmra.mrb[0].mxu0 %v1862
    %v4004 = vpop.f32.mrb[0].mxu0
    %v4005 = vadd.f32 %v3620, %v4004
    %v4006 = vpop.f32.mrb[0].mxu0
    %4007 = vmatprep.mubr.f32.mxu0 0.0
    %4008 = vmatmul.mubr.f32.gmra.mrb[0].mxu0 %v1871
    %v4009 = vpop.f32.mrb[0].mxu0
    %v4010 = vadd.f32 %v3625, %v4009
    %v4011 = vpop.f32.mrb[0].mxu0
    %4012 = vmatprep.mubr.f32.mxu0 0.0
    %4013 = vmatmul.mubr.f32.gmra.mrb[0].mxu0 %v1880
    %v4014 = vpop.f32.mrb[0].mxu0
    %v4015 = vadd.f32 %v3630, %v4014
    %v4016 = vpop.f32.mrb[0].mxu0
    %4017 = vmatprep.mubr.f32.mxu0 0.0
    %4018 = vmatmul.mubr.f32.gmra.mrb[0].mxu0 %v1889
    %v4019 = vpop.f32.mrb[0].mxu0
    %v4020 = vadd.f32 %v3635, %v4019
    %v4021 = vpop.f32.mrb[0].mxu0
    %4022 = vmatprep.mubr.f32.mxu0 0.0
    %4023 = vmatmul.mubr.f32.gmra.mrb[0].mxu0 %v1898
    %v4024 = vpop.f32.mrb[0].mxu0
    %v4025 = vadd.f32 %v3640, %v4024
    %v4026 = vpop.f32.mrb[0].mxu0
    %4027 = vmatprep.mubr.f32.mxu0 0.0
    %4028 = vmatmul.mubr.f32.gmra.mrb[0].mxu0 %v1907
    %v4029 = vpop.f32.mrb[0].mxu0
    %v4030 = vadd.f32 %v3645, %v4029
    %v4031 = vpop.f32.mrb[0].mxu0
    %4032 = vmatprep.mubr.f32.mxu0 0.0
    %4033 = vmatmul.mubr.f32.gmra.mrb[0].mxu0 %v1916
    %v4034 = vpop.f32.mrb[0].mxu0
    %v4035 = vadd.f32 %v3650, %v4034
    %v4036 = vpop.f32.mrb[0].mxu0
    %4037 = vmatprep.mubr.f32.mxu0 0.0
    %4038 = vmatmul.mubr.f32.gmra.mrb[0].mxu0 %v1925
    %v4039 = vpop.f32.mrb[0].mxu0
    %v4040 = vadd.f32 %v3655, %v4039
    %v4041 = vpop.f32.mrb[0].mxu0
    %4042 = vmatprep.mubr.f32.mxu0 0.0
    %4043 = vmatmul.mubr.f32.gmra.mrb[0].mxu0 %v1934
    %v4044 = vpop.f32.mrb[0].mxu0
    %v4045 = vadd.f32 %v3660, %v4044
    %v4046 = vpop.f32.mrb[0].mxu0
    %4047 = vmatprep.mubr.f32.mxu0 0.0
    %4048 = vmatmul.mubr.f32.gmra.mrb[0].mxu0 %v1943
    %v4049 = vpop.f32.mrb[0].mxu0
    %v4050 = vadd.f32 %v3665, %v4049
    %v4051 = vpop.f32.mrb[0].mxu0
    %4052 = vmatprep.mubr.f32.mxu0 0.0
    %4053 = vmatmul.mubr.f32.gmra.mrb[0].mxu0 %v1952
    %v4054 = vpop.f32.mrb[0].mxu0
    %v4055 = vadd.f32 %v3670, %v4054
    %v4056 = vpop.f32.mrb[0].mxu0
    %4057 = vmatprep.mubr.f32.mxu0 0.0
    %4058 = vmatmul.mubr.f32.gmra.mrb[0].mxu0 %v1961
    %v4059 = vpop.f32.mrb[0].mxu0
    %v4060 = vadd.f32 %v3675, %v4059
    %v4061 = vpop.f32.mrb[0].mxu0
    %4062 = vmatprep.mubr.f32.mxu0 0.0
    %4063 = vmatmul.mubr.f32.gmra.mrb[0].mxu0 %v1970
    %v4064 = vpop.f32.mrb[0].mxu0
    %v4065 = vadd.f32 %v3680, %v4064
    %v4066 = vpop.f32.mrb[0].mxu0
    %4067 = vmatprep.mubr.f32.mxu0 0.0
    %4068 = vmatmul.mubr.f32.gmra.mrb[0].mxu0 %v1979
    %v4069 = vpop.f32.mrb[0].mxu0
    %v4070 = vadd.f32 %v3685, %v4069
    %v4071 = vpop.f32.mrb[0].mxu0
    %4072 = vmatprep.mubr.f32.mxu0 0.0
    %4073 = vmatmul.mubr.f32.gmra.mrb[0].mxu0 %v1988
    %v4074 = vpop.f32.mrb[0].mxu0
    %v4075 = vadd.f32 %v3690, %v4074
    %v4076 = vpop.f32.mrb[0].mxu0
    %4077 = vmatprep.mubr.f32.mxu0 0.0
    %4078 = vmatmul.mubr.f32.gmra.mrb[0].mxu0 %v1997
    %v4079 = vpop.f32.mrb[0].mxu0
    %v4080 = vadd.f32 %v3695, %v4079
    %v4081 = vpop.f32.mrb[0].mxu0
    %4082 = vmatprep.mubr.f32.mxu0 0.0
    %4083 = vmatmul.mubr.f32.gmra.mrb[0].mxu0 %v2006
    %v4084 = vpop.f32.mrb[0].mxu0
    %v4085 = vadd.f32 %v3700, %v4084
    %v4086 = vpop.f32.mrb[0].mxu0
    %4087 = vmatprep.mubr.f32.mxu0 0.0
    %4088 = vmatmul.mubr.f32.gmra.mrb[0].mxu0 %v2015
    %v4089 = vpop.f32.mrb[0].mxu0
    %v4090 = vadd.f32 %v3705, %v4089
    %v4091 = vpop.f32.mrb[0].mxu0
    %4092 = vmatprep.mubr.f32.mxu0 0.0
    %4093 = vmatmul.mubr.f32.gmra.mrb[0].mxu0 %v2024
    %v4094 = vpop.f32.mrb[0].mxu0
    %v4095 = vadd.f32 %v3710, %v4094
    %v4096 = vpop.f32.mrb[0].mxu0
    %4097 = vmatprep.mubr.f32.mxu0 0.0
    %4098 = vmatmul.mubr.f32.gmra.mrb[0].mxu0 %v2033
    %v4099 = vpop.f32.mrb[0].mxu0
    %v4100 = vadd.f32 %v3715, %v4099
    %v4101 = vpop.f32.mrb[0].mxu0
    %4102 = vdwg.mxu0
    %v4103 = vadd.f32 %v3785, %v3790
    %v4104 = vadd.f32 %v4103, %v3795
    %v4105 = vadd.f32 %v4104, %v3800
    %v4106 = vadd.f32 %v4105, %v3805
    %v4107 = vadd.f32 %v4106, %v3810
    %v4108 = vadd.f32 %v4107, %v3815
    %v4109 = vadd.f32 %v4108, %v3820
    %v4110 = vadd.f32 %v4109, %v3825
    %v4111 = vadd.f32 %v4110, %v3830
    %v4112 = vadd.f32 %v4111, %v3835
    %v4113 = vadd.f32 %v4112, %v3840
    %v4114 = vadd.f32 %v4113, %v3845
    %v4115 = vadd.f32 %v4114, %v3850
    %v4116 = vadd.f32 %v4115, %v3855
    %v4117 = vadd.f32 %v4116, %v3860
    %v4118 = vadd.f32 %v4117, %v3865
    %v4119 = vadd.f32 %v4118, %v3870
    %v4120 = vadd.f32 %v4119, %v3875
    %v4121 = vadd.f32 %v4120, %v3880
    %v4122 = vadd.f32 %v4121, %v3885
    %v4123 = vadd.f32 %v4122, %v3890
    %v4124 = vadd.f32 %v4123, %v3895
    %v4125 = vadd.f32 %v4124, %v3900
    %v4126 = vadd.f32 %v4125, %v3905
    %v4127 = vadd.f32 %v4126, %v3910
    %v4128 = vadd.f32 %v4127, %v3915
    %v4129 = vadd.f32 %v4128, %v3920
    %v4130 = vadd.f32 %v4129, %v3925
    %v4131 = vadd.f32 %v4130, %v3930
    %v4132 = vadd.f32 %v4131, %v3935
    %v4133 = vadd.f32 %v4132, %v3940
    %v4134 = vadd.f32 %v4133, %v3945
    %v4135 = vadd.f32 %v4134, %v3950
    %v4136 = vadd.f32 %v4135, %v3955
    %v4137 = vadd.f32 %v4136, %v3960
    %v4138 = vadd.f32 %v4137, %v3965
    %v4139 = vadd.f32 %v4138, %v3970
    %v4140 = vadd.f32 %v4139, %v3975
    %v4141 = vadd.f32 %v4140, %v3980
    %v4142 = vadd.f32 %v4141, %v3985
    %v4143 = vadd.f32 %v4142, %v3990
    %v4144 = vadd.f32 %v4143, %v3995
    %v4145 = vadd.f32 %v4144, %v4000
    %v4146 = vadd.f32 %v4145, %v4005
    %v4147 = vadd.f32 %v4146, %v4010
    %v4148 = vadd.f32 %v4147, %v4015
    %v4149 = vadd.f32 %v4148, %v4020
    %v4150 = vadd.f32 %v4149, %v4025
    %v4151 = vadd.f32 %v4150, %v4030
    %v4152 = vadd.f32 %v4151, %v4035
    %v4153 = vadd.f32 %v4152, %v4040
    %v4154 = vadd.f32 %v4153, %v4045
    %v4155 = vadd.f32 %v4154, %v4050
    %v4156 = vadd.f32 %v4155, %v4055
    %v4157 = vadd.f32 %v4156, %v4060
    %v4158 = vadd.f32 %v4157, %v4065
    %v4159 = vadd.f32 %v4158, %v4070
    %v4160 = vadd.f32 %v4159, %v4075
    %v4161 = vadd.f32 %v4160, %v4080
    %v4162 = vadd.f32 %v4161, %v4085
    %v4163 = vadd.f32 %v4162, %v4090
    %v4164 = vadd.f32 %v4163, %v4095
    %v4165 = vadd.f32 %v4164, %v4100
    %v4166 = vrot.slane %v4165, 4
    %v4167 = vadd.f32 %v4165, %v4166
    %v4168 = vrot.slane %v4167, 2
    %v4169 = vadd.f32 %v4167, %v4168
    %v4170 = vrot.slane %v4169, 1
    %v4171 = vadd.f32 %v4169, %v4170
    %v4172 = vmul.f32 %v3785, %v3785
    %v4173 = vmul.f32 %v3790, %v3790
    %v4174 = vmul.f32 %v3795, %v3795
    %v4175 = vmul.f32 %v3800, %v3800
    %v4176 = vmul.f32 %v3805, %v3805
    %v4177 = vmul.f32 %v3810, %v3810
    %v4178 = vmul.f32 %v3815, %v3815
    %v4179 = vmul.f32 %v3820, %v3820
    %v4180 = vmul.f32 %v3825, %v3825
    %v4181 = vmul.f32 %v3830, %v3830
    %v4182 = vmul.f32 %v3835, %v3835
    %v4183 = vmul.f32 %v3840, %v3840
    %v4184 = vmul.f32 %v3845, %v3845
    %v4185 = vmul.f32 %v3850, %v3850
    %v4186 = vmul.f32 %v3855, %v3855
    %v4187 = vmul.f32 %v3860, %v3860
    %v4188 = vmul.f32 %v3865, %v3865
    %v4189 = vmul.f32 %v3870, %v3870
    %v4190 = vmul.f32 %v3875, %v3875
    %v4191 = vmul.f32 %v3880, %v3880
    %v4192 = vmul.f32 %v3885, %v3885
    %v4193 = vmul.f32 %v3890, %v3890
    %v4194 = vmul.f32 %v3895, %v3895
    %v4195 = vmul.f32 %v3900, %v3900
    %v4196 = vmul.f32 %v3905, %v3905
    %v4197 = vmul.f32 %v3910, %v3910
    %v4198 = vmul.f32 %v3915, %v3915
    %v4199 = vmul.f32 %v3920, %v3920
    %v4200 = vmul.f32 %v3925, %v3925
    %v4201 = vmul.f32 %v3930, %v3930
    %v4202 = vmul.f32 %v3935, %v3935
    %v4203 = vmul.f32 %v3940, %v3940
    %v4204 = vmul.f32 %v3945, %v3945
    %v4205 = vmul.f32 %v3950, %v3950
    %v4206 = vmul.f32 %v3955, %v3955
    %v4207 = vmul.f32 %v3960, %v3960
    %v4208 = vmul.f32 %v3965, %v3965
    %v4209 = vmul.f32 %v3970, %v3970
    %v4210 = vmul.f32 %v3975, %v3975
    %v4211 = vmul.f32 %v3980, %v3980
    %v4212 = vmul.f32 %v3985, %v3985
    %v4213 = vmul.f32 %v3990, %v3990
    %v4214 = vmul.f32 %v3995, %v3995
    %v4215 = vmul.f32 %v4000, %v4000
    %v4216 = vmul.f32 %v4005, %v4005
    %v4217 = vmul.f32 %v4010, %v4010
    %v4218 = vmul.f32 %v4015, %v4015
    %v4219 = vmul.f32 %v4020, %v4020
    %v4220 = vmul.f32 %v4025, %v4025
    %v4221 = vmul.f32 %v4030, %v4030
    %v4222 = vmul.f32 %v4035, %v4035
    %v4223 = vmul.f32 %v4040, %v4040
    %v4224 = vmul.f32 %v4045, %v4045
    %v4225 = vmul.f32 %v4050, %v4050
    %v4226 = vmul.f32 %v4055, %v4055
    %v4227 = vmul.f32 %v4060, %v4060
    %v4228 = vmul.f32 %v4065, %v4065
    %v4229 = vmul.f32 %v4070, %v4070
    %v4230 = vmul.f32 %v4075, %v4075
    %v4231 = vmul.f32 %v4080, %v4080
    %v4232 = vmul.f32 %v4085, %v4085
    %v4233 = vmul.f32 %v4090, %v4090
    %v4234 = vmul.f32 %v4095, %v4095
    %v4235 = vmul.f32 %v4100, %v4100
    %v4236 = vadd.f32 %v4172, %v4173
    %v4237 = vadd.f32 %v4236, %v4174
    %v4238 = vadd.f32 %v4237, %v4175
    %v4239 = vadd.f32 %v4238, %v4176
    %v4240 = vadd.f32 %v4239, %v4177
    %v4241 = vadd.f32 %v4240, %v4178
    %v4242 = vadd.f32 %v4241, %v4179
    %v4243 = vadd.f32 %v4242, %v4180
    %v4244 = vadd.f32 %v4243, %v4181
    %v4245 = vadd.f32 %v4244, %v4182
    %v4246 = vadd.f32 %v4245, %v4183
    %v4247 = vadd.f32 %v4246, %v4184
    %v4248 = vadd.f32 %v4247, %v4185
    %v4249 = vadd.f32 %v4248, %v4186
    %v4250 = vadd.f32 %v4249, %v4187
    %v4251 = vadd.f32 %v4250, %v4188
    %v4252 = vadd.f32 %v4251, %v4189
    %v4253 = vadd.f32 %v4252, %v4190
    %v4254 = vadd.f32 %v4253, %v4191
    %v4255 = vadd.f32 %v4254, %v4192
    %v4256 = vadd.f32 %v4255, %v4193
    %v4257 = vadd.f32 %v4256, %v4194
    %v4258 = vadd.f32 %v4257, %v4195
    %v4259 = vadd.f32 %v4258, %v4196
    %v4260 = vadd.f32 %v4259, %v4197
    %v4261 = vadd.f32 %v4260, %v4198
    %v4262 = vadd.f32 %v4261, %v4199
    %v4263 = vadd.f32 %v4262, %v4200
    %v4264 = vadd.f32 %v4263, %v4201
    %v4265 = vadd.f32 %v4264, %v4202
    %v4266 = vadd.f32 %v4265, %v4203
    %v4267 = vadd.f32 %v4266, %v4204
    %v4268 = vadd.f32 %v4267, %v4205
    %v4269 = vadd.f32 %v4268, %v4206
    %v4270 = vadd.f32 %v4269, %v4207
    %v4271 = vadd.f32 %v4270, %v4208
    %v4272 = vadd.f32 %v4271, %v4209
    %v4273 = vadd.f32 %v4272, %v4210
    %v4274 = vadd.f32 %v4273, %v4211
    %v4275 = vadd.f32 %v4274, %v4212
    %v4276 = vadd.f32 %v4275, %v4213
    %v4277 = vadd.f32 %v4276, %v4214
    %v4278 = vadd.f32 %v4277, %v4215
    %v4279 = vadd.f32 %v4278, %v4216
    %v4280 = vadd.f32 %v4279, %v4217
    %v4281 = vadd.f32 %v4280, %v4218
    %v4282 = vadd.f32 %v4281, %v4219
    %v4283 = vadd.f32 %v4282, %v4220
    %v4284 = vadd.f32 %v4283, %v4221
    %v4285 = vadd.f32 %v4284, %v4222
    %v4286 = vadd.f32 %v4285, %v4223
    %v4287 = vadd.f32 %v4286, %v4224
    %v4288 = vadd.f32 %v4287, %v4225
    %v4289 = vadd.f32 %v4288, %v4226
    %v4290 = vadd.f32 %v4289, %v4227
    %v4291 = vadd.f32 %v4290, %v4228
    %v4292 = vadd.f32 %v4291, %v4229
    %v4293 = vadd.f32 %v4292, %v4230
    %v4294 = vadd.f32 %v4293, %v4231
    %v4295 = vadd.f32 %v4294, %v4232
    %v4296 = vadd.f32 %v4295, %v4233
    %v4297 = vadd.f32 %v4296, %v4234
    %v4298 = vadd.f32 %v4297, %v4235
    %v4299 = vrot.slane %v4298, 4
    %v4300 = vadd.f32 %v4298, %v4299
    %v4301 = vrot.slane %v4300, 2
    %v4302 = vadd.f32 %v4300, %v4301
    %v4303 = vrot.slane %v4302, 1
    %v4304 = vadd.f32 %v4302, %v4303
    %v4305 = vmul.f32 %v4171, 0.001953125
    %v4306 = vmul.f32 %v4304, 0.001953125
    %v4307 = vmul.f32 %v4305, %v4305
    %v4308 = vsub.f32 %v4306, %v4307
    %v4309 = vmax.f32 %v4308, 0.0
    %v4310 = vld [vmem:[%s3] sm:$0x1]
    %v4311 = vadd.f32 %v4309, 1e-05
    %v4312 = vrsqrt.pop %v4311
    %v4313 = vmul.f32 %v4310, %v4312
    %v4314 = vld [vmem:[%s4] sm:$0x1]
    %v4315 = vmul.f32 %v4305, %v4313
    %v4316 = vsub.f32 %v4314, %v4315
    %v4318 = vlaneseq
    %v4319 = vshrl.u32 %v4318, 7
    %v4320 = vsub.s32 0, %v4319
    %v4321 = vrot.slane %v4313, %v4320
    %v4323 = vmul.f32 %v3785, %v4321
    %v4324 = vmul.f32 %v3790, %v4321
    %v4325 = vmul.f32 %v3795, %v4321
    %v4326 = vmul.f32 %v3800, %v4321
    %v4327 = vmul.f32 %v3805, %v4321
    %v4328 = vmul.f32 %v3810, %v4321
    %v4329 = vmul.f32 %v3815, %v4321
    %v4330 = vmul.f32 %v3820, %v4321
    %v4331 = vmul.f32 %v3825, %v4321
    %v4332 = vmul.f32 %v3830, %v4321
    %v4333 = vmul.f32 %v3835, %v4321
    %v4334 = vmul.f32 %v3840, %v4321
    %v4335 = vmul.f32 %v3845, %v4321
    %v4336 = vmul.f32 %v3850, %v4321
    %v4337 = vmul.f32 %v3855, %v4321
    %v4338 = vmul.f32 %v3860, %v4321
    %v4339 = vmul.f32 %v3865, %v4321
    %v4340 = vmul.f32 %v3870, %v4321
    %v4341 = vmul.f32 %v3875, %v4321
    %v4342 = vmul.f32 %v3880, %v4321
    %v4343 = vmul.f32 %v3885, %v4321
    %v4344 = vmul.f32 %v3890, %v4321
    %v4345 = vmul.f32 %v3895, %v4321
    %v4346 = vmul.f32 %v3900, %v4321
    %v4347 = vmul.f32 %v3905, %v4321
    %v4348 = vmul.f32 %v3910, %v4321
    %v4349 = vmul.f32 %v3915, %v4321
    %v4350 = vmul.f32 %v3920, %v4321
    %v4351 = vmul.f32 %v3925, %v4321
    %v4352 = vmul.f32 %v3930, %v4321
    %v4353 = vmul.f32 %v3935, %v4321
    %v4354 = vmul.f32 %v3940, %v4321
    %v4355 = vmul.f32 %v3945, %v4321
    %v4356 = vmul.f32 %v3950, %v4321
    %v4357 = vmul.f32 %v3955, %v4321
    %v4358 = vmul.f32 %v3960, %v4321
    %v4359 = vmul.f32 %v3965, %v4321
    %v4360 = vmul.f32 %v3970, %v4321
    %v4361 = vmul.f32 %v3975, %v4321
    %v4362 = vmul.f32 %v3980, %v4321
    %v4363 = vmul.f32 %v3985, %v4321
    %v4364 = vmul.f32 %v3990, %v4321
    %v4365 = vmul.f32 %v3995, %v4321
    %v4366 = vmul.f32 %v4000, %v4321
    %v4367 = vmul.f32 %v4005, %v4321
    %v4368 = vmul.f32 %v4010, %v4321
    %v4369 = vmul.f32 %v4015, %v4321
    %v4370 = vmul.f32 %v4020, %v4321
    %v4371 = vmul.f32 %v4025, %v4321
    %v4372 = vmul.f32 %v4030, %v4321
    %v4373 = vmul.f32 %v4035, %v4321
    %v4374 = vmul.f32 %v4040, %v4321
    %v4375 = vmul.f32 %v4045, %v4321
    %v4376 = vmul.f32 %v4050, %v4321
    %v4377 = vmul.f32 %v4055, %v4321
    %v4378 = vmul.f32 %v4060, %v4321
    %v4379 = vmul.f32 %v4065, %v4321
    %v4380 = vmul.f32 %v4070, %v4321
    %v4381 = vmul.f32 %v4075, %v4321
    %v4382 = vmul.f32 %v4080, %v4321
    %v4383 = vmul.f32 %v4085, %v4321
    %v4384 = vmul.f32 %v4090, %v4321
    %v4385 = vmul.f32 %v4095, %v4321
    %v4386 = vmul.f32 %v4100, %v4321
    %v4388 = vlaneseq
    %v4389 = vshrl.u32 %v4388, 7
    %v4390 = vsub.s32 0, %v4389
    %v4391 = vrot.slane %v4316, %v4390
    %v4393 = vadd.f32 %v4323, %v4391
    %v4394 = vadd.f32 %v4324, %v4391
    %v4395 = vadd.f32 %v4325, %v4391
    %v4396 = vadd.f32 %v4326, %v4391
    %v4397 = vadd.f32 %v4327, %v4391
    %v4398 = vadd.f32 %v4328, %v4391
    %v4399 = vadd.f32 %v4329, %v4391
    %v4400 = vadd.f32 %v4330, %v4391
    %v4401 = vadd.f32 %v4331, %v4391
    %v4402 = vadd.f32 %v4332, %v4391
    %v4403 = vadd.f32 %v4333, %v4391
    %v4404 = vadd.f32 %v4334, %v4391
    %v4405 = vadd.f32 %v4335, %v4391
    %v4406 = vadd.f32 %v4336, %v4391
    %v4407 = vadd.f32 %v4337, %v4391
    %v4408 = vadd.f32 %v4338, %v4391
    %v4409 = vadd.f32 %v4339, %v4391
    %v4410 = vadd.f32 %v4340, %v4391
    %v4411 = vadd.f32 %v4341, %v4391
    %v4412 = vadd.f32 %v4342, %v4391
    %v4413 = vadd.f32 %v4343, %v4391
    %v4414 = vadd.f32 %v4344, %v4391
    %v4415 = vadd.f32 %v4345, %v4391
    %v4416 = vadd.f32 %v4346, %v4391
    %v4417 = vadd.f32 %v4347, %v4391
    %v4418 = vadd.f32 %v4348, %v4391
    %v4419 = vadd.f32 %v4349, %v4391
    %v4420 = vadd.f32 %v4350, %v4391
    %v4421 = vadd.f32 %v4351, %v4391
    %v4422 = vadd.f32 %v4352, %v4391
    %v4423 = vadd.f32 %v4353, %v4391
    %v4424 = vadd.f32 %v4354, %v4391
    %v4425 = vadd.f32 %v4355, %v4391
    %v4426 = vadd.f32 %v4356, %v4391
    %v4427 = vadd.f32 %v4357, %v4391
    %v4428 = vadd.f32 %v4358, %v4391
    %v4429 = vadd.f32 %v4359, %v4391
    %v4430 = vadd.f32 %v4360, %v4391
    %v4431 = vadd.f32 %v4361, %v4391
    %v4432 = vadd.f32 %v4362, %v4391
    %v4433 = vadd.f32 %v4363, %v4391
    %v4434 = vadd.f32 %v4364, %v4391
    %v4435 = vadd.f32 %v4365, %v4391
    %v4436 = vadd.f32 %v4366, %v4391
    %v4437 = vadd.f32 %v4367, %v4391
    %v4438 = vadd.f32 %v4368, %v4391
    %v4439 = vadd.f32 %v4369, %v4391
    %v4440 = vadd.f32 %v4370, %v4391
    %v4441 = vadd.f32 %v4371, %v4391
    %v4442 = vadd.f32 %v4372, %v4391
    %v4443 = vadd.f32 %v4373, %v4391
    %v4444 = vadd.f32 %v4374, %v4391
    %v4445 = vadd.f32 %v4375, %v4391
    %v4446 = vadd.f32 %v4376, %v4391
    %v4447 = vadd.f32 %v4377, %v4391
    %v4448 = vadd.f32 %v4378, %v4391
    %v4449 = vadd.f32 %v4379, %v4391
    %v4450 = vadd.f32 %v4380, %v4391
    %v4451 = vadd.f32 %v4381, %v4391
    %v4452 = vadd.f32 %v4382, %v4391
    %v4453 = vadd.f32 %v4383, %v4391
    %v4454 = vadd.f32 %v4384, %v4391
    %v4455 = vadd.f32 %v4385, %v4391
    %v4456 = vadd.f32 %v4386, %v4391
    %v4457 = vmax.f32 %v4393, 0.0
    %v4458 = vmax.f32 %v4394, 0.0
    %v4459 = vmax.f32 %v4395, 0.0
    %v4460 = vmax.f32 %v4396, 0.0
    %v4461 = vmax.f32 %v4397, 0.0
    %v4462 = vmax.f32 %v4398, 0.0
    %v4463 = vmax.f32 %v4399, 0.0
    %v4464 = vmax.f32 %v4400, 0.0
    %v4465 = vmax.f32 %v4401, 0.0
    %v4466 = vmax.f32 %v4402, 0.0
    %v4467 = vmax.f32 %v4403, 0.0
    %v4468 = vmax.f32 %v4404, 0.0
    %v4469 = vmax.f32 %v4405, 0.0
    %v4470 = vmax.f32 %v4406, 0.0
    %v4471 = vmax.f32 %v4407, 0.0
    %v4472 = vmax.f32 %v4408, 0.0
    %v4473 = vmax.f32 %v4409, 0.0
    %v4474 = vmax.f32 %v4410, 0.0
    %v4475 = vmax.f32 %v4411, 0.0
    %v4476 = vmax.f32 %v4412, 0.0
    %v4477 = vmax.f32 %v4413, 0.0
    %v4478 = vmax.f32 %v4414, 0.0
    %v4479 = vmax.f32 %v4415, 0.0
    %v4480 = vmax.f32 %v4416, 0.0
    %v4481 = vmax.f32 %v4417, 0.0
    %v4482 = vmax.f32 %v4418, 0.0
    %v4483 = vmax.f32 %v4419, 0.0
    %v4484 = vmax.f32 %v4420, 0.0
    %v4485 = vmax.f32 %v4421, 0.0
    %v4486 = vmax.f32 %v4422, 0.0
    %v4487 = vmax.f32 %v4423, 0.0
    %v4488 = vmax.f32 %v4424, 0.0
    %v4489 = vmax.f32 %v4425, 0.0
    %v4490 = vmax.f32 %v4426, 0.0
    %v4491 = vmax.f32 %v4427, 0.0
    %v4492 = vmax.f32 %v4428, 0.0
    %v4493 = vmax.f32 %v4429, 0.0
    %v4494 = vmax.f32 %v4430, 0.0
    %v4495 = vmax.f32 %v4431, 0.0
    %v4496 = vmax.f32 %v4432, 0.0
    %v4497 = vmax.f32 %v4433, 0.0
    %v4498 = vmax.f32 %v4434, 0.0
    %v4499 = vmax.f32 %v4435, 0.0
    %v4500 = vmax.f32 %v4436, 0.0
    %v4501 = vmax.f32 %v4437, 0.0
    %v4502 = vmax.f32 %v4438, 0.0
    %v4503 = vmax.f32 %v4439, 0.0
    %v4504 = vmax.f32 %v4440, 0.0
    %v4505 = vmax.f32 %v4441, 0.0
    %v4506 = vmax.f32 %v4442, 0.0
    %v4507 = vmax.f32 %v4443, 0.0
    %v4508 = vmax.f32 %v4444, 0.0
    %v4509 = vmax.f32 %v4445, 0.0
    %v4510 = vmax.f32 %v4446, 0.0
    %v4511 = vmax.f32 %v4447, 0.0
    %v4512 = vmax.f32 %v4448, 0.0
    %v4513 = vmax.f32 %v4449, 0.0
    %v4514 = vmax.f32 %v4450, 0.0
    %v4515 = vmax.f32 %v4451, 0.0
    %v4516 = vmax.f32 %v4452, 0.0
    %v4517 = vmax.f32 %v4453, 0.0
    %v4518 = vmax.f32 %v4454, 0.0
    %v4519 = vmax.f32 %v4455, 0.0
    %v4520 = vmax.f32 %v4456, 0.0
    %4521 = vst [vmem:[%s240 + $0x1] sm:$0xff] %v4457
    %4522 = vst [vmem:[%s240 + $0x9] sm:$0xff] %v4458
    %4523 = vst [vmem:[%s240 + $0x19] sm:$0xff] %v4459
    %4524 = vst [vmem:[%s240 + $0x21] sm:$0xff] %v4460
    %4525 = vst [vmem:[%s240 + $0x31] sm:$0xff] %v4461
    %4526 = vst [vmem:[%s240 + $0x39] sm:$0xff] %v4462
    %4527 = vst [vmem:[%s240 + $0x49] sm:$0xff] %v4463
    %4528 = vst [vmem:[%s240 + $0x51] sm:$0xff] %v4464
    %4529 = vst [vmem:[%s240 + $0x61] sm:$0xff] %v4465
    %4530 = vst [vmem:[%s240 + $0x69] sm:$0xff] %v4466
    %4531 = vst [vmem:[%s240 + $0x79] sm:$0xff] %v4467
    %4532 = vst [vmem:[%s240 + $0x81] sm:$0xff] %v4468
    %4533 = vst [vmem:[%s240 + $0x91] sm:$0xff] %v4469
    %4534 = vst [vmem:[%s240 + $0x99] sm:$0xff] %v4470
    %4535 = vst [vmem:[%s240 + $0xa9] sm:$0xff] %v4471
    %4536 = vst [vmem:[%s240 + $0xb1] sm:$0xff] %v4472
    %4537 = vst [vmem:[%s240 + $0xc1] sm:$0xff] %v4473
    %4538 = vst [vmem:[%s240 + $0xc9] sm:$0xff] %v4474
    %4539 = vst [vmem:[%s240 + $0xd9] sm:$0xff] %v4475
    %4540 = vst [vmem:[%s240 + $0xe1] sm:$0xff] %v4476
    %4541 = vst [vmem:[%s240 + $0xf1] sm:$0xff] %v4477
    %4542 = vst [vmem:[%s240 + $0xf9] sm:$0xff] %v4478
    %4543 = vst [vmem:[%s240 + $0x109] sm:$0xff] %v4479
    %4544 = vst [vmem:[%s240 + $0x111] sm:$0xff] %v4480
    %4545 = vst [vmem:[%s240 + $0x121] sm:$0xff] %v4481
    %4546 = vst [vmem:[%s240 + $0x129] sm:$0xff] %v4482
    %4547 = vst [vmem:[%s240 + $0x139] sm:$0xff] %v4483
    %4548 = vst [vmem:[%s240 + $0x141] sm:$0xff] %v4484
    %4549 = vst [vmem:[%s240 + $0x151] sm:$0xff] %v4485
    %4550 = vst [vmem:[%s240 + $0x159] sm:$0xff] %v4486
    %4551 = vst [vmem:[%s240 + $0x169] sm:$0xff] %v4487
    %4552 = vst [vmem:[%s240 + $0x171] sm:$0xff] %v4488
    %4553 = vst [vmem:[%s240 + $0x1b1] sm:$0xff] %v4489
    %4554 = vst [vmem:[%s240 + $0x1b9] sm:$0xff] %v4490
    %4555 = vst [vmem:[%s240 + $0x1c9] sm:$0xff] %v4491
    %4556 = vst [vmem:[%s240 + $0x1d1] sm:$0xff] %v4492
    %4557 = vst [vmem:[%s240 + $0x1e1] sm:$0xff] %v4493
    %4558 = vst [vmem:[%s240 + $0x1e9] sm:$0xff] %v4494
    %4559 = vst [vmem:[%s240 + $0x1f9] sm:$0xff] %v4495
    %4560 = vst [vmem:[%s240 + $0x201] sm:$0xff] %v4496
    %4561 = vst [vmem:[%s240 + $0x211] sm:$0xff] %v4497
    %4562 = vst [vmem:[%s240 + $0x219] sm:$0xff] %v4498
    %4563 = vst [vmem:[%s240 + $0x229] sm:$0xff] %v4499
    %4564 = vst [vmem:[%s240 + $0x231] sm:$0xff] %v4500
    %4565 = vst [vmem:[%s240 + $0x241] sm:$0xff] %v4501
    %4566 = vst [vmem:[%s240 + $0x249] sm:$0xff] %v4502
    %4567 = vst [vmem:[%s240 + $0x259] sm:$0xff] %v4503
    %4568 = vst [vmem:[%s240 + $0x261] sm:$0xff] %v4504
    %4569 = vst [vmem:[%s240 + $0x271] sm:$0xff] %v4505
    %4570 = vst [vmem:[%s240 + $0x279] sm:$0xff] %v4506
    %4571 = vst [vmem:[%s240 + $0x289] sm:$0xff] %v4507
    %4572 = vst [vmem:[%s240 + $0x291] sm:$0xff] %v4508
    %4573 = vst [vmem:[%s240 + $0x2a1] sm:$0xff] %v4509
    %4574 = vst [vmem:[%s240 + $0x2a9] sm:$0xff] %v4510
    %4575 = vst [vmem:[%s240 + $0x2b9] sm:$0xff] %v4511
    %4576 = vst [vmem:[%s240 + $0x2c1] sm:$0xff] %v4512
    %4577 = vst [vmem:[%s240 + $0x2d1] sm:$0xff] %v4513
    %4578 = vst [vmem:[%s240 + $0x2d9] sm:$0xff] %v4514
    %4579 = vst [vmem:[%s240 + $0x2e9] sm:$0xff] %v4515
    %4580 = vst [vmem:[%s240 + $0x2f1] sm:$0xff] %v4516
    %4581 = vst [vmem:[%s240 + $0x301] sm:$0xff] %v4517
    %4582 = vst [vmem:[%s240 + $0x309] sm:$0xff] %v4518
    %4583 = vst [vmem:[%s240 + $0x319] sm:$0xff] %v4519
    %4584 = vst [vmem:[%s240 + $0x321] sm:$0xff] %v4520
    %v4585 = vld [vmem:[#allocation2] sm:$0xff]
    %v4586 = vld [vmem:[#allocation2 + $0x8] sm:$0xff]
    %v4587 = vld [vmem:[#allocation2 + $0x18] sm:$0xff]
    %v4588 = vld [vmem:[#allocation2 + $0x20] sm:$0xff]
    %v4589 = vld [vmem:[#allocation2 + $0x30] sm:$0xff]
    %v4590 = vld [vmem:[#allocation2 + $0x38] sm:$0xff]
    %v4591 = vld [vmem:[#allocation2 + $0x48] sm:$0xff]
    %v4592 = vld [vmem:[#allocation2 + $0x50] sm:$0xff]
    %v4593 = vld [vmem:[#allocation2 + $0x60] sm:$0xff]
    %v4594 = vld [vmem:[#allocation2 + $0x68] sm:$0xff]
    %v4595 = vld [vmem:[#allocation2 + $0x78] sm:$0xff]
    %v4596 = vld [vmem:[#allocation2 + $0x80] sm:$0xff]
    %v4597 = vld [vmem:[#allocation2 + $0x90] sm:$0xff]
    %v4598 = vld [vmem:[#allocation2 + $0x98] sm:$0xff]
    %v4599 = vld [vmem:[#allocation2 + $0xa8] sm:$0xff]
    %v4600 = vld [vmem:[#allocation2 + $0xb0] sm:$0xff]
    %v4601 = vld [vmem:[#allocation2 + $0xc0] sm:$0xff]
    %v4602 = vld [vmem:[#allocation2 + $0xc8] sm:$0xff]
    %v4603 = vld [vmem:[#allocation2 + $0xd8] sm:$0xff]
    %v4604 = vld [vmem:[#allocation2 + $0xe0] sm:$0xff]
    %v4605 = vld [vmem:[#allocation2 + $0xf0] sm:$0xff]
    %v4606 = vld [vmem:[#allocation2 + $0xf8] sm:$0xff]
    %v4607 = vld [vmem:[#allocation2 + $0x108] sm:$0xff]
    %v4608 = vld [vmem:[#allocation2 + $0x110] sm:$0xff]
    %v4609 = vld [vmem:[#allocation2 + $0x120] sm:$0xff]
    %v4610 = vld [vmem:[#allocation2 + $0x128] sm:$0xff]
    %v4611 = vld [vmem:[#allocation2 + $0x138] sm:$0xff]
    %v4612 = vld [vmem:[#allocation2 + $0x140] sm:$0xff]
    %v4613 = vld [vmem:[#allocation2 + $0x150] sm:$0xff]
    %v4614 = vld [vmem:[#allocation2 + $0x158] sm:$0xff]
    %v4615 = vld [vmem:[#allocation2 + $0x168] sm:$0xff]
    %v4616 = vld [vmem:[#allocation2 + $0x170] sm:$0xff]
    %v4617 = vld [vmem:[#allocation2 + $0x1b0] sm:$0xff]
    %v4618 = vld [vmem:[#allocation2 + $0x1b8] sm:$0xff]
    %v4619 = vld [vmem:[#allocation2 + $0x1c8] sm:$0xff]
    %v4620 = vld [vmem:[#allocation2 + $0x1d0] sm:$0xff]
    %v4621 = vld [vmem:[#allocation2 + $0x1e0] sm:$0xff]
    %v4622 = vld [vmem:[#allocation2 + $0x1e8] sm:$0xff]
    %v4623 = vld [vmem:[#allocation2 + $0x1f8] sm:$0xff]
    %v4624 = vld [vmem:[#allocation2 + $0x200] sm:$0xff]
    %v4625 = vld [vmem:[#allocation2 + $0x210] sm:$0xff]
    %v4626 = vld [vmem:[#allocation2 + $0x218] sm:$0xff]
    %v4627 = vld [vmem:[#allocation2 + $0x228] sm:$0xff]
    %v4628 = vld [vmem:[#allocation2 + $0x230] sm:$0xff]
    %v4629 = vld [vmem:[#allocation2 + $0x240] sm:$0xff]
    %v4630 = vld [vmem:[#allocation2 + $0x248] sm:$0xff]
    %v4631 = vld [vmem:[#allocation2 + $0x258] sm:$0xff]
    %v4632 = vld [vmem:[#allocation2 + $0x260] sm:$0xff]
    %v4633 = vld [vmem:[#allocation2 + $0x270] sm:$0xff]
    %v4634 = vld [vmem:[#allocation2 + $0x278] sm:$0xff]
    %v4635 = vld [vmem:[#allocation2 + $0x288] sm:$0xff]
    %v4636 = vld [vmem:[#allocation2 + $0x290] sm:$0xff]
    %v4637 = vld [vmem:[#allocation2 + $0x2a0] sm:$0xff]
    %v4638 = vld [vmem:[#allocation2 + $0x2a8] sm:$0xff]
    %v4639 = vld [vmem:[#allocation2 + $0x2b8] sm:$0xff]
    %v4640 = vld [vmem:[#allocation2 + $0x2c0] sm:$0xff]
    %v4641 = vld [vmem:[#allocation2 + $0x2d0] sm:$0xff]
    %v4642 = vld [vmem:[#allocation2 + $0x2d8] sm:$0xff]
    %v4643 = vld [vmem:[#allocation2 + $0x2e8] sm:$0xff]
    %v4644 = vld [vmem:[#allocation2 + $0x2f0] sm:$0xff]
    %v4645 = vld [vmem:[#allocation2 + $0x300] sm:$0xff]
    %v4646 = vld [vmem:[#allocation2 + $0x308] sm:$0xff]
    %v4647 = vld [vmem:[#allocation2 + $0x318] sm:$0xff]
    %v4648 = vld [vmem:[#allocation2 + $0x320] sm:$0xff]
    %4649 = vst [vmem:[#allocation3] sm:$0xff] %v4585
    %4650 = vst [vmem:[#allocation3 + $0x48] sm:$0xff] %v4586
    %4651 = vst [vmem:[#allocation3 + $0x90] sm:$0xff] %v4587
    %4652 = vst [vmem:[#allocation3 + $0xd8] sm:$0xff] %v4588
    %4653 = vst [vmem:[#allocation3 + $0x120] sm:$0xff] %v4589
    %4654 = vst [vmem:[#allocation3 + $0x168] sm:$0xff] %v4590
    %4655 = vst [vmem:[#allocation3 + $0x1b0] sm:$0xff] %v4591
    %4656 = vst [vmem:[#allocation3 + $0x1f8] sm:$0xff] %v4592
    %4657 = vst [vmem:[#allocation3 + $0x240] sm:$0xff] %v4593
    %4658 = vst [vmem:[#allocation3 + $0x288] sm:$0xff] %v4594
    %4659 = vst [vmem:[#allocation3 + $0x2d0] sm:$0xff] %v4595
    %4660 = vst [vmem:[#allocation3 + $0x318] sm:$0xff] %v4596
    %4661 = vst [vmem:[#allocation3 + $0x360] sm:$0xff] %v4597
    %4662 = vst [vmem:[#allocation3 + $0x3a8] sm:$0xff] %v4598
    %4663 = vst [vmem:[#allocation3 + $0x3f0] sm:$0xff] %v4599
    %4664 = vst [vmem:[#allocation3 + $0x438] sm:$0xff] %v4600
    %4665 = vst [vmem:[#allocation3 + $0x480] sm:$0xff] %v4601
    %4666 = vst [vmem:[#allocation3 + $0x4c8] sm:$0xff] %v4602
    %4667 = vst [vmem:[#allocation3 + $0x510] sm:$0xff] %v4603
    %4668 = vst [vmem:[#allocation3 + $0x558] sm:$0xff] %v4604
    %4669 = vst [vmem:[#allocation3 + $0x5a0] sm:$0xff] %v4605
    %4670 = vst [vmem:[#allocation3 + $0x5e8] sm:$0xff] %v4606
    %4671 = vst [vmem:[#allocation3 + $0x630] sm:$0xff] %v4607
    %4672 = vst [vmem:[#allocation3 + $0x678] sm:$0xff] %v4608
    %4673 = vst [vmem:[#allocation3 + $0x6c0] sm:$0xff] %v4609
    %4674 = vst [vmem:[#allocation3 + $0x708] sm:$0xff] %v4610
    %4675 = vst [vmem:[#allocation3 + $0x750] sm:$0xff] %v4611
    %4676 = vst [vmem:[#allocation3 + $0x798] sm:$0xff] %v4612
    %4677 = vst [vmem:[#allocation3 + $0x7e0] sm:$0xff] %v4613
    %4678 = vst [vmem:[#allocation3 + $0x828] sm:$0xff] %v4614
    %4679 = vst [vmem:[#allocation3 + $0x870] sm:$0xff] %v4615
    %4680 = vst [vmem:[#allocation3 + $0x8b8] sm:$0xff] %v4616
    %4681 = vst [vmem:[#allocation3 + $0x900] sm:$0xff] %v4617
    %4682 = vst [vmem:[#allocation3 + $0x948] sm:$0xff] %v4618
    %4683 = vst [vmem:[#allocation3 + $0x990] sm:$0xff] %v4619
    %4684 = vst [vmem:[#allocation3 + $0x9d8] sm:$0xff] %v4620
    %4685 = vst [vmem:[#allocation3 + $0xa20] sm:$0xff] %v4621
    %4686 = vst [vmem:[#allocation3 + $0xa68] sm:$0xff] %v4622
    %4687 = vst [vmem:[#allocation3 + $0xab0] sm:$0xff] %v4623
    %4688 = vst [vmem:[#allocation3 + $0xaf8] sm:$0xff] %v4624
    %4689 = vst [vmem:[#allocation3 + $0xb40] sm:$0xff] %v4625
    %4690 = vst [vmem:[#allocation3 + $0xb88] sm:$0xff] %v4626
    %4691 = vst [vmem:[#allocation3 + $0xbd0] sm:$0xff] %v4627
    %4692 = vst [vmem:[#allocation3 + $0xc18] sm:$0xff] %v4628
    %4693 = vst [vmem:[#allocation3 + $0xc60] sm:$0xff] %v4629
    %4694 = vst [vmem:[#allocation3 + $0xca8] sm:$0xff] %v4630
    %4695 = vst [vmem:[#allocation3 + $0xcf0] sm:$0xff] %v4631
    %4696 = vst [vmem:[#allocation3 + $0xd38] sm:$0xff] %v4632
    %4697 = vst [vmem:[#allocation3 + $0xd80] sm:$0xff] %v4633
    %4698 = vst [vmem:[#allocation3 + $0xdc8] sm:$0xff] %v4634
    %4699 = vst [vmem:[#allocation3 + $0xe10] sm:$0xff] %v4635
    %4700 = vst [vmem:[#allocation3 + $0xe58] sm:$0xff] %v4636
    %4701 = vst [vmem:[#allocation3 + $0xea0] sm:$0xff] %v4637
    %4702 = vst [vmem:[#allocation3 + $0xee8] sm:$0xff] %v4638
    %4703 = vst [vmem:[#allocation3 + $0xf30] sm:$0xff] %v4639
    %4704 = vst [vmem:[#allocation3 + $0xf78] sm:$0xff] %v4640
    %4705 = vst [vmem:[#allocation3 + $0xfc0] sm:$0xff] %v4641
    %4706 = vst [vmem:[#allocation3 + $0x1008] sm:$0xff] %v4642
    %4707 = vst [vmem:[#allocation3 + $0x1050] sm:$0xff] %v4643
    %4708 = vst [vmem:[#allocation3 + $0x1098] sm:$0xff] %v4644
    %4709 = vst [vmem:[#allocation3 + $0x10e0] sm:$0xff] %v4645
    %4710 = vst [vmem:[#allocation3 + $0x1128] sm:$0xff] %v4646
    %4711 = vst [vmem:[#allocation3 + $0x1170] sm:$0xff] %v4647
    %4712 = vst [vmem:[#allocation3 + $0x11b8] sm:$0xff] %v4648
    %v4713 = vld [vmem:[#allocation2 + $0x1] sm:$0xff]
    %v4714 = vld [vmem:[#allocation2 + $0x9] sm:$0xff]
    %v4715 = vld [vmem:[#allocation2 + $0x19] sm:$0xff]
    %v4716 = vld [vmem:[#allocation2 + $0x21] sm:$0xff]
    %v4717 = vld [vmem:[#allocation2 + $0x31] sm:$0xff]
    %v4718 = vld [vmem:[#allocation2 + $0x39] sm:$0xff]
    %v4719 = vld [vmem:[#allocation2 + $0x49] sm:$0xff]
    %v4720 = vld [vmem:[#allocation2 + $0x51] sm:$0xff]
    %v4721 = vld [vmem:[#allocation2 + $0x61] sm:$0xff]
    %v4722 = vld [vmem:[#allocation2 + $0x69] sm:$0xff]
    %v4723 = vld [vmem:[#allocation2 + $0x79] sm:$0xff]
    %v4724 = vld [vmem:[#allocation2 + $0x81] sm:$0xff]
    %v4725 = vld [vmem:[#allocation2 + $0x91] sm:$0xff]
    %v4726 = vld [vmem:[#allocation2 + $0x99] sm:$0xff]
    %v4727 = vld [vmem:[#allocation2 + $0xa9] sm:$0xff]
    %v4728 = vld [vmem:[#allocation2 + $0xb1] sm:$0xff]
    %v4729 = vld [vmem:[#allocation2 + $0xc1] sm:$0xff]
    %v4730 = vld [vmem:[#allocation2 + $0xc9] sm:$0xff]
    %v4731 = vld [vmem:[#allocation2 + $0xd9] sm:$0xff]
    %v4732 = vld [vmem:[#allocation2 + $0xe1] sm:$0xff]
    %v4733 = vld [vmem:[#allocation2 + $0xf1] sm:$0xff]
    %v4734 = vld [vmem:[#allocation2 + $0xf9] sm:$0xff]
    %v4735 = vld [vmem:[#allocation2 + $0x109] sm:$0xff]
    %v4736 = vld [vmem:[#allocation2 + $0x111] sm:$0xff]
    %v4737 = vld [vmem:[#allocation2 + $0x121] sm:$0xff]
    %v4738 = vld [vmem:[#allocation2 + $0x129] sm:$0xff]
    %v4739 = vld [vmem:[#allocation2 + $0x139] sm:$0xff]
    %v4740 = vld [vmem:[#allocation2 + $0x141] sm:$0xff]
    %v4741 = vld [vmem:[#allocation2 + $0x151] sm:$0xff]
    %v4742 = vld [vmem:[#allocation2 + $0x159] sm:$0xff]
    %v4743 = vld [vmem:[#allocation2 + $0x169] sm:$0xff]
    %v4744 = vld [vmem:[#allocation2 + $0x171] sm:$0xff]
    %v4745 = vld [vmem:[#allocation2 + $0x1b1] sm:$0xff]
    %v4746 = vld [vmem:[#allocation2 + $0x1b9] sm:$0xff]
    %v4747 = vld [vmem:[#allocation2 + $0x1c9] sm:$0xff]
    %v4748 = vld [vmem:[#allocation2 + $0x1d1] sm:$0xff]
    %v4749 = vld [vmem:[#allocation2 + $0x1e1] sm:$0xff]
    %v4750 = vld [vmem:[#allocation2 + $0x1e9] sm:$0xff]
    %v4751 = vld [vmem:[#allocation2 + $0x1f9] sm:$0xff]
    %v4752 = vld [vmem:[#allocation2 + $0x201] sm:$0xff]
    %v4753 = vld [vmem:[#allocation2 + $0x211] sm:$0xff]
    %v4754 = vld [vmem:[#allocation2 + $0x219] sm:$0xff]
    %v4755 = vld [vmem:[#allocation2 + $0x229] sm:$0xff]
    %v4756 = vld [vmem:[#allocation2 + $0x231] sm:$0xff]
    %v4757 = vld [vmem:[#allocation2 + $0x241] sm:$0xff]
    %v4758 = vld [vmem:[#allocation2 + $0x249] sm:$0xff]
    %v4759 = vld [vmem:[#allocation2 + $0x259] sm:$0xff]
    %v4760 = vld [vmem:[#allocation2 + $0x261] sm:$0xff]
    %v4761 = vld [vmem:[#allocation2 + $0x271] sm:$0xff]
    %v4762 = vld [vmem:[#allocation2 + $0x279] sm:$0xff]
    %v4763 = vld [vmem:[#allocation2 + $0x289] sm:$0xff]
    %v4764 = vld [vmem:[#allocation2 + $0x291] sm:$0xff]
    %v4765 = vld [vmem:[#allocation2 + $0x2a1] sm:$0xff]
    %v4766 = vld [vmem:[#allocation2 + $0x2a9] sm:$0xff]
    %v4767 = vld [vmem:[#allocation2 + $0x2b9] sm:$0xff]
    %v4768 = vld [vmem:[#allocation2 + $0x2c1] sm:$0xff]
    %v4769 = vld [vmem:[#allocation2 + $0x2d1] sm:$0xff]
    %v4770 = vld [vmem:[#allocation2 + $0x2d9] sm:$0xff]
    %v4771 = vld [vmem:[#allocation2 + $0x2e9] sm:$0xff]
    %v4772 = vld [vmem:[#allocation2 + $0x2f1] sm:$0xff]
    %v4773 = vld [vmem:[#allocation2 + $0x301] sm:$0xff]
    %v4774 = vld [vmem:[#allocation2 + $0x309] sm:$0xff]
    %v4775 = vld [vmem:[#allocation2 + $0x319] sm:$0xff]
    %v4776 = vld [vmem:[#allocation2 + $0x321] sm:$0xff]
    %4777 = vst [vmem:[#allocation3 + $0x8] sm:$0xff] %v4713
    %4778 = vst [vmem:[#allocation3 + $0x50] sm:$0xff] %v4714
    %4779 = vst [vmem:[#allocation3 + $0x98] sm:$0xff] %v4715
    %4780 = vst [vmem:[#allocation3 + $0xe0] sm:$0xff] %v4716
    %4781 = vst [vmem:[#allocation3 + $0x128] sm:$0xff] %v4717
    %4782 = vst [vmem:[#allocation3 + $0x170] sm:$0xff] %v4718
    %4783 = vst [vmem:[#allocation3 + $0x1b8] sm:$0xff] %v4719
    %4784 = vst [vmem:[#allocation3 + $0x200] sm:$0xff] %v4720
    %4785 = vst [vmem:[#allocation3 + $0x248] sm:$0xff] %v4721
    %4786 = vst [vmem:[#allocation3 + $0x290] sm:$0xff] %v4722
    %4787 = vst [vmem:[#allocation3 + $0x2d8] sm:$0xff] %v4723
    %4788 = vst [vmem:[#allocation3 + $0x320] sm:$0xff] %v4724
    %4789 = vst [vmem:[#allocation3 + $0x368] sm:$0xff] %v4725
    %4790 = vst [vmem:[#allocation3 + $0x3b0] sm:$0xff] %v4726
    %4791 = vst [vmem:[#allocation3 + $0x3f8] sm:$0xff] %v4727
    %4792 = vst [vmem:[#allocation3 + $0x440] sm:$0xff] %v4728
    %4793 = vst [vmem:[#allocation3 + $0x488] sm:$0xff] %v4729
    %4794 = vst [vmem:[#allocation3 + $0x4d0] sm:$0xff] %v4730
    %4795 = vst [vmem:[#allocation3 + $0x518] sm:$0xff] %v4731
    %4796 = vst [vmem:[#allocation3 + $0x560] sm:$0xff] %v4732
    %4797 = vst [vmem:[#allocation3 + $0x5a8] sm:$0xff] %v4733
    %4798 = vst [vmem:[#allocation3 + $0x5f0] sm:$0xff] %v4734
    %4799 = vst [vmem:[#allocation3 + $0x638] sm:$0xff] %v4735
    %4800 = vst [vmem:[#allocation3 + $0x680] sm:$0xff] %v4736
    %4801 = vst [vmem:[#allocation3 + $0x6c8] sm:$0xff] %v4737
    %4802 = vst [vmem:[#allocation3 + $0x710] sm:$0xff] %v4738
    %4803 = vst [vmem:[#allocation3 + $0x758] sm:$0xff] %v4739
    %4804 = vst [vmem:[#allocation3 + $0x7a0] sm:$0xff] %v4740
    %4805 = vst [vmem:[#allocation3 + $0x7e8] sm:$0xff] %v4741
    %4806 = vst [vmem:[#allocation3 + $0x830] sm:$0xff] %v4742
    %4807 = vst [vmem:[#allocation3 + $0x878] sm:$0xff] %v4743
    %4808 = vst [vmem:[#allocation3 + $0x8c0] sm:$0xff] %v4744
    %4809 = vst [vmem:[#allocation3 + $0x908] sm:$0xff] %v4745
    %4810 = vst [vmem:[#allocation3 + $0x950] sm:$0xff] %v4746
    %4811 = vst [vmem:[#allocation3 + $0x998] sm:$0xff] %v4747
    %4812 = vst [vmem:[#allocation3 + $0x9e0] sm:$0xff] %v4748
    %4813 = vst [vmem:[#allocation3 + $0xa28] sm:$0xff] %v4749
    %4814 = vst [vmem:[#allocation3 + $0xa70] sm:$0xff] %v4750
    %4815 = vst [vmem:[#allocation3 + $0xab8] sm:$0xff] %v4751
    %4816 = vst [vmem:[#allocation3 + $0xb00] sm:$0xff] %v4752
    %4817 = vst [vmem:[#allocation3 + $0xb48] sm:$0xff] %v4753
    %4818 = vst [vmem:[#allocation3 + $0xb90] sm:$0xff] %v4754
    %4819 = vst [vmem:[#allocation3 + $0xbd8] sm:$0xff] %v4755
    %4820 = vst [vmem:[#allocation3 + $0xc20] sm:$0xff] %v4756
    %4821 = vst [vmem:[#allocation3 + $0xc68] sm:$0xff] %v4757
    %4822 = vst [vmem:[#allocation3 + $0xcb0] sm:$0xff] %v4758
    %4823 = vst [vmem:[#allocation3 + $0xcf8] sm:$0xff] %v4759
    %4824 = vst [vmem:[#allocation3 + $0xd40] sm:$0xff] %v4760
    %4825 = vst [vmem:[#allocation3 + $0xd88] sm:$0xff] %v4761
    %4826 = vst [vmem:[#allocation3 + $0xdd0] sm:$0xff] %v4762
    %4827 = vst [vmem:[#allocation3 + $0xe18] sm:$0xff] %v4763
    %4828 = vst [vmem:[#allocation3 + $0xe60] sm:$0xff] %v4764
    %4829 = vst [vmem:[#allocation3 + $0xea8] sm:$0xff] %v4765
    %4830 = vst [vmem:[#allocation3 + $0xef0] sm:$0xff] %v4766
    %4831 = vst [vmem:[#allocation3 + $0xf38] sm:$0xff] %v4767
    %4832 = vst [vmem:[#allocation3 + $0xf80] sm:$0xff] %v4768
    %4833 = vst [vmem:[#allocation3 + $0xfc8] sm:$0xff] %v4769
    %4834 = vst [vmem:[#allocation3 + $0x1010] sm:$0xff] %v4770
    %4835 = vst [vmem:[#allocation3 + $0x1058] sm:$0xff] %v4771
    %4836 = vst [vmem:[#allocation3 + $0x10a0] sm:$0xff] %v4772
    %4837 = vst [vmem:[#allocation3 + $0x10e8] sm:$0xff] %v4773
    %4838 = vst [vmem:[#allocation3 + $0x1130] sm:$0xff] %v4774
    %4839 = vst [vmem:[#allocation3 + $0x1178] sm:$0xff] %v4775
    %4840 = vst [vmem:[#allocation3 + $0x11c0] sm:$0xff] %v4776
    %v4841 = vld [vmem:[#allocation2 + $0x2] sm:$0xff]
    %v4842 = vld [vmem:[#allocation2 + $0xa] sm:$0xff]
    %v4843 = vld [vmem:[#allocation2 + $0x1a] sm:$0xff]
    %v4844 = vld [vmem:[#allocation2 + $0x22] sm:$0xff]
    %v4845 = vld [vmem:[#allocation2 + $0x32] sm:$0xff]
    %v4846 = vld [vmem:[#allocation2 + $0x3a] sm:$0xff]
    %v4847 = vld [vmem:[#allocation2 + $0x4a] sm:$0xff]
    %v4848 = vld [vmem:[#allocation2 + $0x52] sm:$0xff]
    %v4849 = vld [vmem:[#allocation2 + $0x62] sm:$0xff]
    %v4850 = vld [vmem:[#allocation2 + $0x6a] sm:$0xff]
    %v4851 = vld [vmem:[#allocation2 + $0x7a] sm:$0xff]
    %v4852 = vld [vmem:[#allocation2 + $0x82] sm:$0xff]
    %v4853 = vld [vmem:[#allocation2 + $0x92] sm:$0xff]
    %v4854 = vld [vmem:[#allocation2 + $0x9a] sm:$0xff]
    %v4855 = vld [vmem:[#allocation2 + $0xaa] sm:$0xff]
    %v4856 = vld [vmem:[#allocation2 + $0xb2] sm:$0xff]
    %v4857 = vld [vmem:[#allocation2 + $0xc2] sm:$0xff]
    %v4858 = vld [vmem:[#allocation2 + $0xca] sm:$0xff]
    %v4859 = vld [vmem:[#allocation2 + $0xda] sm:$0xff]
    %v4860 = vld [vmem:[#allocation2 + $0xe2] sm:$0xff]
    %v4861 = vld [vmem:[#allocation2 + $0xf2] sm:$0xff]
    %v4862 = vld [vmem:[#allocation2 + $0xfa] sm:$0xff]
    %v4863 = vld [vmem:[#allocation2 + $0x10a] sm:$0xff]
    %v4864 = vld [vmem:[#allocation2 + $0x112] sm:$0xff]
    %v4865 = vld [vmem:[#allocation2 + $0x122] sm:$0xff]
    %v4866 = vld [vmem:[#allocation2 + $0x12a] sm:$0xff]
    %v4867 = vld [vmem:[#allocation2 + $0x13a] sm:$0xff]
    %v4868 = vld [vmem:[#allocation2 + $0x142] sm:$0xff]
    %v4869 = vld [vmem:[#allocation2 + $0x152] sm:$0xff]
    %v4870 = vld [vmem:[#allocation2 + $0x15a] sm:$0xff]
    %v4871 = vld [vmem:[#allocation2 + $0x16a] sm:$0xff]
    %v4872 = vld [vmem:[#allocation2 + $0x172] sm:$0xff]
    %v4873 = vld [vmem:[#allocation2 + $0x1b2] sm:$0xff]
    %v4874 = vld [vmem:[#allocation2 + $0x1ba] sm:$0xff]
    %v4875 = vld [vmem:[#allocation2 + $0x1ca] sm:$0xff]
    %v4876 = vld [vmem:[#allocation2 + $0x1d2] sm:$0xff]
    %v4877 = vld [vmem:[#allocation2 + $0x1e2] sm:$0xff]
    %v4878 = vld [vmem:[#allocation2 + $0x1ea] sm:$0xff]
    %v4879 = vld [vmem:[#allocation2 + $0x1fa] sm:$0xff]
    %v4880 = vld [vmem:[#allocation2 + $0x202] sm:$0xff]
    %v4881 = vld [vmem:[#allocation2 + $0x212] sm:$0xff]
    %v4882 = vld [vmem:[#allocation2 + $0x21a] sm:$0xff]
    %v4883 = vld [vmem:[#allocation2 + $0x22a] sm:$0xff]
    %v4884 = vld [vmem:[#allocation2 + $0x232] sm:$0xff]
    %v4885 = vld [vmem:[#allocation2 + $0x242] sm:$0xff]
    %v4886 = vld [vmem:[#allocation2 + $0x24a] sm:$0xff]
    %v4887 = vld [vmem:[#allocation2 + $0x25a] sm:$0xff]
    %v4888 = vld [vmem:[#allocation2 + $0x262] sm:$0xff]
    %v4889 = vld [vmem:[#allocation2 + $0x272] sm:$0xff]
    %v4890 = vld [vmem:[#allocation2 + $0x27a] sm:$0xff]
    %v4891 = vld [vmem:[#allocation2 + $0x28a] sm:$0xff]
    %v4892 = vld [vmem:[#allocation2 + $0x292] sm:$0xff]
    %v4893 = vld [vmem:[#allocation2 + $0x2a2] sm:$0xff]
    %v4894 = vld [vmem:[#allocation2 + $0x2aa] sm:$0xff]
    %v4895 = vld [vmem:[#allocation2 + $0x2ba] sm:$0xff]
    %v4896 = vld [vmem:[#allocation2 + $0x2c2] sm:$0xff]
    %v4897 = vld [vmem:[#allocation2 + $0x2d2] sm:$0xff]
    %v4898 = vld [vmem:[#allocation2 + $0x2da] sm:$0xff]
    %v4899 = vld [vmem:[#allocation2 + $0x2ea] sm:$0xff]
    %v4900 = vld [vmem:[#allocation2 + $0x2f2] sm:$0xff]
    %v4901 = vld [vmem:[#allocation2 + $0x302] sm:$0xff]
    %v4902 = vld [vmem:[#allocation2 + $0x30a] sm:$0xff]
    %v4903 = vld [vmem:[#allocation2 + $0x31a] sm:$0xff]
    %v4904 = vld [vmem:[#allocation2 + $0x322] sm:$0xff]
    %4905 = vst [vmem:[#allocation3 + $0x10] sm:$0xff] %v4841
    %4906 = vst [vmem:[#allocation3 + $0x58] sm:$0xff] %v4842
    %4907 = vst [vmem:[#allocation3 + $0xa0] sm:$0xff] %v4843
    %4908 = vst [vmem:[#allocation3 + $0xe8] sm:$0xff] %v4844
    %4909 = vst [vmem:[#allocation3 + $0x130] sm:$0xff] %v4845
    %4910 = vst [vmem:[#allocation3 + $0x178] sm:$0xff] %v4846
    %4911 = vst [vmem:[#allocation3 + $0x1c0] sm:$0xff] %v4847
    %4912 = vst [vmem:[#allocation3 + $0x208] sm:$0xff] %v4848
    %4913 = vst [vmem:[#allocation3 + $0x250] sm:$0xff] %v4849
    %4914 = vst [vmem:[#allocation3 + $0x298] sm:$0xff] %v4850
    %4915 = vst [vmem:[#allocation3 + $0x2e0] sm:$0xff] %v4851
    %4916 = vst [vmem:[#allocation3 + $0x328] sm:$0xff] %v4852
    %4917 = vst [vmem:[#allocation3 + $0x370] sm:$0xff] %v4853
    %4918 = vst [vmem:[#allocation3 + $0x3b8] sm:$0xff] %v4854
    %4919 = vst [vmem:[#allocation3 + $0x400] sm:$0xff] %v4855
    %4920 = vst [vmem:[#allocation3 + $0x448] sm:$0xff] %v4856
    %4921 = vst [vmem:[#allocation3 + $0x490] sm:$0xff] %v4857
    %4922 = vst [vmem:[#allocation3 + $0x4d8] sm:$0xff] %v4858
    %4923 = vst [vmem:[#allocation3 + $0x520] sm:$0xff] %v4859
    %4924 = vst [vmem:[#allocation3 + $0x568] sm:$0xff] %v4860
    %4925 = vst [vmem:[#allocation3 + $0x5b0] sm:$0xff] %v4861
    %4926 = vst [vmem:[#allocation3 + $0x5f8] sm:$0xff] %v4862
    %4927 = vst [vmem:[#allocation3 + $0x640] sm:$0xff] %v4863
    %4928 = vst [vmem:[#allocation3 + $0x688] sm:$0xff] %v4864
    %4929 = vst [vmem:[#allocation3 + $0x6d0] sm:$0xff] %v4865
    %4930 = vst [vmem:[#allocation3 + $0x718] sm:$0xff] %v4866
    %4931 = vst [vmem:[#allocation3 + $0x760] sm:$0xff] %v4867
    %4932 = vst [vmem:[#allocation3 + $0x7a8] sm:$0xff] %v4868
    %4933 = vst [vmem:[#allocation3 + $0x7f0] sm:$0xff] %v4869
    %4934 = vst [vmem:[#allocation3 + $0x838] sm:$0xff] %v4870
    %4935 = vst [vmem:[#allocation3 + $0x880] sm:$0xff] %v4871
    %4936 = vst [vmem:[#allocation3 + $0x8c8] sm:$0xff] %v4872
    %4937 = vst [vmem:[#allocation3 + $0x910] sm:$0xff] %v4873
    %4938 = vst [vmem:[#allocation3 + $0x958] sm:$0xff] %v4874
    %4939 = vst [vmem:[#allocation3 + $0x9a0] sm:$0xff] %v4875
    %4940 = vst [vmem:[#allocation3 + $0x9e8] sm:$0xff] %v4876
    %4941 = vst [vmem:[#allocation3 + $0xa30] sm:$0xff] %v4877
    %4942 = vst [vmem:[#allocation3 + $0xa78] sm:$0xff] %v4878
    %4943 = vst [vmem:[#allocation3 + $0xac0] sm:$0xff] %v4879
    %4944 = vst [vmem:[#allocation3 + $0xb08] sm:$0xff] %v4880
    %4945 = vst [vmem:[#allocation3 + $0xb50] sm:$0xff] %v4881
    %4946 = vst [vmem:[#allocation3 + $0xb98] sm:$0xff] %v4882
    %4947 = vst [vmem:[#allocation3 + $0xbe0] sm:$0xff] %v4883
    %4948 = vst [vmem:[#allocation3 + $0xc28] sm:$0xff] %v4884
    %4949 = vst [vmem:[#allocation3 + $0xc70] sm:$0xff] %v4885
    %4950 = vst [vmem:[#allocation3 + $0xcb8] sm:$0xff] %v4886
    %4951 = vst [vmem:[#allocation3 + $0xd00] sm:$0xff] %v4887
    %4952 = vst [vmem:[#allocation3 + $0xd48] sm:$0xff] %v4888
    %4953 = vst [vmem:[#allocation3 + $0xd90] sm:$0xff] %v4889
    %4954 = vst [vmem:[#allocation3 + $0xdd8] sm:$0xff] %v4890
    %4955 = vst [vmem:[#allocation3 + $0xe20] sm:$0xff] %v4891
    %4956 = vst [vmem:[#allocation3 + $0xe68] sm:$0xff] %v4892
    %4957 = vst [vmem:[#allocation3 + $0xeb0] sm:$0xff] %v4893
    %4958 = vst [vmem:[#allocation3 + $0xef8] sm:$0xff] %v4894
    %4959 = vst [vmem:[#allocation3 + $0xf40] sm:$0xff] %v4895
    %4960 = vst [vmem:[#allocation3 + $0xf88] sm:$0xff] %v4896
    %4961 = vst [vmem:[#allocation3 + $0xfd0] sm:$0xff] %v4897
    %4962 = vst [vmem:[#allocation3 + $0x1018] sm:$0xff] %v4898
    %4963 = vst [vmem:[#allocation3 + $0x1060] sm:$0xff] %v4899
    %4964 = vst [vmem:[#allocation3 + $0x10a8] sm:$0xff] %v4900
    %4965 = vst [vmem:[#allocation3 + $0x10f0] sm:$0xff] %v4901
    %4966 = vst [vmem:[#allocation3 + $0x1138] sm:$0xff] %v4902
    %4967 = vst [vmem:[#allocation3 + $0x1180] sm:$0xff] %v4903
    %4968 = vst [vmem:[#allocation3 + $0x11c8] sm:$0xff] %v4904
    %v4969 = vld [vmem:[%s240] sm:$0xff]
    %v4970 = vld [vmem:[%s240 + $0x8] sm:$0xff]
    %v4971 = vld [vmem:[%s240 + $0x18] sm:$0xff]
    %v4972 = vld [vmem:[%s240 + $0x20] sm:$0xff]
    %v4973 = vld [vmem:[%s240 + $0x30] sm:$0xff]
    %v4974 = vld [vmem:[%s240 + $0x38] sm:$0xff]
    %v4975 = vld [vmem:[%s240 + $0x48] sm:$0xff]
    %v4976 = vld [vmem:[%s240 + $0x50] sm:$0xff]
    %v4977 = vld [vmem:[%s240 + $0x60] sm:$0xff]
    %v4978 = vld [vmem:[%s240 + $0x68] sm:$0xff]
    %v4979 = vld [vmem:[%s240 + $0x78] sm:$0xff]
    %v4980 = vld [vmem:[%s240 + $0x80] sm:$0xff]
    %v4981 = vld [vmem:[%s240 + $0x90] sm:$0xff]
    %v4982 = vld [vmem:[%s240 + $0x98] sm:$0xff]
    %v4983 = vld [vmem:[%s240 + $0xa8] sm:$0xff]
    %v4984 = vld [vmem:[%s240 + $0xb0] sm:$0xff]
    %v4985 = vld [vmem:[%s240 + $0xc0] sm:$0xff]
    %v4986 = vld [vmem:[%s240 + $0xc8] sm:$0xff]
    %v4987 = vld [vmem:[%s240 + $0xd8] sm:$0xff]
    %v4988 = vld [vmem:[%s240 + $0xe0] sm:$0xff]
    %v4989 = vld [vmem:[%s240 + $0xf0] sm:$0xff]
    %v4990 = vld [vmem:[%s240 + $0xf8] sm:$0xff]
    %v4991 = vld [vmem:[%s240 + $0x108] sm:$0xff]
    %v4992 = vld [vmem:[%s240 + $0x110] sm:$0xff]
    %v4993 = vld [vmem:[%s240 + $0x120] sm:$0xff]
    %v4994 = vld [vmem:[%s240 + $0x128] sm:$0xff]
    %v4995 = vld [vmem:[%s240 + $0x138] sm:$0xff]
    %v4996 = vld [vmem:[%s240 + $0x140] sm:$0xff]
    %v4997 = vld [vmem:[%s240 + $0x150] sm:$0xff]
    %v4998 = vld [vmem:[%s240 + $0x158] sm:$0xff]
    %v4999 = vld [vmem:[%s240 + $0x168] sm:$0xff]
    %v5000 = vld [vmem:[%s240 + $0x170] sm:$0xff]
    %v5001 = vld [vmem:[%s240 + $0x1b0] sm:$0xff]
    %v5002 = vld [vmem:[%s240 + $0x1b8] sm:$0xff]
    %v5003 = vld [vmem:[%s240 + $0x1c8] sm:$0xff]
    %v5004 = vld [vmem:[%s240 + $0x1d0] sm:$0xff]
    %v5005 = vld [vmem:[%s240 + $0x1e0] sm:$0xff]
    %v5006 = vld [vmem:[%s240 + $0x1e8] sm:$0xff]
    %v5007 = vld [vmem:[%s240 + $0x1f8] sm:$0xff]
    %v5008 = vld [vmem:[%s240 + $0x200] sm:$0xff]
    %v5009 = vld [vmem:[%s240 + $0x210] sm:$0xff]
    %v5010 = vld [vmem:[%s240 + $0x218] sm:$0xff]
    %v5011 = vld [vmem:[%s240 + $0x228] sm:$0xff]
    %v5012 = vld [vmem:[%s240 + $0x230] sm:$0xff]
    %v5013 = vld [vmem:[%s240 + $0x240] sm:$0xff]
    %v5014 = vld [vmem:[%s240 + $0x248] sm:$0xff]
    %v5015 = vld [vmem:[%s240 + $0x258] sm:$0xff]
    %v5016 = vld [vmem:[%s240 + $0x260] sm:$0xff]
    %v5017 = vld [vmem:[%s240 + $0x270] sm:$0xff]
    %v5018 = vld [vmem:[%s240 + $0x278] sm:$0xff]
    %v5019 = vld [vmem:[%s240 + $0x288] sm:$0xff]
    %v5020 = vld [vmem:[%s240 + $0x290] sm:$0xff]
    %v5021 = vld [vmem:[%s240 + $0x2a0] sm:$0xff]
    %v5022 = vld [vmem:[%s240 + $0x2a8] sm:$0xff]
    %v5023 = vld [vmem:[%s240 + $0x2b8] sm:$0xff]
    %v5024 = vld [vmem:[%s240 + $0x2c0] sm:$0xff]
    %v5025 = vld [vmem:[%s240 + $0x2d0] sm:$0xff]
    %v5026 = vld [vmem:[%s240 + $0x2d8] sm:$0xff]
    %v5027 = vld [vmem:[%s240 + $0x2e8] sm:$0xff]
    %v5028 = vld [vmem:[%s240 + $0x2f0] sm:$0xff]
    %v5029 = vld [vmem:[%s240 + $0x300] sm:$0xff]
    %v5030 = vld [vmem:[%s240 + $0x308] sm:$0xff]
    %v5031 = vld [vmem:[%s240 + $0x318] sm:$0xff]
    %v5032 = vld [vmem:[%s240 + $0x320] sm:$0xff]
    %5033 = vst [vmem:[#allocation3 + $0x18] sm:$0xff] %v4969
    %5034 = vst [vmem:[#allocation3 + $0x60] sm:$0xff] %v4970
    %5035 = vst [vmem:[#allocation3 + $0xa8] sm:$0xff] %v4971
    %5036 = vst [vmem:[#allocation3 + $0xf0] sm:$0xff] %v4972
    %5037 = vst [vmem:[#allocation3 + $0x138] sm:$0xff] %v4973
    %5038 = vst [vmem:[#allocation3 + $0x180] sm:$0xff] %v4974
    %5039 = vst [vmem:[#allocation3 + $0x1c8] sm:$0xff] %v4975
    %5040 = vst [vmem:[#allocation3 + $0x210] sm:$0xff] %v4976
    %5041 = vst [vmem:[#allocation3 + $0x258] sm:$0xff] %v4977
    %5042 = vst [vmem:[#allocation3 + $0x2a0] sm:$0xff] %v4978
    %5043 = vst [vmem:[#allocation3 + $0x2e8] sm:$0xff] %v4979
    %5044 = vst [vmem:[#allocation3 + $0x330] sm:$0xff] %v4980
    %5045 = vst [vmem:[#allocation3 + $0x378] sm:$0xff] %v4981
    %5046 = vst [vmem:[#allocation3 + $0x3c0] sm:$0xff] %v4982
    %5047 = vst [vmem:[#allocation3 + $0x408] sm:$0xff] %v4983
    %5048 = vst [vmem:[#allocation3 + $0x450] sm:$0xff] %v4984
    %5049 = vst [vmem:[#allocation3 + $0x498] sm:$0xff] %v4985
    %5050 = vst [vmem:[#allocation3 + $0x4e0] sm:$0xff] %v4986
    %5051 = vst [vmem:[#allocation3 + $0x528] sm:$0xff] %v4987
    %5052 = vst [vmem:[#allocation3 + $0x570] sm:$0xff] %v4988
    %5053 = vst [vmem:[#allocation3 + $0x5b8] sm:$0xff] %v4989
    %5054 = vst [vmem:[#allocation3 + $0x600] sm:$0xff] %v4990
    %5055 = vst [vmem:[#allocation3 + $0x648] sm:$0xff] %v4991
    %5056 = vst [vmem:[#allocation3 + $0x690] sm:$0xff] %v4992
    %5057 = vst [vmem:[#allocation3 + $0x6d8] sm:$0xff] %v4993
    %5058 = vst [vmem:[#allocation3 + $0x720] sm:$0xff] %v4994
    %5059 = vst [vmem:[#allocation3 + $0x768] sm:$0xff] %v4995
    %5060 = vst [vmem:[#allocation3 + $0x7b0] sm:$0xff] %v4996
    %5061 = vst [vmem:[#allocation3 + $0x7f8] sm:$0xff] %v4997
    %5062 = vst [vmem:[#allocation3 + $0x840] sm:$0xff] %v4998
    %5063 = vst [vmem:[#allocation3 + $0x888] sm:$0xff] %v4999
    %5064 = vst [vmem:[#allocation3 + $0x8d0] sm:$0xff] %v5000
    %5065 = vst [vmem:[#allocation3 + $0x918] sm:$0xff] %v5001
    %5066 = vst [vmem:[#allocation3 + $0x960] sm:$0xff] %v5002
    %5067 = vst [vmem:[#allocation3 + $0x9a8] sm:$0xff] %v5003
    %5068 = vst [vmem:[#allocation3 + $0x9f0] sm:$0xff] %v5004
    %5069 = vst [vmem:[#allocation3 + $0xa38] sm:$0xff] %v5005
    %5070 = vst [vmem:[#allocation3 + $0xa80] sm:$0xff] %v5006
    %5071 = vst [vmem:[#allocation3 + $0xac8] sm:$0xff] %v5007
    %5072 = vst [vmem:[#allocation3 + $0xb10] sm:$0xff] %v5008
    %5073 = vst [vmem:[#allocation3 + $0xb58] sm:$0xff] %v5009
    %5074 = vst [vmem:[#allocation3 + $0xba0] sm:$0xff] %v5010
    %5075 = vst [vmem:[#allocation3 + $0xbe8] sm:$0xff] %v5011
    %5076 = vst [vmem:[#allocation3 + $0xc30] sm:$0xff] %v5012
    %5077 = vst [vmem:[#allocation3 + $0xc78] sm:$0xff] %v5013
    %5078 = vst [vmem:[#allocation3 + $0xcc0] sm:$0xff] %v5014
    %5079 = vst [vmem:[#allocation3 + $0xd08] sm:$0xff] %v5015
    %5080 = vst [vmem:[#allocation3 + $0xd50] sm:$0xff] %v5016
    %5081 = vst [vmem:[#allocation3 + $0xd98] sm:$0xff] %v5017
    %5082 = vst [vmem:[#allocation3 + $0xde0] sm:$0xff] %v5018
    %5083 = vst [vmem:[#allocation3 + $0xe28] sm:$0xff] %v5019
    %5084 = vst [vmem:[#allocation3 + $0xe70] sm:$0xff] %v5020
    %5085 = vst [vmem:[#allocation3 + $0xeb8] sm:$0xff] %v5021
    %5086 = vst [vmem:[#allocation3 + $0xf00] sm:$0xff] %v5022
    %5087 = vst [vmem:[#allocation3 + $0xf48] sm:$0xff] %v5023
    %5088 = vst [vmem:[#allocation3 + $0xf90] sm:$0xff] %v5024
    %5089 = vst [vmem:[#allocation3 + $0xfd8] sm:$0xff] %v5025
    %5090 = vst [vmem:[#allocation3 + $0x1020] sm:$0xff] %v5026
    %5091 = vst [vmem:[#allocation3 + $0x1068] sm:$0xff] %v5027
    %5092 = vst [vmem:[#allocation3 + $0x10b0] sm:$0xff] %v5028
    %5093 = vst [vmem:[#allocation3 + $0x10f8] sm:$0xff] %v5029
    %5094 = vst [vmem:[#allocation3 + $0x1140] sm:$0xff] %v5030
    %5095 = vst [vmem:[#allocation3 + $0x1188] sm:$0xff] %v5031
    %5096 = vst [vmem:[#allocation3 + $0x11d0] sm:$0xff] %v5032
    %v5097 = vld [vmem:[%s240 + $0x1] sm:$0xff]
    %v5098 = vld [vmem:[%s240 + $0x9] sm:$0xff]
    %v5099 = vld [vmem:[%s240 + $0x19] sm:$0xff]
    %v5100 = vld [vmem:[%s240 + $0x21] sm:$0xff]
    %v5101 = vld [vmem:[%s240 + $0x31] sm:$0xff]
    %v5102 = vld [vmem:[%s240 + $0x39] sm:$0xff]
    %v5103 = vld [vmem:[%s240 + $0x49] sm:$0xff]
    %v5104 = vld [vmem:[%s240 + $0x51] sm:$0xff]
    %v5105 = vld [vmem:[%s240 + $0x61] sm:$0xff]
    %v5106 = vld [vmem:[%s240 + $0x69] sm:$0xff]
    %v5107 = vld [vmem:[%s240 + $0x79] sm:$0xff]
    %v5108 = vld [vmem:[%s240 + $0x81] sm:$0xff]
    %v5109 = vld [vmem:[%s240 + $0x91] sm:$0xff]
    %v5110 = vld [vmem:[%s240 + $0x99] sm:$0xff]
    %v5111 = vld [vmem:[%s240 + $0xa9] sm:$0xff]
    %v5112 = vld [vmem:[%s240 + $0xb1] sm:$0xff]
    %v5113 = vld [vmem:[%s240 + $0xc1] sm:$0xff]
    %v5114 = vld [vmem:[%s240 + $0xc9] sm:$0xff]
    %v5115 = vld [vmem:[%s240 + $0xd9] sm:$0xff]
    %v5116 = vld [vmem:[%s240 + $0xe1] sm:$0xff]
    %v5117 = vld [vmem:[%s240 + $0xf1] sm:$0xff]
    %v5118 = vld [vmem:[%s240 + $0xf9] sm:$0xff]
    %v5119 = vld [vmem:[%s240 + $0x109] sm:$0xff]
    %v5120 = vld [vmem:[%s240 + $0x111] sm:$0xff]
    %v5121 = vld [vmem:[%s240 + $0x121] sm:$0xff]
    %v5122 = vld [vmem:[%s240 + $0x129] sm:$0xff]
    %v5123 = vld [vmem:[%s240 + $0x139] sm:$0xff]
    %v5124 = vld [vmem:[%s240 + $0x141] sm:$0xff]
    %v5125 = vld [vmem:[%s240 + $0x151] sm:$0xff]
    %v5126 = vld [vmem:[%s240 + $0x159] sm:$0xff]
    %v5127 = vld [vmem:[%s240 + $0x169] sm:$0xff]
    %v5128 = vld [vmem:[%s240 + $0x171] sm:$0xff]
    %v5129 = vld [vmem:[%s240 + $0x1b1] sm:$0xff]
    %v5130 = vld [vmem:[%s240 + $0x1b9] sm:$0xff]
    %v5131 = vld [vmem:[%s240 + $0x1c9] sm:$0xff]
    %v5132 = vld [vmem:[%s240 + $0x1d1] sm:$0xff]
    %v5133 = vld [vmem:[%s240 + $0x1e1] sm:$0xff]
    %v5134 = vld [vmem:[%s240 + $0x1e9] sm:$0xff]
    %v5135 = vld [vmem:[%s240 + $0x1f9] sm:$0xff]
    %v5136 = vld [vmem:[%s240 + $0x201] sm:$0xff]
    %v5137 = vld [vmem:[%s240 + $0x211] sm:$0xff]
    %v5138 = vld [vmem:[%s240 + $0x219] sm:$0xff]
    %v5139 = vld [vmem:[%s240 + $0x229] sm:$0xff]
    %v5140 = vld [vmem:[%s240 + $0x231] sm:$0xff]
    %v5141 = vld [vmem:[%s240 + $0x241] sm:$0xff]
    %v5142 = vld [vmem:[%s240 + $0x249] sm:$0xff]
    %v5143 = vld [vmem:[%s240 + $0x259] sm:$0xff]
    %v5144 = vld [vmem:[%s240 + $0x261] sm:$0xff]
    %v5145 = vld [vmem:[%s240 + $0x271] sm:$0xff]
    %v5146 = vld [vmem:[%s240 + $0x279] sm:$0xff]
    %v5147 = vld [vmem:[%s240 + $0x289] sm:$0xff]
    %v5148 = vld [vmem:[%s240 + $0x291] sm:$0xff]
    %v5149 = vld [vmem:[%s240 + $0x2a1] sm:$0xff]
    %v5150 = vld [vmem:[%s240 + $0x2a9] sm:$0xff]
    %v5151 = vld [vmem:[%s240 + $0x2b9] sm:$0xff]
    %v5152 = vld [vmem:[%s240 + $0x2c1] sm:$0xff]
    %v5153 = vld [vmem:[%s240 + $0x2d1] sm:$0xff]
    %v5154 = vld [vmem:[%s240 + $0x2d9] sm:$0xff]
    %v5155 = vld [vmem:[%s240 + $0x2e9] sm:$0xff]
    %v5156 = vld [vmem:[%s240 + $0x2f1] sm:$0xff]
    %v5157 = vld [vmem:[%s240 + $0x301] sm:$0xff]
    %v5158 = vld [vmem:[%s240 + $0x309] sm:$0xff]
    %v5159 = vld [vmem:[%s240 + $0x319] sm:$0xff]
    %v5160 = vld [vmem:[%s240 + $0x321] sm:$0xff]
    %5161 = vst [vmem:[#allocation3 + $0x20] sm:$0xff] %v5097
    %5162 = vst [vmem:[#allocation3 + $0x68] sm:$0xff] %v5098
    %5163 = vst [vmem:[#allocation3 + $0xb0] sm:$0xff] %v5099
    %5164 = vst [vmem:[#allocation3 + $0xf8] sm:$0xff] %v5100
    %5165 = vst [vmem:[#allocation3 + $0x140] sm:$0xff] %v5101
    %5166 = vst [vmem:[#allocation3 + $0x188] sm:$0xff] %v5102
    %5167 = vst [vmem:[#allocation3 + $0x1d0] sm:$0xff] %v5103
    %5168 = vst [vmem:[#allocation3 + $0x218] sm:$0xff] %v5104
    %5169 = vst [vmem:[#allocation3 + $0x260] sm:$0xff] %v5105
    %5170 = vst [vmem:[#allocation3 + $0x2a8] sm:$0xff] %v5106
    %5171 = vst [vmem:[#allocation3 + $0x2f0] sm:$0xff] %v5107
    %5172 = vst [vmem:[#allocation3 + $0x338] sm:$0xff] %v5108
    %5173 = vst [vmem:[#allocation3 + $0x380] sm:$0xff] %v5109
    %5174 = vst [vmem:[#allocation3 + $0x3c8] sm:$0xff] %v5110
    %5175 = vst [vmem:[#allocation3 + $0x410] sm:$0xff] %v5111
    %5176 = vst [vmem:[#allocation3 + $0x458] sm:$0xff] %v5112
    %5177 = vst [vmem:[#allocation3 + $0x4a0] sm:$0xff] %v5113
    %5178 = vst [vmem:[#allocation3 + $0x4e8] sm:$0xff] %v5114
    %5179 = vst [vmem:[#allocation3 + $0x530] sm:$0xff] %v5115
    %5180 = vst [vmem:[#allocation3 + $0x578] sm:$0xff] %v5116
    %5181 = vst [vmem:[#allocation3 + $0x5c0] sm:$0xff] %v5117
    %5182 = vst [vmem:[#allocation3 + $0x608] sm:$0xff] %v5118
    %5183 = vst [vmem:[#allocation3 + $0x650] sm:$0xff] %v5119
    %5184 = vst [vmem:[#allocation3 + $0x698] sm:$0xff] %v5120
    %5185 = vst [vmem:[#allocation3 + $0x6e0] sm:$0xff] %v5121
    %5186 = vst [vmem:[#allocation3 + $0x728] sm:$0xff] %v5122
    %5187 = vst [vmem:[#allocation3 + $0x770] sm:$0xff] %v5123
    %5188 = vst [vmem:[#allocation3 + $0x7b8] sm:$0xff] %v5124
    %5189 = vst [vmem:[#allocation3 + $0x800] sm:$0xff] %v5125
    %5190 = vst [vmem:[#allocation3 + $0x848] sm:$0xff] %v5126
    %5191 = vst [vmem:[#allocation3 + $0x890] sm:$0xff] %v5127
    %5192 = vst [vmem:[#allocation3 + $0x8d8] sm:$0xff] %v5128
    %5193 = vst [vmem:[#allocation3 + $0x920] sm:$0xff] %v5129
    %5194 = vst [vmem:[#allocation3 + $0x968] sm:$0xff] %v5130
    %5195 = vst [vmem:[#allocation3 + $0x9b0] sm:$0xff] %v5131
    %5196 = vst [vmem:[#allocation3 + $0x9f8] sm:$0xff] %v5132
    %5197 = vst [vmem:[#allocation3 + $0xa40] sm:$0xff] %v5133
    %5198 = vst [vmem:[#allocation3 + $0xa88] sm:$0xff] %v5134
    %5199 = vst [vmem:[#allocation3 + $0xad0] sm:$0xff] %v5135
    %5200 = vst [vmem:[#allocation3 + $0xb18] sm:$0xff] %v5136
    %5201 = vst [vmem:[#allocation3 + $0xb60] sm:$0xff] %v5137
    %5202 = vst [vmem:[#allocation3 + $0xba8] sm:$0xff] %v5138
    %5203 = vst [vmem:[#allocation3 + $0xbf0] sm:$0xff] %v5139
    %5204 = vst [vmem:[#allocation3 + $0xc38] sm:$0xff] %v5140
    %5205 = vst [vmem:[#allocation3 + $0xc80] sm:$0xff] %v5141
    %5206 = vst [vmem:[#allocation3 + $0xcc8] sm:$0xff] %v5142
    %5207 = vst [vmem:[#allocation3 + $0xd10] sm:$0xff] %v5143
    %5208 = vst [vmem:[#allocation3 + $0xd58] sm:$0xff] %v5144
    %5209 = vst [vmem:[#allocation3 + $0xda0] sm:$0xff] %v5145
    %5210 = vst [vmem:[#allocation3 + $0xde8] sm:$0xff] %v5146
    %5211 = vst [vmem:[#allocation3 + $0xe30] sm:$0xff] %v5147
    %5212 = vst [vmem:[#allocation3 + $0xe78] sm:$0xff] %v5148
    %5213 = vst [vmem:[#allocation3 + $0xec0] sm:$0xff] %v5149
    %5214 = vst [vmem:[#allocation3 + $0xf08] sm:$0xff] %v5150
    %5215 = vst [vmem:[#allocation3 + $0xf50] sm:$0xff] %v5151
    %5216 = vst [vmem:[#allocation3 + $0xf98] sm:$0xff] %v5152
    %5217 = vst [vmem:[#allocation3 + $0xfe0] sm:$0xff] %v5153
    %5218 = vst [vmem:[#allocation3 + $0x1028] sm:$0xff] %v5154
    %5219 = vst [vmem:[#allocation3 + $0x1070] sm:$0xff] %v5155
    %5220 = vst [vmem:[#allocation3 + $0x10b8] sm:$0xff] %v5156
    %5221 = vst [vmem:[#allocation3 + $0x1100] sm:$0xff] %v5157
    %5222 = vst [vmem:[#allocation3 + $0x1148] sm:$0xff] %v5158
    %5223 = vst [vmem:[#allocation3 + $0x1190] sm:$0xff] %v5159
    %5224 = vst [vmem:[#allocation3 + $0x11d8] sm:$0xff] %v5160
    %v5225 = vld [vmem:[%s240 + $0x2] sm:$0xff]
    %v5226 = vld [vmem:[%s240 + $0xa] sm:$0xff]
    %v5227 = vld [vmem:[%s240 + $0x1a] sm:$0xff]
    %v5228 = vld [vmem:[%s240 + $0x22] sm:$0xff]
    %v5229 = vld [vmem:[%s240 + $0x32] sm:$0xff]
    %v5230 = vld [vmem:[%s240 + $0x3a] sm:$0xff]
    %v5231 = vld [vmem:[%s240 + $0x4a] sm:$0xff]
    %v5232 = vld [vmem:[%s240 + $0x52] sm:$0xff]
    %v5233 = vld [vmem:[%s240 + $0x62] sm:$0xff]
    %v5234 = vld [vmem:[%s240 + $0x6a] sm:$0xff]
    %v5235 = vld [vmem:[%s240 + $0x7a] sm:$0xff]
    %v5236 = vld [vmem:[%s240 + $0x82] sm:$0xff]
    %v5237 = vld [vmem:[%s240 + $0x92] sm:$0xff]
    %v5238 = vld [vmem:[%s240 + $0x9a] sm:$0xff]
    %v5239 = vld [vmem:[%s240 + $0xaa] sm:$0xff]
    %v5240 = vld [vmem:[%s240 + $0xb2] sm:$0xff]
    %v5241 = vld [vmem:[%s240 + $0xc2] sm:$0xff]
    %v5242 = vld [vmem:[%s240 + $0xca] sm:$0xff]
    %v5243 = vld [vmem:[%s240 + $0xda] sm:$0xff]
    %v5244 = vld [vmem:[%s240 + $0xe2] sm:$0xff]
    %v5245 = vld [vmem:[%s240 + $0xf2] sm:$0xff]
    %v5246 = vld [vmem:[%s240 + $0xfa] sm:$0xff]
    %v5247 = vld [vmem:[%s240 + $0x10a] sm:$0xff]
    %v5248 = vld [vmem:[%s240 + $0x112] sm:$0xff]
    %v5249 = vld [vmem:[%s240 + $0x122] sm:$0xff]
    %v5250 = vld [vmem:[%s240 + $0x12a] sm:$0xff]
    %v5251 = vld [vmem:[%s240 + $0x13a] sm:$0xff]
    %v5252 = vld [vmem:[%s240 + $0x142] sm:$0xff]
    %v5253 = vld [vmem:[%s240 + $0x152] sm:$0xff]
    %v5254 = vld [vmem:[%s240 + $0x15a] sm:$0xff]
    %v5255 = vld [vmem:[%s240 + $0x16a] sm:$0xff]
    %v5256 = vld [vmem:[%s240 + $0x172] sm:$0xff]
    %v5257 = vld [vmem:[%s240 + $0x1b2] sm:$0xff]
    %v5258 = vld [vmem:[%s240 + $0x1ba] sm:$0xff]
    %v5259 = vld [vmem:[%s240 + $0x1ca] sm:$0xff]
    %v5260 = vld [vmem:[%s240 + $0x1d2] sm:$0xff]
    %v5261 = vld [vmem:[%s240 + $0x1e2] sm:$0xff]
    %v5262 = vld [vmem:[%s240 + $0x1ea] sm:$0xff]
    %v5263 = vld [vmem:[%s240 + $0x1fa] sm:$0xff]
    %v5264 = vld [vmem:[%s240 + $0x202] sm:$0xff]
    %v5265 = vld [vmem:[%s240 + $0x212] sm:$0xff]
    %v5266 = vld [vmem:[%s240 + $0x21a] sm:$0xff]
    %v5267 = vld [vmem:[%s240 + $0x22a] sm:$0xff]
    %v5268 = vld [vmem:[%s240 + $0x232] sm:$0xff]
    %v5269 = vld [vmem:[%s240 + $0x242] sm:$0xff]
    %v5270 = vld [vmem:[%s240 + $0x24a] sm:$0xff]
    %v5271 = vld [vmem:[%s240 + $0x25a] sm:$0xff]
    %v5272 = vld [vmem:[%s240 + $0x262] sm:$0xff]
    %v5273 = vld [vmem:[%s240 + $0x272] sm:$0xff]
    %v5274 = vld [vmem:[%s240 + $0x27a] sm:$0xff]
    %v5275 = vld [vmem:[%s240 + $0x28a] sm:$0xff]
    %v5276 = vld [vmem:[%s240 + $0x292] sm:$0xff]
    %v5277 = vld [vmem:[%s240 + $0x2a2] sm:$0xff]
    %v5278 = vld [vmem:[%s240 + $0x2aa] sm:$0xff]
    %v5279 = vld [vmem:[%s240 + $0x2ba] sm:$0xff]
    %v5280 = vld [vmem:[%s240 + $0x2c2] sm:$0xff]
    %v5281 = vld [vmem:[%s240 + $0x2d2] sm:$0xff]
    %v5282 = vld [vmem:[%s240 + $0x2da] sm:$0xff]
    %v5283 = vld [vmem:[%s240 + $0x2ea] sm:$0xff]
    %v5284 = vld [vmem:[%s240 + $0x2f2] sm:$0xff]
    %v5285 = vld [vmem:[%s240 + $0x302] sm:$0xff]
    %v5286 = vld [vmem:[%s240 + $0x30a] sm:$0xff]
    %v5287 = vld [vmem:[%s240 + $0x31a] sm:$0xff]
    %v5288 = vld [vmem:[%s240 + $0x322] sm:$0xff]
    %5289 = vst [vmem:[#allocation3 + $0x28] sm:$0xff] %v5225
    %5290 = vst [vmem:[#allocation3 + $0x70] sm:$0xff] %v5226
    %5291 = vst [vmem:[#allocation3 + $0xb8] sm:$0xff] %v5227
    %5292 = vst [vmem:[#allocation3 + $0x100] sm:$0xff] %v5228
    %5293 = vst [vmem:[#allocation3 + $0x148] sm:$0xff] %v5229
    %5294 = vst [vmem:[#allocation3 + $0x190] sm:$0xff] %v5230
    %5295 = vst [vmem:[#allocation3 + $0x1d8] sm:$0xff] %v5231
    %5296 = vst [vmem:[#allocation3 + $0x220] sm:$0xff] %v5232
    %5297 = vst [vmem:[#allocation3 + $0x268] sm:$0xff] %v5233
    %5298 = vst [vmem:[#allocation3 + $0x2b0] sm:$0xff] %v5234
    %5299 = vst [vmem:[#allocation3 + $0x2f8] sm:$0xff] %v5235
    %5300 = vst [vmem:[#allocation3 + $0x340] sm:$0xff] %v5236
    %5301 = vst [vmem:[#allocation3 + $0x388] sm:$0xff] %v5237
    %5302 = vst [vmem:[#allocation3 + $0x3d0] sm:$0xff] %v5238
    %5303 = vst [vmem:[#allocation3 + $0x418] sm:$0xff] %v5239
    %5304 = vst [vmem:[#allocation3 + $0x460] sm:$0xff] %v5240
    %5305 = vst [vmem:[#allocation3 + $0x4a8] sm:$0xff] %v5241
    %5306 = vst [vmem:[#allocation3 + $0x4f0] sm:$0xff] %v5242
    %5307 = vst [vmem:[#allocation3 + $0x538] sm:$0xff] %v5243
    %5308 = vst [vmem:[#allocation3 + $0x580] sm:$0xff] %v5244
    %5309 = vst [vmem:[#allocation3 + $0x5c8] sm:$0xff] %v5245
    %5310 = vst [vmem:[#allocation3 + $0x610] sm:$0xff] %v5246
    %5311 = vst [vmem:[#allocation3 + $0x658] sm:$0xff] %v5247
    %5312 = vst [vmem:[#allocation3 + $0x6a0] sm:$0xff] %v5248
    %5313 = vst [vmem:[#allocation3 + $0x6e8] sm:$0xff] %v5249
    %5314 = vst [vmem:[#allocation3 + $0x730] sm:$0xff] %v5250
    %5315 = vst [vmem:[#allocation3 + $0x778] sm:$0xff] %v5251
    %5316 = vst [vmem:[#allocation3 + $0x7c0] sm:$0xff] %v5252
    %5317 = vst [vmem:[#allocation3 + $0x808] sm:$0xff] %v5253
    %5318 = vst [vmem:[#allocation3 + $0x850] sm:$0xff] %v5254
    %5319 = vst [vmem:[#allocation3 + $0x898] sm:$0xff] %v5255
    %5320 = vst [vmem:[#allocation3 + $0x8e0] sm:$0xff] %v5256
    %5321 = vst [vmem:[#allocation3 + $0x928] sm:$0xff] %v5257
    %5322 = vst [vmem:[#allocation3 + $0x970] sm:$0xff] %v5258
    %5323 = vst [vmem:[#allocation3 + $0x9b8] sm:$0xff] %v5259
    %5324 = vst [vmem:[#allocation3 + $0xa00] sm:$0xff] %v5260
    %5325 = vst [vmem:[#allocation3 + $0xa48] sm:$0xff] %v5261
    %5326 = vst [vmem:[#allocation3 + $0xa90] sm:$0xff] %v5262
    %5327 = vst [vmem:[#allocation3 + $0xad8] sm:$0xff] %v5263
    %5328 = vst [vmem:[#allocation3 + $0xb20] sm:$0xff] %v5264
    %5329 = vst [vmem:[#allocation3 + $0xb68] sm:$0xff] %v5265
    %5330 = vst [vmem:[#allocation3 + $0xbb0] sm:$0xff] %v5266
    %5331 = vst [vmem:[#allocation3 + $0xbf8] sm:$0xff] %v5267
    %5332 = vst [vmem:[#allocation3 + $0xc40] sm:$0xff] %v5268
    %5333 = vst [vmem:[#allocation3 + $0xc88] sm:$0xff] %v5269
    %5334 = vst [vmem:[#allocation3 + $0xcd0] sm:$0xff] %v5270
    %5335 = vst [vmem:[#allocation3 + $0xd18] sm:$0xff] %v5271
    %5336 = vst [vmem:[#allocation3 + $0xd60] sm:$0xff] %v5272
    %5337 = vst [vmem:[#allocation3 + $0xda8] sm:$0xff] %v5273
    %5338 = vst [vmem:[#allocation3 + $0xdf0] sm:$0xff] %v5274
    %5339 = vst [vmem:[#allocation3 + $0xe38] sm:$0xff] %v5275
    %5340 = vst [vmem:[#allocation3 + $0xe80] sm:$0xff] %v5276
    %5341 = vst [vmem:[#allocation3 + $0xec8] sm:$0xff] %v5277
    %5342 = vst [vmem:[#allocation3 + $0xf10] sm:$0xff] %v5278
    %5343 = vst [vmem:[#allocation3 + $0xf58] sm:$0xff] %v5279
    %5344 = vst [vmem:[#allocation3 + $0xfa0] sm:$0xff] %v5280
    %5345 = vst [vmem:[#allocation3 + $0xfe8] sm:$0xff] %v5281
    %5346 = vst [vmem:[#allocation3 + $0x1030] sm:$0xff] %v5282
    %5347 = vst [vmem:[#allocation3 + $0x1078] sm:$0xff] %v5283
    %5348 = vst [vmem:[#allocation3 + $0x10c0] sm:$0xff] %v5284
    %5349 = vst [vmem:[#allocation3 + $0x1108] sm:$0xff] %v5285
    %5350 = vst [vmem:[#allocation3 + $0x1150] sm:$0xff] %v5286
    %5351 = vst [vmem:[#allocation3 + $0x1198] sm:$0xff] %v5287
    %5352 = vst [vmem:[#allocation3 + $0x11e0] sm:$0xff] %v5288
    %v5353 = vld [vmem:[%s1073] sm:$0xff]
    %v5354 = vld [vmem:[%s1073 + $0x8] sm:$0xff]
    %v5355 = vld [vmem:[%s1073 + $0x18] sm:$0xff]
    %v5356 = vld [vmem:[%s1073 + $0x20] sm:$0xff]
    %v5357 = vld [vmem:[%s1073 + $0x30] sm:$0xff]
    %v5358 = vld [vmem:[%s1073 + $0x38] sm:$0xff]
    %v5359 = vld [vmem:[%s1073 + $0x48] sm:$0xff]
    %v5360 = vld [vmem:[%s1073 + $0x50] sm:$0xff]
    %v5361 = vld [vmem:[%s1073 + $0x60] sm:$0xff]
    %v5362 = vld [vmem:[%s1073 + $0x68] sm:$0xff]
    %v5363 = vld [vmem:[%s1073 + $0x78] sm:$0xff]
    %v5364 = vld [vmem:[%s1073 + $0x80] sm:$0xff]
    %v5365 = vld [vmem:[%s1073 + $0x90] sm:$0xff]
    %v5366 = vld [vmem:[%s1073 + $0x98] sm:$0xff]
    %v5367 = vld [vmem:[%s1073 + $0xa8] sm:$0xff]
    %v5368 = vld [vmem:[%s1073 + $0xb0] sm:$0xff]
    %v5369 = vld [vmem:[%s1073 + $0xc0] sm:$0xff]
    %v5370 = vld [vmem:[%s1073 + $0xc8] sm:$0xff]
    %v5371 = vld [vmem:[%s1073 + $0xd8] sm:$0xff]
    %v5372 = vld [vmem:[%s1073 + $0xe0] sm:$0xff]
    %v5373 = vld [vmem:[%s1073 + $0xf0] sm:$0xff]
    %v5374 = vld [vmem:[%s1073 + $0xf8] sm:$0xff]
    %v5375 = vld [vmem:[%s1073 + $0x108] sm:$0xff]
    %v5376 = vld [vmem:[%s1073 + $0x110] sm:$0xff]
    %v5377 = vld [vmem:[%s1073 + $0x120] sm:$0xff]
    %v5378 = vld [vmem:[%s1073 + $0x128] sm:$0xff]
    %v5379 = vld [vmem:[%s1073 + $0x138] sm:$0xff]
    %v5380 = vld [vmem:[%s1073 + $0x140] sm:$0xff]
    %v5381 = vld [vmem:[%s1073 + $0x150] sm:$0xff]
    %v5382 = vld [vmem:[%s1073 + $0x158] sm:$0xff]
    %v5383 = vld [vmem:[%s1073 + $0x168] sm:$0xff]
    %v5384 = vld [vmem:[%s1073 + $0x170] sm:$0xff]
    %v5385 = vld [vmem:[%s1073 + $0x1b0] sm:$0xff]
    %v5386 = vld [vmem:[%s1073 + $0x1b8] sm:$0xff]
    %v5387 = vld [vmem:[%s1073 + $0x1c8] sm:$0xff]
    %v5388 = vld [vmem:[%s1073 + $0x1d0] sm:$0xff]
    %v5389 = vld [vmem:[%s1073 + $0x1e0] sm:$0xff]
    %v5390 = vld [vmem:[%s1073 + $0x1e8] sm:$0xff]
    %v5391 = vld [vmem:[%s1073 + $0x1f8] sm:$0xff]
    %v5392 = vld [vmem:[%s1073 + $0x200] sm:$0xff]
    %v5393 = vld [vmem:[%s1073 + $0x210] sm:$0xff]
    %v5394 = vld [vmem:[%s1073 + $0x218] sm:$0xff]
    %v5395 = vld [vmem:[%s1073 + $0x228] sm:$0xff]
    %v5396 = vld [vmem:[%s1073 + $0x230] sm:$0xff]
    %v5397 = vld [vmem:[%s1073 + $0x240] sm:$0xff]
    %v5398 = vld [vmem:[%s1073 + $0x248] sm:$0xff]
    %v5399 = vld [vmem:[%s1073 + $0x258] sm:$0xff]
    %v5400 = vld [vmem:[%s1073 + $0x260] sm:$0xff]
    %v5401 = vld [vmem:[%s1073 + $0x270] sm:$0xff]
    %v5402 = vld [vmem:[%s1073 + $0x278] sm:$0xff]
    %v5403 = vld [vmem:[%s1073 + $0x288] sm:$0xff]
    %v5404 = vld [vmem:[%s1073 + $0x290] sm:$0xff]
    %v5405 = vld [vmem:[%s1073 + $0x2a0] sm:$0xff]
    %v5406 = vld [vmem:[%s1073 + $0x2a8] sm:$0xff]
    %v5407 = vld [vmem:[%s1073 + $0x2b8] sm:$0xff]
    %v5408 = vld [vmem:[%s1073 + $0x2c0] sm:$0xff]
    %v5409 = vld [vmem:[%s1073 + $0x2d0] sm:$0xff]
    %v5410 = vld [vmem:[%s1073 + $0x2d8] sm:$0xff]
    %v5411 = vld [vmem:[%s1073 + $0x2e8] sm:$0xff]
    %v5412 = vld [vmem:[%s1073 + $0x2f0] sm:$0xff]
    %v5413 = vld [vmem:[%s1073 + $0x300] sm:$0xff]
    %v5414 = vld [vmem:[%s1073 + $0x308] sm:$0xff]
    %v5415 = vld [vmem:[%s1073 + $0x318] sm:$0xff]
    %v5416 = vld [vmem:[%s1073 + $0x320] sm:$0xff]
    %5417 = vst [vmem:[#allocation3 + $0x30] sm:$0xff] %v5353
    %5418 = vst [vmem:[#allocation3 + $0x78] sm:$0xff] %v5354
    %5419 = vst [vmem:[#allocation3 + $0xc0] sm:$0xff] %v5355
    %5420 = vst [vmem:[#allocation3 + $0x108] sm:$0xff] %v5356
    %5421 = vst [vmem:[#allocation3 + $0x150] sm:$0xff] %v5357
    %5422 = vst [vmem:[#allocation3 + $0x198] sm:$0xff] %v5358
    %5423 = vst [vmem:[#allocation3 + $0x1e0] sm:$0xff] %v5359
    %5424 = vst [vmem:[#allocation3 + $0x228] sm:$0xff] %v5360
    %5425 = vst [vmem:[#allocation3 + $0x270] sm:$0xff] %v5361
    %5426 = vst [vmem:[#allocation3 + $0x2b8] sm:$0xff] %v5362
    %5427 = vst [vmem:[#allocation3 + $0x300] sm:$0xff] %v5363
    %5428 = vst [vmem:[#allocation3 + $0x348] sm:$0xff] %v5364
    %5429 = vst [vmem:[#allocation3 + $0x390] sm:$0xff] %v5365
    %5430 = vst [vmem:[#allocation3 + $0x3d8] sm:$0xff] %v5366
    %5431 = vst [vmem:[#allocation3 + $0x420] sm:$0xff] %v5367
    %5432 = vst [vmem:[#allocation3 + $0x468] sm:$0xff] %v5368
    %5433 = vst [vmem:[#allocation3 + $0x4b0] sm:$0xff] %v5369
    %5434 = vst [vmem:[#allocation3 + $0x4f8] sm:$0xff] %v5370
    %5435 = vst [vmem:[#allocation3 + $0x540] sm:$0xff] %v5371
    %5436 = vst [vmem:[#allocation3 + $0x588] sm:$0xff] %v5372
    %5437 = vst [vmem:[#allocation3 + $0x5d0] sm:$0xff] %v5373
    %5438 = vst [vmem:[#allocation3 + $0x618] sm:$0xff] %v5374
    %5439 = vst [vmem:[#allocation3 + $0x660] sm:$0xff] %v5375
    %5440 = vst [vmem:[#allocation3 + $0x6a8] sm:$0xff] %v5376
    %5441 = vst [vmem:[#allocation3 + $0x6f0] sm:$0xff] %v5377
    %5442 = vst [vmem:[#allocation3 + $0x738] sm:$0xff] %v5378
    %5443 = vst [vmem:[#allocation3 + $0x780] sm:$0xff] %v5379
    %5444 = vst [vmem:[#allocation3 + $0x7c8] sm:$0xff] %v5380
    %5445 = vst [vmem:[#allocation3 + $0x810] sm:$0xff] %v5381
    %5446 = vst [vmem:[#allocation3 + $0x858] sm:$0xff] %v5382
    %5447 = vst [vmem:[#allocation3 + $0x8a0] sm:$0xff] %v5383
    %5448 = vst [vmem:[#allocation3 + $0x8e8] sm:$0xff] %v5384
    %5449 = vst [vmem:[#allocation3 + $0x930] sm:$0xff] %v5385
    %5450 = vst [vmem:[#allocation3 + $0x978] sm:$0xff] %v5386
    %5451 = vst [vmem:[#allocation3 + $0x9c0] sm:$0xff] %v5387
    %5452 = vst [vmem:[#allocation3 + $0xa08] sm:$0xff] %v5388
    %5453 = vst [vmem:[#allocation3 + $0xa50] sm:$0xff] %v5389
    %5454 = vst [vmem:[#allocation3 + $0xa98] sm:$0xff] %v5390
    %5455 = vst [vmem:[#allocation3 + $0xae0] sm:$0xff] %v5391
    %5456 = vst [vmem:[#allocation3 + $0xb28] sm:$0xff] %v5392
    %5457 = vst [vmem:[#allocation3 + $0xb70] sm:$0xff] %v5393
    %5458 = vst [vmem:[#allocation3 + $0xbb8] sm:$0xff] %v5394
    %5459 = vst [vmem:[#allocation3 + $0xc00] sm:$0xff] %v5395
    %5460 = vst [vmem:[#allocation3 + $0xc48] sm:$0xff] %v5396
    %5461 = vst [vmem:[#allocation3 + $0xc90] sm:$0xff] %v5397
    %5462 = vst [vmem:[#allocation3 + $0xcd8] sm:$0xff] %v5398
    %5463 = vst [vmem:[#allocation3 + $0xd20] sm:$0xff] %v5399
    %5464 = vst [vmem:[#allocation3 + $0xd68] sm:$0xff] %v5400
    %5465 = vst [vmem:[#allocation3 + $0xdb0] sm:$0xff] %v5401
    %5466 = vst [vmem:[#allocation3 + $0xdf8] sm:$0xff] %v5402
    %5467 = vst [vmem:[#allocation3 + $0xe40] sm:$0xff] %v5403
    %5468 = vst [vmem:[#allocation3 + $0xe88] sm:$0xff] %v5404
    %5469 = vst [vmem:[#allocation3 + $0xed0] sm:$0xff] %v5405
    %5470 = vst [vmem:[#allocation3 + $0xf18] sm:$0xff] %v5406
    %5471 = vst [vmem:[#allocation3 + $0xf60] sm:$0xff] %v5407
    %5472 = vst [vmem:[#allocation3 + $0xfa8] sm:$0xff] %v5408
    %5473 = vst [vmem:[#allocation3 + $0xff0] sm:$0xff] %v5409
    %5474 = vst [vmem:[#allocation3 + $0x1038] sm:$0xff] %v5410
    %5475 = vst [vmem:[#allocation3 + $0x1080] sm:$0xff] %v5411
    %5476 = vst [vmem:[#allocation3 + $0x10c8] sm:$0xff] %v5412
    %5477 = vst [vmem:[#allocation3 + $0x1110] sm:$0xff] %v5413
    %5478 = vst [vmem:[#allocation3 + $0x1158] sm:$0xff] %v5414
    %5479 = vst [vmem:[#allocation3 + $0x11a0] sm:$0xff] %v5415
    %5480 = vst [vmem:[#allocation3 + $0x11e8] sm:$0xff] %v5416
    %v5481 = vld [vmem:[%s1073 + $0x1] sm:$0xff]
    %v5482 = vld [vmem:[%s1073 + $0x9] sm:$0xff]
    %v5483 = vld [vmem:[%s1073 + $0x19] sm:$0xff]
    %v5484 = vld [vmem:[%s1073 + $0x21] sm:$0xff]
    %v5485 = vld [vmem:[%s1073 + $0x31] sm:$0xff]
    %v5486 = vld [vmem:[%s1073 + $0x39] sm:$0xff]
    %v5487 = vld [vmem:[%s1073 + $0x49] sm:$0xff]
    %v5488 = vld [vmem:[%s1073 + $0x51] sm:$0xff]
    %v5489 = vld [vmem:[%s1073 + $0x61] sm:$0xff]
    %v5490 = vld [vmem:[%s1073 + $0x69] sm:$0xff]
    %v5491 = vld [vmem:[%s1073 + $0x79] sm:$0xff]
    %v5492 = vld [vmem:[%s1073 + $0x81] sm:$0xff]
    %v5493 = vld [vmem:[%s1073 + $0x91] sm:$0xff]
    %v5494 = vld [vmem:[%s1073 + $0x99] sm:$0xff]
    %v5495 = vld [vmem:[%s1073 + $0xa9] sm:$0xff]
    %v5496 = vld [vmem:[%s1073 + $0xb1] sm:$0xff]
    %v5497 = vld [vmem:[%s1073 + $0xc1] sm:$0xff]
    %v5498 = vld [vmem:[%s1073 + $0xc9] sm:$0xff]
    %v5499 = vld [vmem:[%s1073 + $0xd9] sm:$0xff]
    %v5500 = vld [vmem:[%s1073 + $0xe1] sm:$0xff]
    %v5501 = vld [vmem:[%s1073 + $0xf1] sm:$0xff]
    %v5502 = vld [vmem:[%s1073 + $0xf9] sm:$0xff]
    %v5503 = vld [vmem:[%s1073 + $0x109] sm:$0xff]
    %v5504 = vld [vmem:[%s1073 + $0x111] sm:$0xff]
    %v5505 = vld [vmem:[%s1073 + $0x121] sm:$0xff]
    %v5506 = vld [vmem:[%s1073 + $0x129] sm:$0xff]
    %v5507 = vld [vmem:[%s1073 + $0x139] sm:$0xff]
    %v5508 = vld [vmem:[%s1073 + $0x141] sm:$0xff]
    %v5509 = vld [vmem:[%s1073 + $0x151] sm:$0xff]
    %v5510 = vld [vmem:[%s1073 + $0x159] sm:$0xff]
    %v5511 = vld [vmem:[%s1073 + $0x169] sm:$0xff]
    %v5512 = vld [vmem:[%s1073 + $0x171] sm:$0xff]
    %v5513 = vld [vmem:[%s1073 + $0x1b1] sm:$0xff]
    %v5514 = vld [vmem:[%s1073 + $0x1b9] sm:$0xff]
    %v5515 = vld [vmem:[%s1073 + $0x1c9] sm:$0xff]
    %v5516 = vld [vmem:[%s1073 + $0x1d1] sm:$0xff]
    %v5517 = vld [vmem:[%s1073 + $0x1e1] sm:$0xff]
    %v5518 = vld [vmem:[%s1073 + $0x1e9] sm:$0xff]
    %v5519 = vld [vmem:[%s1073 + $0x1f9] sm:$0xff]
    %v5520 = vld [vmem:[%s1073 + $0x201] sm:$0xff]
    %v5521 = vld [vmem:[%s1073 + $0x211] sm:$0xff]
    %v5522 = vld [vmem:[%s1073 + $0x219] sm:$0xff]
    %v5523 = vld [vmem:[%s1073 + $0x229] sm:$0xff]
    %v5524 = vld [vmem:[%s1073 + $0x231] sm:$0xff]
    %v5525 = vld [vmem:[%s1073 + $0x241] sm:$0xff]
    %v5526 = vld [vmem:[%s1073 + $0x249] sm:$0xff]
    %v5527 = vld [vmem:[%s1073 + $0x259] sm:$0xff]
    %v5528 = vld [vmem:[%s1073 + $0x261] sm:$0xff]
    %v5529 = vld [vmem:[%s1073 + $0x271] sm:$0xff]
    %v5530 = vld [vmem:[%s1073 + $0x279] sm:$0xff]
    %v5531 = vld [vmem:[%s1073 + $0x289] sm:$0xff]
    %v5532 = vld [vmem:[%s1073 + $0x291] sm:$0xff]
    %v5533 = vld [vmem:[%s1073 + $0x2a1] sm:$0xff]
    %v5534 = vld [vmem:[%s1073 + $0x2a9] sm:$0xff]
    %v5535 = vld [vmem:[%s1073 + $0x2b9] sm:$0xff]
    %v5536 = vld [vmem:[%s1073 + $0x2c1] sm:$0xff]
    %v5537 = vld [vmem:[%s1073 + $0x2d1] sm:$0xff]
    %v5538 = vld [vmem:[%s1073 + $0x2d9] sm:$0xff]
    %v5539 = vld [vmem:[%s1073 + $0x2e9] sm:$0xff]
    %v5540 = vld [vmem:[%s1073 + $0x2f1] sm:$0xff]
    %v5541 = vld [vmem:[%s1073 + $0x301] sm:$0xff]
    %v5542 = vld [vmem:[%s1073 + $0x309] sm:$0xff]
    %v5543 = vld [vmem:[%s1073 + $0x319] sm:$0xff]
    %v5544 = vld [vmem:[%s1073 + $0x321] sm:$0xff]
    %5545 = vst [vmem:[#allocation3 + $0x38] sm:$0xff] %v5481
    %5546 = vst [vmem:[#allocation3 + $0x80] sm:$0xff] %v5482
    %5547 = vst [vmem:[#allocation3 + $0xc8] sm:$0xff] %v5483
    %5548 = vst [vmem:[#allocation3 + $0x110] sm:$0xff] %v5484
    %5549 = vst [vmem:[#allocation3 + $0x158] sm:$0xff] %v5485
    %5550 = vst [vmem:[#allocation3 + $0x1a0] sm:$0xff] %v5486
    %5551 = vst [vmem:[#allocation3 + $0x1e8] sm:$0xff] %v5487
    %5552 = vst [vmem:[#allocation3 + $0x230] sm:$0xff] %v5488
    %5553 = vst [vmem:[#allocation3 + $0x278] sm:$0xff] %v5489
    %5554 = vst [vmem:[#allocation3 + $0x2c0] sm:$0xff] %v5490
    %5555 = vst [vmem:[#allocation3 + $0x308] sm:$0xff] %v5491
    %5556 = vst [vmem:[#allocation3 + $0x350] sm:$0xff] %v5492
    %5557 = vst [vmem:[#allocation3 + $0x398] sm:$0xff] %v5493
    %5558 = vst [vmem:[#allocation3 + $0x3e0] sm:$0xff] %v5494
    %5559 = vst [vmem:[#allocation3 + $0x428] sm:$0xff] %v5495
    %5560 = vst [vmem:[#allocation3 + $0x470] sm:$0xff] %v5496
    %5561 = vst [vmem:[#allocation3 + $0x4b8] sm:$0xff] %v5497
    %5562 = vst [vmem:[#allocation3 + $0x500] sm:$0xff] %v5498
    %5563 = vst [vmem:[#allocation3 + $0x548] sm:$0xff] %v5499
    %5564 = vst [vmem:[#allocation3 + $0x590] sm:$0xff] %v5500
    %5565 = vst [vmem:[#allocation3 + $0x5d8] sm:$0xff] %v5501
    %5566 = vst [vmem:[#allocation3 + $0x620] sm:$0xff] %v5502
    %5567 = vst [vmem:[#allocation3 + $0x668] sm:$0xff] %v5503
    %5568 = vst [vmem:[#allocation3 + $0x6b0] sm:$0xff] %v5504
    %5569 = vst [vmem:[#allocation3 + $0x6f8] sm:$0xff] %v5505
    %5570 = vst [vmem:[#allocation3 + $0x740] sm:$0xff] %v5506
    %5571 = vst [vmem:[#allocation3 + $0x788] sm:$0xff] %v5507
    %5572 = vst [vmem:[#allocation3 + $0x7d0] sm:$0xff] %v5508
    %5573 = vst [vmem:[#allocation3 + $0x818] sm:$0xff] %v5509
    %5574 = vst [vmem:[#allocation3 + $0x860] sm:$0xff] %v5510
    %5575 = vst [vmem:[#allocation3 + $0x8a8] sm:$0xff] %v5511
    %5576 = vst [vmem:[#allocation3 + $0x8f0] sm:$0xff] %v5512
    %5577 = vst [vmem:[#allocation3 + $0x938] sm:$0xff] %v5513
    %5578 = vst [vmem:[#allocation3 + $0x980] sm:$0xff] %v5514
    %5579 = vst [vmem:[#allocation3 + $0x9c8] sm:$0xff] %v5515
    %5580 = vst [vmem:[#allocation3 + $0xa10] sm:$0xff] %v5516
    %5581 = vst [vmem:[#allocation3 + $0xa58] sm:$0xff] %v5517
    %5582 = vst [vmem:[#allocation3 + $0xaa0] sm:$0xff] %v5518
    %5583 = vst [vmem:[#allocation3 + $0xae8] sm:$0xff] %v5519
    %5584 = vst [vmem:[#allocation3 + $0xb30] sm:$0xff] %v5520
    %5585 = vst [vmem:[#allocation3 + $0xb78] sm:$0xff] %v5521
    %5586 = vst [vmem:[#allocation3 + $0xbc0] sm:$0xff] %v5522
    %5587 = vst [vmem:[#allocation3 + $0xc08] sm:$0xff] %v5523
    %5588 = vst [vmem:[#allocation3 + $0xc50] sm:$0xff] %v5524
    %5589 = vst [vmem:[#allocation3 + $0xc98] sm:$0xff] %v5525
    %5590 = vst [vmem:[#allocation3 + $0xce0] sm:$0xff] %v5526
    %5591 = vst [vmem:[#allocation3 + $0xd28] sm:$0xff] %v5527
    %5592 = vst [vmem:[#allocation3 + $0xd70] sm:$0xff] %v5528
    %5593 = vst [vmem:[#allocation3 + $0xdb8] sm:$0xff] %v5529
    %5594 = vst [vmem:[#allocation3 + $0xe00] sm:$0xff] %v5530
    %5595 = vst [vmem:[#allocation3 + $0xe48] sm:$0xff] %v5531
    %5596 = vst [vmem:[#allocation3 + $0xe90] sm:$0xff] %v5532
    %5597 = vst [vmem:[#allocation3 + $0xed8] sm:$0xff] %v5533
    %5598 = vst [vmem:[#allocation3 + $0xf20] sm:$0xff] %v5534
    %5599 = vst [vmem:[#allocation3 + $0xf68] sm:$0xff] %v5535
    %5600 = vst [vmem:[#allocation3 + $0xfb0] sm:$0xff] %v5536
    %5601 = vst [vmem:[#allocation3 + $0xff8] sm:$0xff] %v5537
    %5602 = vst [vmem:[#allocation3 + $0x1040] sm:$0xff] %v5538
    %5603 = vst [vmem:[#allocation3 + $0x1088] sm:$0xff] %v5539
    %5604 = vst [vmem:[#allocation3 + $0x10d0] sm:$0xff] %v5540
    %5605 = vst [vmem:[#allocation3 + $0x1118] sm:$0xff] %v5541
    %5606 = vst [vmem:[#allocation3 + $0x1160] sm:$0xff] %v5542
    %5607 = vst [vmem:[#allocation3 + $0x11a8] sm:$0xff] %v5543
    %5608 = vst [vmem:[#allocation3 + $0x11f0] sm:$0xff] %v5544
    %v5609 = vld [vmem:[%s1073 + $0x2] sm:$0xff]
    %v5610 = vld [vmem:[%s1073 + $0xa] sm:$0xff]
    %v5611 = vld [vmem:[%s1073 + $0x1a] sm:$0xff]
    %v5612 = vld [vmem:[%s1073 + $0x22] sm:$0xff]
    %v5613 = vld [vmem:[%s1073 + $0x32] sm:$0xff]
    %v5614 = vld [vmem:[%s1073 + $0x3a] sm:$0xff]
    %v5615 = vld [vmem:[%s1073 + $0x4a] sm:$0xff]
    %v5616 = vld [vmem:[%s1073 + $0x52] sm:$0xff]
    %v5617 = vld [vmem:[%s1073 + $0x62] sm:$0xff]
    %v5618 = vld [vmem:[%s1073 + $0x6a] sm:$0xff]
    %v5619 = vld [vmem:[%s1073 + $0x7a] sm:$0xff]
    %v5620 = vld [vmem:[%s1073 + $0x82] sm:$0xff]
    %v5621 = vld [vmem:[%s1073 + $0x92] sm:$0xff]
    %v5622 = vld [vmem:[%s1073 + $0x9a] sm:$0xff]
    %v5623 = vld [vmem:[%s1073 + $0xaa] sm:$0xff]
    %v5624 = vld [vmem:[%s1073 + $0xb2] sm:$0xff]
    %v5625 = vld [vmem:[%s1073 + $0xc2] sm:$0xff]
    %v5626 = vld [vmem:[%s1073 + $0xca] sm:$0xff]
    %v5627 = vld [vmem:[%s1073 + $0xda] sm:$0xff]
    %v5628 = vld [vmem:[%s1073 + $0xe2] sm:$0xff]
    %v5629 = vld [vmem:[%s1073 + $0xf2] sm:$0xff]
    %v5630 = vld [vmem:[%s1073 + $0xfa] sm:$0xff]
    %v5631 = vld [vmem:[%s1073 + $0x10a] sm:$0xff]
    %v5632 = vld [vmem:[%s1073 + $0x112] sm:$0xff]
    %v5633 = vld [vmem:[%s1073 + $0x122] sm:$0xff]
    %v5634 = vld [vmem:[%s1073 + $0x12a] sm:$0xff]
    %v5635 = vld [vmem:[%s1073 + $0x13a] sm:$0xff]
    %v5636 = vld [vmem:[%s1073 + $0x142] sm:$0xff]
    %v5637 = vld [vmem:[%s1073 + $0x152] sm:$0xff]
    %v5638 = vld [vmem:[%s1073 + $0x15a] sm:$0xff]
    %v5639 = vld [vmem:[%s1073 + $0x16a] sm:$0xff]
    %v5640 = vld [vmem:[%s1073 + $0x172] sm:$0xff]
    %v5641 = vld [vmem:[%s1073 + $0x1b2] sm:$0xff]
    %v5642 = vld [vmem:[%s1073 + $0x1ba] sm:$0xff]
    %v5643 = vld [vmem:[%s1073 + $0x1ca] sm:$0xff]
    %v5644 = vld [vmem:[%s1073 + $0x1d2] sm:$0xff]
    %v5645 = vld [vmem:[%s1073 + $0x1e2] sm:$0xff]
    %v5646 = vld [vmem:[%s1073 + $0x1ea] sm:$0xff]
    %v5647 = vld [vmem:[%s1073 + $0x1fa] sm:$0xff]
    %v5648 = vld [vmem:[%s1073 + $0x202] sm:$0xff]
    %v5649 = vld [vmem:[%s1073 + $0x212] sm:$0xff]
    %v5650 = vld [vmem:[%s1073 + $0x21a] sm:$0xff]
    %v5651 = vld [vmem:[%s1073 + $0x22a] sm:$0xff]
    %v5652 = vld [vmem:[%s1073 + $0x232] sm:$0xff]
    %v5653 = vld [vmem:[%s1073 + $0x242] sm:$0xff]
    %v5654 = vld [vmem:[%s1073 + $0x24a] sm:$0xff]
    %v5655 = vld [vmem:[%s1073 + $0x25a] sm:$0xff]
    %v5656 = vld [vmem:[%s1073 + $0x262] sm:$0xff]
    %v5657 = vld [vmem:[%s1073 + $0x272] sm:$0xff]
    %v5658 = vld [vmem:[%s1073 + $0x27a] sm:$0xff]
    %v5659 = vld [vmem:[%s1073 + $0x28a] sm:$0xff]
    %v5660 = vld [vmem:[%s1073 + $0x292] sm:$0xff]
    %v5661 = vld [vmem:[%s1073 + $0x2a2] sm:$0xff]
    %v5662 = vld [vmem:[%s1073 + $0x2aa] sm:$0xff]
    %v5663 = vld [vmem:[%s1073 + $0x2ba] sm:$0xff]
    %v5664 = vld [vmem:[%s1073 + $0x2c2] sm:$0xff]
    %v5665 = vld [vmem:[%s1073 + $0x2d2] sm:$0xff]
    %v5666 = vld [vmem:[%s1073 + $0x2da] sm:$0xff]
    %v5667 = vld [vmem:[%s1073 + $0x2ea] sm:$0xff]
    %v5668 = vld [vmem:[%s1073 + $0x2f2] sm:$0xff]
    %v5669 = vld [vmem:[%s1073 + $0x302] sm:$0xff]
    %v5670 = vld [vmem:[%s1073 + $0x30a] sm:$0xff]
    %v5671 = vld [vmem:[%s1073 + $0x31a] sm:$0xff]
    %v5672 = vld [vmem:[%s1073 + $0x322] sm:$0xff]
    %5673 = vst [vmem:[#allocation3 + $0x40] sm:$0xff] %v5609
    %5674 = vst [vmem:[#allocation3 + $0x88] sm:$0xff] %v5610
    %5675 = vst [vmem:[#allocation3 + $0xd0] sm:$0xff] %v5611
    %5676 = vst [vmem:[#allocation3 + $0x118] sm:$0xff] %v5612
    %5677 = vst [vmem:[#allocation3 + $0x160] sm:$0xff] %v5613
    %5678 = vst [vmem:[#allocation3 + $0x1a8] sm:$0xff] %v5614
    %5679 = vst [vmem:[#allocation3 + $0x1f0] sm:$0xff] %v5615
    %5680 = vst [vmem:[#allocation3 + $0x238] sm:$0xff] %v5616
    %5681 = vst [vmem:[#allocation3 + $0x280] sm:$0xff] %v5617
    %5682 = vst [vmem:[#allocation3 + $0x2c8] sm:$0xff] %v5618
    %5683 = vst [vmem:[#allocation3 + $0x310] sm:$0xff] %v5619
    %5684 = vst [vmem:[#allocation3 + $0x358] sm:$0xff] %v5620
    %5685 = vst [vmem:[#allocation3 + $0x3a0] sm:$0xff] %v5621
    %5686 = vst [vmem:[#allocation3 + $0x3e8] sm:$0xff] %v5622
    %5687 = vst [vmem:[#allocation3 + $0x430] sm:$0xff] %v5623
    %5688 = vst [vmem:[#allocation3 + $0x478] sm:$0xff] %v5624
    %5689 = vst [vmem:[#allocation3 + $0x4c0] sm:$0xff] %v5625
    %5690 = vst [vmem:[#allocation3 + $0x508] sm:$0xff] %v5626
    %5691 = vst [vmem:[#allocation3 + $0x550] sm:$0xff] %v5627
    %5692 = vst [vmem:[#allocation3 + $0x598] sm:$0xff] %v5628
    %5693 = vst [vmem:[#allocation3 + $0x5e0] sm:$0xff] %v5629
    %5694 = vst [vmem:[#allocation3 + $0x628] sm:$0xff] %v5630
    %5695 = vst [vmem:[#allocation3 + $0x670] sm:$0xff] %v5631
    %5696 = vst [vmem:[#allocation3 + $0x6b8] sm:$0xff] %v5632
    %5697 = vst [vmem:[#allocation3 + $0x700] sm:$0xff] %v5633
    %5698 = vst [vmem:[#allocation3 + $0x748] sm:$0xff] %v5634
    %5699 = vst [vmem:[#allocation3 + $0x790] sm:$0xff] %v5635
    %5700 = vst [vmem:[#allocation3 + $0x7d8] sm:$0xff] %v5636
    %5701 = vst [vmem:[#allocation3 + $0x820] sm:$0xff] %v5637
    %5702 = vst [vmem:[#allocation3 + $0x868] sm:$0xff] %v5638
    %5703 = vst [vmem:[#allocation3 + $0x8b0] sm:$0xff] %v5639
    %5704 = vst [vmem:[#allocation3 + $0x8f8] sm:$0xff] %v5640
    %5705 = vst [vmem:[#allocation3 + $0x940] sm:$0xff] %v5641
    %5706 = vst [vmem:[#allocation3 + $0x988] sm:$0xff] %v5642
    %5707 = vst [vmem:[#allocation3 + $0x9d0] sm:$0xff] %v5643
    %5708 = vst [vmem:[#allocation3 + $0xa18] sm:$0xff] %v5644
    %5709 = vst [vmem:[#allocation3 + $0xa60] sm:$0xff] %v5645
    %5710 = vst [vmem:[#allocation3 + $0xaa8] sm:$0xff] %v5646
    %5711 = vst [vmem:[#allocation3 + $0xaf0] sm:$0xff] %v5647
    %5712 = vst [vmem:[#allocation3 + $0xb38] sm:$0xff] %v5648
    %5713 = vst [vmem:[#allocation3 + $0xb80] sm:$0xff] %v5649
    %5714 = vst [vmem:[#allocation3 + $0xbc8] sm:$0xff] %v5650
    %5715 = vst [vmem:[#allocation3 + $0xc10] sm:$0xff] %v5651
    %5716 = vst [vmem:[#allocation3 + $0xc58] sm:$0xff] %v5652
    %5717 = vst [vmem:[#allocation3 + $0xca0] sm:$0xff] %v5653
    %5718 = vst [vmem:[#allocation3 + $0xce8] sm:$0xff] %v5654
    %5719 = vst [vmem:[#allocation3 + $0xd30] sm:$0xff] %v5655
    %5720 = vst [vmem:[#allocation3 + $0xd78] sm:$0xff] %v5656
    %5721 = vst [vmem:[#allocation3 + $0xdc0] sm:$0xff] %v5657
    %5722 = vst [vmem:[#allocation3 + $0xe08] sm:$0xff] %v5658
    %5723 = vst [vmem:[#allocation3 + $0xe50] sm:$0xff] %v5659
    %5724 = vst [vmem:[#allocation3 + $0xe98] sm:$0xff] %v5660
    %5725 = vst [vmem:[#allocation3 + $0xee0] sm:$0xff] %v5661
    %5726 = vst [vmem:[#allocation3 + $0xf28] sm:$0xff] %v5662
    %5727 = vst [vmem:[#allocation3 + $0xf70] sm:$0xff] %v5663
    %5728 = vst [vmem:[#allocation3 + $0xfb8] sm:$0xff] %v5664
    %5729 = vst [vmem:[#allocation3 + $0x1000] sm:$0xff] %v5665
    %5730 = vst [vmem:[#allocation3 + $0x1048] sm:$0xff] %v5666
    %5731 = vst [vmem:[#allocation3 + $0x1090] sm:$0xff] %v5667
    %5732 = vst [vmem:[#allocation3 + $0x10d8] sm:$0xff] %v5668
    %5733 = vst [vmem:[#allocation3 + $0x1120] sm:$0xff] %v5669
    %5734 = vst [vmem:[#allocation3 + $0x1168] sm:$0xff] %v5670
    %5735 = vst [vmem:[#allocation3 + $0x11b0] sm:$0xff] %v5671
    %5736 = vst [vmem:[#allocation3 + $0x11f8] sm:$0xff] %v5672
    %v5737 = vld [vmem:[#allocation3] sm:$0xff]
    %v5738 = vld [vmem:[#allocation3 + $0x8] sm:$0xff]
    %v5739 = vld [vmem:[#allocation3 + $0x10] sm:$0xff]
    %v5740 = vld [vmem:[#allocation3 + $0x18] sm:$0xff]
    %v5741 = vld [vmem:[#allocation3 + $0x20] sm:$0xff]
    %v5742 = vld [vmem:[#allocation3 + $0x28] sm:$0xff]
    %v5743 = vld [vmem:[#allocation3 + $0x30] sm:$0xff]
    %v5744 = vld [vmem:[#allocation3 + $0x38] sm:$0xff]
    %v5745 = vld [vmem:[#allocation3 + $0x40] sm:$0xff]
    %v5746 = vld [vmem:[#allocation3 + $0x48] sm:$0xff]
    %v5747 = vld [vmem:[#allocation3 + $0x50] sm:$0xff]
    %v5748 = vld [vmem:[#allocation3 + $0x58] sm:$0xff]
    %v5749 = vld [vmem:[#allocation3 + $0x60] sm:$0xff]
    %v5750 = vld [vmem:[#allocation3 + $0x68] sm:$0xff]
    %v5751 = vld [vmem:[#allocation3 + $0x70] sm:$0xff]
    %v5752 = vld [vmem:[#allocation3 + $0x78] sm:$0xff]
    %v5753 = vld [vmem:[#allocation3 + $0x80] sm:$0xff]
    %v5754 = vld [vmem:[#allocation3 + $0x88] sm:$0xff]
    %v5755 = vld [vmem:[#allocation3 + $0x90] sm:$0xff]
    %v5756 = vld [vmem:[#allocation3 + $0x98] sm:$0xff]
    %v5757 = vld [vmem:[#allocation3 + $0xa0] sm:$0xff]
    %v5758 = vld [vmem:[#allocation3 + $0xa8] sm:$0xff]
    %v5759 = vld [vmem:[#allocation3 + $0xb0] sm:$0xff]
    %v5760 = vld [vmem:[#allocation3 + $0xb8] sm:$0xff]
    %v5761 = vld [vmem:[#allocation3 + $0xc0] sm:$0xff]
    %v5762 = vld [vmem:[#allocation3 + $0xc8] sm:$0xff]
    %v5763 = vld [vmem:[#allocation3 + $0xd0] sm:$0xff]
    %v5764 = vld [vmem:[#allocation3 + $0xd8] sm:$0xff]
    %v5765 = vld [vmem:[#allocation3 + $0xe0] sm:$0xff]
    %v5766 = vld [vmem:[#allocation3 + $0xe8] sm:$0xff]
    %v5767 = vld [vmem:[#allocation3 + $0xf0] sm:$0xff]
    %v5768 = vld [vmem:[#allocation3 + $0xf8] sm:$0xff]
    %v5769 = vld [vmem:[#allocation3 + $0x100] sm:$0xff]
    %v5770 = vld [vmem:[#allocation3 + $0x108] sm:$0xff]
    %v5771 = vld [vmem:[#allocation3 + $0x110] sm:$0xff]
    %v5772 = vld [vmem:[#allocation3 + $0x118] sm:$0xff]
    %v5773 = vld [vmem:[#allocation3 + $0x120] sm:$0xff]
    %v5774 = vld [vmem:[#allocation3 + $0x128] sm:$0xff]
    %v5775 = vld [vmem:[#allocation3 + $0x130] sm:$0xff]
    %v5776 = vld [vmem:[#allocation3 + $0x138] sm:$0xff]
    %v5777 = vld [vmem:[#allocation3 + $0x140] sm:$0xff]
    %v5778 = vld [vmem:[#allocation3 + $0x148] sm:$0xff]
    %v5779 = vld [vmem:[#allocation3 + $0x150] sm:$0xff]
    %v5780 = vld [vmem:[#allocation3 + $0x158] sm:$0xff]
    %v5781 = vld [vmem:[#allocation3 + $0x160] sm:$0xff]
    %v5782 = vld [vmem:[#allocation3 + $0x168] sm:$0xff]
    %v5783 = vld [vmem:[#allocation3 + $0x170] sm:$0xff]
    %v5784 = vld [vmem:[#allocation3 + $0x178] sm:$0xff]
    %v5785 = vld [vmem:[#allocation3 + $0x180] sm:$0xff]
    %v5786 = vld [vmem:[#allocation3 + $0x188] sm:$0xff]
    %v5787 = vld [vmem:[#allocation3 + $0x190] sm:$0xff]
    %v5788 = vld [vmem:[#allocation3 + $0x198] sm:$0xff]
    %v5789 = vld [vmem:[#allocation3 + $0x1a0] sm:$0xff]
    %v5790 = vld [vmem:[#allocation3 + $0x1a8] sm:$0xff]
    %v5791 = vld [vmem:[#allocation3 + $0x1b0] sm:$0xff]
    %v5792 = vld [vmem:[#allocation3 + $0x1b8] sm:$0xff]
    %v5793 = vld [vmem:[#allocation3 + $0x1c0] sm:$0xff]
    %v5794 = vld [vmem:[#allocation3 + $0x1c8] sm:$0xff]
    %v5795 = vld [vmem:[#allocation3 + $0x1d0] sm:$0xff]
    %v5796 = vld [vmem:[#allocation3 + $0x1d8] sm:$0xff]
    %v5797 = vld [vmem:[#allocation3 + $0x1e0] sm:$0xff]
    %v5798 = vld [vmem:[#allocation3 + $0x1e8] sm:$0xff]
    %v5799 = vld [vmem:[#allocation3 + $0x1f0] sm:$0xff]
    %v5800 = vld [vmem:[#allocation3 + $0x1f8] sm:$0xff]
    %v5801 = vld [vmem:[#allocation3 + $0x200] sm:$0xff]
    %v5802 = vld [vmem:[#allocation3 + $0x208] sm:$0xff]
    %v5803 = vld [vmem:[#allocation3 + $0x210] sm:$0xff]
    %v5804 = vld [vmem:[#allocation3 + $0x218] sm:$0xff]
    %v5805 = vld [vmem:[#allocation3 + $0x220] sm:$0xff]
    %v5806 = vld [vmem:[#allocation3 + $0x228] sm:$0xff]
    %v5807 = vld [vmem:[#allocation3 + $0x230] sm:$0xff]
    %v5808 = vld [vmem:[#allocation3 + $0x238] sm:$0xff]
    %v5809 = vld [vmem:[#allocation3 + $0x240] sm:$0xff]
    %v5810 = vld [vmem:[#allocation3 + $0x248] sm:$0xff]
    %v5811 = vld [vmem:[#allocation3 + $0x250] sm:$0xff]
    %v5812 = vld [vmem:[#allocation3 + $0x258] sm:$0xff]
    %v5813 = vld [vmem:[#allocation3 + $0x260] sm:$0xff]
    %v5814 = vld [vmem:[#allocation3 + $0x268] sm:$0xff]
    %v5815 = vld [vmem:[#allocation3 + $0x270] sm:$0xff]
    %v5816 = vld [vmem:[#allocation3 + $0x278] sm:$0xff]
    %v5817 = vld [vmem:[#allocation3 + $0x280] sm:$0xff]
    %v5818 = vld [vmem:[#allocation3 + $0x288] sm:$0xff]
    %v5819 = vld [vmem:[#allocation3 + $0x290] sm:$0xff]
    %v5820 = vld [vmem:[#allocation3 + $0x298] sm:$0xff]
    %v5821 = vld [vmem:[#allocation3 + $0x2a0] sm:$0xff]
    %v5822 = vld [vmem:[#allocation3 + $0x2a8] sm:$0xff]
    %v5823 = vld [vmem:[#allocation3 + $0x2b0] sm:$0xff]
    %v5824 = vld [vmem:[#allocation3 + $0x2b8] sm:$0xff]
    %v5825 = vld [vmem:[#allocation3 + $0x2c0] sm:$0xff]
    %v5826 = vld [vmem:[#allocation3 + $0x2c8] sm:$0xff]
    %v5827 = vld [vmem:[#allocation3 + $0x2d0] sm:$0xff]
    %v5828 = vld [vmem:[#allocation3 + $0x2d8] sm:$0xff]
    %v5829 = vld [vmem:[#allocation3 + $0x2e0] sm:$0xff]
    %v5830 = vld [vmem:[#allocation3 + $0x2e8] sm:$0xff]
    %v5831 = vld [vmem:[#allocation3 + $0x2f0] sm:$0xff]
    %v5832 = vld [vmem:[#allocation3 + $0x2f8] sm:$0xff]
    %v5833 = vld [vmem:[#allocation3 + $0x300] sm:$0xff]
    %v5834 = vld [vmem:[#allocation3 + $0x308] sm:$0xff]
    %v5835 = vld [vmem:[#allocation3 + $0x310] sm:$0xff]
    %v5836 = vld [vmem:[#allocation3 + $0x318] sm:$0xff]
    %v5837 = vld [vmem:[#allocation3 + $0x320] sm:$0xff]
    %v5838 = vld [vmem:[#allocation3 + $0x328] sm:$0xff]
    %v5839 = vld [vmem:[#allocation3 + $0x330] sm:$0xff]
    %v5840 = vld [vmem:[#allocation3 + $0x338] sm:$0xff]
    %v5841 = vld [vmem:[#allocation3 + $0x340] sm:$0xff]
    %v5842 = vld [vmem:[#allocation3 + $0x348] sm:$0xff]
    %v5843 = vld [vmem:[#allocation3 + $0x350] sm:$0xff]
    %v5844 = vld [vmem:[#allocation3 + $0x358] sm:$0xff]
    %v5845 = vld [vmem:[#allocation3 + $0x360] sm:$0xff]
    %v5846 = vld [vmem:[#allocation3 + $0x368] sm:$0xff]
    %v5847 = vld [vmem:[#allocation3 + $0x370] sm:$0xff]
    %v5848 = vld [vmem:[#allocation3 + $0x378] sm:$0xff]
    %v5849 = vld [vmem:[#allocation3 + $0x380] sm:$0xff]
    %v5850 = vld [vmem:[#allocation3 + $0x388] sm:$0xff]
    %v5851 = vld [vmem:[#allocation3 + $0x390] sm:$0xff]
    %v5852 = vld [vmem:[#allocation3 + $0x398] sm:$0xff]
    %v5853 = vld [vmem:[#allocation3 + $0x3a0] sm:$0xff]
    %v5854 = vld [vmem:[#allocation3 + $0x3a8] sm:$0xff]
    %v5855 = vld [vmem:[#allocation3 + $0x3b0] sm:$0xff]
    %v5856 = vld [vmem:[#allocation3 + $0x3b8] sm:$0xff]
    %v5857 = vld [vmem:[#allocation3 + $0x3c0] sm:$0xff]
    %v5858 = vld [vmem:[#allocation3 + $0x3c8] sm:$0xff]
    %v5859 = vld [vmem:[#allocation3 + $0x3d0] sm:$0xff]
    %v5860 = vld [vmem:[#allocation3 + $0x3d8] sm:$0xff]
    %v5861 = vld [vmem:[#allocation3 + $0x3e0] sm:$0xff]
    %v5862 = vld [vmem:[#allocation3 + $0x3e8] sm:$0xff]
    %v5863 = vld [vmem:[#allocation3 + $0x3f0] sm:$0xff]
    %v5864 = vld [vmem:[#allocation3 + $0x3f8] sm:$0xff]
    %v5865 = vld [vmem:[#allocation3 + $0x400] sm:$0xff]
    %v5866 = vld [vmem:[#allocation3 + $0x408] sm:$0xff]
    %v5867 = vld [vmem:[#allocation3 + $0x410] sm:$0xff]
    %v5868 = vld [vmem:[#allocation3 + $0x418] sm:$0xff]
    %v5869 = vld [vmem:[#allocation3 + $0x420] sm:$0xff]
    %v5870 = vld [vmem:[#allocation3 + $0x428] sm:$0xff]
    %v5871 = vld [vmem:[#allocation3 + $0x430] sm:$0xff]
    %v5872 = vld [vmem:[#allocation3 + $0x438] sm:$0xff]
    %v5873 = vld [vmem:[#allocation3 + $0x440] sm:$0xff]
    %v5874 = vld [vmem:[#allocation3 + $0x448] sm:$0xff]
    %v5875 = vld [vmem:[#allocation3 + $0x450] sm:$0xff]
    %v5876 = vld [vmem:[#allocation3 + $0x458] sm:$0xff]
    %v5877 = vld [vmem:[#allocation3 + $0x460] sm:$0xff]
    %v5878 = vld [vmem:[#allocation3 + $0x468] sm:$0xff]
    %v5879 = vld [vmem:[#allocation3 + $0x470] sm:$0xff]
    %v5880 = vld [vmem:[#allocation3 + $0x478] sm:$0xff]
    %v5881 = vld [vmem:[#allocation3 + $0x480] sm:$0xff]
    %v5882 = vld [vmem:[#allocation3 + $0x488] sm:$0xff]
    %v5883 = vld [vmem:[#allocation3 + $0x490] sm:$0xff]
    %v5884 = vld [vmem:[#allocation3 + $0x498] sm:$0xff]
    %v5885 = vld [vmem:[#allocation3 + $0x4a0] sm:$0xff]
    %v5886 = vld [vmem:[#allocation3 + $0x4a8] sm:$0xff]
    %v5887 = vld [vmem:[#allocation3 + $0x4b0] sm:$0xff]
    %v5888 = vld [vmem:[#allocation3 + $0x4b8] sm:$0xff]
    %v5889 = vld [vmem:[#allocation3 + $0x4c0] sm:$0xff]
    %v5890 = vld [vmem:[#allocation3 + $0x4c8] sm:$0xff]
    %v5891 = vld [vmem:[#allocation3 + $0x4d0] sm:$0xff]
    %v5892 = vld [vmem:[#allocation3 + $0x4d8] sm:$0xff]
    %v5893 = vld [vmem:[#allocation3 + $0x4e0] sm:$0xff]
    %v5894 = vld [vmem:[#allocation3 + $0x4e8] sm:$0xff]
    %v5895 = vld [vmem:[#allocation3 + $0x4f0] sm:$0xff]
    %v5896 = vld [vmem:[#allocation3 + $0x4f8] sm:$0xff]
    %v5897 = vld [vmem:[#allocation3 + $0x500] sm:$0xff]
    %v5898 = vld [vmem:[#allocation3 + $0x508] sm:$0xff]
    %v5899 = vld [vmem:[#allocation3 + $0x510] sm:$0xff]
    %v5900 = vld [vmem:[#allocation3 + $0x518] sm:$0xff]
    %v5901 = vld [vmem:[#allocation3 + $0x520] sm:$0xff]
    %v5902 = vld [vmem:[#allocation3 + $0x528] sm:$0xff]
    %v5903 = vld [vmem:[#allocation3 + $0x530] sm:$0xff]
    %v5904 = vld [vmem:[#allocation3 + $0x538] sm:$0xff]
    %v5905 = vld [vmem:[#allocation3 + $0x540] sm:$0xff]
    %v5906 = vld [vmem:[#allocation3 + $0x548] sm:$0xff]
    %v5907 = vld [vmem:[#allocation3 + $0x550] sm:$0xff]
    %v5908 = vld [vmem:[#allocation3 + $0x558] sm:$0xff]
    %v5909 = vld [vmem:[#allocation3 + $0x560] sm:$0xff]
    %v5910 = vld [vmem:[#allocation3 + $0x568] sm:$0xff]
    %v5911 = vld [vmem:[#allocation3 + $0x570] sm:$0xff]
    %v5912 = vld [vmem:[#allocation3 + $0x578] sm:$0xff]
    %v5913 = vld [vmem:[#allocation3 + $0x580] sm:$0xff]
    %v5914 = vld [vmem:[#allocation3 + $0x588] sm:$0xff]
    %v5915 = vld [vmem:[#allocation3 + $0x590] sm:$0xff]
    %v5916 = vld [vmem:[#allocation3 + $0x598] sm:$0xff]
    %v5917 = vld [vmem:[#allocation3 + $0x5a0] sm:$0xff]
    %v5918 = vld [vmem:[#allocation3 + $0x5a8] sm:$0xff]
    %v5919 = vld [vmem:[#allocation3 + $0x5b0] sm:$0xff]
    %v5920 = vld [vmem:[#allocation3 + $0x5b8] sm:$0xff]
    %v5921 = vld [vmem:[#allocation3 + $0x5c0] sm:$0xff]
    %v5922 = vld [vmem:[#allocation3 + $0x5c8] sm:$0xff]
    %v5923 = vld [vmem:[#allocation3 + $0x5d0] sm:$0xff]
    %v5924 = vld [vmem:[#allocation3 + $0x5d8] sm:$0xff]
    %v5925 = vld [vmem:[#allocation3 + $0x5e0] sm:$0xff]
    %v5926 = vld [vmem:[#allocation3 + $0x5e8] sm:$0xff]
    %v5927 = vld [vmem:[#allocation3 + $0x5f0] sm:$0xff]
    %v5928 = vld [vmem:[#allocation3 + $0x5f8] sm:$0xff]
    %v5929 = vld [vmem:[#allocation3 + $0x600] sm:$0xff]
    %v5930 = vld [vmem:[#allocation3 + $0x608] sm:$0xff]
    %v5931 = vld [vmem:[#allocation3 + $0x610] sm:$0xff]
    %v5932 = vld [vmem:[#allocation3 + $0x618] sm:$0xff]
    %v5933 = vld [vmem:[#allocation3 + $0x620] sm:$0xff]
    %v5934 = vld [vmem:[#allocation3 + $0x628] sm:$0xff]
    %v5935 = vld [vmem:[#allocation3 + $0x630] sm:$0xff]
    %v5936 = vld [vmem:[#allocation3 + $0x638] sm:$0xff]
    %v5937 = vld [vmem:[#allocation3 + $0x640] sm:$0xff]
    %v5938 = vld [vmem:[#allocation3 + $0x648] sm:$0xff]
    %v5939 = vld [vmem:[#allocation3 + $0x650] sm:$0xff]
    %v5940 = vld [vmem:[#allocation3 + $0x658] sm:$0xff]
    %v5941 = vld [vmem:[#allocation3 + $0x660] sm:$0xff]
    %v5942 = vld [vmem:[#allocation3 + $0x668] sm:$0xff]
    %v5943 = vld [vmem:[#allocation3 + $0x670] sm:$0xff]
    %v5944 = vld [vmem:[#allocation3 + $0x678] sm:$0xff]
    %v5945 = vld [vmem:[#allocation3 + $0x680] sm:$0xff]
    %v5946 = vld [vmem:[#allocation3 + $0x688] sm:$0xff]
    %v5947 = vld [vmem:[#allocation3 + $0x690] sm:$0xff]
    %v5948 = vld [vmem:[#allocation3 + $0x698] sm:$0xff]
    %v5949 = vld [vmem:[#allocation3 + $0x6a0] sm:$0xff]
    %v5950 = vld [vmem:[#allocation3 + $0x6a8] sm:$0xff]
    %v5951 = vld [vmem:[#allocation3 + $0x6b0] sm:$0xff]
    %v5952 = vld [vmem:[#allocation3 + $0x6b8] sm:$0xff]
    %v5953 = vld [vmem:[#allocation3 + $0x6c0] sm:$0xff]
    %v5954 = vld [vmem:[#allocation3 + $0x6c8] sm:$0xff]
    %v5955 = vld [vmem:[#allocation3 + $0x6d0] sm:$0xff]
    %v5956 = vld [vmem:[#allocation3 + $0x6d8] sm:$0xff]
    %v5957 = vld [vmem:[#allocation3 + $0x6e0] sm:$0xff]
    %v5958 = vld [vmem:[#allocation3 + $0x6e8] sm:$0xff]
    %v5959 = vld [vmem:[#allocation3 + $0x6f0] sm:$0xff]
    %v5960 = vld [vmem:[#allocation3 + $0x6f8] sm:$0xff]
    %v5961 = vld [vmem:[#allocation3 + $0x700] sm:$0xff]
    %v5962 = vld [vmem:[#allocation3 + $0x708] sm:$0xff]
    %v5963 = vld [vmem:[#allocation3 + $0x710] sm:$0xff]
    %v5964 = vld [vmem:[#allocation3 + $0x718] sm:$0xff]
    %v5965 = vld [vmem:[#allocation3 + $0x720] sm:$0xff]
    %v5966 = vld [vmem:[#allocation3 + $0x728] sm:$0xff]
    %v5967 = vld [vmem:[#allocation3 + $0x730] sm:$0xff]
    %v5968 = vld [vmem:[#allocation3 + $0x738] sm:$0xff]
    %v5969 = vld [vmem:[#allocation3 + $0x740] sm:$0xff]
    %v5970 = vld [vmem:[#allocation3 + $0x748] sm:$0xff]
    %v5971 = vld [vmem:[#allocation3 + $0x750] sm:$0xff]
    %v5972 = vld [vmem:[#allocation3 + $0x758] sm:$0xff]
    %v5973 = vld [vmem:[#allocation3 + $0x760] sm:$0xff]
    %v5974 = vld [vmem:[#allocation3 + $0x768] sm:$0xff]
    %v5975 = vld [vmem:[#allocation3 + $0x770] sm:$0xff]
    %v5976 = vld [vmem:[#allocation3 + $0x778] sm:$0xff]
    %v5977 = vld [vmem:[#allocation3 + $0x780] sm:$0xff]
    %v5978 = vld [vmem:[#allocation3 + $0x788] sm:$0xff]
    %v5979 = vld [vmem:[#allocation3 + $0x790] sm:$0xff]
    %v5980 = vld [vmem:[#allocation3 + $0x798] sm:$0xff]
    %v5981 = vld [vmem:[#allocation3 + $0x7a0] sm:$0xff]
    %v5982 = vld [vmem:[#allocation3 + $0x7a8] sm:$0xff]
    %v5983 = vld [vmem:[#allocation3 + $0x7b0] sm:$0xff]
    %v5984 = vld [vmem:[#allocation3 + $0x7b8] sm:$0xff]
    %v5985 = vld [vmem:[#allocation3 + $0x7c0] sm:$0xff]
    %v5986 = vld [vmem:[#allocation3 + $0x7c8] sm:$0xff]
    %v5987 = vld [vmem:[#allocation3 + $0x7d0] sm:$0xff]
    %v5988 = vld [vmem:[#allocation3 + $0x7d8] sm:$0xff]
    %v5989 = vld [vmem:[#allocation3 + $0x7e0] sm:$0xff]
    %v5990 = vld [vmem:[#allocation3 + $0x7e8] sm:$0xff]
    %v5991 = vld [vmem:[#allocation3 + $0x7f0] sm:$0xff]
    %v5992 = vld [vmem:[#allocation3 + $0x7f8] sm:$0xff]
    %v5993 = vld [vmem:[#allocation3 + $0x800] sm:$0xff]
    %v5994 = vld [vmem:[#allocation3 + $0x808] sm:$0xff]
    %v5995 = vld [vmem:[#allocation3 + $0x810] sm:$0xff]
    %v5996 = vld [vmem:[#allocation3 + $0x818] sm:$0xff]
    %v5997 = vld [vmem:[#allocation3 + $0x820] sm:$0xff]
    %v5998 = vld [vmem:[#allocation3 + $0x828] sm:$0xff]
    %v5999 = vld [vmem:[#allocation3 + $0x830] sm:$0xff]
    %v6000 = vld [vmem:[#allocation3 + $0x838] sm:$0xff]
    %v6001 = vld [vmem:[#allocation3 + $0x840] sm:$0xff]
    %v6002 = vld [vmem:[#allocation3 + $0x848] sm:$0xff]
    %v6003 = vld [vmem:[#allocation3 + $0x850] sm:$0xff]
    %v6004 = vld [vmem:[#allocation3 + $0x858] sm:$0xff]
    %v6005 = vld [vmem:[#allocation3 + $0x860] sm:$0xff]
    %v6006 = vld [vmem:[#allocation3 + $0x868] sm:$0xff]
    %v6007 = vld [vmem:[#allocation3 + $0x870] sm:$0xff]
    %v6008 = vld [vmem:[#allocation3 + $0x878] sm:$0xff]
    %v6009 = vld [vmem:[#allocation3 + $0x880] sm:$0xff]
    %v6010 = vld [vmem:[#allocation3 + $0x888] sm:$0xff]
    %v6011 = vld [vmem:[#allocation3 + $0x890] sm:$0xff]
    %v6012 = vld [vmem:[#allocation3 + $0x898] sm:$0xff]
    %v6013 = vld [vmem:[#allocation3 + $0x8a0] sm:$0xff]
    %v6014 = vld [vmem:[#allocation3 + $0x8a8] sm:$0xff]
    %v6015 = vld [vmem:[#allocation3 + $0x8b0] sm:$0xff]
    %v6016 = vld [vmem:[#allocation3 + $0x8b8] sm:$0xff]
    %v6017 = vld [vmem:[#allocation3 + $0x8c0] sm:$0xff]
    %v6018 = vld [vmem:[#allocation3 + $0x8c8] sm:$0xff]
    %v6019 = vld [vmem:[#allocation3 + $0x8d0] sm:$0xff]
    %v6020 = vld [vmem:[#allocation3 + $0x8d8] sm:$0xff]
    %v6021 = vld [vmem:[#allocation3 + $0x8e0] sm:$0xff]
    %v6022 = vld [vmem:[#allocation3 + $0x8e8] sm:$0xff]
    %v6023 = vld [vmem:[#allocation3 + $0x8f0] sm:$0xff]
    %v6024 = vld [vmem:[#allocation3 + $0x8f8] sm:$0xff]
    %v6025 = vld [vmem:[#allocation3 + $0x900] sm:$0xff]
    %v6026 = vld [vmem:[#allocation3 + $0x908] sm:$0xff]
    %v6027 = vld [vmem:[#allocation3 + $0x910] sm:$0xff]
    %v6028 = vld [vmem:[#allocation3 + $0x918] sm:$0xff]
    %v6029 = vld [vmem:[#allocation3 + $0x920] sm:$0xff]
    %v6030 = vld [vmem:[#allocation3 + $0x928] sm:$0xff]
    %v6031 = vld [vmem:[#allocation3 + $0x930] sm:$0xff]
    %v6032 = vld [vmem:[#allocation3 + $0x938] sm:$0xff]
    %v6033 = vld [vmem:[#allocation3 + $0x940] sm:$0xff]
    %v6034 = vld [vmem:[#allocation3 + $0x948] sm:$0xff]
    %v6035 = vld [vmem:[#allocation3 + $0x950] sm:$0xff]
    %v6036 = vld [vmem:[#allocation3 + $0x958] sm:$0xff]
    %v6037 = vld [vmem:[#allocation3 + $0x960] sm:$0xff]
    %v6038 = vld [vmem:[#allocation3 + $0x968] sm:$0xff]
    %v6039 = vld [vmem:[#allocation3 + $0x970] sm:$0xff]
    %v6040 = vld [vmem:[#allocation3 + $0x978] sm:$0xff]
    %v6041 = vld [vmem:[#allocation3 + $0x980] sm:$0xff]
    %v6042 = vld [vmem:[#allocation3 + $0x988] sm:$0xff]
    %v6043 = vld [vmem:[#allocation3 + $0x990] sm:$0xff]
    %v6044 = vld [vmem:[#allocation3 + $0x998] sm:$0xff]
    %v6045 = vld [vmem:[#allocation3 + $0x9a0] sm:$0xff]
    %v6046 = vld [vmem:[#allocation3 + $0x9a8] sm:$0xff]
    %v6047 = vld [vmem:[#allocation3 + $0x9b0] sm:$0xff]
    %v6048 = vld [vmem:[#allocation3 + $0x9b8] sm:$0xff]
    %v6049 = vld [vmem:[#allocation3 + $0x9c0] sm:$0xff]
    %v6050 = vld [vmem:[#allocation3 + $0x9c8] sm:$0xff]
    %v6051 = vld [vmem:[#allocation3 + $0x9d0] sm:$0xff]
    %v6052 = vld [vmem:[#allocation3 + $0x9d8] sm:$0xff]
    %v6053 = vld [vmem:[#allocation3 + $0x9e0] sm:$0xff]
    %v6054 = vld [vmem:[#allocation3 + $0x9e8] sm:$0xff]
    %v6055 = vld [vmem:[#allocation3 + $0x9f0] sm:$0xff]
    %v6056 = vld [vmem:[#allocation3 + $0x9f8] sm:$0xff]
    %v6057 = vld [vmem:[#allocation3 + $0xa00] sm:$0xff]
    %v6058 = vld [vmem:[#allocation3 + $0xa08] sm:$0xff]
    %v6059 = vld [vmem:[#allocation3 + $0xa10] sm:$0xff]
    %v6060 = vld [vmem:[#allocation3 + $0xa18] sm:$0xff]
    %v6061 = vld [vmem:[#allocation3 + $0xa20] sm:$0xff]
    %v6062 = vld [vmem:[#allocation3 + $0xa28] sm:$0xff]
    %v6063 = vld [vmem:[#allocation3 + $0xa30] sm:$0xff]
    %v6064 = vld [vmem:[#allocation3 + $0xa38] sm:$0xff]
    %v6065 = vld [vmem:[#allocation3 + $0xa40] sm:$0xff]
    %v6066 = vld [vmem:[#allocation3 + $0xa48] sm:$0xff]
    %v6067 = vld [vmem:[#allocation3 + $0xa50] sm:$0xff]
    %v6068 = vld [vmem:[#allocation3 + $0xa58] sm:$0xff]
    %v6069 = vld [vmem:[#allocation3 + $0xa60] sm:$0xff]
    %v6070 = vld [vmem:[#allocation3 + $0xa68] sm:$0xff]
    %v6071 = vld [vmem:[#allocation3 + $0xa70] sm:$0xff]
    %v6072 = vld [vmem:[#allocation3 + $0xa78] sm:$0xff]
    %v6073 = vld [vmem:[#allocation3 + $0xa80] sm:$0xff]
    %v6074 = vld [vmem:[#allocation3 + $0xa88] sm:$0xff]
    %v6075 = vld [vmem:[#allocation3 + $0xa90] sm:$0xff]
    %v6076 = vld [vmem:[#allocation3 + $0xa98] sm:$0xff]
    %v6077 = vld [vmem:[#allocation3 + $0xaa0] sm:$0xff]
    %v6078 = vld [vmem:[#allocation3 + $0xaa8] sm:$0xff]
    %v6079 = vld [vmem:[#allocation3 + $0xab0] sm:$0xff]
    %v6080 = vld [vmem:[#allocation3 + $0xab8] sm:$0xff]
    %v6081 = vld [vmem:[#allocation3 + $0xac0] sm:$0xff]
    %v6082 = vld [vmem:[#allocation3 + $0xac8] sm:$0xff]
    %v6083 = vld [vmem:[#allocation3 + $0xad0] sm:$0xff]
    %v6084 = vld [vmem:[#allocation3 + $0xad8] sm:$0xff]
    %v6085 = vld [vmem:[#allocation3 + $0xae0] sm:$0xff]
    %v6086 = vld [vmem:[#allocation3 + $0xae8] sm:$0xff]
    %v6087 = vld [vmem:[#allocation3 + $0xaf0] sm:$0xff]
    %v6088 = vld [vmem:[#allocation3 + $0xaf8] sm:$0xff]
    %v6089 = vld [vmem:[#allocation3 + $0xb00] sm:$0xff]
    %v6090 = vld [vmem:[#allocation3 + $0xb08] sm:$0xff]
    %v6091 = vld [vmem:[#allocation3 + $0xb10] sm:$0xff]
    %v6092 = vld [vmem:[#allocation3 + $0xb18] sm:$0xff]
    %v6093 = vld [vmem:[#allocation3 + $0xb20] sm:$0xff]
    %v6094 = vld [vmem:[#allocation3 + $0xb28] sm:$0xff]
    %v6095 = vld [vmem:[#allocation3 + $0xb30] sm:$0xff]
    %v6096 = vld [vmem:[#allocation3 + $0xb38] sm:$0xff]
    %v6097 = vld [vmem:[#allocation3 + $0xb40] sm:$0xff]
    %v6098 = vld [vmem:[#allocation3 + $0xb48] sm:$0xff]
    %v6099 = vld [vmem:[#allocation3 + $0xb50] sm:$0xff]
    %v6100 = vld [vmem:[#allocation3 + $0xb58] sm:$0xff]
    %v6101 = vld [vmem:[#allocation3 + $0xb60] sm:$0xff]
    %v6102 = vld [vmem:[#allocation3 + $0xb68] sm:$0xff]
    %v6103 = vld [vmem:[#allocation3 + $0xb70] sm:$0xff]
    %v6104 = vld [vmem:[#allocation3 + $0xb78] sm:$0xff]
    %v6105 = vld [vmem:[#allocation3 + $0xb80] sm:$0xff]
    %v6106 = vld [vmem:[#allocation3 + $0xb88] sm:$0xff]
    %v6107 = vld [vmem:[#allocation3 + $0xb90] sm:$0xff]
    %v6108 = vld [vmem:[#allocation3 + $0xb98] sm:$0xff]
    %v6109 = vld [vmem:[#allocation3 + $0xba0] sm:$0xff]
    %v6110 = vld [vmem:[#allocation3 + $0xba8] sm:$0xff]
    %v6111 = vld [vmem:[#allocation3 + $0xbb0] sm:$0xff]
    %v6112 = vld [vmem:[#allocation3 + $0xbb8] sm:$0xff]
    %v6113 = vld [vmem:[#allocation3 + $0xbc0] sm:$0xff]
    %v6114 = vld [vmem:[#allocation3 + $0xbc8] sm:$0xff]
    %v6115 = vld [vmem:[#allocation3 + $0xbd0] sm:$0xff]
    %v6116 = vld [vmem:[#allocation3 + $0xbd8] sm:$0xff]
    %v6117 = vld [vmem:[#allocation3 + $0xbe0] sm:$0xff]
    %v6118 = vld [vmem:[#allocation3 + $0xbe8] sm:$0xff]
    %v6119 = vld [vmem:[#allocation3 + $0xbf0] sm:$0xff]
    %v6120 = vld [vmem:[#allocation3 + $0xbf8] sm:$0xff]
    %v6121 = vld [vmem:[#allocation3 + $0xc00] sm:$0xff]
    %v6122 = vld [vmem:[#allocation3 + $0xc08] sm:$0xff]
    %v6123 = vld [vmem:[#allocation3 + $0xc10] sm:$0xff]
    %v6124 = vld [vmem:[#allocation3 + $0xc18] sm:$0xff]
    %v6125 = vld [vmem:[#allocation3 + $0xc20] sm:$0xff]
    %v6126 = vld [vmem:[#allocation3 + $0xc28] sm:$0xff]
    %v6127 = vld [vmem:[#allocation3 + $0xc30] sm:$0xff]
    %v6128 = vld [vmem:[#allocation3 + $0xc38] sm:$0xff]
    %v6129 = vld [vmem:[#allocation3 + $0xc40] sm:$0xff]
    %v6130 = vld [vmem:[#allocation3 + $0xc48] sm:$0xff]
    %v6131 = vld [vmem:[#allocation3 + $0xc50] sm:$0xff]
    %v6132 = vld [vmem:[#allocation3 + $0xc58] sm:$0xff]
    %v6133 = vld [vmem:[#allocation3 + $0xc60] sm:$0xff]
    %v6134 = vld [vmem:[#allocation3 + $0xc68] sm:$0xff]
    %v6135 = vld [vmem:[#allocation3 + $0xc70] sm:$0xff]
    %v6136 = vld [vmem:[#allocation3 + $0xc78] sm:$0xff]
    %v6137 = vld [vmem:[#allocation3 + $0xc80] sm:$0xff]
    %v6138 = vld [vmem:[#allocation3 + $0xc88] sm:$0xff]
    %v6139 = vld [vmem:[#allocation3 + $0xc90] sm:$0xff]
    %v6140 = vld [vmem:[#allocation3 + $0xc98] sm:$0xff]
    %v6141 = vld [vmem:[#allocation3 + $0xca0] sm:$0xff]
    %v6142 = vld [vmem:[#allocation3 + $0xca8] sm:$0xff]
    %v6143 = vld [vmem:[#allocation3 + $0xcb0] sm:$0xff]
    %v6144 = vld [vmem:[#allocation3 + $0xcb8] sm:$0xff]
    %v6145 = vld [vmem:[#allocation3 + $0xcc0] sm:$0xff]
    %v6146 = vld [vmem:[#allocation3 + $0xcc8] sm:$0xff]
    %v6147 = vld [vmem:[#allocation3 + $0xcd0] sm:$0xff]
    %v6148 = vld [vmem:[#allocation3 + $0xcd8] sm:$0xff]
    %v6149 = vld [vmem:[#allocation3 + $0xce0] sm:$0xff]
    %v6150 = vld [vmem:[#allocation3 + $0xce8] sm:$0xff]
    %v6151 = vld [vmem:[#allocation3 + $0xcf0] sm:$0xff]
    %v6152 = vld [vmem:[#allocation3 + $0xcf8] sm:$0xff]
    %v6153 = vld [vmem:[#allocation3 + $0xd00] sm:$0xff]
    %v6154 = vld [vmem:[#allocation3 + $0xd08] sm:$0xff]
    %v6155 = vld [vmem:[#allocation3 + $0xd10] sm:$0xff]
    %v6156 = vld [vmem:[#allocation3 + $0xd18] sm:$0xff]
    %v6157 = vld [vmem:[#allocation3 + $0xd20] sm:$0xff]
    %v6158 = vld [vmem:[#allocation3 + $0xd28] sm:$0xff]
    %v6159 = vld [vmem:[#allocation3 + $0xd30] sm:$0xff]
    %v6160 = vld [vmem:[#allocation3 + $0xd38] sm:$0xff]
    %v6161 = vld [vmem:[#allocation3 + $0xd40] sm:$0xff]
    %v6162 = vld [vmem:[#allocation3 + $0xd48] sm:$0xff]
    %v6163 = vld [vmem:[#allocation3 + $0xd50] sm:$0xff]
    %v6164 = vld [vmem:[#allocation3 + $0xd58] sm:$0xff]
    %v6165 = vld [vmem:[#allocation3 + $0xd60] sm:$0xff]
    %v6166 = vld [vmem:[#allocation3 + $0xd68] sm:$0xff]
    %v6167 = vld [vmem:[#allocation3 + $0xd70] sm:$0xff]
    %v6168 = vld [vmem:[#allocation3 + $0xd78] sm:$0xff]
    %v6169 = vld [vmem:[#allocation3 + $0xd80] sm:$0xff]
    %v6170 = vld [vmem:[#allocation3 + $0xd88] sm:$0xff]
    %v6171 = vld [vmem:[#allocation3 + $0xd90] sm:$0xff]
    %v6172 = vld [vmem:[#allocation3 + $0xd98] sm:$0xff]
    %v6173 = vld [vmem:[#allocation3 + $0xda0] sm:$0xff]
    %v6174 = vld [vmem:[#allocation3 + $0xda8] sm:$0xff]
    %v6175 = vld [vmem:[#allocation3 + $0xdb0] sm:$0xff]
    %v6176 = vld [vmem:[#allocation3 + $0xdb8] sm:$0xff]
    %v6177 = vld [vmem:[#allocation3 + $0xdc0] sm:$0xff]
    %v6178 = vld [vmem:[#allocation3 + $0xdc8] sm:$0xff]
    %v6179 = vld [vmem:[#allocation3 + $0xdd0] sm:$0xff]
    %v6180 = vld [vmem:[#allocation3 + $0xdd8] sm:$0xff]
    %v6181 = vld [vmem:[#allocation3 + $0xde0] sm:$0xff]
    %v6182 = vld [vmem:[#allocation3 + $0xde8] sm:$0xff]
    %v6183 = vld [vmem:[#allocation3 + $0xdf0] sm:$0xff]
    %v6184 = vld [vmem:[#allocation3 + $0xdf8] sm:$0xff]
    %v6185 = vld [vmem:[#allocation3 + $0xe00] sm:$0xff]
    %v6186 = vld [vmem:[#allocation3 + $0xe08] sm:$0xff]
    %v6187 = vld [vmem:[#allocation3 + $0xe10] sm:$0xff]
    %v6188 = vld [vmem:[#allocation3 + $0xe18] sm:$0xff]
    %v6189 = vld [vmem:[#allocation3 + $0xe20] sm:$0xff]
    %v6190 = vld [vmem:[#allocation3 + $0xe28] sm:$0xff]
    %v6191 = vld [vmem:[#allocation3 + $0xe30] sm:$0xff]
    %v6192 = vld [vmem:[#allocation3 + $0xe38] sm:$0xff]
    %v6193 = vld [vmem:[#allocation3 + $0xe40] sm:$0xff]
    %v6194 = vld [vmem:[#allocation3 + $0xe48] sm:$0xff]
    %v6195 = vld [vmem:[#allocation3 + $0xe50] sm:$0xff]
    %v6196 = vld [vmem:[#allocation3 + $0xe58] sm:$0xff]
    %v6197 = vld [vmem:[#allocation3 + $0xe60] sm:$0xff]
    %v6198 = vld [vmem:[#allocation3 + $0xe68] sm:$0xff]
    %v6199 = vld [vmem:[#allocation3 + $0xe70] sm:$0xff]
    %v6200 = vld [vmem:[#allocation3 + $0xe78] sm:$0xff]
    %v6201 = vld [vmem:[#allocation3 + $0xe80] sm:$0xff]
    %v6202 = vld [vmem:[#allocation3 + $0xe88] sm:$0xff]
    %v6203 = vld [vmem:[#allocation3 + $0xe90] sm:$0xff]
    %v6204 = vld [vmem:[#allocation3 + $0xe98] sm:$0xff]
    %v6205 = vld [vmem:[#allocation3 + $0xea0] sm:$0xff]
    %v6206 = vld [vmem:[#allocation3 + $0xea8] sm:$0xff]
    %v6207 = vld [vmem:[#allocation3 + $0xeb0] sm:$0xff]
    %v6208 = vld [vmem:[#allocation3 + $0xeb8] sm:$0xff]
    %v6209 = vld [vmem:[#allocation3 + $0xec0] sm:$0xff]
    %v6210 = vld [vmem:[#allocation3 + $0xec8] sm:$0xff]
    %v6211 = vld [vmem:[#allocation3 + $0xed0] sm:$0xff]
    %v6212 = vld [vmem:[#allocation3 + $0xed8] sm:$0xff]
    %v6213 = vld [vmem:[#allocation3 + $0xee0] sm:$0xff]
    %v6214 = vld [vmem:[#allocation3 + $0xee8] sm:$0xff]
    %v6215 = vld [vmem:[#allocation3 + $0xef0] sm:$0xff]
    %v6216 = vld [vmem:[#allocation3 + $0xef8] sm:$0xff]
    %v6217 = vld [vmem:[#allocation3 + $0xf00] sm:$0xff]
    %v6218 = vld [vmem:[#allocation3 + $0xf08] sm:$0xff]
    %v6219 = vld [vmem:[#allocation3 + $0xf10] sm:$0xff]
    %v6220 = vld [vmem:[#allocation3 + $0xf18] sm:$0xff]
    %v6221 = vld [vmem:[#allocation3 + $0xf20] sm:$0xff]
    %v6222 = vld [vmem:[#allocation3 + $0xf28] sm:$0xff]
    %v6223 = vld [vmem:[#allocation3 + $0xf30] sm:$0xff]
    %v6224 = vld [vmem:[#allocation3 + $0xf38] sm:$0xff]
    %v6225 = vld [vmem:[#allocation3 + $0xf40] sm:$0xff]
    %v6226 = vld [vmem:[#allocation3 + $0xf48] sm:$0xff]
    %v6227 = vld [vmem:[#allocation3 + $0xf50] sm:$0xff]
    %v6228 = vld [vmem:[#allocation3 + $0xf58] sm:$0xff]
    %v6229 = vld [vmem:[#allocation3 + $0xf60] sm:$0xff]
    %v6230 = vld [vmem:[#allocation3 + $0xf68] sm:$0xff]
    %v6231 = vld [vmem:[#allocation3 + $0xf70] sm:$0xff]
    %v6232 = vld [vmem:[#allocation3 + $0xf78] sm:$0xff]
    %v6233 = vld [vmem:[#allocation3 + $0xf80] sm:$0xff]
    %v6234 = vld [vmem:[#allocation3 + $0xf88] sm:$0xff]
    %v6235 = vld [vmem:[#allocation3 + $0xf90] sm:$0xff]
    %v6236 = vld [vmem:[#allocation3 + $0xf98] sm:$0xff]
    %v6237 = vld [vmem:[#allocation3 + $0xfa0] sm:$0xff]
    %v6238 = vld [vmem:[#allocation3 + $0xfa8] sm:$0xff]
    %v6239 = vld [vmem:[#allocation3 + $0xfb0] sm:$0xff]
    %v6240 = vld [vmem:[#allocation3 + $0xfb8] sm:$0xff]
    %v6241 = vld [vmem:[#allocation3 + $0xfc0] sm:$0xff]
    %v6242 = vld [vmem:[#allocation3 + $0xfc8] sm:$0xff]
    %v6243 = vld [vmem:[#allocation3 + $0xfd0] sm:$0xff]
    %v6244 = vld [vmem:[#allocation3 + $0xfd8] sm:$0xff]
    %v6245 = vld [vmem:[#allocation3 + $0xfe0] sm:$0xff]
    %v6246 = vld [vmem:[#allocation3 + $0xfe8] sm:$0xff]
    %v6247 = vld [vmem:[#allocation3 + $0xff0] sm:$0xff]
    %v6248 = vld [vmem:[#allocation3 + $0xff8] sm:$0xff]
    %v6249 = vld [vmem:[#allocation3 + $0x1000] sm:$0xff]
    %v6250 = vld [vmem:[#allocation3 + $0x1008] sm:$0xff]
    %v6251 = vld [vmem:[#allocation3 + $0x1010] sm:$0xff]
    %v6252 = vld [vmem:[#allocation3 + $0x1018] sm:$0xff]
    %v6253 = vld [vmem:[#allocation3 + $0x1020] sm:$0xff]
    %v6254 = vld [vmem:[#allocation3 + $0x1028] sm:$0xff]
    %v6255 = vld [vmem:[#allocation3 + $0x1030] sm:$0xff]
    %v6256 = vld [vmem:[#allocation3 + $0x1038] sm:$0xff]
    %v6257 = vld [vmem:[#allocation3 + $0x1040] sm:$0xff]
    %v6258 = vld [vmem:[#allocation3 + $0x1048] sm:$0xff]
    %v6259 = vld [vmem:[#allocation3 + $0x1050] sm:$0xff]
    %v6260 = vld [vmem:[#allocation3 + $0x1058] sm:$0xff]
    %v6261 = vld [vmem:[#allocation3 + $0x1060] sm:$0xff]
    %v6262 = vld [vmem:[#allocation3 + $0x1068] sm:$0xff]
    %v6263 = vld [vmem:[#allocation3 + $0x1070] sm:$0xff]
    %v6264 = vld [vmem:[#allocation3 + $0x1078] sm:$0xff]
    %v6265 = vld [vmem:[#allocation3 + $0x1080] sm:$0xff]
    %v6266 = vld [vmem:[#allocation3 + $0x1088] sm:$0xff]
    %v6267 = vld [vmem:[#allocation3 + $0x1090] sm:$0xff]
    %v6268 = vld [vmem:[#allocation3 + $0x1098] sm:$0xff]
    %v6269 = vld [vmem:[#allocation3 + $0x10a0] sm:$0xff]
    %v6270 = vld [vmem:[#allocation3 + $0x10a8] sm:$0xff]
    %v6271 = vld [vmem:[#allocation3 + $0x10b0] sm:$0xff]
    %v6272 = vld [vmem:[#allocation3 + $0x10b8] sm:$0xff]
    %v6273 = vld [vmem:[#allocation3 + $0x10c0] sm:$0xff]
    %v6274 = vld [vmem:[#allocation3 + $0x10c8] sm:$0xff]
    %v6275 = vld [vmem:[#allocation3 + $0x10d0] sm:$0xff]
    %v6276 = vld [vmem:[#allocation3 + $0x10d8] sm:$0xff]
    %v6277 = vld [vmem:[#allocation3 + $0x10e0] sm:$0xff]
    %v6278 = vld [vmem:[#allocation3 + $0x10e8] sm:$0xff]
    %v6279 = vld [vmem:[#allocation3 + $0x10f0] sm:$0xff]
    %v6280 = vld [vmem:[#allocation3 + $0x10f8] sm:$0xff]
    %v6281 = vld [vmem:[#allocation3 + $0x1100] sm:$0xff]
    %v6282 = vld [vmem:[#allocation3 + $0x1108] sm:$0xff]
    %v6283 = vld [vmem:[#allocation3 + $0x1110] sm:$0xff]
    %v6284 = vld [vmem:[#allocation3 + $0x1118] sm:$0xff]
    %v6285 = vld [vmem:[#allocation3 + $0x1120] sm:$0xff]
    %v6286 = vld [vmem:[#allocation3 + $0x1128] sm:$0xff]
    %v6287 = vld [vmem:[#allocation3 + $0x1130] sm:$0xff]
    %v6288 = vld [vmem:[#allocation3 + $0x1138] sm:$0xff]
    %v6289 = vld [vmem:[#allocation3 + $0x1140] sm:$0xff]
    %v6290 = vld [vmem:[#allocation3 + $0x1148] sm:$0xff]
    %v6291 = vld [vmem:[#allocation3 + $0x1150] sm:$0xff]
    %v6292 = vld [vmem:[#allocation3 + $0x1158] sm:$0xff]
    %v6293 = vld [vmem:[#allocation3 + $0x1160] sm:$0xff]
    %v6294 = vld [vmem:[#allocation3 + $0x1168] sm:$0xff]
    %v6295 = vld [vmem:[#allocation3 + $0x1170] sm:$0xff]
    %v6296 = vld [vmem:[#allocation3 + $0x1178] sm:$0xff]
    %v6297 = vld [vmem:[#allocation3 + $0x1180] sm:$0xff]
    %v6298 = vld [vmem:[#allocation3 + $0x1188] sm:$0xff]
    %v6299 = vld [vmem:[#allocation3 + $0x1190] sm:$0xff]
    %v6300 = vld [vmem:[#allocation3 + $0x1198] sm:$0xff]
    %v6301 = vld [vmem:[#allocation3 + $0x11a0] sm:$0xff]
    %v6302 = vld [vmem:[#allocation3 + $0x11a8] sm:$0xff]
    %v6303 = vld [vmem:[#allocation3 + $0x11b0] sm:$0xff]
    %v6304 = vld [vmem:[#allocation3 + $0x11b8] sm:$0xff]
    %v6305 = vld [vmem:[#allocation3 + $0x11c0] sm:$0xff]
    %v6306 = vld [vmem:[#allocation3 + $0x11c8] sm:$0xff]
    %v6307 = vld [vmem:[#allocation3 + $0x11d0] sm:$0xff]
    %v6308 = vld [vmem:[#allocation3 + $0x11d8] sm:$0xff]
    %v6309 = vld [vmem:[#allocation3 + $0x11e0] sm:$0xff]
    %v6310 = vld [vmem:[#allocation3 + $0x11e8] sm:$0xff]
    %v6311 = vld [vmem:[#allocation3 + $0x11f0] sm:$0xff]
    %v6312 = vld [vmem:[#allocation3 + $0x11f8] sm:$0xff]
    %v6313 = vld [vmem:[#allocation9] sm:$0xff]
    %v6314 = vld [vmem:[#allocation9 + $0x8] sm:$0xff]
    %v6315 = vld [vmem:[#allocation9 + $0x10] sm:$0xff]
    %v6316 = vld [vmem:[#allocation9 + $0x18] sm:$0xff]
    %v6317 = vld [vmem:[#allocation9 + $0x20] sm:$0xff]
    %v6318 = vld [vmem:[#allocation9 + $0x28] sm:$0xff]
    %v6319 = vld [vmem:[#allocation9 + $0x30] sm:$0xff]
    %v6320 = vld [vmem:[#allocation9 + $0x38] sm:$0xff]
    %v6321 = vld [vmem:[#allocation9 + $0x40] sm:$0xff]
    %v6322 = vld [vmem:[#allocation9 + $0x48] sm:$0xff]
    %v6323 = vld [vmem:[#allocation9 + $0x50] sm:$0xff]
    %v6324 = vld [vmem:[#allocation9 + $0x58] sm:$0xff]
    %v6325 = vld [vmem:[#allocation9 + $0x60] sm:$0xff]
    %v6326 = vld [vmem:[#allocation9 + $0x68] sm:$0xff]
    %v6327 = vld [vmem:[#allocation9 + $0x70] sm:$0xff]
    %v6328 = vld [vmem:[#allocation9 + $0x78] sm:$0xff]
    %v6329 = vld [vmem:[#allocation9 + $0x80] sm:$0xff]
    %v6330 = vld [vmem:[#allocation9 + $0x88] sm:$0xff]
    %v6331 = vld [vmem:[#allocation9 + $0x90] sm:$0xff]
    %v6332 = vld [vmem:[#allocation9 + $0x98] sm:$0xff]
    %v6333 = vld [vmem:[#allocation9 + $0xa0] sm:$0xff]
    %v6334 = vld [vmem:[#allocation9 + $0xa8] sm:$0xff]
    %v6335 = vld [vmem:[#allocation9 + $0xb0] sm:$0xff]
    %v6336 = vld [vmem:[#allocation9 + $0xb8] sm:$0xff]
    %v6337 = vld [vmem:[#allocation9 + $0xc0] sm:$0xff]
    %v6338 = vld [vmem:[#allocation9 + $0xc8] sm:$0xff]
    %v6339 = vld [vmem:[#allocation9 + $0xd0] sm:$0xff]
    %v6340 = vld [vmem:[#allocation9 + $0xd8] sm:$0xff]
    %v6341 = vld [vmem:[#allocation9 + $0xe0] sm:$0xff]
    %v6342 = vld [vmem:[#allocation9 + $0xe8] sm:$0xff]
    %v6343 = vld [vmem:[#allocation9 + $0xf0] sm:$0xff]
    %v6344 = vld [vmem:[#allocation9 + $0xf8] sm:$0xff]
    %v6345 = vld [vmem:[#allocation9 + $0x100] sm:$0xff]
    %v6346 = vld [vmem:[#allocation9 + $0x108] sm:$0xff]
    %v6347 = vld [vmem:[#allocation9 + $0x110] sm:$0xff]
    %v6348 = vld [vmem:[#allocation9 + $0x118] sm:$0xff]
    %v6349 = vld [vmem:[#allocation9 + $0x120] sm:$0xff]
    %v6350 = vld [vmem:[#allocation9 + $0x128] sm:$0xff]
    %v6351 = vld [vmem:[#allocation9 + $0x130] sm:$0xff]
    %v6352 = vld [vmem:[#allocation9 + $0x138] sm:$0xff]
    %v6353 = vld [vmem:[#allocation9 + $0x140] sm:$0xff]
    %v6354 = vld [vmem:[#allocation9 + $0x148] sm:$0xff]
    %v6355 = vld [vmem:[#allocation9 + $0x150] sm:$0xff]
    %v6356 = vld [vmem:[#allocation9 + $0x158] sm:$0xff]
    %v6357 = vld [vmem:[#allocation9 + $0x160] sm:$0xff]
    %v6358 = vld [vmem:[#allocation9 + $0x168] sm:$0xff]
    %v6359 = vld [vmem:[#allocation9 + $0x170] sm:$0xff]
    %v6360 = vld [vmem:[#allocation9 + $0x178] sm:$0xff]
    %v6361 = vld [vmem:[#allocation9 + $0x180] sm:$0xff]
    %v6362 = vld [vmem:[#allocation9 + $0x188] sm:$0xff]
    %v6363 = vld [vmem:[#allocation9 + $0x190] sm:$0xff]
    %v6364 = vld [vmem:[#allocation9 + $0x198] sm:$0xff]
    %v6365 = vld [vmem:[#allocation9 + $0x1a0] sm:$0xff]
    %v6366 = vld [vmem:[#allocation9 + $0x1a8] sm:$0xff]
    %v6367 = vld [vmem:[#allocation9 + $0x1b0] sm:$0xff]
    %v6368 = vld [vmem:[#allocation9 + $0x1b8] sm:$0xff]
    %v6369 = vld [vmem:[#allocation9 + $0x1c0] sm:$0xff]
    %v6370 = vld [vmem:[#allocation9 + $0x1c8] sm:$0xff]
    %v6371 = vld [vmem:[#allocation9 + $0x1d0] sm:$0xff]
    %v6372 = vld [vmem:[#allocation9 + $0x1d8] sm:$0xff]
    %v6373 = vld [vmem:[#allocation9 + $0x1e0] sm:$0xff]
    %v6374 = vld [vmem:[#allocation9 + $0x1e8] sm:$0xff]
    %v6375 = vld [vmem:[#allocation9 + $0x1f0] sm:$0xff]
    %v6376 = vld [vmem:[#allocation9 + $0x1f8] sm:$0xff]
    %v6377 = vld [vmem:[#allocation9 + $0x200] sm:$0xff]
    %v6378 = vld [vmem:[#allocation9 + $0x208] sm:$0xff]
    %v6379 = vld [vmem:[#allocation9 + $0x210] sm:$0xff]
    %v6380 = vld [vmem:[#allocation9 + $0x218] sm:$0xff]
    %v6381 = vld [vmem:[#allocation9 + $0x220] sm:$0xff]
    %v6382 = vld [vmem:[#allocation9 + $0x228] sm:$0xff]
    %v6383 = vld [vmem:[#allocation9 + $0x230] sm:$0xff]
    %v6384 = vld [vmem:[#allocation9 + $0x238] sm:$0xff]
    %v6385 = vld [vmem:[#allocation9 + $0x240] sm:$0xff]
    %v6386 = vld [vmem:[#allocation9 + $0x248] sm:$0xff]
    %v6387 = vld [vmem:[#allocation9 + $0x250] sm:$0xff]
    %v6388 = vld [vmem:[#allocation9 + $0x258] sm:$0xff]
    %v6389 = vld [vmem:[#allocation9 + $0x260] sm:$0xff]
    %v6390 = vld [vmem:[#allocation9 + $0x268] sm:$0xff]
    %v6391 = vld [vmem:[#allocation9 + $0x270] sm:$0xff]
    %v6392 = vld [vmem:[#allocation9 + $0x278] sm:$0xff]
    %v6393 = vld [vmem:[#allocation9 + $0x280] sm:$0xff]
    %v6394 = vld [vmem:[#allocation9 + $0x288] sm:$0xff]
    %v6395 = vld [vmem:[#allocation9 + $0x290] sm:$0xff]
    %v6396 = vld [vmem:[#allocation9 + $0x298] sm:$0xff]
    %v6397 = vld [vmem:[#allocation9 + $0x2a0] sm:$0xff]
    %v6398 = vld [vmem:[#allocation9 + $0x2a8] sm:$0xff]
    %v6399 = vld [vmem:[#allocation9 + $0x2b0] sm:$0xff]
    %v6400 = vld [vmem:[#allocation9 + $0x2b8] sm:$0xff]
    %v6401 = vld [vmem:[#allocation9 + $0x2c0] sm:$0xff]
    %v6402 = vld [vmem:[#allocation9 + $0x2c8] sm:$0xff]
    %v6403 = vld [vmem:[#allocation9 + $0x2d0] sm:$0xff]
    %v6404 = vld [vmem:[#allocation9 + $0x2d8] sm:$0xff]
    %v6405 = vld [vmem:[#allocation9 + $0x2e0] sm:$0xff]
    %v6406 = vld [vmem:[#allocation9 + $0x2e8] sm:$0xff]
    %v6407 = vld [vmem:[#allocation9 + $0x2f0] sm:$0xff]
    %v6408 = vld [vmem:[#allocation9 + $0x2f8] sm:$0xff]
    %v6409 = vld [vmem:[#allocation9 + $0x300] sm:$0xff]
    %v6410 = vld [vmem:[#allocation9 + $0x308] sm:$0xff]
    %v6411 = vld [vmem:[#allocation9 + $0x310] sm:$0xff]
    %v6412 = vld [vmem:[#allocation9 + $0x318] sm:$0xff]
    %v6413 = vld [vmem:[#allocation9 + $0x320] sm:$0xff]
    %v6414 = vld [vmem:[#allocation9 + $0x328] sm:$0xff]
    %v6415 = vld [vmem:[#allocation9 + $0x330] sm:$0xff]
    %v6416 = vld [vmem:[#allocation9 + $0x338] sm:$0xff]
    %v6417 = vld [vmem:[#allocation9 + $0x340] sm:$0xff]
    %v6418 = vld [vmem:[#allocation9 + $0x348] sm:$0xff]
    %v6419 = vld [vmem:[#allocation9 + $0x350] sm:$0xff]
    %v6420 = vld [vmem:[#allocation9 + $0x358] sm:$0xff]
    %v6421 = vld [vmem:[#allocation9 + $0x360] sm:$0xff]
    %v6422 = vld [vmem:[#allocation9 + $0x368] sm:$0xff]
    %v6423 = vld [vmem:[#allocation9 + $0x370] sm:$0xff]
    %v6424 = vld [vmem:[#allocation9 + $0x378] sm:$0xff]
    %v6425 = vld [vmem:[#allocation9 + $0x380] sm:$0xff]
    %v6426 = vld [vmem:[#allocation9 + $0x388] sm:$0xff]
    %v6427 = vld [vmem:[#allocation9 + $0x390] sm:$0xff]
    %v6428 = vld [vmem:[#allocation9 + $0x398] sm:$0xff]
    %v6429 = vld [vmem:[#allocation9 + $0x3a0] sm:$0xff]
    %v6430 = vld [vmem:[#allocation9 + $0x3a8] sm:$0xff]
    %v6431 = vld [vmem:[#allocation9 + $0x3b0] sm:$0xff]
    %v6432 = vld [vmem:[#allocation9 + $0x3b8] sm:$0xff]
    %v6433 = vld [vmem:[#allocation9 + $0x3c0] sm:$0xff]
    %v6434 = vld [vmem:[#allocation9 + $0x3c8] sm:$0xff]
    %v6435 = vld [vmem:[#allocation9 + $0x3d0] sm:$0xff]
    %v6436 = vld [vmem:[#allocation9 + $0x3d8] sm:$0xff]
    %v6437 = vld [vmem:[#allocation9 + $0x3e0] sm:$0xff]
    %v6438 = vld [vmem:[#allocation9 + $0x3e8] sm:$0xff]
    %v6439 = vld [vmem:[#allocation9 + $0x3f0] sm:$0xff]
    %v6440 = vld [vmem:[#allocation9 + $0x3f8] sm:$0xff]
    %v6441 = vld [vmem:[#allocation9 + $0x400] sm:$0xff]
    %v6442 = vld [vmem:[#allocation9 + $0x408] sm:$0xff]
    %v6443 = vld [vmem:[#allocation9 + $0x410] sm:$0xff]
    %v6444 = vld [vmem:[#allocation9 + $0x418] sm:$0xff]
    %v6445 = vld [vmem:[#allocation9 + $0x420] sm:$0xff]
    %v6446 = vld [vmem:[#allocation9 + $0x428] sm:$0xff]
    %v6447 = vld [vmem:[#allocation9 + $0x430] sm:$0xff]
    %v6448 = vld [vmem:[#allocation9 + $0x438] sm:$0xff]
    %v6449 = vld [vmem:[#allocation9 + $0x440] sm:$0xff]
    %v6450 = vld [vmem:[#allocation9 + $0x448] sm:$0xff]
    %v6451 = vld [vmem:[#allocation9 + $0x450] sm:$0xff]
    %v6452 = vld [vmem:[#allocation9 + $0x458] sm:$0xff]
    %v6453 = vld [vmem:[#allocation9 + $0x460] sm:$0xff]
    %v6454 = vld [vmem:[#allocation9 + $0x468] sm:$0xff]
    %v6455 = vld [vmem:[#allocation9 + $0x470] sm:$0xff]
    %v6456 = vld [vmem:[#allocation9 + $0x478] sm:$0xff]
    %6457 = vmatprep.subr.mxu0 0.0
    %6458 = vmatpush1.msra.mxu0 %v6313
    %6459 = vmatprep.subr.mxu0 0.0
    %6460 = vmatpush1.msra.mxu0 %v6314
    %6461 = vmatprep.subr.mxu0 0.0
    %6462 = vmatpush1.msra.mxu0 %v6315
    %6463 = vmatprep.subr.mxu0 0.0
    %6464 = vmatpush1.msra.mxu0 %v6316
    %6465 = vmatprep.subr.mxu0 0.0
    %6466 = vmatpush1.msra.mxu0 %v6317
    %6467 = vmatprep.subr.mxu0 0.0
    %6468 = vmatpush1.msra.mxu0 %v6318
    %6469 = vmatprep.subr.mxu0 0.0
    %6470 = vmatpush1.msra.mxu0 %v6319
    %6471 = vmatprep.subr.mxu0 0.0
    %6472 = vmatpush1.msra.mxu0 %v6320
    %6473 = vmatprep.subr.mxu0 0.0
    %6474 = vmatpush1.msra.mxu0 %v6321
    %6475 = vmatprep.subr.mxu0 0.0
    %6476 = vmatpush1.msra.mxu0 %v6322
    %6477 = vmatprep.subr.mxu0 0.0
    %6478 = vmatpush1.msra.mxu0 %v6323
    %6479 = vmatprep.subr.mxu0 0.0
    %6480 = vmatpush1.msra.mxu0 %v6324
    %6481 = vmatprep.subr.mxu0 0.0
    %6482 = vmatpush1.msra.mxu0 %v6325
    %6483 = vmatprep.subr.mxu0 0.0
    %6484 = vmatpush1.msra.mxu0 %v6326
    %6485 = vmatprep.subr.mxu0 0.0
    %6486 = vmatpush1.msra.mxu0 %v6327
    %6487 = vmatprep.subr.mxu0 0.0
    %6488 = vmatpush1.msra.mxu0 %v6328
    %6489 = vmatprep.subr.mxu0 0.0
    %6490 = vmatpush1.msra.mxu0 %v6329
    %6491 = vmatprep.subr.mxu0 0.0
    %6492 = vmatpush1.msra.mxu0 %v6330
    %6493 = vmatprep.subr.mxu0 0.0
    %6494 = vmatpush1.msra.mxu0 %v6331
    %6495 = vmatprep.subr.mxu0 0.0
    %6496 = vmatpush1.msra.mxu0 %v6332
    %6497 = vmatprep.subr.mxu0 0.0
    %6498 = vmatpush1.msra.mxu0 %v6333
    %6499 = vmatprep.subr.mxu0 0.0
    %6500 = vmatpush1.msra.mxu0 %v6334
    %6501 = vmatprep.subr.mxu0 0.0
    %6502 = vmatpush1.msra.mxu0 %v6335
    %6503 = vmatprep.subr.mxu0 0.0
    %6504 = vmatpush1.msra.mxu0 %v6336
    %6505 = vmatprep.subr.mxu0 0.0
    %6506 = vmatpush1.msra.mxu0 %v6337
    %6507 = vmatprep.subr.mxu0 0.0
    %6508 = vmatpush1.msra.mxu0 %v6338
    %6509 = vmatprep.subr.mxu0 0.0
    %6510 = vmatpush1.msra.mxu0 %v6339
    %6511 = vmatprep.subr.mxu0 0.0
    %6512 = vmatpush1.msra.mxu0 %v6340
    %6513 = vmatprep.subr.mxu0 0.0
    %6514 = vmatpush1.msra.mxu0 %v6341
    %6515 = vmatprep.subr.mxu0 0.0
    %6516 = vmatpush1.msra.mxu0 %v6342
    %6517 = vmatprep.subr.mxu0 0.0
    %6518 = vmatpush1.msra.mxu0 %v6343
    %6519 = vmatprep.subr.mxu0 0.0
    %6520 = vmatpush1.msra.mxu0 %v6344
    %6521 = vmatprep.mubr.f32.mxu0 %v5738
    %6522 = vmatmul.mubr.f32.gmra.mrb[0].mxu0 %v5737
    %v6523 = vpop.f32.mrb[0].mxu0
    %v6524 = vadd.f32 0.0, %v6523
    %v6525 = vpop.f32.mrb[0].mxu0
    %6526 = vmatprep.mubr.f32.mxu0 %v5747
    %6527 = vmatmul.mubr.f32.gmra.mrb[0].mxu0 %v5746
    %v6528 = vpop.f32.mrb[0].mxu0
    %v6529 = vadd.f32 0.0, %v6528
    %v6530 = vpop.f32.mrb[0].mxu0
    %6531 = vmatprep.mubr.f32.mxu0 %v5756
    %6532 = vmatmul.mubr.f32.gmra.mrb[0].mxu0 %v5755
    %v6533 = vpop.f32.mrb[0].mxu0
    %v6534 = vadd.f32 0.0, %v6533
    %v6535 = vpop.f32.mrb[0].mxu0
    %6536 = vmatprep.mubr.f32.mxu0 %v5765
    %6537 = vmatmul.mubr.f32.gmra.mrb[0].mxu0 %v5764
    %v6538 = vpop.f32.mrb[0].mxu0
    %v6539 = vadd.f32 0.0, %v6538
    %v6540 = vpop.f32.mrb[0].mxu0
    %6541 = vmatprep.mubr.f32.mxu0 %v5774
    %6542 = vmatmul.mubr.f32.gmra.mrb[0].mxu0 %v5773
    %v6543 = vpop.f32.mrb[0].mxu0
    %v6544 = vadd.f32 0.0, %v6543
    %v6545 = vpop.f32.mrb[0].mxu0
    %6546 = vmatprep.mubr.f32.mxu0 %v5783
    %6547 = vmatmul.mubr.f32.gmra.mrb[0].mxu0 %v5782
    %v6548 = vpop.f32.mrb[0].mxu0
    %v6549 = vadd.f32 0.0, %v6548
    %v6550 = vpop.f32.mrb[0].mxu0
    %6551 = vmatprep.mubr.f32.mxu0 %v5792
    %6552 = vmatmul.mubr.f32.gmra.mrb[0].mxu0 %v5791
    %v6553 = vpop.f32.mrb[0].mxu0
    %v6554 = vadd.f32 0.0, %v6553
    %v6555 = vpop.f32.mrb[0].mxu0
    %6556 = vmatprep.mubr.f32.mxu0 %v5801
    %6557 = vmatmul.mubr.f32.gmra.mrb[0].mxu0 %v5800
    %v6558 = vpop.f32.mrb[0].mxu0
    %v6559 = vadd.f32 0.0, %v6558
    %v6560 = vpop.f32.mrb[0].mxu0
    %6561 = vmatprep.mubr.f32.mxu0 %v5810
    %6562 = vmatmul.mubr.f32.gmra.mrb[0].mxu0 %v5809
    %v6563 = vpop.f32.mrb[0].mxu0
    %v6564 = vadd.f32 0.0, %v6563
    %v6565 = vpop.f32.mrb[0].mxu0
    %6566 = vmatprep.mubr.f32.mxu0 %v5819
    %6567 = vmatmul.mubr.f32.gmra.mrb[0].mxu0 %v5818
    %v6568 = vpop.f32.mrb[0].mxu0
    %v6569 = vadd.f32 0.0, %v6568
    %v6570 = vpop.f32.mrb[0].mxu0
    %6571 = vmatprep.mubr.f32.mxu0 %v5828
    %6572 = vmatmul.mubr.f32.gmra.mrb[0].mxu0 %v5827
    %v6573 = vpop.f32.mrb[0].mxu0
    %v6574 = vadd.f32 0.0, %v6573
    %v6575 = vpop.f32.mrb[0].mxu0
    %6576 = vmatprep.mubr.f32.mxu0 %v5837
    %6577 = vmatmul.mubr.f32.gmra.mrb[0].mxu0 %v5836
    %v6578 = vpop.f32.mrb[0].mxu0
    %v6579 = vadd.f32 0.0, %v6578
    %v6580 = vpop.f32.mrb[0].mxu0
    %6581 = vmatprep.mubr.f32.mxu0 %v5846
    %6582 = vmatmul.mubr.f32.gmra.mrb[0].mxu0 %v5845
    %v6583 = vpop.f32.mrb[0].mxu0
    %v6584 = vadd.f32 0.0, %v6583
    %v6585 = vpop.f32.mrb[0].mxu0
    %6586 = vmatprep.mubr.f32.mxu0 %v5855
    %6587 = vmatmul.mubr.f32.gmra.mrb[0].mxu0 %v5854
    %v6588 = vpop.f32.mrb[0].mxu0
    %v6589 = vadd.f32 0.0, %v6588
    %v6590 = vpop.f32.mrb[0].mxu0
    %6591 = vmatprep.mubr.f32.mxu0 %v5864
    %6592 = vmatmul.mubr.f32.gmra.mrb[0].mxu0 %v5863
    %v6593 = vpop.f32.mrb[0].mxu0
    %v6594 = vadd.f32 0.0, %v6593
    %v6595 = vpop.f32.mrb[0].mxu0
    %6596 = vmatprep.mubr.f32.mxu0 %v5873
    %6597 = vmatmul.mubr.f32.gmra.mrb[0].mxu0 %v5872
    %v6598 = vpop.f32.mrb[0].mxu0
    %v6599 = vadd.f32 0.0, %v6598
    %v6600 = vpop.f32.mrb[0].mxu0
    %6601 = vmatprep.mubr.f32.mxu0 %v5882
    %6602 = vmatmul.mubr.f32.gmra.mrb[0].mxu0 %v5881
    %v6603 = vpop.f32.mrb[0].mxu0
    %v6604 = vadd.f32 0.0, %v6603
    %v6605 = vpop.f32.mrb[0].mxu0
    %6606 = vmatprep.mubr.f32.mxu0 %v5891
    %6607 = vmatmul.mubr.f32.gmra.mrb[0].mxu0 %v5890
    %v6608 = vpop.f32.mrb[0].mxu0
    %v6609 = vadd.f32 0.0, %v6608
    %v6610 = vpop.f32.mrb[0].mxu0
    %6611 = vmatprep.mubr.f32.mxu0 %v5900
    %6612 = vmatmul.mubr.f32.gmra.mrb[0].mxu0 %v5899
    %v6613 = vpop.f32.mrb[0].mxu0
    %v6614 = vadd.f32 0.0, %v6613
    %v6615 = vpop.f32.mrb[0].mxu0
    %6616 = vmatprep.mubr.f32.mxu0 %v5909
    %6617 = vmatmul.mubr.f32.gmra.mrb[0].mxu0 %v5908
    %v6618 = vpop.f32.mrb[0].mxu0
    %v6619 = vadd.f32 0.0, %v6618
    %v6620 = vpop.f32.mrb[0].mxu0
    %6621 = vmatprep.mubr.f32.mxu0 %v5918
    %6622 = vmatmul.mubr.f32.gmra.mrb[0].mxu0 %v5917
    %v6623 = vpop.f32.mrb[0].mxu0
    %v6624 = vadd.f32 0.0, %v6623
    %v6625 = vpop.f32.mrb[0].mxu0
    %6626 = vmatprep.mubr.f32.mxu0 %v5927
    %6627 = vmatmul.mubr.f32.gmra.mrb[0].mxu0 %v5926
    %v6628 = vpop.f32.mrb[0].mxu0
    %v6629 = vadd.f32 0.0, %v6628
    %v6630 = vpop.f32.mrb[0].mxu0
    %6631 = vmatprep.mubr.f32.mxu0 %v5936
    %6632 = vmatmul.mubr.f32.gmra.mrb[0].mxu0 %v5935
    %v6633 = vpop.f32.mrb[0].mxu0
    %v6634 = vadd.f32 0.0, %v6633
    %v6635 = vpop.f32.mrb[0].mxu0
    %6636 = vmatprep.mubr.f32.mxu0 %v5945
    %6637 = vmatmul.mubr.f32.gmra.mrb[0].mxu0 %v5944
    %v6638 = vpop.f32.mrb[0].mxu0
    %v6639 = vadd.f32 0.0, %v6638
    %v6640 = vpop.f32.mrb[0].mxu0
    %6641 = vmatprep.mubr.f32.mxu0 %v5954
    %6642 = vmatmul.mubr.f32.gmra.mrb[0].mxu0 %v5953
    %v6643 = vpop.f32.mrb[0].mxu0
    %v6644 = vadd.f32 0.0, %v6643
    %v6645 = vpop.f32.mrb[0].mxu0
    %6646 = vmatprep.mubr.f32.mxu0 %v5963
    %6647 = vmatmul.mubr.f32.gmra.mrb[0].mxu0 %v5962
    %v6648 = vpop.f32.mrb[0].mxu0
    %v6649 = vadd.f32 0.0, %v6648
    %v6650 = vpop.f32.mrb[0].mxu0
    %6651 = vmatprep.mubr.f32.mxu0 %v5972
    %6652 = vmatmul.mubr.f32.gmra.mrb[0].mxu0 %v5971
    %v6653 = vpop.f32.mrb[0].mxu0
    %v6654 = vadd.f32 0.0, %v6653
    %v6655 = vpop.f32.mrb[0].mxu0
    %6656 = vmatprep.mubr.f32.mxu0 %v5981
    %6657 = vmatmul.mubr.f32.gmra.mrb[0].mxu0 %v5980
    %v6658 = vpop.f32.mrb[0].mxu0
    %v6659 = vadd.f32 0.0, %v6658
    %v6660 = vpop.f32.mrb[0].mxu0
    %6661 = vmatprep.mubr.f32.mxu0 %v5990
    %6662 = vmatmul.mubr.f32.gmra.mrb[0].mxu0 %v5989
    %v6663 = vpop.f32.mrb[0].mxu0
    %v6664 = vadd.f32 0.0, %v6663
    %v6665 = vpop.f32.mrb[0].mxu0
    %6666 = vmatprep.mubr.f32.mxu0 %v5999
    %6667 = vmatmul.mubr.f32.gmra.mrb[0].mxu0 %v5998
    %v6668 = vpop.f32.mrb[0].mxu0
    %v6669 = vadd.f32 0.0, %v6668
    %v6670 = vpop.f32.mrb[0].mxu0
    %6671 = vmatprep.mubr.f32.mxu0 %v6008
    %6672 = vmatmul.mubr.f32.gmra.mrb[0].mxu0 %v6007
    %v6673 = vpop.f32.mrb[0].mxu0
    %v6674 = vadd.f32 0.0, %v6673
    %v6675 = vpop.f32.mrb[0].mxu0
    %6676 = vmatprep.mubr.f32.mxu0 %v6017
    %6677 = vmatmul.mubr.f32.gmra.mrb[0].mxu0 %v6016
    %v6678 = vpop.f32.mrb[0].mxu0
    %v6679 = vadd.f32 0.0, %v6678
    %v6680 = vpop.f32.mrb[0].mxu0
    %6681 = vmatprep.mubr.f32.mxu0 %v6026
    %6682 = vmatmul.mubr.f32.gmra.mrb[0].mxu0 %v6025
    %v6683 = vpop.f32.mrb[0].mxu0
    %v6684 = vadd.f32 0.0, %v6683
    %v6685 = vpop.f32.mrb[0].mxu0
    %6686 = vmatprep.mubr.f32.mxu0 %v6035
    %6687 = vmatmul.mubr.f32.gmra.mrb[0].mxu0 %v6034
    %v6688 = vpop.f32.mrb[0].mxu0
    %v6689 = vadd.f32 0.0, %v6688
    %v6690 = vpop.f32.mrb[0].mxu0
    %6691 = vmatprep.mubr.f32.mxu0 %v6044
    %6692 = vmatmul.mubr.f32.gmra.mrb[0].mxu0 %v6043
    %v6693 = vpop.f32.mrb[0].mxu0
    %v6694 = vadd.f32 0.0, %v6693
    %v6695 = vpop.f32.mrb[0].mxu0
    %6696 = vmatprep.mubr.f32.mxu0 %v6053
    %6697 = vmatmul.mubr.f32.gmra.mrb[0].mxu0 %v6052
    %v6698 = vpop.f32.mrb[0].mxu0
    %v6699 = vadd.f32 0.0, %v6698
    %v6700 = vpop.f32.mrb[0].mxu0
    %6701 = vmatprep.mubr.f32.mxu0 %v6062
    %6702 = vmatmul.mubr.f32.gmra.mrb[0].mxu0 %v6061
    %v6703 = vpop.f32.mrb[0].mxu0
    %v6704 = vadd.f32 0.0, %v6703
    %v6705 = vpop.f32.mrb[0].mxu0
    %6706 = vmatprep.mubr.f32.mxu0 %v6071
    %6707 = vmatmul.mubr.f32.gmra.mrb[0].mxu0 %v6070
    %v6708 = vpop.f32.mrb[0].mxu0
    %v6709 = vadd.f32 0.0, %v6708
    %v6710 = vpop.f32.mrb[0].mxu0
    %6711 = vmatprep.mubr.f32.mxu0 %v6080
    %6712 = vmatmul.mubr.f32.gmra.mrb[0].mxu0 %v6079
    %v6713 = vpop.f32.mrb[0].mxu0
    %v6714 = vadd.f32 0.0, %v6713
    %v6715 = vpop.f32.mrb[0].mxu0
    %6716 = vmatprep.mubr.f32.mxu0 %v6089
    %6717 = vmatmul.mubr.f32.gmra.mrb[0].mxu0 %v6088
    %v6718 = vpop.f32.mrb[0].mxu0
    %v6719 = vadd.f32 0.0, %v6718
    %v6720 = vpop.f32.mrb[0].mxu0
    %6721 = vmatprep.mubr.f32.mxu0 %v6098
    %6722 = vmatmul.mubr.f32.gmra.mrb[0].mxu0 %v6097
    %v6723 = vpop.f32.mrb[0].mxu0
    %v6724 = vadd.f32 0.0, %v6723
    %v6725 = vpop.f32.mrb[0].mxu0
    %6726 = vmatprep.mubr.f32.mxu0 %v6107
    %6727 = vmatmul.mubr.f32.gmra.mrb[0].mxu0 %v6106
    %v6728 = vpop.f32.mrb[0].mxu0
    %v6729 = vadd.f32 0.0, %v6728
    %v6730 = vpop.f32.mrb[0].mxu0
    %6731 = vmatprep.mubr.f32.mxu0 %v6116
    %6732 = vmatmul.mubr.f32.gmra.mrb[0].mxu0 %v6115
    %v6733 = vpop.f32.mrb[0].mxu0
    %v6734 = vadd.f32 0.0, %v6733
    %v6735 = vpop.f32.mrb[0].mxu0
    %6736 = vmatprep.mubr.f32.mxu0 %v6125
    %6737 = vmatmul.mubr.f32.gmra.mrb[0].mxu0 %v6124
    %v6738 = vpop.f32.mrb[0].mxu0
    %v6739 = vadd.f32 0.0, %v6738
    %v6740 = vpop.f32.mrb[0].mxu0
    %6741 = vmatprep.mubr.f32.mxu0 %v6134
    %6742 = vmatmul.mubr.f32.gmra.mrb[0].mxu0 %v6133
    %v6743 = vpop.f32.mrb[0].mxu0
    %v6744 = vadd.f32 0.0, %v6743
    %v6745 = vpop.f32.mrb[0].mxu0
    %6746 = vmatprep.mubr.f32.mxu0 %v6143
    %6747 = vmatmul.mubr.f32.gmra.mrb[0].mxu0 %v6142
    %v6748 = vpop.f32.mrb[0].mxu0
    %v6749 = vadd.f32 0.0, %v6748
    %v6750 = vpop.f32.mrb[0].mxu0
    %6751 = vmatprep.mubr.f32.mxu0 %v6152
    %6752 = vmatmul.mubr.f32.gmra.mrb[0].mxu0 %v6151
    %v6753 = vpop.f32.mrb[0].mxu0
    %v6754 = vadd.f32 0.0, %v6753
    %v6755 = vpop.f32.mrb[0].mxu0
    %6756 = vmatprep.mubr.f32.mxu0 %v6161
    %6757 = vmatmul.mubr.f32.gmra.mrb[0].mxu0 %v6160
    %v6758 = vpop.f32.mrb[0].mxu0
    %v6759 = vadd.f32 0.0, %v6758
    %v6760 = vpop.f32.mrb[0].mxu0
    %6761 = vmatprep.mubr.f32.mxu0 %v6170
    %6762 = vmatmul.mubr.f32.gmra.mrb[0].mxu0 %v6169
    %v6763 = vpop.f32.mrb[0].mxu0
    %v6764 = vadd.f32 0.0, %v6763
    %v6765 = vpop.f32.mrb[0].mxu0
    %6766 = vmatprep.mubr.f32.mxu0 %v6179
    %6767 = vmatmul.mubr.f32.gmra.mrb[0].mxu0 %v6178
    %v6768 = vpop.f32.mrb[0].mxu0
    %v6769 = vadd.f32 0.0, %v6768
    %v6770 = vpop.f32.mrb[0].mxu0
    %6771 = vmatprep.mubr.f32.mxu0 %v6188
    %6772 = vmatmul.mubr.f32.gmra.mrb[0].mxu0 %v6187
    %v6773 = vpop.f32.mrb[0].mxu0
    %v6774 = vadd.f32 0.0, %v6773
    %v6775 = vpop.f32.mrb[0].mxu0
    %6776 = vmatprep.mubr.f32.mxu0 %v6197
    %6777 = vmatmul.mubr.f32.gmra.mrb[0].mxu0 %v6196
    %v6778 = vpop.f32.mrb[0].mxu0
    %v6779 = vadd.f32 0.0, %v6778
    %v6780 = vpop.f32.mrb[0].mxu0
    %6781 = vmatprep.mubr.f32.mxu0 %v6206
    %6782 = vmatmul.mubr.f32.gmra.mrb[0].mxu0 %v6205
    %v6783 = vpop.f32.mrb[0].mxu0
    %v6784 = vadd.f32 0.0, %v6783
    %v6785 = vpop.f32.mrb[0].mxu0
    %6786 = vmatprep.mubr.f32.mxu0 %v6215
    %6787 = vmatmul.mubr.f32.gmra.mrb[0].mxu0 %v6214
    %v6788 = vpop.f32.mrb[0].mxu0
    %v6789 = vadd.f32 0.0, %v6788
    %v6790 = vpop.f32.mrb[0].mxu0
    %6791 = vmatprep.mubr.f32.mxu0 %v6224
    %6792 = vmatmul.mubr.f32.gmra.mrb[0].mxu0 %v6223
    %v6793 = vpop.f32.mrb[0].mxu0
    %v6794 = vadd.f32 0.0, %v6793
    %v6795 = vpop.f32.mrb[0].mxu0
    %6796 = vmatprep.mubr.f32.mxu0 %v6233
    %6797 = vmatmul.mubr.f32.gmra.mrb[0].mxu0 %v6232
    %v6798 = vpop.f32.mrb[0].mxu0
    %v6799 = vadd.f32 0.0, %v6798
    %v6800 = vpop.f32.mrb[0].mxu0
    %6801 = vmatprep.mubr.f32.mxu0 %v6242
    %6802 = vmatmul.mubr.f32.gmra.mrb[0].mxu0 %v6241
    %v6803 = vpop.f32.mrb[0].mxu0
    %v6804 = vadd.f32 0.0, %v6803
    %v6805 = vpop.f32.mrb[0].mxu0
    %6806 = vmatprep.mubr.f32.mxu0 %v6251
    %6807 = vmatmul.mubr.f32.gmra.mrb[0].mxu0 %v6250
    %v6808 = vpop.f32.mrb[0].mxu0
    %v6809 = vadd.f32 0.0, %v6808
    %v6810 = vpop.f32.mrb[0].mxu0
    %6811 = vmatprep.mubr.f32.mxu0 %v6260
    %6812 = vmatmul.mubr.f32.gmra.mrb[0].mxu0 %v6259
    %v6813 = vpop.f32.mrb[0].mxu0
    %v6814 = vadd.f32 0.0, %v6813
    %v6815 = vpop.f32.mrb[0].mxu0
    %6816 = vmatprep.mubr.f32.mxu0 %v6269
    %6817 = vmatmul.mubr.f32.gmra.mrb[0].mxu0 %v6268
    %v6818 = vpop.f32.mrb[0].mxu0
    %v6819 = vadd.f32 0.0, %v6818
    %v6820 = vpop.f32.mrb[0].mxu0
    %6821 = vmatprep.mubr.f32.mxu0 %v6278
    %6822 = vmatmul.mubr.f32.gmra.mrb[0].mxu0 %v6277
    %v6823 = vpop.f32.mrb[0].mxu0
    %v6824 = vadd.f32 0.0, %v6823
    %v6825 = vpop.f32.mrb[0].mxu0
    %6826 = vmatprep.mubr.f32.mxu0 %v6287
    %6827 = vmatmul.mubr.f32.gmra.mrb[0].mxu0 %v6286
    %v6828 = vpop.f32.mrb[0].mxu0
    %v6829 = vadd.f32 0.0, %v6828
    %v6830 = vpop.f32.mrb[0].mxu0
    %6831 = vmatprep.mubr.f32.mxu0 %v6296
    %6832 = vmatmul.mubr.f32.gmra.mrb[0].mxu0 %v6295
    %v6833 = vpop.f32.mrb[0].mxu0
    %v6834 = vadd.f32 0.0, %v6833
    %v6835 = vpop.f32.mrb[0].mxu0
    %6836 = vmatprep.mubr.f32.mxu0 %v6305
    %6837 = vmatmul.mubr.f32.gmra.mrb[0].mxu0 %v6304
    %v6838 = vpop.f32.mrb[0].mxu0
    %v6839 = vadd.f32 0.0, %v6838
    %v6840 = vpop.f32.mrb[0].mxu0
    %6841 = vdwg.mxu0
    %6842 = vmatprep.subr.mxu0 0.0
    %6843 = vmatpush1.msra.mxu0 %v6345
    %6844 = vmatprep.subr.mxu0 0.0
    %6845 = vmatpush1.msra.mxu0 %v6346
    %6846 = vmatprep.subr.mxu0 0.0
    %6847 = vmatpush1.msra.mxu0 %v6347
    %6848 = vmatprep.subr.mxu0 0.0
    %6849 = vmatpush1.msra.mxu0 %v6348
    %6850 = vmatprep.subr.mxu0 0.0
    %6851 = vmatpush1.msra.mxu0 %v6349
    %6852 = vmatprep.subr.mxu0 0.0
    %6853 = vmatpush1.msra.mxu0 %v6350
    %6854 = vmatprep.subr.mxu0 0.0
    %6855 = vmatpush1.msra.mxu0 %v6351
    %6856 = vmatprep.subr.mxu0 0.0
    %6857 = vmatpush1.msra.mxu0 %v6352
    %6858 = vmatprep.subr.mxu0 0.0
    %6859 = vmatpush1.msra.mxu0 %v6353
    %6860 = vmatprep.subr.mxu0 0.0
    %6861 = vmatpush1.msra.mxu0 %v6354
    %6862 = vmatprep.subr.mxu0 0.0
    %6863 = vmatpush1.msra.mxu0 %v6355
    %6864 = vmatprep.subr.mxu0 0.0
    %6865 = vmatpush1.msra.mxu0 %v6356
    %6866 = vmatprep.subr.mxu0 0.0
    %6867 = vmatpush1.msra.mxu0 %v6357
    %6868 = vmatprep.subr.mxu0 0.0
    %6869 = vmatpush1.msra.mxu0 %v6358
    %6870 = vmatprep.subr.mxu0 0.0
    %6871 = vmatpush1.msra.mxu0 %v6359
    %6872 = vmatprep.subr.mxu0 0.0
    %6873 = vmatpush1.msra.mxu0 %v6360
    %6874 = vmatprep.subr.mxu0 0.0
    %6875 = vmatpush1.msra.mxu0 %v6361
    %6876 = vmatprep.subr.mxu0 0.0
    %6877 = vmatpush1.msra.mxu0 %v6362
    %6878 = vmatprep.subr.mxu0 0.0
    %6879 = vmatpush1.msra.mxu0 %v6363
    %6880 = vmatprep.subr.mxu0 0.0
    %6881 = vmatpush1.msra.mxu0 %v6364
    %6882 = vmatprep.subr.mxu0 0.0
    %6883 = vmatpush1.msra.mxu0 %v6365
    %6884 = vmatprep.subr.mxu0 0.0
    %6885 = vmatpush1.msra.mxu0 %v6366
    %6886 = vmatprep.subr.mxu0 0.0
    %6887 = vmatpush1.msra.mxu0 %v6367
    %6888 = vmatprep.subr.mxu0 0.0
    %6889 = vmatpush1.msra.mxu0 %v6368
    %6890 = vmatprep.subr.mxu0 0.0
    %6891 = vmatpush1.msra.mxu0 %v6369
    %6892 = vmatprep.subr.mxu0 0.0
    %6893 = vmatpush1.msra.mxu0 %v6370
    %6894 = vmatprep.subr.mxu0 0.0
    %6895 = vmatpush1.msra.mxu0 %v6371
    %6896 = vmatprep.subr.mxu0 0.0
    %6897 = vmatpush1.msra.mxu0 %v6372
    %6898 = vmatprep.subr.mxu0 0.0
    %6899 = vmatpush1.msra.mxu0 %v6373
    %6900 = vmatprep.subr.mxu0 0.0
    %6901 = vmatpush1.msra.mxu0 %v6374
    %6902 = vmatprep.subr.mxu0 0.0
    %6903 = vmatpush1.msra.mxu0 %v6375
    %6904 = vmatprep.subr.mxu0 0.0
    %6905 = vmatpush1.msra.mxu0 %v6376
    %6906 = vmatprep.mubr.f32.mxu0 %v5740
    %6907 = vmatmul.mubr.f32.gmra.mrb[0].mxu0 %v5739
    %v6908 = vpop.f32.mrb[0].mxu0
    %v6909 = vadd.f32 %v6524, %v6908
    %v6910 = vpop.f32.mrb[0].mxu0
    %6911 = vmatprep.mubr.f32.mxu0 %v5749
    %6912 = vmatmul.mubr.f32.gmra.mrb[0].mxu0 %v5748
    %v6913 = vpop.f32.mrb[0].mxu0
    %v6914 = vadd.f32 %v6529, %v6913
    %v6915 = vpop.f32.mrb[0].mxu0
    %6916 = vmatprep.mubr.f32.mxu0 %v5758
    %6917 = vmatmul.mubr.f32.gmra.mrb[0].mxu0 %v5757
    %v6918 = vpop.f32.mrb[0].mxu0
    %v6919 = vadd.f32 %v6534, %v6918
    %v6920 = vpop.f32.mrb[0].mxu0
    %6921 = vmatprep.mubr.f32.mxu0 %v5767
    %6922 = vmatmul.mubr.f32.gmra.mrb[0].mxu0 %v5766
    %v6923 = vpop.f32.mrb[0].mxu0
    %v6924 = vadd.f32 %v6539, %v6923
    %v6925 = vpop.f32.mrb[0].mxu0
    %6926 = vmatprep.mubr.f32.mxu0 %v5776
    %6927 = vmatmul.mubr.f32.gmra.mrb[0].mxu0 %v5775
    %v6928 = vpop.f32.mrb[0].mxu0
    %v6929 = vadd.f32 %v6544, %v6928
    %v6930 = vpop.f32.mrb[0].mxu0
    %6931 = vmatprep.mubr.f32.mxu0 %v5785
    %6932 = vmatmul.mubr.f32.gmra.mrb[0].mxu0 %v5784
    %v6933 = vpop.f32.mrb[0].mxu0
    %v6934 = vadd.f32 %v6549, %v6933
    %v6935 = vpop.f32.mrb[0].mxu0
    %6936 = vmatprep.mubr.f32.mxu0 %v5794
    %6937 = vmatmul.mubr.f32.gmra.mrb[0].mxu0 %v5793
    %v6938 = vpop.f32.mrb[0].mxu0
    %v6939 = vadd.f32 %v6554, %v6938
    %v6940 = vpop.f32.mrb[0].mxu0
    %6941 = vmatprep.mubr.f32.mxu0 %v5803
    %6942 = vmatmul.mubr.f32.gmra.mrb[0].mxu0 %v5802
    %v6943 = vpop.f32.mrb[0].mxu0
    %v6944 = vadd.f32 %v6559, %v6943
    %v6945 = vpop.f32.mrb[0].mxu0
    %6946 = vmatprep.mubr.f32.mxu0 %v5812
    %6947 = vmatmul.mubr.f32.gmra.mrb[0].mxu0 %v5811
    %v6948 = vpop.f32.mrb[0].mxu0
    %v6949 = vadd.f32 %v6564, %v6948
    %v6950 = vpop.f32.mrb[0].mxu0
    %6951 = vmatprep.mubr.f32.mxu0 %v5821
    %6952 = vmatmul.mubr.f32.gmra.mrb[0].mxu0 %v5820
    %v6953 = vpop.f32.mrb[0].mxu0
    %v6954 = vadd.f32 %v6569, %v6953
    %v6955 = vpop.f32.mrb[0].mxu0
    %6956 = vmatprep.mubr.f32.mxu0 %v5830
    %6957 = vmatmul.mubr.f32.gmra.mrb[0].mxu0 %v5829
    %v6958 = vpop.f32.mrb[0].mxu0
    %v6959 = vadd.f32 %v6574, %v6958
    %v6960 = vpop.f32.mrb[0].mxu0
    %6961 = vmatprep.mubr.f32.mxu0 %v5839
    %6962 = vmatmul.mubr.f32.gmra.mrb[0].mxu0 %v5838
    %v6963 = vpop.f32.mrb[0].mxu0
    %v6964 = vadd.f32 %v6579, %v6963
    %v6965 = vpop.f32.mrb[0].mxu0
    %6966 = vmatprep.mubr.f32.mxu0 %v5848
    %6967 = vmatmul.mubr.f32.gmra.mrb[0].mxu0 %v5847
    %v6968 = vpop.f32.mrb[0].mxu0
    %v6969 = vadd.f32 %v6584, %v6968
    %v6970 = vpop.f32.mrb[0].mxu0
    %6971 = vmatprep.mubr.f32.mxu0 %v5857
    %6972 = vmatmul.mubr.f32.gmra.mrb[0].mxu0 %v5856
    %v6973 = vpop.f32.mrb[0].mxu0
    %v6974 = vadd.f32 %v6589, %v6973
    %v6975 = vpop.f32.mrb[0].mxu0
    %6976 = vmatprep.mubr.f32.mxu0 %v5866
    %6977 = vmatmul.mubr.f32.gmra.mrb[0].mxu0 %v5865
    %v6978 = vpop.f32.mrb[0].mxu0
    %v6979 = vadd.f32 %v6594, %v6978
    %v6980 = vpop.f32.mrb[0].mxu0
    %6981 = vmatprep.mubr.f32.mxu0 %v5875
    %6982 = vmatmul.mubr.f32.gmra.mrb[0].mxu0 %v5874
    %v6983 = vpop.f32.mrb[0].mxu0
    %v6984 = vadd.f32 %v6599, %v6983
    %v6985 = vpop.f32.mrb[0].mxu0
    %6986 = vmatprep.mubr.f32.mxu0 %v5884
    %6987 = vmatmul.mubr.f32.gmra.mrb[0].mxu0 %v5883
    %v6988 = vpop.f32.mrb[0].mxu0
    %v6989 = vadd.f32 %v6604, %v6988
    %v6990 = vpop.f32.mrb[0].mxu0
    %6991 = vmatprep.mubr.f32.mxu0 %v5893
    %6992 = vmatmul.mubr.f32.gmra.mrb[0].mxu0 %v5892
    %v6993 = vpop.f32.mrb[0].mxu0
    %v6994 = vadd.f32 %v6609, %v6993
    %v6995 = vpop.f32.mrb[0].mxu0
    %6996 = vmatprep.mubr.f32.mxu0 %v5902
    %6997 = vmatmul.mubr.f32.gmra.mrb[0].mxu0 %v5901
    %v6998 = vpop.f32.mrb[0].mxu0
    %v6999 = vadd.f32 %v6614, %v6998
    %v7000 = vpop.f32.mrb[0].mxu0
    %7001 = vmatprep.mubr.f32.mxu0 %v5911
    %7002 = vmatmul.mubr.f32.gmra.mrb[0].mxu0 %v5910
    %v7003 = vpop.f32.mrb[0].mxu0
    %v7004 = vadd.f32 %v6619, %v7003
    %v7005 = vpop.f32.mrb[0].mxu0
    %7006 = vmatprep.mubr.f32.mxu0 %v5920
    %7007 = vmatmul.mubr.f32.gmra.mrb[0].mxu0 %v5919
    %v7008 = vpop.f32.mrb[0].mxu0
    %v7009 = vadd.f32 %v6624, %v7008
    %v7010 = vpop.f32.mrb[0].mxu0
    %7011 = vmatprep.mubr.f32.mxu0 %v5929
    %7012 = vmatmul.mubr.f32.gmra.mrb[0].mxu0 %v5928
    %v7013 = vpop.f32.mrb[0].mxu0
    %v7014 = vadd.f32 %v6629, %v7013
    %v7015 = vpop.f32.mrb[0].mxu0
    %7016 = vmatprep.mubr.f32.mxu0 %v5938
    %7017 = vmatmul.mubr.f32.gmra.mrb[0].mxu0 %v5937
    %v7018 = vpop.f32.mrb[0].mxu0
    %v7019 = vadd.f32 %v6634, %v7018
    %v7020 = vpop.f32.mrb[0].mxu0
    %7021 = vmatprep.mubr.f32.mxu0 %v5947
    %7022 = vmatmul.mubr.f32.gmra.mrb[0].mxu0 %v5946
    %v7023 = vpop.f32.mrb[0].mxu0
    %v7024 = vadd.f32 %v6639, %v7023
    %v7025 = vpop.f32.mrb[0].mxu0
    %7026 = vmatprep.mubr.f32.mxu0 %v5956
    %7027 = vmatmul.mubr.f32.gmra.mrb[0].mxu0 %v5955
    %v7028 = vpop.f32.mrb[0].mxu0
    %v7029 = vadd.f32 %v6644, %v7028
    %v7030 = vpop.f32.mrb[0].mxu0
    %7031 = vmatprep.mubr.f32.mxu0 %v5965
    %7032 = vmatmul.mubr.f32.gmra.mrb[0].mxu0 %v5964
    %v7033 = vpop.f32.mrb[0].mxu0
    %v7034 = vadd.f32 %v6649, %v7033
    %v7035 = vpop.f32.mrb[0].mxu0
    %7036 = vmatprep.mubr.f32.mxu0 %v5974
    %7037 = vmatmul.mubr.f32.gmra.mrb[0].mxu0 %v5973
    %v7038 = vpop.f32.mrb[0].mxu0
    %v7039 = vadd.f32 %v6654, %v7038
    %v7040 = vpop.f32.mrb[0].mxu0
    %7041 = vmatprep.mubr.f32.mxu0 %v5983
    %7042 = vmatmul.mubr.f32.gmra.mrb[0].mxu0 %v5982
    %v7043 = vpop.f32.mrb[0].mxu0
    %v7044 = vadd.f32 %v6659, %v7043
    %v7045 = vpop.f32.mrb[0].mxu0
    %7046 = vmatprep.mubr.f32.mxu0 %v5992
    %7047 = vmatmul.mubr.f32.gmra.mrb[0].mxu0 %v5991
    %v7048 = vpop.f32.mrb[0].mxu0
    %v7049 = vadd.f32 %v6664, %v7048
    %v7050 = vpop.f32.mrb[0].mxu0
    %7051 = vmatprep.mubr.f32.mxu0 %v6001
    %7052 = vmatmul.mubr.f32.gmra.mrb[0].mxu0 %v6000
    %v7053 = vpop.f32.mrb[0].mxu0
    %v7054 = vadd.f32 %v6669, %v7053
    %v7055 = vpop.f32.mrb[0].mxu0
    %7056 = vmatprep.mubr.f32.mxu0 %v6010
    %7057 = vmatmul.mubr.f32.gmra.mrb[0].mxu0 %v6009
    %v7058 = vpop.f32.mrb[0].mxu0
    %v7059 = vadd.f32 %v6674, %v7058
    %v7060 = vpop.f32.mrb[0].mxu0
    %7061 = vmatprep.mubr.f32.mxu0 %v6019
    %7062 = vmatmul.mubr.f32.gmra.mrb[0].mxu0 %v6018
    %v7063 = vpop.f32.mrb[0].mxu0
    %v7064 = vadd.f32 %v6679, %v7063
    %v7065 = vpop.f32.mrb[0].mxu0
    %7066 = vmatprep.mubr.f32.mxu0 %v6028
    %7067 = vmatmul.mubr.f32.gmra.mrb[0].mxu0 %v6027
    %v7068 = vpop.f32.mrb[0].mxu0
    %v7069 = vadd.f32 %v6684, %v7068
    %v7070 = vpop.f32.mrb[0].mxu0
    %7071 = vmatprep.mubr.f32.mxu0 %v6037
    %7072 = vmatmul.mubr.f32.gmra.mrb[0].mxu0 %v6036
    %v7073 = vpop.f32.mrb[0].mxu0
    %v7074 = vadd.f32 %v6689, %v7073
    %v7075 = vpop.f32.mrb[0].mxu0
    %7076 = vmatprep.mubr.f32.mxu0 %v6046
    %7077 = vmatmul.mubr.f32.gmra.mrb[0].mxu0 %v6045
    %v7078 = vpop.f32.mrb[0].mxu0
    %v7079 = vadd.f32 %v6694, %v7078
    %v7080 = vpop.f32.mrb[0].mxu0
    %7081 = vmatprep.mubr.f32.mxu0 %v6055
    %7082 = vmatmul.mubr.f32.gmra.mrb[0].mxu0 %v6054
    %v7083 = vpop.f32.mrb[0].mxu0
    %v7084 = vadd.f32 %v6699, %v7083
    %v7085 = vpop.f32.mrb[0].mxu0
    %7086 = vmatprep.mubr.f32.mxu0 %v6064
    %7087 = vmatmul.mubr.f32.gmra.mrb[0].mxu0 %v6063
    %v7088 = vpop.f32.mrb[0].mxu0
    %v7089 = vadd.f32 %v6704, %v7088
    %v7090 = vpop.f32.mrb[0].mxu0
    %7091 = vmatprep.mubr.f32.mxu0 %v6073
    %7092 = vmatmul.mubr.f32.gmra.mrb[0].mxu0 %v6072
    %v7093 = vpop.f32.mrb[0].mxu0
    %v7094 = vadd.f32 %v6709, %v7093
    %v7095 = vpop.f32.mrb[0].mxu0
    %7096 = vmatprep.mubr.f32.mxu0 %v6082
    %7097 = vmatmul.mubr.f32.gmra.mrb[0].mxu0 %v6081
    %v7098 = vpop.f32.mrb[0].mxu0
    %v7099 = vadd.f32 %v6714, %v7098
    %v7100 = vpop.f32.mrb[0].mxu0
    %7101 = vmatprep.mubr.f32.mxu0 %v6091
    %7102 = vmatmul.mubr.f32.gmra.mrb[0].mxu0 %v6090
    %v7103 = vpop.f32.mrb[0].mxu0
    %v7104 = vadd.f32 %v6719, %v7103
    %v7105 = vpop.f32.mrb[0].mxu0
    %7106 = vmatprep.mubr.f32.mxu0 %v6100
    %7107 = vmatmul.mubr.f32.gmra.mrb[0].mxu0 %v6099
    %v7108 = vpop.f32.mrb[0].mxu0
    %v7109 = vadd.f32 %v6724, %v7108
    %v7110 = vpop.f32.mrb[0].mxu0
    %7111 = vmatprep.mubr.f32.mxu0 %v6109
    %7112 = vmatmul.mubr.f32.gmra.mrb[0].mxu0 %v6108
    %v7113 = vpop.f32.mrb[0].mxu0
    %v7114 = vadd.f32 %v6729, %v7113
    %v7115 = vpop.f32.mrb[0].mxu0
    %7116 = vmatprep.mubr.f32.mxu0 %v6118
    %7117 = vmatmul.mubr.f32.gmra.mrb[0].mxu0 %v6117
    %v7118 = vpop.f32.mrb[0].mxu0
    %v7119 = vadd.f32 %v6734, %v7118
    %v7120 = vpop.f32.mrb[0].mxu0
    %7121 = vmatprep.mubr.f32.mxu0 %v6127
    %7122 = vmatmul.mubr.f32.gmra.mrb[0].mxu0 %v6126
    %v7123 = vpop.f32.mrb[0].mxu0
    %v7124 = vadd.f32 %v6739, %v7123
    %v7125 = vpop.f32.mrb[0].mxu0
    %7126 = vmatprep.mubr.f32.mxu0 %v6136
    %7127 = vmatmul.mubr.f32.gmra.mrb[0].mxu0 %v6135
    %v7128 = vpop.f32.mrb[0].mxu0
    %v7129 = vadd.f32 %v6744, %v7128
    %v7130 = vpop.f32.mrb[0].mxu0
    %7131 = vmatprep.mubr.f32.mxu0 %v6145
    %7132 = vmatmul.mubr.f32.gmra.mrb[0].mxu0 %v6144
    %v7133 = vpop.f32.mrb[0].mxu0
    %v7134 = vadd.f32 %v6749, %v7133
    %v7135 = vpop.f32.mrb[0].mxu0
    %7136 = vmatprep.mubr.f32.mxu0 %v6154
    %7137 = vmatmul.mubr.f32.gmra.mrb[0].mxu0 %v6153
    %v7138 = vpop.f32.mrb[0].mxu0
    %v7139 = vadd.f32 %v6754, %v7138
    %v7140 = vpop.f32.mrb[0].mxu0
    %7141 = vmatprep.mubr.f32.mxu0 %v6163
    %7142 = vmatmul.mubr.f32.gmra.mrb[0].mxu0 %v6162
    %v7143 = vpop.f32.mrb[0].mxu0
    %v7144 = vadd.f32 %v6759, %v7143
    %v7145 = vpop.f32.mrb[0].mxu0
    %7146 = vmatprep.mubr.f32.mxu0 %v6172
    %7147 = vmatmul.mubr.f32.gmra.mrb[0].mxu0 %v6171
    %v7148 = vpop.f32.mrb[0].mxu0
    %v7149 = vadd.f32 %v6764, %v7148
    %v7150 = vpop.f32.mrb[0].mxu0
    %7151 = vmatprep.mubr.f32.mxu0 %v6181
    %7152 = vmatmul.mubr.f32.gmra.mrb[0].mxu0 %v6180
    %v7153 = vpop.f32.mrb[0].mxu0
    %v7154 = vadd.f32 %v6769, %v7153
    %v7155 = vpop.f32.mrb[0].mxu0
    %7156 = vmatprep.mubr.f32.mxu0 %v6190
    %7157 = vmatmul.mubr.f32.gmra.mrb[0].mxu0 %v6189
    %v7158 = vpop.f32.mrb[0].mxu0
    %v7159 = vadd.f32 %v6774, %v7158
    %v7160 = vpop.f32.mrb[0].mxu0
    %7161 = vmatprep.mubr.f32.mxu0 %v6199
    %7162 = vmatmul.mubr.f32.gmra.mrb[0].mxu0 %v6198
    %v7163 = vpop.f32.mrb[0].mxu0
    %v7164 = vadd.f32 %v6779, %v7163
    %v7165 = vpop.f32.mrb[0].mxu0
    %7166 = vmatprep.mubr.f32.mxu0 %v6208
    %7167 = vmatmul.mubr.f32.gmra.mrb[0].mxu0 %v6207
    %v7168 = vpop.f32.mrb[0].mxu0
    %v7169 = vadd.f32 %v6784, %v7168
    %v7170 = vpop.f32.mrb[0].mxu0
    %7171 = vmatprep.mubr.f32.mxu0 %v6217
    %7172 = vmatmul.mubr.f32.gmra.mrb[0].mxu0 %v6216
    %v7173 = vpop.f32.mrb[0].mxu0
    %v7174 = vadd.f32 %v6789, %v7173
    %v7175 = vpop.f32.mrb[0].mxu0
    %7176 = vmatprep.mubr.f32.mxu0 %v6226
    %7177 = vmatmul.mubr.f32.gmra.mrb[0].mxu0 %v6225
    %v7178 = vpop.f32.mrb[0].mxu0
    %v7179 = vadd.f32 %v6794, %v7178
    %v7180 = vpop.f32.mrb[0].mxu0
    %7181 = vmatprep.mubr.f32.mxu0 %v6235
    %7182 = vmatmul.mubr.f32.gmra.mrb[0].mxu0 %v6234
    %v7183 = vpop.f32.mrb[0].mxu0
    %v7184 = vadd.f32 %v6799, %v7183
    %v7185 = vpop.f32.mrb[0].mxu0
    %7186 = vmatprep.mubr.f32.mxu0 %v6244
    %7187 = vmatmul.mubr.f32.gmra.mrb[0].mxu0 %v6243
    %v7188 = vpop.f32.mrb[0].mxu0
    %v7189 = vadd.f32 %v6804, %v7188
    %v7190 = vpop.f32.mrb[0].mxu0
    %7191 = vmatprep.mubr.f32.mxu0 %v6253
    %7192 = vmatmul.mubr.f32.gmra.mrb[0].mxu0 %v6252
    %v7193 = vpop.f32.mrb[0].mxu0
    %v7194 = vadd.f32 %v6809, %v7193
    %v7195 = vpop.f32.mrb[0].mxu0
    %7196 = vmatprep.mubr.f32.mxu0 %v6262
    %7197 = vmatmul.mubr.f32.gmra.mrb[0].mxu0 %v6261
    %v7198 = vpop.f32.mrb[0].mxu0
    %v7199 = vadd.f32 %v6814, %v7198
    %v7200 = vpop.f32.mrb[0].mxu0
    %7201 = vmatprep.mubr.f32.mxu0 %v6271
    %7202 = vmatmul.mubr.f32.gmra.mrb[0].mxu0 %v6270
    %v7203 = vpop.f32.mrb[0].mxu0
    %v7204 = vadd.f32 %v6819, %v7203
    %v7205 = vpop.f32.mrb[0].mxu0
    %7206 = vmatprep.mubr.f32.mxu0 %v6280
    %7207 = vmatmul.mubr.f32.gmra.mrb[0].mxu0 %v6279
    %v7208 = vpop.f32.mrb[0].mxu0
    %v7209 = vadd.f32 %v6824, %v7208
    %v7210 = vpop.f32.mrb[0].mxu0
    %7211 = vmatprep.mubr.f32.mxu0 %v6289
    %7212 = vmatmul.mubr.f32.gmra.mrb[0].mxu0 %v6288
    %v7213 = vpop.f32.mrb[0].mxu0
    %v7214 = vadd.f32 %v6829, %v7213
    %v7215 = vpop.f32.mrb[0].mxu0
    %7216 = vmatprep.mubr.f32.mxu0 %v6298
    %7217 = vmatmul.mubr.f32.gmra.mrb[0].mxu0 %v6297
    %v7218 = vpop.f32.mrb[0].mxu0
    %v7219 = vadd.f32 %v6834, %v7218
    %v7220 = vpop.f32.mrb[0].mxu0
    %7221 = vmatprep.mubr.f32.mxu0 %v6307
    %7222 = vmatmul.mubr.f32.gmra.mrb[0].mxu0 %v6306
    %v7223 = vpop.f32.mrb[0].mxu0
    %v7224 = vadd.f32 %v6839, %v7223
    %v7225 = vpop.f32.mrb[0].mxu0
    %7226 = vdwg.mxu0
    %7227 = vmatprep.subr.mxu0 0.0
    %7228 = vmatpush1.msra.mxu0 %v6377
    %7229 = vmatprep.subr.mxu0 0.0
    %7230 = vmatpush1.msra.mxu0 %v6378
    %7231 = vmatprep.subr.mxu0 0.0
    %7232 = vmatpush1.msra.mxu0 %v6379
    %7233 = vmatprep.subr.mxu0 0.0
    %7234 = vmatpush1.msra.mxu0 %v6380
    %7235 = vmatprep.subr.mxu0 0.0
    %7236 = vmatpush1.msra.mxu0 %v6381
    %7237 = vmatprep.subr.mxu0 0.0
    %7238 = vmatpush1.msra.mxu0 %v6382
    %7239 = vmatprep.subr.mxu0 0.0
    %7240 = vmatpush1.msra.mxu0 %v6383
    %7241 = vmatprep.subr.mxu0 0.0
    %7242 = vmatpush1.msra.mxu0 %v6384
    %7243 = vmatprep.subr.mxu0 0.0
    %7244 = vmatpush1.msra.mxu0 %v6385
    %7245 = vmatprep.subr.mxu0 0.0
    %7246 = vmatpush1.msra.mxu0 %v6386
    %7247 = vmatprep.subr.mxu0 0.0
    %7248 = vmatpush1.msra.mxu0 %v6387
    %7249 = vmatprep.subr.mxu0 0.0
    %7250 = vmatpush1.msra.mxu0 %v6388
    %7251 = vmatprep.subr.mxu0 0.0
    %7252 = vmatpush1.msra.mxu0 %v6389
    %7253 = vmatprep.subr.mxu0 0.0
    %7254 = vmatpush1.msra.mxu0 %v6390
    %7255 = vmatprep.subr.mxu0 0.0
    %7256 = vmatpush1.msra.mxu0 %v6391
    %7257 = vmatprep.subr.mxu0 0.0
    %7258 = vmatpush1.msra.mxu0 %v6392
    %7259 = vmatprep.subr.mxu0 0.0
    %7260 = vmatpush1.msra.mxu0 %v6393
    %7261 = vmatprep.subr.mxu0 0.0
    %7262 = vmatpush1.msra.mxu0 %v6394
    %7263 = vmatprep.subr.mxu0 0.0
    %7264 = vmatpush1.msra.mxu0 %v6395
    %7265 = vmatprep.subr.mxu0 0.0
    %7266 = vmatpush1.msra.mxu0 %v6396
    %7267 = vmatprep.subr.mxu0 0.0
    %7268 = vmatpush1.msra.mxu0 %v6397
    %7269 = vmatprep.subr.mxu0 0.0
    %7270 = vmatpush1.msra.mxu0 %v6398
    %7271 = vmatprep.subr.mxu0 0.0
    %7272 = vmatpush1.msra.mxu0 %v6399
    %7273 = vmatprep.subr.mxu0 0.0
    %7274 = vmatpush1.msra.mxu0 %v6400
    %7275 = vmatprep.subr.mxu0 0.0
    %7276 = vmatpush1.msra.mxu0 %v6401
    %7277 = vmatprep.subr.mxu0 0.0
    %7278 = vmatpush1.msra.mxu0 %v6402
    %7279 = vmatprep.subr.mxu0 0.0
    %7280 = vmatpush1.msra.mxu0 %v6403
    %7281 = vmatprep.subr.mxu0 0.0
    %7282 = vmatpush1.msra.mxu0 %v6404
    %7283 = vmatprep.subr.mxu0 0.0
    %7284 = vmatpush1.msra.mxu0 %v6405
    %7285 = vmatprep.subr.mxu0 0.0
    %7286 = vmatpush1.msra.mxu0 %v6406
    %7287 = vmatprep.subr.mxu0 0.0
    %7288 = vmatpush1.msra.mxu0 %v6407
    %7289 = vmatprep.subr.mxu0 0.0
    %7290 = vmatpush1.msra.mxu0 %v6408
    %7291 = vmatprep.mubr.f32.mxu0 %v5742
    %7292 = vmatmul.mubr.f32.gmra.mrb[0].mxu0 %v5741
    %v7293 = vpop.f32.mrb[0].mxu0
    %v7294 = vadd.f32 %v6909, %v7293
    %v7295 = vpop.f32.mrb[0].mxu0
    %7296 = vmatprep.mubr.f32.mxu0 %v5751
    %7297 = vmatmul.mubr.f32.gmra.mrb[0].mxu0 %v5750
    %v7298 = vpop.f32.mrb[0].mxu0
    %v7299 = vadd.f32 %v6914, %v7298
    %v7300 = vpop.f32.mrb[0].mxu0
    %7301 = vmatprep.mubr.f32.mxu0 %v5760
    %7302 = vmatmul.mubr.f32.gmra.mrb[0].mxu0 %v5759
    %v7303 = vpop.f32.mrb[0].mxu0
    %v7304 = vadd.f32 %v6919, %v7303
    %v7305 = vpop.f32.mrb[0].mxu0
    %7306 = vmatprep.mubr.f32.mxu0 %v5769
    %7307 = vmatmul.mubr.f32.gmra.mrb[0].mxu0 %v5768
    %v7308 = vpop.f32.mrb[0].mxu0
    %v7309 = vadd.f32 %v6924, %v7308
    %v7310 = vpop.f32.mrb[0].mxu0
    %7311 = vmatprep.mubr.f32.mxu0 %v5778
    %7312 = vmatmul.mubr.f32.gmra.mrb[0].mxu0 %v5777
    %v7313 = vpop.f32.mrb[0].mxu0
    %v7314 = vadd.f32 %v6929, %v7313
    %v7315 = vpop.f32.mrb[0].mxu0
    %7316 = vmatprep.mubr.f32.mxu0 %v5787
    %7317 = vmatmul.mubr.f32.gmra.mrb[0].mxu0 %v5786
    %v7318 = vpop.f32.mrb[0].mxu0
    %v7319 = vadd.f32 %v6934, %v7318
    %v7320 = vpop.f32.mrb[0].mxu0
    %7321 = vmatprep.mubr.f32.mxu0 %v5796
    %7322 = vmatmul.mubr.f32.gmra.mrb[0].mxu0 %v5795
    %v7323 = vpop.f32.mrb[0].mxu0
    %v7324 = vadd.f32 %v6939, %v7323
    %v7325 = vpop.f32.mrb[0].mxu0
    %7326 = vmatprep.mubr.f32.mxu0 %v5805
    %7327 = vmatmul.mubr.f32.gmra.mrb[0].mxu0 %v5804
    %v7328 = vpop.f32.mrb[0].mxu0
    %v7329 = vadd.f32 %v6944, %v7328
    %v7330 = vpop.f32.mrb[0].mxu0
    %7331 = vmatprep.mubr.f32.mxu0 %v5814
    %7332 = vmatmul.mubr.f32.gmra.mrb[0].mxu0 %v5813
    %v7333 = vpop.f32.mrb[0].mxu0
    %v7334 = vadd.f32 %v6949, %v7333
    %v7335 = vpop.f32.mrb[0].mxu0
    %7336 = vmatprep.mubr.f32.mxu0 %v5823
    %7337 = vmatmul.mubr.f32.gmra.mrb[0].mxu0 %v5822
    %v7338 = vpop.f32.mrb[0].mxu0
    %v7339 = vadd.f32 %v6954, %v7338
    %v7340 = vpop.f32.mrb[0].mxu0
    %7341 = vmatprep.mubr.f32.mxu0 %v5832
    %7342 = vmatmul.mubr.f32.gmra.mrb[0].mxu0 %v5831
    %v7343 = vpop.f32.mrb[0].mxu0
    %v7344 = vadd.f32 %v6959, %v7343
    %v7345 = vpop.f32.mrb[0].mxu0
    %7346 = vmatprep.mubr.f32.mxu0 %v5841
    %7347 = vmatmul.mubr.f32.gmra.mrb[0].mxu0 %v5840
    %v7348 = vpop.f32.mrb[0].mxu0
    %v7349 = vadd.f32 %v6964, %v7348
    %v7350 = vpop.f32.mrb[0].mxu0
    %7351 = vmatprep.mubr.f32.mxu0 %v5850
    %7352 = vmatmul.mubr.f32.gmra.mrb[0].mxu0 %v5849
    %v7353 = vpop.f32.mrb[0].mxu0
    %v7354 = vadd.f32 %v6969, %v7353
    %v7355 = vpop.f32.mrb[0].mxu0
    %7356 = vmatprep.mubr.f32.mxu0 %v5859
    %7357 = vmatmul.mubr.f32.gmra.mrb[0].mxu0 %v5858
    %v7358 = vpop.f32.mrb[0].mxu0
    %v7359 = vadd.f32 %v6974, %v7358
    %v7360 = vpop.f32.mrb[0].mxu0
    %7361 = vmatprep.mubr.f32.mxu0 %v5868
    %7362 = vmatmul.mubr.f32.gmra.mrb[0].mxu0 %v5867
    %v7363 = vpop.f32.mrb[0].mxu0
    %v7364 = vadd.f32 %v6979, %v7363
    %v7365 = vpop.f32.mrb[0].mxu0
    %7366 = vmatprep.mubr.f32.mxu0 %v5877
    %7367 = vmatmul.mubr.f32.gmra.mrb[0].mxu0 %v5876
    %v7368 = vpop.f32.mrb[0].mxu0
    %v7369 = vadd.f32 %v6984, %v7368
    %v7370 = vpop.f32.mrb[0].mxu0
    %7371 = vmatprep.mubr.f32.mxu0 %v5886
    %7372 = vmatmul.mubr.f32.gmra.mrb[0].mxu0 %v5885
    %v7373 = vpop.f32.mrb[0].mxu0
    %v7374 = vadd.f32 %v6989, %v7373
    %v7375 = vpop.f32.mrb[0].mxu0
    %7376 = vmatprep.mubr.f32.mxu0 %v5895
    %7377 = vmatmul.mubr.f32.gmra.mrb[0].mxu0 %v5894
    %v7378 = vpop.f32.mrb[0].mxu0
    %v7379 = vadd.f32 %v6994, %v7378
    %v7380 = vpop.f32.mrb[0].mxu0
    %7381 = vmatprep.mubr.f32.mxu0 %v5904
    %7382 = vmatmul.mubr.f32.gmra.mrb[0].mxu0 %v5903
    %v7383 = vpop.f32.mrb[0].mxu0
    %v7384 = vadd.f32 %v6999, %v7383
    %v7385 = vpop.f32.mrb[0].mxu0
    %7386 = vmatprep.mubr.f32.mxu0 %v5913
    %7387 = vmatmul.mubr.f32.gmra.mrb[0].mxu0 %v5912
    %v7388 = vpop.f32.mrb[0].mxu0
    %v7389 = vadd.f32 %v7004, %v7388
    %v7390 = vpop.f32.mrb[0].mxu0
    %7391 = vmatprep.mubr.f32.mxu0 %v5922
    %7392 = vmatmul.mubr.f32.gmra.mrb[0].mxu0 %v5921
    %v7393 = vpop.f32.mrb[0].mxu0
    %v7394 = vadd.f32 %v7009, %v7393
    %v7395 = vpop.f32.mrb[0].mxu0
    %7396 = vmatprep.mubr.f32.mxu0 %v5931
    %7397 = vmatmul.mubr.f32.gmra.mrb[0].mxu0 %v5930
    %v7398 = vpop.f32.mrb[0].mxu0
    %v7399 = vadd.f32 %v7014, %v7398
    %v7400 = vpop.f32.mrb[0].mxu0
    %7401 = vmatprep.mubr.f32.mxu0 %v5940
    %7402 = vmatmul.mubr.f32.gmra.mrb[0].mxu0 %v5939
    %v7403 = vpop.f32.mrb[0].mxu0
    %v7404 = vadd.f32 %v7019, %v7403
    %v7405 = vpop.f32.mrb[0].mxu0
    %7406 = vmatprep.mubr.f32.mxu0 %v5949
    %7407 = vmatmul.mubr.f32.gmra.mrb[0].mxu0 %v5948
    %v7408 = vpop.f32.mrb[0].mxu0
    %v7409 = vadd.f32 %v7024, %v7408
    %v7410 = vpop.f32.mrb[0].mxu0
    %7411 = vmatprep.mubr.f32.mxu0 %v5958
    %7412 = vmatmul.mubr.f32.gmra.mrb[0].mxu0 %v5957
    %v7413 = vpop.f32.mrb[0].mxu0
    %v7414 = vadd.f32 %v7029, %v7413
    %v7415 = vpop.f32.mrb[0].mxu0
    %7416 = vmatprep.mubr.f32.mxu0 %v5967
    %7417 = vmatmul.mubr.f32.gmra.mrb[0].mxu0 %v5966
    %v7418 = vpop.f32.mrb[0].mxu0
    %v7419 = vadd.f32 %v7034, %v7418
    %v7420 = vpop.f32.mrb[0].mxu0
    %7421 = vmatprep.mubr.f32.mxu0 %v5976
    %7422 = vmatmul.mubr.f32.gmra.mrb[0].mxu0 %v5975
    %v7423 = vpop.f32.mrb[0].mxu0
    %v7424 = vadd.f32 %v7039, %v7423
    %v7425 = vpop.f32.mrb[0].mxu0
    %7426 = vmatprep.mubr.f32.mxu0 %v5985
    %7427 = vmatmul.mubr.f32.gmra.mrb[0].mxu0 %v5984
    %v7428 = vpop.f32.mrb[0].mxu0
    %v7429 = vadd.f32 %v7044, %v7428
    %v7430 = vpop.f32.mrb[0].mxu0
    %7431 = vmatprep.mubr.f32.mxu0 %v5994
    %7432 = vmatmul.mubr.f32.gmra.mrb[0].mxu0 %v5993
    %v7433 = vpop.f32.mrb[0].mxu0
    %v7434 = vadd.f32 %v7049, %v7433
    %v7435 = vpop.f32.mrb[0].mxu0
    %7436 = vmatprep.mubr.f32.mxu0 %v6003
    %7437 = vmatmul.mubr.f32.gmra.mrb[0].mxu0 %v6002
    %v7438 = vpop.f32.mrb[0].mxu0
    %v7439 = vadd.f32 %v7054, %v7438
    %v7440 = vpop.f32.mrb[0].mxu0
    %7441 = vmatprep.mubr.f32.mxu0 %v6012
    %7442 = vmatmul.mubr.f32.gmra.mrb[0].mxu0 %v6011
    %v7443 = vpop.f32.mrb[0].mxu0
    %v7444 = vadd.f32 %v7059, %v7443
    %v7445 = vpop.f32.mrb[0].mxu0
    %7446 = vmatprep.mubr.f32.mxu0 %v6021
    %7447 = vmatmul.mubr.f32.gmra.mrb[0].mxu0 %v6020
    %v7448 = vpop.f32.mrb[0].mxu0
    %v7449 = vadd.f32 %v7064, %v7448
    %v7450 = vpop.f32.mrb[0].mxu0
    %7451 = vmatprep.mubr.f32.mxu0 %v6030
    %7452 = vmatmul.mubr.f32.gmra.mrb[0].mxu0 %v6029
    %v7453 = vpop.f32.mrb[0].mxu0
    %v7454 = vadd.f32 %v7069, %v7453
    %v7455 = vpop.f32.mrb[0].mxu0
    %7456 = vmatprep.mubr.f32.mxu0 %v6039
    %7457 = vmatmul.mubr.f32.gmra.mrb[0].mxu0 %v6038
    %v7458 = vpop.f32.mrb[0].mxu0
    %v7459 = vadd.f32 %v7074, %v7458
    %v7460 = vpop.f32.mrb[0].mxu0
    %7461 = vmatprep.mubr.f32.mxu0 %v6048
    %7462 = vmatmul.mubr.f32.gmra.mrb[0].mxu0 %v6047
    %v7463 = vpop.f32.mrb[0].mxu0
    %v7464 = vadd.f32 %v7079, %v7463
    %v7465 = vpop.f32.mrb[0].mxu0
    %7466 = vmatprep.mubr.f32.mxu0 %v6057
    %7467 = vmatmul.mubr.f32.gmra.mrb[0].mxu0 %v6056
    %v7468 = vpop.f32.mrb[0].mxu0
    %v7469 = vadd.f32 %v7084, %v7468
    %v7470 = vpop.f32.mrb[0].mxu0
    %7471 = vmatprep.mubr.f32.mxu0 %v6066
    %7472 = vmatmul.mubr.f32.gmra.mrb[0].mxu0 %v6065
    %v7473 = vpop.f32.mrb[0].mxu0
    %v7474 = vadd.f32 %v7089, %v7473
    %v7475 = vpop.f32.mrb[0].mxu0
    %7476 = vmatprep.mubr.f32.mxu0 %v6075
    %7477 = vmatmul.mubr.f32.gmra.mrb[0].mxu0 %v6074
    %v7478 = vpop.f32.mrb[0].mxu0
    %v7479 = vadd.f32 %v7094, %v7478
    %v7480 = vpop.f32.mrb[0].mxu0
    %7481 = vmatprep.mubr.f32.mxu0 %v6084
    %7482 = vmatmul.mubr.f32.gmra.mrb[0].mxu0 %v6083
    %v7483 = vpop.f32.mrb[0].mxu0
    %v7484 = vadd.f32 %v7099, %v7483
    %v7485 = vpop.f32.mrb[0].mxu0
    %7486 = vmatprep.mubr.f32.mxu0 %v6093
    %7487 = vmatmul.mubr.f32.gmra.mrb[0].mxu0 %v6092
    %v7488 = vpop.f32.mrb[0].mxu0
    %v7489 = vadd.f32 %v7104, %v7488
    %v7490 = vpop.f32.mrb[0].mxu0
    %7491 = vmatprep.mubr.f32.mxu0 %v6102
    %7492 = vmatmul.mubr.f32.gmra.mrb[0].mxu0 %v6101
    %v7493 = vpop.f32.mrb[0].mxu0
    %v7494 = vadd.f32 %v7109, %v7493
    %v7495 = vpop.f32.mrb[0].mxu0
    %7496 = vmatprep.mubr.f32.mxu0 %v6111
    %7497 = vmatmul.mubr.f32.gmra.mrb[0].mxu0 %v6110
    %v7498 = vpop.f32.mrb[0].mxu0
    %v7499 = vadd.f32 %v7114, %v7498
    %v7500 = vpop.f32.mrb[0].mxu0
    %7501 = vmatprep.mubr.f32.mxu0 %v6120
    %7502 = vmatmul.mubr.f32.gmra.mrb[0].mxu0 %v6119
    %v7503 = vpop.f32.mrb[0].mxu0
    %v7504 = vadd.f32 %v7119, %v7503
    %v7505 = vpop.f32.mrb[0].mxu0
    %7506 = vmatprep.mubr.f32.mxu0 %v6129
    %7507 = vmatmul.mubr.f32.gmra.mrb[0].mxu0 %v6128
    %v7508 = vpop.f32.mrb[0].mxu0
    %v7509 = vadd.f32 %v7124, %v7508
    %v7510 = vpop.f32.mrb[0].mxu0
    %7511 = vmatprep.mubr.f32.mxu0 %v6138
    %7512 = vmatmul.mubr.f32.gmra.mrb[0].mxu0 %v6137
    %v7513 = vpop.f32.mrb[0].mxu0
    %v7514 = vadd.f32 %v7129, %v7513
    %v7515 = vpop.f32.mrb[0].mxu0
    %7516 = vmatprep.mubr.f32.mxu0 %v6147
    %7517 = vmatmul.mubr.f32.gmra.mrb[0].mxu0 %v6146
    %v7518 = vpop.f32.mrb[0].mxu0
    %v7519 = vadd.f32 %v7134, %v7518
    %v7520 = vpop.f32.mrb[0].mxu0
    %7521 = vmatprep.mubr.f32.mxu0 %v6156
    %7522 = vmatmul.mubr.f32.gmra.mrb[0].mxu0 %v6155
    %v7523 = vpop.f32.mrb[0].mxu0
    %v7524 = vadd.f32 %v7139, %v7523
    %v7525 = vpop.f32.mrb[0].mxu0
    %7526 = vmatprep.mubr.f32.mxu0 %v6165
    %7527 = vmatmul.mubr.f32.gmra.mrb[0].mxu0 %v6164
    %v7528 = vpop.f32.mrb[0].mxu0
    %v7529 = vadd.f32 %v7144, %v7528
    %v7530 = vpop.f32.mrb[0].mxu0
    %7531 = vmatprep.mubr.f32.mxu0 %v6174
    %7532 = vmatmul.mubr.f32.gmra.mrb[0].mxu0 %v6173
    %v7533 = vpop.f32.mrb[0].mxu0
    %v7534 = vadd.f32 %v7149, %v7533
    %v7535 = vpop.f32.mrb[0].mxu0
    %7536 = vmatprep.mubr.f32.mxu0 %v6183
    %7537 = vmatmul.mubr.f32.gmra.mrb[0].mxu0 %v6182
    %v7538 = vpop.f32.mrb[0].mxu0
    %v7539 = vadd.f32 %v7154, %v7538
    %v7540 = vpop.f32.mrb[0].mxu0
    %7541 = vmatprep.mubr.f32.mxu0 %v6192
    %7542 = vmatmul.mubr.f32.gmra.mrb[0].mxu0 %v6191
    %v7543 = vpop.f32.mrb[0].mxu0
    %v7544 = vadd.f32 %v7159, %v7543
    %v7545 = vpop.f32.mrb[0].mxu0
    %7546 = vmatprep.mubr.f32.mxu0 %v6201
    %7547 = vmatmul.mubr.f32.gmra.mrb[0].mxu0 %v6200
    %v7548 = vpop.f32.mrb[0].mxu0
    %v7549 = vadd.f32 %v7164, %v7548
    %v7550 = vpop.f32.mrb[0].mxu0
    %7551 = vmatprep.mubr.f32.mxu0 %v6210
    %7552 = vmatmul.mubr.f32.gmra.mrb[0].mxu0 %v6209
    %v7553 = vpop.f32.mrb[0].mxu0
    %v7554 = vadd.f32 %v7169, %v7553
    %v7555 = vpop.f32.mrb[0].mxu0
    %7556 = vmatprep.mubr.f32.mxu0 %v6219
    %7557 = vmatmul.mubr.f32.gmra.mrb[0].mxu0 %v6218
    %v7558 = vpop.f32.mrb[0].mxu0
    %v7559 = vadd.f32 %v7174, %v7558
    %v7560 = vpop.f32.mrb[0].mxu0
    %7561 = vmatprep.mubr.f32.mxu0 %v6228
    %7562 = vmatmul.mubr.f32.gmra.mrb[0].mxu0 %v6227
    %v7563 = vpop.f32.mrb[0].mxu0
    %v7564 = vadd.f32 %v7179, %v7563
    %v7565 = vpop.f32.mrb[0].mxu0
    %7566 = vmatprep.mubr.f32.mxu0 %v6237
    %7567 = vmatmul.mubr.f32.gmra.mrb[0].mxu0 %v6236
    %v7568 = vpop.f32.mrb[0].mxu0
    %v7569 = vadd.f32 %v7184, %v7568
    %v7570 = vpop.f32.mrb[0].mxu0
    %7571 = vmatprep.mubr.f32.mxu0 %v6246
    %7572 = vmatmul.mubr.f32.gmra.mrb[0].mxu0 %v6245
    %v7573 = vpop.f32.mrb[0].mxu0
    %v7574 = vadd.f32 %v7189, %v7573
    %v7575 = vpop.f32.mrb[0].mxu0
    %7576 = vmatprep.mubr.f32.mxu0 %v6255
    %7577 = vmatmul.mubr.f32.gmra.mrb[0].mxu0 %v6254
    %v7578 = vpop.f32.mrb[0].mxu0
    %v7579 = vadd.f32 %v7194, %v7578
    %v7580 = vpop.f32.mrb[0].mxu0
    %7581 = vmatprep.mubr.f32.mxu0 %v6264
    %7582 = vmatmul.mubr.f32.gmra.mrb[0].mxu0 %v6263
    %v7583 = vpop.f32.mrb[0].mxu0
    %v7584 = vadd.f32 %v7199, %v7583
    %v7585 = vpop.f32.mrb[0].mxu0
    %7586 = vmatprep.mubr.f32.mxu0 %v6273
    %7587 = vmatmul.mubr.f32.gmra.mrb[0].mxu0 %v6272
    %v7588 = vpop.f32.mrb[0].mxu0
    %v7589 = vadd.f32 %v7204, %v7588
    %v7590 = vpop.f32.mrb[0].mxu0
    %7591 = vmatprep.mubr.f32.mxu0 %v6282
    %7592 = vmatmul.mubr.f32.gmra.mrb[0].mxu0 %v6281
    %v7593 = vpop.f32.mrb[0].mxu0
    %v7594 = vadd.f32 %v7209, %v7593
    %v7595 = vpop.f32.mrb[0].mxu0
    %7596 = vmatprep.mubr.f32.mxu0 %v6291
    %7597 = vmatmul.mubr.f32.gmra.mrb[0].mxu0 %v6290
    %v7598 = vpop.f32.mrb[0].mxu0
    %v7599 = vadd.f32 %v7214, %v7598
    %v7600 = vpop.f32.mrb[0].mxu0
    %7601 = vmatprep.mubr.f32.mxu0 %v6300
    %7602 = vmatmul.mubr.f32.gmra.mrb[0].mxu0 %v6299
    %v7603 = vpop.f32.mrb[0].mxu0
    %v7604 = vadd.f32 %v7219, %v7603
    %v7605 = vpop.f32.mrb[0].mxu0
    %7606 = vmatprep.mubr.f32.mxu0 %v6309
    %7607 = vmatmul.mubr.f32.gmra.mrb[0].mxu0 %v6308
    %v7608 = vpop.f32.mrb[0].mxu0
    %v7609 = vadd.f32 %v7224, %v7608
    %v7610 = vpop.f32.mrb[0].mxu0
    %7611 = vdwg.mxu0
    %7612 = vmatprep.subr.mxu0 0.0
    %7613 = vmatpush1.msra.mxu0 %v6409
    %7614 = vmatprep.subr.mxu0 0.0
    %7615 = vmatpush1.msra.mxu0 %v6410
    %7616 = vmatprep.subr.mxu0 0.0
    %7617 = vmatpush1.msra.mxu0 %v6411
    %7618 = vmatprep.subr.mxu0 0.0
    %7619 = vmatpush1.msra.mxu0 %v6412
    %7620 = vmatprep.subr.mxu0 0.0
    %7621 = vmatpush1.msra.mxu0 %v6413
    %7622 = vmatprep.subr.mxu0 0.0
    %7623 = vmatpush1.msra.mxu0 %v6414
    %7624 = vmatprep.subr.mxu0 0.0
    %7625 = vmatpush1.msra.mxu0 %v6415
    %7626 = vmatprep.subr.mxu0 0.0
    %7627 = vmatpush1.msra.mxu0 %v6416
    %7628 = vmatprep.subr.mxu0 0.0
    %7629 = vmatpush1.msra.mxu0 %v6417
    %7630 = vmatprep.subr.mxu0 0.0
    %7631 = vmatpush1.msra.mxu0 %v6418
    %7632 = vmatprep.subr.mxu0 0.0
    %7633 = vmatpush1.msra.mxu0 %v6419
    %7634 = vmatprep.subr.mxu0 0.0
    %7635 = vmatpush1.msra.mxu0 %v6420
    %7636 = vmatprep.subr.mxu0 0.0
    %7637 = vmatpush1.msra.mxu0 %v6421
    %7638 = vmatprep.subr.mxu0 0.0
    %7639 = vmatpush1.msra.mxu0 %v6422
    %7640 = vmatprep.subr.mxu0 0.0
    %7641 = vmatpush1.msra.mxu0 %v6423
    %7642 = vmatprep.subr.mxu0 0.0
    %7643 = vmatpush1.msra.mxu0 %v6424
    %7644 = vmatprep.subr.mxu0 0.0
    %7645 = vmatpush1.msra.mxu0 %v6425
    %7646 = vmatprep.subr.mxu0 0.0
    %7647 = vmatpush1.msra.mxu0 %v6426
    %7648 = vmatprep.subr.mxu0 0.0
    %7649 = vmatpush1.msra.mxu0 %v6427
    %7650 = vmatprep.subr.mxu0 0.0
    %7651 = vmatpush1.msra.mxu0 %v6428
    %7652 = vmatprep.subr.mxu0 0.0
    %7653 = vmatpush1.msra.mxu0 %v6429
    %7654 = vmatprep.subr.mxu0 0.0
    %7655 = vmatpush1.msra.mxu0 %v6430
    %7656 = vmatprep.subr.mxu0 0.0
    %7657 = vmatpush1.msra.mxu0 %v6431
    %7658 = vmatprep.subr.mxu0 0.0
    %7659 = vmatpush1.msra.mxu0 %v6432
    %7660 = vmatprep.subr.mxu0 0.0
    %7661 = vmatpush1.msra.mxu0 %v6433
    %7662 = vmatprep.subr.mxu0 0.0
    %7663 = vmatpush1.msra.mxu0 %v6434
    %7664 = vmatprep.subr.mxu0 0.0
    %7665 = vmatpush1.msra.mxu0 %v6435
    %7666 = vmatprep.subr.mxu0 0.0
    %7667 = vmatpush1.msra.mxu0 %v6436
    %7668 = vmatprep.subr.mxu0 0.0
    %7669 = vmatpush1.msra.mxu0 %v6437
    %7670 = vmatprep.subr.mxu0 0.0
    %7671 = vmatpush1.msra.mxu0 %v6438
    %7672 = vmatprep.subr.mxu0 0.0
    %7673 = vmatpush1.msra.mxu0 %v6439
    %7674 = vmatprep.subr.mxu0 0.0
    %7675 = vmatpush1.msra.mxu0 %v6440
    %7676 = vmatprep.mubr.f32.mxu0 %v5744
    %7677 = vmatmul.mubr.f32.gmra.mrb[0].mxu0 %v5743
    %v7678 = vpop.f32.mrb[0].mxu0
    %v7679 = vadd.f32 %v7294, %v7678
    %v7680 = vpop.f32.mrb[0].mxu0
    %7681 = vmatprep.mubr.f32.mxu0 %v5753
    %7682 = vmatmul.mubr.f32.gmra.mrb[0].mxu0 %v5752
    %v7683 = vpop.f32.mrb[0].mxu0
    %v7684 = vadd.f32 %v7299, %v7683
    %v7685 = vpop.f32.mrb[0].mxu0
    %7686 = vmatprep.mubr.f32.mxu0 %v5762
    %7687 = vmatmul.mubr.f32.gmra.mrb[0].mxu0 %v5761
    %v7688 = vpop.f32.mrb[0].mxu0
    %v7689 = vadd.f32 %v7304, %v7688
    %v7690 = vpop.f32.mrb[0].mxu0
    %7691 = vmatprep.mubr.f32.mxu0 %v5771
    %7692 = vmatmul.mubr.f32.gmra.mrb[0].mxu0 %v5770
    %v7693 = vpop.f32.mrb[0].mxu0
    %v7694 = vadd.f32 %v7309, %v7693
    %v7695 = vpop.f32.mrb[0].mxu0
    %7696 = vmatprep.mubr.f32.mxu0 %v5780
    %7697 = vmatmul.mubr.f32.gmra.mrb[0].mxu0 %v5779
    %v7698 = vpop.f32.mrb[0].mxu0
    %v7699 = vadd.f32 %v7314, %v7698
    %v7700 = vpop.f32.mrb[0].mxu0
    %7701 = vmatprep.mubr.f32.mxu0 %v5789
    %7702 = vmatmul.mubr.f32.gmra.mrb[0].mxu0 %v5788
    %v7703 = vpop.f32.mrb[0].mxu0
    %v7704 = vadd.f32 %v7319, %v7703
    %v7705 = vpop.f32.mrb[0].mxu0
    %7706 = vmatprep.mubr.f32.mxu0 %v5798
    %7707 = vmatmul.mubr.f32.gmra.mrb[0].mxu0 %v5797
    %v7708 = vpop.f32.mrb[0].mxu0
    %v7709 = vadd.f32 %v7324, %v7708
    %v7710 = vpop.f32.mrb[0].mxu0
    %7711 = vmatprep.mubr.f32.mxu0 %v5807
    %7712 = vmatmul.mubr.f32.gmra.mrb[0].mxu0 %v5806
    %v7713 = vpop.f32.mrb[0].mxu0
    %v7714 = vadd.f32 %v7329, %v7713
    %v7715 = vpop.f32.mrb[0].mxu0
    %7716 = vmatprep.mubr.f32.mxu0 %v5816
    %7717 = vmatmul.mubr.f32.gmra.mrb[0].mxu0 %v5815
    %v7718 = vpop.f32.mrb[0].mxu0
    %v7719 = vadd.f32 %v7334, %v7718
    %v7720 = vpop.f32.mrb[0].mxu0
    %7721 = vmatprep.mubr.f32.mxu0 %v5825
    %7722 = vmatmul.mubr.f32.gmra.mrb[0].mxu0 %v5824
    %v7723 = vpop.f32.mrb[0].mxu0
    %v7724 = vadd.f32 %v7339, %v7723
    %v7725 = vpop.f32.mrb[0].mxu0
    %7726 = vmatprep.mubr.f32.mxu0 %v5834
    %7727 = vmatmul.mubr.f32.gmra.mrb[0].mxu0 %v5833
    %v7728 = vpop.f32.mrb[0].mxu0
    %v7729 = vadd.f32 %v7344, %v7728
    %v7730 = vpop.f32.mrb[0].mxu0
    %7731 = vmatprep.mubr.f32.mxu0 %v5843
    %7732 = vmatmul.mubr.f32.gmra.mrb[0].mxu0 %v5842
    %v7733 = vpop.f32.mrb[0].mxu0
    %v7734 = vadd.f32 %v7349, %v7733
    %v7735 = vpop.f32.mrb[0].mxu0
    %7736 = vmatprep.mubr.f32.mxu0 %v5852
    %7737 = vmatmul.mubr.f32.gmra.mrb[0].mxu0 %v5851
    %v7738 = vpop.f32.mrb[0].mxu0
    %v7739 = vadd.f32 %v7354, %v7738
    %v7740 = vpop.f32.mrb[0].mxu0
    %7741 = vmatprep.mubr.f32.mxu0 %v5861
    %7742 = vmatmul.mubr.f32.gmra.mrb[0].mxu0 %v5860
    %v7743 = vpop.f32.mrb[0].mxu0
    %v7744 = vadd.f32 %v7359, %v7743
    %v7745 = vpop.f32.mrb[0].mxu0
    %7746 = vmatprep.mubr.f32.mxu0 %v5870
    %7747 = vmatmul.mubr.f32.gmra.mrb[0].mxu0 %v5869
    %v7748 = vpop.f32.mrb[0].mxu0
    %v7749 = vadd.f32 %v7364, %v7748
    %v7750 = vpop.f32.mrb[0].mxu0
    %7751 = vmatprep.mubr.f32.mxu0 %v5879
    %7752 = vmatmul.mubr.f32.gmra.mrb[0].mxu0 %v5878
    %v7753 = vpop.f32.mrb[0].mxu0
    %v7754 = vadd.f32 %v7369, %v7753
    %v7755 = vpop.f32.mrb[0].mxu0
    %7756 = vmatprep.mubr.f32.mxu0 %v5888
    %7757 = vmatmul.mubr.f32.gmra.mrb[0].mxu0 %v5887
    %v7758 = vpop.f32.mrb[0].mxu0
    %v7759 = vadd.f32 %v7374, %v7758
    %v7760 = vpop.f32.mrb[0].mxu0
    %7761 = vmatprep.mubr.f32.mxu0 %v5897
    %7762 = vmatmul.mubr.f32.gmra.mrb[0].mxu0 %v5896
    %v7763 = vpop.f32.mrb[0].mxu0
    %v7764 = vadd.f32 %v7379, %v7763
    %v7765 = vpop.f32.mrb[0].mxu0
    %7766 = vmatprep.mubr.f32.mxu0 %v5906
    %7767 = vmatmul.mubr.f32.gmra.mrb[0].mxu0 %v5905
    %v7768 = vpop.f32.mrb[0].mxu0
    %v7769 = vadd.f32 %v7384, %v7768
    %v7770 = vpop.f32.mrb[0].mxu0
    %7771 = vmatprep.mubr.f32.mxu0 %v5915
    %7772 = vmatmul.mubr.f32.gmra.mrb[0].mxu0 %v5914
    %v7773 = vpop.f32.mrb[0].mxu0
    %v7774 = vadd.f32 %v7389, %v7773
    %v7775 = vpop.f32.mrb[0].mxu0
    %7776 = vmatprep.mubr.f32.mxu0 %v5924
    %7777 = vmatmul.mubr.f32.gmra.mrb[0].mxu0 %v5923
    %v7778 = vpop.f32.mrb[0].mxu0
    %v7779 = vadd.f32 %v7394, %v7778
    %v7780 = vpop.f32.mrb[0].mxu0
    %7781 = vmatprep.mubr.f32.mxu0 %v5933
    %7782 = vmatmul.mubr.f32.gmra.mrb[0].mxu0 %v5932
    %v7783 = vpop.f32.mrb[0].mxu0
    %v7784 = vadd.f32 %v7399, %v7783
    %v7785 = vpop.f32.mrb[0].mxu0
    %7786 = vmatprep.mubr.f32.mxu0 %v5942
    %7787 = vmatmul.mubr.f32.gmra.mrb[0].mxu0 %v5941
    %v7788 = vpop.f32.mrb[0].mxu0
    %v7789 = vadd.f32 %v7404, %v7788
    %v7790 = vpop.f32.mrb[0].mxu0
    %7791 = vmatprep.mubr.f32.mxu0 %v5951
    %7792 = vmatmul.mubr.f32.gmra.mrb[0].mxu0 %v5950
    %v7793 = vpop.f32.mrb[0].mxu0
    %v7794 = vadd.f32 %v7409, %v7793
    %v7795 = vpop.f32.mrb[0].mxu0
    %7796 = vmatprep.mubr.f32.mxu0 %v5960
    %7797 = vmatmul.mubr.f32.gmra.mrb[0].mxu0 %v5959
    %v7798 = vpop.f32.mrb[0].mxu0
    %v7799 = vadd.f32 %v7414, %v7798
    %v7800 = vpop.f32.mrb[0].mxu0
    %7801 = vmatprep.mubr.f32.mxu0 %v5969
    %7802 = vmatmul.mubr.f32.gmra.mrb[0].mxu0 %v5968
    %v7803 = vpop.f32.mrb[0].mxu0
    %v7804 = vadd.f32 %v7419, %v7803
    %v7805 = vpop.f32.mrb[0].mxu0
    %7806 = vmatprep.mubr.f32.mxu0 %v5978
    %7807 = vmatmul.mubr.f32.gmra.mrb[0].mxu0 %v5977
    %v7808 = vpop.f32.mrb[0].mxu0
    %v7809 = vadd.f32 %v7424, %v7808
    %v7810 = vpop.f32.mrb[0].mxu0
    %7811 = vmatprep.mubr.f32.mxu0 %v5987
    %7812 = vmatmul.mubr.f32.gmra.mrb[0].mxu0 %v5986
    %v7813 = vpop.f32.mrb[0].mxu0
    %v7814 = vadd.f32 %v7429, %v7813
    %v7815 = vpop.f32.mrb[0].mxu0
    %7816 = vmatprep.mubr.f32.mxu0 %v5996
    %7817 = vmatmul.mubr.f32.gmra.mrb[0].mxu0 %v5995
    %v7818 = vpop.f32.mrb[0].mxu0
    %v7819 = vadd.f32 %v7434, %v7818
    %v7820 = vpop.f32.mrb[0].mxu0
    %7821 = vmatprep.mubr.f32.mxu0 %v6005
    %7822 = vmatmul.mubr.f32.gmra.mrb[0].mxu0 %v6004
    %v7823 = vpop.f32.mrb[0].mxu0
    %v7824 = vadd.f32 %v7439, %v7823
    %v7825 = vpop.f32.mrb[0].mxu0
    %7826 = vmatprep.mubr.f32.mxu0 %v6014
    %7827 = vmatmul.mubr.f32.gmra.mrb[0].mxu0 %v6013
    %v7828 = vpop.f32.mrb[0].mxu0
    %v7829 = vadd.f32 %v7444, %v7828
    %v7830 = vpop.f32.mrb[0].mxu0
    %7831 = vmatprep.mubr.f32.mxu0 %v6023
    %7832 = vmatmul.mubr.f32.gmra.mrb[0].mxu0 %v6022
    %v7833 = vpop.f32.mrb[0].mxu0
    %v7834 = vadd.f32 %v7449, %v7833
    %v7835 = vpop.f32.mrb[0].mxu0
    %7836 = vmatprep.mubr.f32.mxu0 %v6032
    %7837 = vmatmul.mubr.f32.gmra.mrb[0].mxu0 %v6031
    %v7838 = vpop.f32.mrb[0].mxu0
    %v7839 = vadd.f32 %v7454, %v7838
    %v7840 = vpop.f32.mrb[0].mxu0
    %7841 = vmatprep.mubr.f32.mxu0 %v6041
    %7842 = vmatmul.mubr.f32.gmra.mrb[0].mxu0 %v6040
    %v7843 = vpop.f32.mrb[0].mxu0
    %v7844 = vadd.f32 %v7459, %v7843
    %v7845 = vpop.f32.mrb[0].mxu0
    %7846 = vmatprep.mubr.f32.mxu0 %v6050
    %7847 = vmatmul.mubr.f32.gmra.mrb[0].mxu0 %v6049
    %v7848 = vpop.f32.mrb[0].mxu0
    %v7849 = vadd.f32 %v7464, %v7848
    %v7850 = vpop.f32.mrb[0].mxu0
    %7851 = vmatprep.mubr.f32.mxu0 %v6059
    %7852 = vmatmul.mubr.f32.gmra.mrb[0].mxu0 %v6058
    %v7853 = vpop.f32.mrb[0].mxu0
    %v7854 = vadd.f32 %v7469, %v7853
    %v7855 = vpop.f32.mrb[0].mxu0
    %7856 = vmatprep.mubr.f32.mxu0 %v6068
    %7857 = vmatmul.mubr.f32.gmra.mrb[0].mxu0 %v6067
    %v7858 = vpop.f32.mrb[0].mxu0
    %v7859 = vadd.f32 %v7474, %v7858
    %v7860 = vpop.f32.mrb[0].mxu0
    %7861 = vmatprep.mubr.f32.mxu0 %v6077
    %7862 = vmatmul.mubr.f32.gmra.mrb[0].mxu0 %v6076
    %v7863 = vpop.f32.mrb[0].mxu0
    %v7864 = vadd.f32 %v7479, %v7863
    %v7865 = vpop.f32.mrb[0].mxu0
    %7866 = vmatprep.mubr.f32.mxu0 %v6086
    %7867 = vmatmul.mubr.f32.gmra.mrb[0].mxu0 %v6085
    %v7868 = vpop.f32.mrb[0].mxu0
    %v7869 = vadd.f32 %v7484, %v7868
    %v7870 = vpop.f32.mrb[0].mxu0
    %7871 = vmatprep.mubr.f32.mxu0 %v6095
    %7872 = vmatmul.mubr.f32.gmra.mrb[0].mxu0 %v6094
    %v7873 = vpop.f32.mrb[0].mxu0
    %v7874 = vadd.f32 %v7489, %v7873
    %v7875 = vpop.f32.mrb[0].mxu0
    %7876 = vmatprep.mubr.f32.mxu0 %v6104
    %7877 = vmatmul.mubr.f32.gmra.mrb[0].mxu0 %v6103
    %v7878 = vpop.f32.mrb[0].mxu0
    %v7879 = vadd.f32 %v7494, %v7878
    %v7880 = vpop.f32.mrb[0].mxu0
    %7881 = vmatprep.mubr.f32.mxu0 %v6113
    %7882 = vmatmul.mubr.f32.gmra.mrb[0].mxu0 %v6112
    %v7883 = vpop.f32.mrb[0].mxu0
    %v7884 = vadd.f32 %v7499, %v7883
    %v7885 = vpop.f32.mrb[0].mxu0
    %7886 = vmatprep.mubr.f32.mxu0 %v6122
    %7887 = vmatmul.mubr.f32.gmra.mrb[0].mxu0 %v6121
    %v7888 = vpop.f32.mrb[0].mxu0
    %v7889 = vadd.f32 %v7504, %v7888
    %v7890 = vpop.f32.mrb[0].mxu0
    %7891 = vmatprep.mubr.f32.mxu0 %v6131
    %7892 = vmatmul.mubr.f32.gmra.mrb[0].mxu0 %v6130
    %v7893 = vpop.f32.mrb[0].mxu0
    %v7894 = vadd.f32 %v7509, %v7893
    %v7895 = vpop.f32.mrb[0].mxu0
    %7896 = vmatprep.mubr.f32.mxu0 %v6140
    %7897 = vmatmul.mubr.f32.gmra.mrb[0].mxu0 %v6139
    %v7898 = vpop.f32.mrb[0].mxu0
    %v7899 = vadd.f32 %v7514, %v7898
    %v7900 = vpop.f32.mrb[0].mxu0
    %7901 = vmatprep.mubr.f32.mxu0 %v6149
    %7902 = vmatmul.mubr.f32.gmra.mrb[0].mxu0 %v6148
    %v7903 = vpop.f32.mrb[0].mxu0
    %v7904 = vadd.f32 %v7519, %v7903
    %v7905 = vpop.f32.mrb[0].mxu0
    %7906 = vmatprep.mubr.f32.mxu0 %v6158
    %7907 = vmatmul.mubr.f32.gmra.mrb[0].mxu0 %v6157
    %v7908 = vpop.f32.mrb[0].mxu0
    %v7909 = vadd.f32 %v7524, %v7908
    %v7910 = vpop.f32.mrb[0].mxu0
    %7911 = vmatprep.mubr.f32.mxu0 %v6167
    %7912 = vmatmul.mubr.f32.gmra.mrb[0].mxu0 %v6166
    %v7913 = vpop.f32.mrb[0].mxu0
    %v7914 = vadd.f32 %v7529, %v7913
    %v7915 = vpop.f32.mrb[0].mxu0
    %7916 = vmatprep.mubr.f32.mxu0 %v6176
    %7917 = vmatmul.mubr.f32.gmra.mrb[0].mxu0 %v6175
    %v7918 = vpop.f32.mrb[0].mxu0
    %v7919 = vadd.f32 %v7534, %v7918
    %v7920 = vpop.f32.mrb[0].mxu0
    %7921 = vmatprep.mubr.f32.mxu0 %v6185
    %7922 = vmatmul.mubr.f32.gmra.mrb[0].mxu0 %v6184
    %v7923 = vpop.f32.mrb[0].mxu0
    %v7924 = vadd.f32 %v7539, %v7923
    %v7925 = vpop.f32.mrb[0].mxu0
    %7926 = vmatprep.mubr.f32.mxu0 %v6194
    %7927 = vmatmul.mubr.f32.gmra.mrb[0].mxu0 %v6193
    %v7928 = vpop.f32.mrb[0].mxu0
    %v7929 = vadd.f32 %v7544, %v7928
    %v7930 = vpop.f32.mrb[0].mxu0
    %7931 = vmatprep.mubr.f32.mxu0 %v6203
    %7932 = vmatmul.mubr.f32.gmra.mrb[0].mxu0 %v6202
    %v7933 = vpop.f32.mrb[0].mxu0
    %v7934 = vadd.f32 %v7549, %v7933
    %v7935 = vpop.f32.mrb[0].mxu0
    %7936 = vmatprep.mubr.f32.mxu0 %v6212
    %7937 = vmatmul.mubr.f32.gmra.mrb[0].mxu0 %v6211
    %v7938 = vpop.f32.mrb[0].mxu0
    %v7939 = vadd.f32 %v7554, %v7938
    %v7940 = vpop.f32.mrb[0].mxu0
    %7941 = vmatprep.mubr.f32.mxu0 %v6221
    %7942 = vmatmul.mubr.f32.gmra.mrb[0].mxu0 %v6220
    %v7943 = vpop.f32.mrb[0].mxu0
    %v7944 = vadd.f32 %v7559, %v7943
    %v7945 = vpop.f32.mrb[0].mxu0
    %7946 = vmatprep.mubr.f32.mxu0 %v6230
    %7947 = vmatmul.mubr.f32.gmra.mrb[0].mxu0 %v6229
    %v7948 = vpop.f32.mrb[0].mxu0
    %v7949 = vadd.f32 %v7564, %v7948
    %v7950 = vpop.f32.mrb[0].mxu0
    %7951 = vmatprep.mubr.f32.mxu0 %v6239
    %7952 = vmatmul.mubr.f32.gmra.mrb[0].mxu0 %v6238
    %v7953 = vpop.f32.mrb[0].mxu0
    %v7954 = vadd.f32 %v7569, %v7953
    %v7955 = vpop.f32.mrb[0].mxu0
    %7956 = vmatprep.mubr.f32.mxu0 %v6248
    %7957 = vmatmul.mubr.f32.gmra.mrb[0].mxu0 %v6247
    %v7958 = vpop.f32.mrb[0].mxu0
    %v7959 = vadd.f32 %v7574, %v7958
    %v7960 = vpop.f32.mrb[0].mxu0
    %7961 = vmatprep.mubr.f32.mxu0 %v6257
    %7962 = vmatmul.mubr.f32.gmra.mrb[0].mxu0 %v6256
    %v7963 = vpop.f32.mrb[0].mxu0
    %v7964 = vadd.f32 %v7579, %v7963
    %v7965 = vpop.f32.mrb[0].mxu0
    %7966 = vmatprep.mubr.f32.mxu0 %v6266
    %7967 = vmatmul.mubr.f32.gmra.mrb[0].mxu0 %v6265
    %v7968 = vpop.f32.mrb[0].mxu0
    %v7969 = vadd.f32 %v7584, %v7968
    %v7970 = vpop.f32.mrb[0].mxu0
    %7971 = vmatprep.mubr.f32.mxu0 %v6275
    %7972 = vmatmul.mubr.f32.gmra.mrb[0].mxu0 %v6274
    %v7973 = vpop.f32.mrb[0].mxu0
    %v7974 = vadd.f32 %v7589, %v7973
    %v7975 = vpop.f32.mrb[0].mxu0
    %7976 = vmatprep.mubr.f32.mxu0 %v6284
    %7977 = vmatmul.mubr.f32.gmra.mrb[0].mxu0 %v6283
    %v7978 = vpop.f32.mrb[0].mxu0
    %v7979 = vadd.f32 %v7594, %v7978
    %v7980 = vpop.f32.mrb[0].mxu0
    %7981 = vmatprep.mubr.f32.mxu0 %v6293
    %7982 = vmatmul.mubr.f32.gmra.mrb[0].mxu0 %v6292
    %v7983 = vpop.f32.mrb[0].mxu0
    %v7984 = vadd.f32 %v7599, %v7983
    %v7985 = vpop.f32.mrb[0].mxu0
    %7986 = vmatprep.mubr.f32.mxu0 %v6302
    %7987 = vmatmul.mubr.f32.gmra.mrb[0].mxu0 %v6301
    %v7988 = vpop.f32.mrb[0].mxu0
    %v7989 = vadd.f32 %v7604, %v7988
    %v7990 = vpop.f32.mrb[0].mxu0
    %7991 = vmatprep.mubr.f32.mxu0 %v6311
    %7992 = vmatmul.mubr.f32.gmra.mrb[0].mxu0 %v6310
    %v7993 = vpop.f32.mrb[0].mxu0
    %v7994 = vadd.f32 %v7609, %v7993
    %v7995 = vpop.f32.mrb[0].mxu0
    %7996 = vdwg.mxu0
    %7997 = vmatprep.subr.mxu0 0.0
    %7998 = vmatpush1.msra.mxu0 %v6441
    %7999 = vmatprep.subr.mxu0 0.0
    %8000 = vmatpush1.msra.mxu0 %v6442
    %8001 = vmatprep.subr.mxu0 0.0
    %8002 = vmatpush1.msra.mxu0 %v6443
    %8003 = vmatprep.subr.mxu0 0.0
    %8004 = vmatpush1.msra.mxu0 %v6444
    %8005 = vmatprep.subr.mxu0 0.0
    %8006 = vmatpush1.msra.mxu0 %v6445
    %8007 = vmatprep.subr.mxu0 0.0
    %8008 = vmatpush1.msra.mxu0 %v6446
    %8009 = vmatprep.subr.mxu0 0.0
    %8010 = vmatpush1.msra.mxu0 %v6447
    %8011 = vmatprep.subr.mxu0 0.0
    %8012 = vmatpush1.msra.mxu0 %v6448
    %8013 = vmatprep.subr.mxu0 0.0
    %8014 = vmatpush1.msra.mxu0 %v6449
    %8015 = vmatprep.subr.mxu0 0.0
    %8016 = vmatpush1.msra.mxu0 %v6450
    %8017 = vmatprep.subr.mxu0 0.0
    %8018 = vmatpush1.msra.mxu0 %v6451
    %8019 = vmatprep.subr.mxu0 0.0
    %8020 = vmatpush1.msra.mxu0 %v6452
    %8021 = vmatprep.subr.mxu0 0.0
    %8022 = vmatpush1.msra.mxu0 %v6453
    %8023 = vmatprep.subr.mxu0 0.0
    %8024 = vmatpush1.msra.mxu0 %v6454
    %8025 = vmatprep.subr.mxu0 0.0
    %8026 = vmatpush1.msra.mxu0 %v6455
    %8027 = vmatprep.subr.mxu0 0.0
    %8028 = vmatpush1.msra.mxu0 %v6456
    %8029 = vmatprep.subr.mxu0 0.0
    %8030 = vmatpush1.msra.mxu0 0.0
    %8031 = vmatprep.subr.mxu0 0.0
    %8032 = vmatpush1.msra.mxu0 0.0
    %8033 = vmatprep.subr.mxu0 0.0
    %8034 = vmatpush1.msra.mxu0 0.0
    %8035 = vmatprep.subr.mxu0 0.0
    %8036 = vmatpush1.msra.mxu0 0.0
    %8037 = vmatprep.subr.mxu0 0.0
    %8038 = vmatpush1.msra.mxu0 0.0
    %8039 = vmatprep.subr.mxu0 0.0
    %8040 = vmatpush1.msra.mxu0 0.0
    %8041 = vmatprep.subr.mxu0 0.0
    %8042 = vmatpush1.msra.mxu0 0.0
    %8043 = vmatprep.subr.mxu0 0.0
    %8044 = vmatpush1.msra.mxu0 0.0
    %8045 = vmatprep.subr.mxu0 0.0
    %8046 = vmatpush1.msra.mxu0 0.0
    %8047 = vmatprep.subr.mxu0 0.0
    %8048 = vmatpush1.msra.mxu0 0.0
    %8049 = vmatprep.subr.mxu0 0.0
    %8050 = vmatpush1.msra.mxu0 0.0
    %8051 = vmatprep.subr.mxu0 0.0
    %8052 = vmatpush1.msra.mxu0 0.0
    %8053 = vmatprep.subr.mxu0 0.0
    %8054 = vmatpush1.msra.mxu0 0.0
    %8055 = vmatprep.subr.mxu0 0.0
    %8056 = vmatpush1.msra.mxu0 0.0
    %8057 = vmatprep.subr.mxu0 0.0
    %8058 = vmatpush1.msra.mxu0 0.0
    %8059 = vmatprep.subr.mxu0 0.0
    %8060 = vmatpush1.msra.mxu0 0.0
    %8061 = vmatprep.mubr.f32.mxu0 0.0
    %8062 = vmatmul.mubr.f32.gmra.mrb[0].mxu0 %v5745
    %v8063 = vpop.f32.mrb[0].mxu0
    %v8064 = vadd.f32 %v7679, %v8063
    %v8065 = vpop.f32.mrb[0].mxu0
    %8066 = vmatprep.mubr.f32.mxu0 0.0
    %8067 = vmatmul.mubr.f32.gmra.mrb[0].mxu0 %v5754
    %v8068 = vpop.f32.mrb[0].mxu0
    %v8069 = vadd.f32 %v7684, %v8068
    %v8070 = vpop.f32.mrb[0].mxu0
    %8071 = vmatprep.mubr.f32.mxu0 0.0
    %8072 = vmatmul.mubr.f32.gmra.mrb[0].mxu0 %v5763
    %v8073 = vpop.f32.mrb[0].mxu0
    %v8074 = vadd.f32 %v7689, %v8073
    %v8075 = vpop.f32.mrb[0].mxu0
    %8076 = vmatprep.mubr.f32.mxu0 0.0
    %8077 = vmatmul.mubr.f32.gmra.mrb[0].mxu0 %v5772
    %v8078 = vpop.f32.mrb[0].mxu0
    %v8079 = vadd.f32 %v7694, %v8078
    %v8080 = vpop.f32.mrb[0].mxu0
    %8081 = vmatprep.mubr.f32.mxu0 0.0
    %8082 = vmatmul.mubr.f32.gmra.mrb[0].mxu0 %v5781
    %v8083 = vpop.f32.mrb[0].mxu0
    %v8084 = vadd.f32 %v7699, %v8083
    %v8085 = vpop.f32.mrb[0].mxu0
    %8086 = vmatprep.mubr.f32.mxu0 0.0
    %8087 = vmatmul.mubr.f32.gmra.mrb[0].mxu0 %v5790
    %v8088 = vpop.f32.mrb[0].mxu0
    %v8089 = vadd.f32 %v7704, %v8088
    %v8090 = vpop.f32.mrb[0].mxu0
    %8091 = vmatprep.mubr.f32.mxu0 0.0
    %8092 = vmatmul.mubr.f32.gmra.mrb[0].mxu0 %v5799
    %v8093 = vpop.f32.mrb[0].mxu0
    %v8094 = vadd.f32 %v7709, %v8093
    %v8095 = vpop.f32.mrb[0].mxu0
    %8096 = vmatprep.mubr.f32.mxu0 0.0
    %8097 = vmatmul.mubr.f32.gmra.mrb[0].mxu0 %v5808
    %v8098 = vpop.f32.mrb[0].mxu0
    %v8099 = vadd.f32 %v7714, %v8098
    %v8100 = vpop.f32.mrb[0].mxu0
    %8101 = vmatprep.mubr.f32.mxu0 0.0
    %8102 = vmatmul.mubr.f32.gmra.mrb[0].mxu0 %v5817
    %v8103 = vpop.f32.mrb[0].mxu0
    %v8104 = vadd.f32 %v7719, %v8103
    %v8105 = vpop.f32.mrb[0].mxu0
    %8106 = vmatprep.mubr.f32.mxu0 0.0
    %8107 = vmatmul.mubr.f32.gmra.mrb[0].mxu0 %v5826
    %v8108 = vpop.f32.mrb[0].mxu0
    %v8109 = vadd.f32 %v7724, %v8108
    %v8110 = vpop.f32.mrb[0].mxu0
    %8111 = vmatprep.mubr.f32.mxu0 0.0
    %8112 = vmatmul.mubr.f32.gmra.mrb[0].mxu0 %v5835
    %v8113 = vpop.f32.mrb[0].mxu0
    %v8114 = vadd.f32 %v7729, %v8113
    %v8115 = vpop.f32.mrb[0].mxu0
    %8116 = vmatprep.mubr.f32.mxu0 0.0
    %8117 = vmatmul.mubr.f32.gmra.mrb[0].mxu0 %v5844
    %v8118 = vpop.f32.mrb[0].mxu0
    %v8119 = vadd.f32 %v7734, %v8118
    %v8120 = vpop.f32.mrb[0].mxu0
    %8121 = vmatprep.mubr.f32.mxu0 0.0
    %8122 = vmatmul.mubr.f32.gmra.mrb[0].mxu0 %v5853
    %v8123 = vpop.f32.mrb[0].mxu0
    %v8124 = vadd.f32 %v7739, %v8123
    %v8125 = vpop.f32.mrb[0].mxu0
    %8126 = vmatprep.mubr.f32.mxu0 0.0
    %8127 = vmatmul.mubr.f32.gmra.mrb[0].mxu0 %v5862
    %v8128 = vpop.f32.mrb[0].mxu0
    %v8129 = vadd.f32 %v7744, %v8128
    %v8130 = vpop.f32.mrb[0].mxu0
    %8131 = vmatprep.mubr.f32.mxu0 0.0
    %8132 = vmatmul.mubr.f32.gmra.mrb[0].mxu0 %v5871
    %v8133 = vpop.f32.mrb[0].mxu0
    %v8134 = vadd.f32 %v7749, %v8133
    %v8135 = vpop.f32.mrb[0].mxu0
    %8136 = vmatprep.mubr.f32.mxu0 0.0
    %8137 = vmatmul.mubr.f32.gmra.mrb[0].mxu0 %v5880
    %v8138 = vpop.f32.mrb[0].mxu0
    %v8139 = vadd.f32 %v7754, %v8138
    %v8140 = vpop.f32.mrb[0].mxu0
    %8141 = vmatprep.mubr.f32.mxu0 0.0
    %8142 = vmatmul.mubr.f32.gmra.mrb[0].mxu0 %v5889
    %v8143 = vpop.f32.mrb[0].mxu0
    %v8144 = vadd.f32 %v7759, %v8143
    %v8145 = vpop.f32.mrb[0].mxu0
    %8146 = vmatprep.mubr.f32.mxu0 0.0
    %8147 = vmatmul.mubr.f32.gmra.mrb[0].mxu0 %v5898
    %v8148 = vpop.f32.mrb[0].mxu0
    %v8149 = vadd.f32 %v7764, %v8148
    %v8150 = vpop.f32.mrb[0].mxu0
    %8151 = vmatprep.mubr.f32.mxu0 0.0
    %8152 = vmatmul.mubr.f32.gmra.mrb[0].mxu0 %v5907
    %v8153 = vpop.f32.mrb[0].mxu0
    %v8154 = vadd.f32 %v7769, %v8153
    %v8155 = vpop.f32.mrb[0].mxu0
    %8156 = vmatprep.mubr.f32.mxu0 0.0
    %8157 = vmatmul.mubr.f32.gmra.mrb[0].mxu0 %v5916
    %v8158 = vpop.f32.mrb[0].mxu0
    %v8159 = vadd.f32 %v7774, %v8158
    %v8160 = vpop.f32.mrb[0].mxu0
    %8161 = vmatprep.mubr.f32.mxu0 0.0
    %8162 = vmatmul.mubr.f32.gmra.mrb[0].mxu0 %v5925
    %v8163 = vpop.f32.mrb[0].mxu0
    %v8164 = vadd.f32 %v7779, %v8163
    %v8165 = vpop.f32.mrb[0].mxu0
    %8166 = vmatprep.mubr.f32.mxu0 0.0
    %8167 = vmatmul.mubr.f32.gmra.mrb[0].mxu0 %v5934
    %v8168 = vpop.f32.mrb[0].mxu0
    %v8169 = vadd.f32 %v7784, %v8168
    %v8170 = vpop.f32.mrb[0].mxu0
    %8171 = vmatprep.mubr.f32.mxu0 0.0
    %8172 = vmatmul.mubr.f32.gmra.mrb[0].mxu0 %v5943
    %v8173 = vpop.f32.mrb[0].mxu0
    %v8174 = vadd.f32 %v7789, %v8173
    %v8175 = vpop.f32.mrb[0].mxu0
    %8176 = vmatprep.mubr.f32.mxu0 0.0
    %8177 = vmatmul.mubr.f32.gmra.mrb[0].mxu0 %v5952
    %v8178 = vpop.f32.mrb[0].mxu0
    %v8179 = vadd.f32 %v7794, %v8178
    %v8180 = vpop.f32.mrb[0].mxu0
    %8181 = vmatprep.mubr.f32.mxu0 0.0
    %8182 = vmatmul.mubr.f32.gmra.mrb[0].mxu0 %v5961
    %v8183 = vpop.f32.mrb[0].mxu0
    %v8184 = vadd.f32 %v7799, %v8183
    %v8185 = vpop.f32.mrb[0].mxu0
    %8186 = vmatprep.mubr.f32.mxu0 0.0
    %8187 = vmatmul.mubr.f32.gmra.mrb[0].mxu0 %v5970
    %v8188 = vpop.f32.mrb[0].mxu0
    %v8189 = vadd.f32 %v7804, %v8188
    %v8190 = vpop.f32.mrb[0].mxu0
    %8191 = vmatprep.mubr.f32.mxu0 0.0
    %8192 = vmatmul.mubr.f32.gmra.mrb[0].mxu0 %v5979
    %v8193 = vpop.f32.mrb[0].mxu0
    %v8194 = vadd.f32 %v7809, %v8193
    %v8195 = vpop.f32.mrb[0].mxu0
    %8196 = vmatprep.mubr.f32.mxu0 0.0
    %8197 = vmatmul.mubr.f32.gmra.mrb[0].mxu0 %v5988
    %v8198 = vpop.f32.mrb[0].mxu0
    %v8199 = vadd.f32 %v7814, %v8198
    %v8200 = vpop.f32.mrb[0].mxu0
    %8201 = vmatprep.mubr.f32.mxu0 0.0
    %8202 = vmatmul.mubr.f32.gmra.mrb[0].mxu0 %v5997
    %v8203 = vpop.f32.mrb[0].mxu0
    %v8204 = vadd.f32 %v7819, %v8203
    %v8205 = vpop.f32.mrb[0].mxu0
    %8206 = vmatprep.mubr.f32.mxu0 0.0
    %8207 = vmatmul.mubr.f32.gmra.mrb[0].mxu0 %v6006
    %v8208 = vpop.f32.mrb[0].mxu0
    %v8209 = vadd.f32 %v7824, %v8208
    %v8210 = vpop.f32.mrb[0].mxu0
    %8211 = vmatprep.mubr.f32.mxu0 0.0
    %8212 = vmatmul.mubr.f32.gmra.mrb[0].mxu0 %v6015
    %v8213 = vpop.f32.mrb[0].mxu0
    %v8214 = vadd.f32 %v7829, %v8213
    %v8215 = vpop.f32.mrb[0].mxu0
    %8216 = vmatprep.mubr.f32.mxu0 0.0
    %8217 = vmatmul.mubr.f32.gmra.mrb[0].mxu0 %v6024
    %v8218 = vpop.f32.mrb[0].mxu0
    %v8219 = vadd.f32 %v7834, %v8218
    %v8220 = vpop.f32.mrb[0].mxu0
    %8221 = vmatprep.mubr.f32.mxu0 0.0
    %8222 = vmatmul.mubr.f32.gmra.mrb[0].mxu0 %v6033
    %v8223 = vpop.f32.mrb[0].mxu0
    %v8224 = vadd.f32 %v7839, %v8223
    %v8225 = vpop.f32.mrb[0].mxu0
    %8226 = vmatprep.mubr.f32.mxu0 0.0
    %8227 = vmatmul.mubr.f32.gmra.mrb[0].mxu0 %v6042
    %v8228 = vpop.f32.mrb[0].mxu0
    %v8229 = vadd.f32 %v7844, %v8228
    %v8230 = vpop.f32.mrb[0].mxu0
    %8231 = vmatprep.mubr.f32.mxu0 0.0
    %8232 = vmatmul.mubr.f32.gmra.mrb[0].mxu0 %v6051
    %v8233 = vpop.f32.mrb[0].mxu0
    %v8234 = vadd.f32 %v7849, %v8233
    %v8235 = vpop.f32.mrb[0].mxu0
    %8236 = vmatprep.mubr.f32.mxu0 0.0
    %8237 = vmatmul.mubr.f32.gmra.mrb[0].mxu0 %v6060
    %v8238 = vpop.f32.mrb[0].mxu0
    %v8239 = vadd.f32 %v7854, %v8238
    %v8240 = vpop.f32.mrb[0].mxu0
    %8241 = vmatprep.mubr.f32.mxu0 0.0
    %8242 = vmatmul.mubr.f32.gmra.mrb[0].mxu0 %v6069
    %v8243 = vpop.f32.mrb[0].mxu0
    %v8244 = vadd.f32 %v7859, %v8243
    %v8245 = vpop.f32.mrb[0].mxu0
    %8246 = vmatprep.mubr.f32.mxu0 0.0
    %8247 = vmatmul.mubr.f32.gmra.mrb[0].mxu0 %v6078
    %v8248 = vpop.f32.mrb[0].mxu0
    %v8249 = vadd.f32 %v7864, %v8248
    %v8250 = vpop.f32.mrb[0].mxu0
    %8251 = vmatprep.mubr.f32.mxu0 0.0
    %8252 = vmatmul.mubr.f32.gmra.mrb[0].mxu0 %v6087
    %v8253 = vpop.f32.mrb[0].mxu0
    %v8254 = vadd.f32 %v7869, %v8253
    %v8255 = vpop.f32.mrb[0].mxu0
    %8256 = vmatprep.mubr.f32.mxu0 0.0
    %8257 = vmatmul.mubr.f32.gmra.mrb[0].mxu0 %v6096
    %v8258 = vpop.f32.mrb[0].mxu0
    %v8259 = vadd.f32 %v7874, %v8258
    %v8260 = vpop.f32.mrb[0].mxu0
    %8261 = vmatprep.mubr.f32.mxu0 0.0
    %8262 = vmatmul.mubr.f32.gmra.mrb[0].mxu0 %v6105
    %v8263 = vpop.f32.mrb[0].mxu0
    %v8264 = vadd.f32 %v7879, %v8263
    %v8265 = vpop.f32.mrb[0].mxu0
    %8266 = vmatprep.mubr.f32.mxu0 0.0
    %8267 = vmatmul.mubr.f32.gmra.mrb[0].mxu0 %v6114
    %v8268 = vpop.f32.mrb[0].mxu0
    %v8269 = vadd.f32 %v7884, %v8268
    %v8270 = vpop.f32.mrb[0].mxu0
    %8271 = vmatprep.mubr.f32.mxu0 0.0
    %8272 = vmatmul.mubr.f32.gmra.mrb[0].mxu0 %v6123
    %v8273 = vpop.f32.mrb[0].mxu0
    %v8274 = vadd.f32 %v7889, %v8273
    %v8275 = vpop.f32.mrb[0].mxu0
    %8276 = vmatprep.mubr.f32.mxu0 0.0
    %8277 = vmatmul.mubr.f32.gmra.mrb[0].mxu0 %v6132
    %v8278 = vpop.f32.mrb[0].mxu0
    %v8279 = vadd.f32 %v7894, %v8278
    %v8280 = vpop.f32.mrb[0].mxu0
    %8281 = vmatprep.mubr.f32.mxu0 0.0
    %8282 = vmatmul.mubr.f32.gmra.mrb[0].mxu0 %v6141
    %v8283 = vpop.f32.mrb[0].mxu0
    %v8284 = vadd.f32 %v7899, %v8283
    %v8285 = vpop.f32.mrb[0].mxu0
    %8286 = vmatprep.mubr.f32.mxu0 0.0
    %8287 = vmatmul.mubr.f32.gmra.mrb[0].mxu0 %v6150
    %v8288 = vpop.f32.mrb[0].mxu0
    %v8289 = vadd.f32 %v7904, %v8288
    %v8290 = vpop.f32.mrb[0].mxu0
    %8291 = vmatprep.mubr.f32.mxu0 0.0
    %8292 = vmatmul.mubr.f32.gmra.mrb[0].mxu0 %v6159
    %v8293 = vpop.f32.mrb[0].mxu0
    %v8294 = vadd.f32 %v7909, %v8293
    %v8295 = vpop.f32.mrb[0].mxu0
    %8296 = vmatprep.mubr.f32.mxu0 0.0
    %8297 = vmatmul.mubr.f32.gmra.mrb[0].mxu0 %v6168
    %v8298 = vpop.f32.mrb[0].mxu0
    %v8299 = vadd.f32 %v7914, %v8298
    %v8300 = vpop.f32.mrb[0].mxu0
    %8301 = vmatprep.mubr.f32.mxu0 0.0
    %8302 = vmatmul.mubr.f32.gmra.mrb[0].mxu0 %v6177
    %v8303 = vpop.f32.mrb[0].mxu0
    %v8304 = vadd.f32 %v7919, %v8303
    %v8305 = vpop.f32.mrb[0].mxu0
    %8306 = vmatprep.mubr.f32.mxu0 0.0
    %8307 = vmatmul.mubr.f32.gmra.mrb[0].mxu0 %v6186
    %v8308 = vpop.f32.mrb[0].mxu0
    %v8309 = vadd.f32 %v7924, %v8308
    %v8310 = vpop.f32.mrb[0].mxu0
    %8311 = vmatprep.mubr.f32.mxu0 0.0
    %8312 = vmatmul.mubr.f32.gmra.mrb[0].mxu0 %v6195
    %v8313 = vpop.f32.mrb[0].mxu0
    %v8314 = vadd.f32 %v7929, %v8313
    %v8315 = vpop.f32.mrb[0].mxu0
    %8316 = vmatprep.mubr.f32.mxu0 0.0
    %8317 = vmatmul.mubr.f32.gmra.mrb[0].mxu0 %v6204
    %v8318 = vpop.f32.mrb[0].mxu0
    %v8319 = vadd.f32 %v7934, %v8318
    %v8320 = vpop.f32.mrb[0].mxu0
    %8321 = vmatprep.mubr.f32.mxu0 0.0
    %8322 = vmatmul.mubr.f32.gmra.mrb[0].mxu0 %v6213
    %v8323 = vpop.f32.mrb[0].mxu0
    %v8324 = vadd.f32 %v7939, %v8323
    %v8325 = vpop.f32.mrb[0].mxu0
    %8326 = vmatprep.mubr.f32.mxu0 0.0
    %8327 = vmatmul.mubr.f32.gmra.mrb[0].mxu0 %v6222
    %v8328 = vpop.f32.mrb[0].mxu0
    %v8329 = vadd.f32 %v7944, %v8328
    %v8330 = vpop.f32.mrb[0].mxu0
    %8331 = vmatprep.mubr.f32.mxu0 0.0
    %8332 = vmatmul.mubr.f32.gmra.mrb[0].mxu0 %v6231
    %v8333 = vpop.f32.mrb[0].mxu0
    %v8334 = vadd.f32 %v7949, %v8333
    %v8335 = vpop.f32.mrb[0].mxu0
    %8336 = vmatprep.mubr.f32.mxu0 0.0
    %8337 = vmatmul.mubr.f32.gmra.mrb[0].mxu0 %v6240
    %v8338 = vpop.f32.mrb[0].mxu0
    %v8339 = vadd.f32 %v7954, %v8338
    %v8340 = vpop.f32.mrb[0].mxu0
    %8341 = vmatprep.mubr.f32.mxu0 0.0
    %8342 = vmatmul.mubr.f32.gmra.mrb[0].mxu0 %v6249
    %v8343 = vpop.f32.mrb[0].mxu0
    %v8344 = vadd.f32 %v7959, %v8343
    %v8345 = vpop.f32.mrb[0].mxu0
    %8346 = vmatprep.mubr.f32.mxu0 0.0
    %8347 = vmatmul.mubr.f32.gmra.mrb[0].mxu0 %v6258
    %v8348 = vpop.f32.mrb[0].mxu0
    %v8349 = vadd.f32 %v7964, %v8348
    %v8350 = vpop.f32.mrb[0].mxu0
    %8351 = vmatprep.mubr.f32.mxu0 0.0
    %8352 = vmatmul.mubr.f32.gmra.mrb[0].mxu0 %v6267
    %v8353 = vpop.f32.mrb[0].mxu0
    %v8354 = vadd.f32 %v7969, %v8353
    %v8355 = vpop.f32.mrb[0].mxu0
    %8356 = vmatprep.mubr.f32.mxu0 0.0
    %8357 = vmatmul.mubr.f32.gmra.mrb[0].mxu0 %v6276
    %v8358 = vpop.f32.mrb[0].mxu0
    %v8359 = vadd.f32 %v7974, %v8358
    %v8360 = vpop.f32.mrb[0].mxu0
    %8361 = vmatprep.mubr.f32.mxu0 0.0
    %8362 = vmatmul.mubr.f32.gmra.mrb[0].mxu0 %v6285
    %v8363 = vpop.f32.mrb[0].mxu0
    %v8364 = vadd.f32 %v7979, %v8363
    %v8365 = vpop.f32.mrb[0].mxu0
    %8366 = vmatprep.mubr.f32.mxu0 0.0
    %8367 = vmatmul.mubr.f32.gmra.mrb[0].mxu0 %v6294
    %v8368 = vpop.f32.mrb[0].mxu0
    %v8369 = vadd.f32 %v7984, %v8368
    %v8370 = vpop.f32.mrb[0].mxu0
    %8371 = vmatprep.mubr.f32.mxu0 0.0
    %8372 = vmatmul.mubr.f32.gmra.mrb[0].mxu0 %v6303
    %v8373 = vpop.f32.mrb[0].mxu0
    %v8374 = vadd.f32 %v7989, %v8373
    %v8375 = vpop.f32.mrb[0].mxu0
    %8376 = vmatprep.mubr.f32.mxu0 0.0
    %8377 = vmatmul.mubr.f32.gmra.mrb[0].mxu0 %v6312
    %v8378 = vpop.f32.mrb[0].mxu0
    %v8379 = vadd.f32 %v7994, %v8378
    %v8380 = vpop.f32.mrb[0].mxu0
    %8381 = vdwg.mxu0
    %v8382 = vadd.f32 %v8064, %v8069
    %v8383 = vadd.f32 %v8382, %v8074
    %v8384 = vadd.f32 %v8383, %v8079
    %v8385 = vadd.f32 %v8384, %v8084
    %v8386 = vadd.f32 %v8385, %v8089
    %v8387 = vadd.f32 %v8386, %v8094
    %v8388 = vadd.f32 %v8387, %v8099
    %v8389 = vadd.f32 %v8388, %v8104
    %v8390 = vadd.f32 %v8389, %v8109
    %v8391 = vadd.f32 %v8390, %v8114
    %v8392 = vadd.f32 %v8391, %v8119
    %v8393 = vadd.f32 %v8392, %v8124
    %v8394 = vadd.f32 %v8393, %v8129
    %v8395 = vadd.f32 %v8394, %v8134
    %v8396 = vadd.f32 %v8395, %v8139
    %v8397 = vadd.f32 %v8396, %v8144
    %v8398 = vadd.f32 %v8397, %v8149
    %v8399 = vadd.f32 %v8398, %v8154
    %v8400 = vadd.f32 %v8399, %v8159
    %v8401 = vadd.f32 %v8400, %v8164
    %v8402 = vadd.f32 %v8401, %v8169
    %v8403 = vadd.f32 %v8402, %v8174
    %v8404 = vadd.f32 %v8403, %v8179
    %v8405 = vadd.f32 %v8404, %v8184
    %v8406 = vadd.f32 %v8405, %v8189
    %v8407 = vadd.f32 %v8406, %v8194
    %v8408 = vadd.f32 %v8407, %v8199
    %v8409 = vadd.f32 %v8408, %v8204
    %v8410 = vadd.f32 %v8409, %v8209
    %v8411 = vadd.f32 %v8410, %v8214
    %v8412 = vadd.f32 %v8411, %v8219
    %v8413 = vadd.f32 %v8412, %v8224
    %v8414 = vadd.f32 %v8413, %v8229
    %v8415 = vadd.f32 %v8414, %v8234
    %v8416 = vadd.f32 %v8415, %v8239
    %v8417 = vadd.f32 %v8416, %v8244
    %v8418 = vadd.f32 %v8417, %v8249
    %v8419 = vadd.f32 %v8418, %v8254
    %v8420 = vadd.f32 %v8419, %v8259
    %v8421 = vadd.f32 %v8420, %v8264
    %v8422 = vadd.f32 %v8421, %v8269
    %v8423 = vadd.f32 %v8422, %v8274
    %v8424 = vadd.f32 %v8423, %v8279
    %v8425 = vadd.f32 %v8424, %v8284
    %v8426 = vadd.f32 %v8425, %v8289
    %v8427 = vadd.f32 %v8426, %v8294
    %v8428 = vadd.f32 %v8427, %v8299
    %v8429 = vadd.f32 %v8428, %v8304
    %v8430 = vadd.f32 %v8429, %v8309
    %v8431 = vadd.f32 %v8430, %v8314
    %v8432 = vadd.f32 %v8431, %v8319
    %v8433 = vadd.f32 %v8432, %v8324
    %v8434 = vadd.f32 %v8433, %v8329
    %v8435 = vadd.f32 %v8434, %v8334
    %v8436 = vadd.f32 %v8435, %v8339
    %v8437 = vadd.f32 %v8436, %v8344
    %v8438 = vadd.f32 %v8437, %v8349
    %v8439 = vadd.f32 %v8438, %v8354
    %v8440 = vadd.f32 %v8439, %v8359
    %v8441 = vadd.f32 %v8440, %v8364
    %v8442 = vadd.f32 %v8441, %v8369
    %v8443 = vadd.f32 %v8442, %v8374
    %v8444 = vadd.f32 %v8443, %v8379
    %v8445 = vrot.slane %v8444, 4
    %v8446 = vadd.f32 %v8444, %v8445
    %v8447 = vrot.slane %v8446, 2
    %v8448 = vadd.f32 %v8446, %v8447
    %v8449 = vrot.slane %v8448, 1
    %v8450 = vadd.f32 %v8448, %v8449
    %v8451 = vmul.f32 %v8064, %v8064
    %v8452 = vmul.f32 %v8069, %v8069
    %v8453 = vmul.f32 %v8074, %v8074
    %v8454 = vmul.f32 %v8079, %v8079
    %v8455 = vmul.f32 %v8084, %v8084
    %v8456 = vmul.f32 %v8089, %v8089
    %v8457 = vmul.f32 %v8094, %v8094
    %v8458 = vmul.f32 %v8099, %v8099
    %v8459 = vmul.f32 %v8104, %v8104
    %v8460 = vmul.f32 %v8109, %v8109
    %v8461 = vmul.f32 %v8114, %v8114
    %v8462 = vmul.f32 %v8119, %v8119
    %v8463 = vmul.f32 %v8124, %v8124
    %v8464 = vmul.f32 %v8129, %v8129
    %v8465 = vmul.f32 %v8134, %v8134
    %v8466 = vmul.f32 %v8139, %v8139
    %v8467 = vmul.f32 %v8144, %v8144
    %v8468 = vmul.f32 %v8149, %v8149
    %v8469 = vmul.f32 %v8154, %v8154
    %v8470 = vmul.f32 %v8159, %v8159
    %v8471 = vmul.f32 %v8164, %v8164
    %v8472 = vmul.f32 %v8169, %v8169
    %v8473 = vmul.f32 %v8174, %v8174
    %v8474 = vmul.f32 %v8179, %v8179
    %v8475 = vmul.f32 %v8184, %v8184
    %v8476 = vmul.f32 %v8189, %v8189
    %v8477 = vmul.f32 %v8194, %v8194
    %v8478 = vmul.f32 %v8199, %v8199
    %v8479 = vmul.f32 %v8204, %v8204
    %v8480 = vmul.f32 %v8209, %v8209
    %v8481 = vmul.f32 %v8214, %v8214
    %v8482 = vmul.f32 %v8219, %v8219
    %v8483 = vmul.f32 %v8224, %v8224
    %v8484 = vmul.f32 %v8229, %v8229
    %v8485 = vmul.f32 %v8234, %v8234
    %v8486 = vmul.f32 %v8239, %v8239
    %v8487 = vmul.f32 %v8244, %v8244
    %v8488 = vmul.f32 %v8249, %v8249
    %v8489 = vmul.f32 %v8254, %v8254
    %v8490 = vmul.f32 %v8259, %v8259
    %v8491 = vmul.f32 %v8264, %v8264
    %v8492 = vmul.f32 %v8269, %v8269
    %v8493 = vmul.f32 %v8274, %v8274
    %v8494 = vmul.f32 %v8279, %v8279
    %v8495 = vmul.f32 %v8284, %v8284
    %v8496 = vmul.f32 %v8289, %v8289
    %v8497 = vmul.f32 %v8294, %v8294
    %v8498 = vmul.f32 %v8299, %v8299
    %v8499 = vmul.f32 %v8304, %v8304
    %v8500 = vmul.f32 %v8309, %v8309
    %v8501 = vmul.f32 %v8314, %v8314
    %v8502 = vmul.f32 %v8319, %v8319
    %v8503 = vmul.f32 %v8324, %v8324
    %v8504 = vmul.f32 %v8329, %v8329
    %v8505 = vmul.f32 %v8334, %v8334
    %v8506 = vmul.f32 %v8339, %v8339
    %v8507 = vmul.f32 %v8344, %v8344
    %v8508 = vmul.f32 %v8349, %v8349
    %v8509 = vmul.f32 %v8354, %v8354
    %v8510 = vmul.f32 %v8359, %v8359
    %v8511 = vmul.f32 %v8364, %v8364
    %v8512 = vmul.f32 %v8369, %v8369
    %v8513 = vmul.f32 %v8374, %v8374
    %v8514 = vmul.f32 %v8379, %v8379
    %v8515 = vadd.f32 %v8451, %v8452
    %v8516 = vadd.f32 %v8515, %v8453
    %v8517 = vadd.f32 %v8516, %v8454
    %v8518 = vadd.f32 %v8517, %v8455
    %v8519 = vadd.f32 %v8518, %v8456
    %v8520 = vadd.f32 %v8519, %v8457
    %v8521 = vadd.f32 %v8520, %v8458
    %v8522 = vadd.f32 %v8521, %v8459
    %v8523 = vadd.f32 %v8522, %v8460
    %v8524 = vadd.f32 %v8523, %v8461
    %v8525 = vadd.f32 %v8524, %v8462
    %v8526 = vadd.f32 %v8525, %v8463
    %v8527 = vadd.f32 %v8526, %v8464
    %v8528 = vadd.f32 %v8527, %v8465
    %v8529 = vadd.f32 %v8528, %v8466
    %v8530 = vadd.f32 %v8529, %v8467
    %v8531 = vadd.f32 %v8530, %v8468
    %v8532 = vadd.f32 %v8531, %v8469
    %v8533 = vadd.f32 %v8532, %v8470
    %v8534 = vadd.f32 %v8533, %v8471
    %v8535 = vadd.f32 %v8534, %v8472
    %v8536 = vadd.f32 %v8535, %v8473
    %v8537 = vadd.f32 %v8536, %v8474
    %v8538 = vadd.f32 %v8537, %v8475
    %v8539 = vadd.f32 %v8538, %v8476
    %v8540 = vadd.f32 %v8539, %v8477
    %v8541 = vadd.f32 %v8540, %v8478
    %v8542 = vadd.f32 %v8541, %v8479
    %v8543 = vadd.f32 %v8542, %v8480
    %v8544 = vadd.f32 %v8543, %v8481
    %v8545 = vadd.f32 %v8544, %v8482
    %v8546 = vadd.f32 %v8545, %v8483
    %v8547 = vadd.f32 %v8546, %v8484
    %v8548 = vadd.f32 %v8547, %v8485
    %v8549 = vadd.f32 %v8548, %v8486
    %v8550 = vadd.f32 %v8549, %v8487
    %v8551 = vadd.f32 %v8550, %v8488
    %v8552 = vadd.f32 %v8551, %v8489
    %v8553 = vadd.f32 %v8552, %v8490
    %v8554 = vadd.f32 %v8553, %v8491
    %v8555 = vadd.f32 %v8554, %v8492
    %v8556 = vadd.f32 %v8555, %v8493
    %v8557 = vadd.f32 %v8556, %v8494
    %v8558 = vadd.f32 %v8557, %v8495
    %v8559 = vadd.f32 %v8558, %v8496
    %v8560 = vadd.f32 %v8559, %v8497
    %v8561 = vadd.f32 %v8560, %v8498
    %v8562 = vadd.f32 %v8561, %v8499
    %v8563 = vadd.f32 %v8562, %v8500
    %v8564 = vadd.f32 %v8563, %v8501
    %v8565 = vadd.f32 %v8564, %v8502
    %v8566 = vadd.f32 %v8565, %v8503
    %v8567 = vadd.f32 %v8566, %v8504
    %v8568 = vadd.f32 %v8567, %v8505
    %v8569 = vadd.f32 %v8568, %v8506
    %v8570 = vadd.f32 %v8569, %v8507
    %v8571 = vadd.f32 %v8570, %v8508
    %v8572 = vadd.f32 %v8571, %v8509
    %v8573 = vadd.f32 %v8572, %v8510
    %v8574 = vadd.f32 %v8573, %v8511
    %v8575 = vadd.f32 %v8574, %v8512
    %v8576 = vadd.f32 %v8575, %v8513
    %v8577 = vadd.f32 %v8576, %v8514
    %v8578 = vrot.slane %v8577, 4
    %v8579 = vadd.f32 %v8577, %v8578
    %v8580 = vrot.slane %v8579, 2
    %v8581 = vadd.f32 %v8579, %v8580
    %v8582 = vrot.slane %v8581, 1
    %v8583 = vadd.f32 %v8581, %v8582
    %v8584 = vmul.f32 %v8450, 0.001953125
    %v8585 = vmul.f32 %v8583, 0.001953125
    %v8586 = vmul.f32 %v8584, %v8584
    %v8587 = vsub.f32 %v8585, %v8586
    %v8588 = vmax.f32 %v8587, 0.0
    %v8589 = vld [vmem:[%s5] sm:$0x1]
    %v8590 = vadd.f32 %v8588, 1e-05
    %v8591 = vrsqrt.pop %v8590
    %v8592 = vmul.f32 %v8589, %v8591
    %v8593 = vld [vmem:[%s6] sm:$0x1]
    %v8594 = vmul.f32 %v8584, %v8592
    %v8595 = vsub.f32 %v8593, %v8594
    %v8597 = vlaneseq
    %v8598 = vshrl.u32 %v8597, 7
    %v8599 = vsub.s32 0, %v8598
    %v8600 = vrot.slane %v8592, %v8599
    %v8602 = vmul.f32 %v8064, %v8600
    %v8603 = vmul.f32 %v8069, %v8600
    %v8604 = vmul.f32 %v8074, %v8600
    %v8605 = vmul.f32 %v8079, %v8600
    %v8606 = vmul.f32 %v8084, %v8600
    %v8607 = vmul.f32 %v8089, %v8600
    %v8608 = vmul.f32 %v8094, %v8600
    %v8609 = vmul.f32 %v8099, %v8600
    %v8610 = vmul.f32 %v8104, %v8600
    %v8611 = vmul.f32 %v8109, %v8600
    %v8612 = vmul.f32 %v8114, %v8600
    %v8613 = vmul.f32 %v8119, %v8600
    %v8614 = vmul.f32 %v8124, %v8600
    %v8615 = vmul.f32 %v8129, %v8600
    %v8616 = vmul.f32 %v8134, %v8600
    %v8617 = vmul.f32 %v8139, %v8600
    %v8618 = vmul.f32 %v8144, %v8600
    %v8619 = vmul.f32 %v8149, %v8600
    %v8620 = vmul.f32 %v8154, %v8600
    %v8621 = vmul.f32 %v8159, %v8600
    %v8622 = vmul.f32 %v8164, %v8600
    %v8623 = vmul.f32 %v8169, %v8600
    %v8624 = vmul.f32 %v8174, %v8600
    %v8625 = vmul.f32 %v8179, %v8600
    %v8626 = vmul.f32 %v8184, %v8600
    %v8627 = vmul.f32 %v8189, %v8600
    %v8628 = vmul.f32 %v8194, %v8600
    %v8629 = vmul.f32 %v8199, %v8600
    %v8630 = vmul.f32 %v8204, %v8600
    %v8631 = vmul.f32 %v8209, %v8600
    %v8632 = vmul.f32 %v8214, %v8600
    %v8633 = vmul.f32 %v8219, %v8600
    %v8634 = vmul.f32 %v8224, %v8600
    %v8635 = vmul.f32 %v8229, %v8600
    %v8636 = vmul.f32 %v8234, %v8600
    %v8637 = vmul.f32 %v8239, %v8600
    %v8638 = vmul.f32 %v8244, %v8600
    %v8639 = vmul.f32 %v8249, %v8600
    %v8640 = vmul.f32 %v8254, %v8600
    %v8641 = vmul.f32 %v8259, %v8600
    %v8642 = vmul.f32 %v8264, %v8600
    %v8643 = vmul.f32 %v8269, %v8600
    %v8644 = vmul.f32 %v8274, %v8600
    %v8645 = vmul.f32 %v8279, %v8600
    %v8646 = vmul.f32 %v8284, %v8600
    %v8647 = vmul.f32 %v8289, %v8600
    %v8648 = vmul.f32 %v8294, %v8600
    %v8649 = vmul.f32 %v8299, %v8600
    %v8650 = vmul.f32 %v8304, %v8600
    %v8651 = vmul.f32 %v8309, %v8600
    %v8652 = vmul.f32 %v8314, %v8600
    %v8653 = vmul.f32 %v8319, %v8600
    %v8654 = vmul.f32 %v8324, %v8600
    %v8655 = vmul.f32 %v8329, %v8600
    %v8656 = vmul.f32 %v8334, %v8600
    %v8657 = vmul.f32 %v8339, %v8600
    %v8658 = vmul.f32 %v8344, %v8600
    %v8659 = vmul.f32 %v8349, %v8600
    %v8660 = vmul.f32 %v8354, %v8600
    %v8661 = vmul.f32 %v8359, %v8600
    %v8662 = vmul.f32 %v8364, %v8600
    %v8663 = vmul.f32 %v8369, %v8600
    %v8664 = vmul.f32 %v8374, %v8600
    %v8665 = vmul.f32 %v8379, %v8600
    %v8667 = vlaneseq
    %v8668 = vshrl.u32 %v8667, 7
    %v8669 = vsub.s32 0, %v8668
    %v8670 = vrot.slane %v8595, %v8669
    %v8672 = vadd.f32 %v8602, %v8670
    %v8673 = vadd.f32 %v8603, %v8670
    %v8674 = vadd.f32 %v8604, %v8670
    %v8675 = vadd.f32 %v8605, %v8670
    %v8676 = vadd.f32 %v8606, %v8670
    %v8677 = vadd.f32 %v8607, %v8670
    %v8678 = vadd.f32 %v8608, %v8670
    %v8679 = vadd.f32 %v8609, %v8670
    %v8680 = vadd.f32 %v8610, %v8670
    %v8681 = vadd.f32 %v8611, %v8670
    %v8682 = vadd.f32 %v8612, %v8670
    %v8683 = vadd.f32 %v8613, %v8670
    %v8684 = vadd.f32 %v8614, %v8670
    %v8685 = vadd.f32 %v8615, %v8670
    %v8686 = vadd.f32 %v8616, %v8670
    %v8687 = vadd.f32 %v8617, %v8670
    %v8688 = vadd.f32 %v8618, %v8670
    %v8689 = vadd.f32 %v8619, %v8670
    %v8690 = vadd.f32 %v8620, %v8670
    %v8691 = vadd.f32 %v8621, %v8670
    %v8692 = vadd.f32 %v8622, %v8670
    %v8693 = vadd.f32 %v8623, %v8670
    %v8694 = vadd.f32 %v8624, %v8670
    %v8695 = vadd.f32 %v8625, %v8670
    %v8696 = vadd.f32 %v8626, %v8670
    %v8697 = vadd.f32 %v8627, %v8670
    %v8698 = vadd.f32 %v8628, %v8670
    %v8699 = vadd.f32 %v8629, %v8670
    %v8700 = vadd.f32 %v8630, %v8670
    %v8701 = vadd.f32 %v8631, %v8670
    %v8702 = vadd.f32 %v8632, %v8670
    %v8703 = vadd.f32 %v8633, %v8670
    %v8704 = vadd.f32 %v8634, %v8670
    %v8705 = vadd.f32 %v8635, %v8670
    %v8706 = vadd.f32 %v8636, %v8670
    %v8707 = vadd.f32 %v8637, %v8670
    %v8708 = vadd.f32 %v8638, %v8670
    %v8709 = vadd.f32 %v8639, %v8670
    %v8710 = vadd.f32 %v8640, %v8670
    %v8711 = vadd.f32 %v8641, %v8670
    %v8712 = vadd.f32 %v8642, %v8670
    %v8713 = vadd.f32 %v8643, %v8670
    %v8714 = vadd.f32 %v8644, %v8670
    %v8715 = vadd.f32 %v8645, %v8670
    %v8716 = vadd.f32 %v8646, %v8670
    %v8717 = vadd.f32 %v8647, %v8670
    %v8718 = vadd.f32 %v8648, %v8670
    %v8719 = vadd.f32 %v8649, %v8670
    %v8720 = vadd.f32 %v8650, %v8670
    %v8721 = vadd.f32 %v8651, %v8670
    %v8722 = vadd.f32 %v8652, %v8670
    %v8723 = vadd.f32 %v8653, %v8670
    %v8724 = vadd.f32 %v8654, %v8670
    %v8725 = vadd.f32 %v8655, %v8670
    %v8726 = vadd.f32 %v8656, %v8670
    %v8727 = vadd.f32 %v8657, %v8670
    %v8728 = vadd.f32 %v8658, %v8670
    %v8729 = vadd.f32 %v8659, %v8670
    %v8730 = vadd.f32 %v8660, %v8670
    %v8731 = vadd.f32 %v8661, %v8670
    %v8732 = vadd.f32 %v8662, %v8670
    %v8733 = vadd.f32 %v8663, %v8670
    %v8734 = vadd.f32 %v8664, %v8670
    %v8735 = vadd.f32 %v8665, %v8670
    %v8736 = vld [vmem:[#allocation4] sm:$0xff]
    %v8737 = vld [vmem:[#allocation4 + $0x8] sm:$0xff]
    %v8738 = vld [vmem:[#allocation4 + $0x10] sm:$0xff]
    %v8739 = vld [vmem:[#allocation4 + $0x18] sm:$0xff]
    %v8740 = vld [vmem:[#allocation4 + $0x20] sm:$0xff]
    %v8741 = vld [vmem:[#allocation4 + $0x28] sm:$0xff]
    %v8742 = vld [vmem:[#allocation4 + $0x30] sm:$0xff]
    %v8743 = vld [vmem:[#allocation4 + $0x38] sm:$0xff]
    %v8744 = vld [vmem:[#allocation4 + $0x40] sm:$0xff]
    %v8745 = vld [vmem:[#allocation4 + $0x48] sm:$0xff]
    %v8746 = vld [vmem:[#allocation4 + $0x50] sm:$0xff]
    %v8747 = vld [vmem:[#allocation4 + $0x58] sm:$0xff]
    %v8748 = vld [vmem:[#allocation4 + $0x60] sm:$0xff]
    %v8749 = vld [vmem:[#allocation4 + $0x68] sm:$0xff]
    %v8750 = vld [vmem:[#allocation4 + $0x70] sm:$0xff]
    %v8751 = vld [vmem:[#allocation4 + $0x78] sm:$0xff]
    %v8752 = vld [vmem:[#allocation4 + $0x80] sm:$0xff]
    %v8753 = vld [vmem:[#allocation4 + $0x88] sm:$0xff]
    %v8754 = vld [vmem:[#allocation4 + $0x90] sm:$0xff]
    %v8755 = vld [vmem:[#allocation4 + $0x98] sm:$0xff]
    %v8756 = vld [vmem:[#allocation4 + $0xa0] sm:$0xff]
    %v8757 = vld [vmem:[#allocation4 + $0xa8] sm:$0xff]
    %v8758 = vld [vmem:[#allocation4 + $0xb0] sm:$0xff]
    %v8759 = vld [vmem:[#allocation4 + $0xb8] sm:$0xff]
    %v8760 = vld [vmem:[#allocation4 + $0xc0] sm:$0xff]
    %v8761 = vld [vmem:[#allocation4 + $0xc8] sm:$0xff]
    %v8762 = vld [vmem:[#allocation4 + $0xd0] sm:$0xff]
    %v8763 = vld [vmem:[#allocation4 + $0xd8] sm:$0xff]
    %v8764 = vld [vmem:[#allocation4 + $0xe0] sm:$0xff]
    %v8765 = vld [vmem:[#allocation4 + $0xe8] sm:$0xff]
    %v8766 = vld [vmem:[#allocation4 + $0xf0] sm:$0xff]
    %v8767 = vld [vmem:[#allocation4 + $0xf8] sm:$0xff]
    %v8768 = vld [vmem:[#allocation4 + $0x100] sm:$0xff]
    %v8769 = vld [vmem:[#allocation4 + $0x108] sm:$0xff]
    %v8770 = vld [vmem:[#allocation4 + $0x110] sm:$0xff]
    %v8771 = vld [vmem:[#allocation4 + $0x118] sm:$0xff]
    %v8772 = vld [vmem:[#allocation4 + $0x120] sm:$0xff]
    %v8773 = vld [vmem:[#allocation4 + $0x128] sm:$0xff]
    %v8774 = vld [vmem:[#allocation4 + $0x130] sm:$0xff]
    %v8775 = vld [vmem:[#allocation4 + $0x138] sm:$0xff]
    %v8776 = vld [vmem:[#allocation4 + $0x140] sm:$0xff]
    %v8777 = vld [vmem:[#allocation4 + $0x148] sm:$0xff]
    %v8778 = vld [vmem:[#allocation4 + $0x150] sm:$0xff]
    %v8779 = vld [vmem:[#allocation4 + $0x158] sm:$0xff]
    %v8780 = vld [vmem:[#allocation4 + $0x160] sm:$0xff]
    %v8781 = vld [vmem:[#allocation4 + $0x168] sm:$0xff]
    %v8782 = vld [vmem:[#allocation4 + $0x170] sm:$0xff]
    %v8783 = vld [vmem:[#allocation4 + $0x178] sm:$0xff]
    %v8784 = vld [vmem:[#allocation4 + $0x180] sm:$0xff]
    %v8785 = vld [vmem:[#allocation4 + $0x188] sm:$0xff]
    %v8786 = vld [vmem:[#allocation4 + $0x190] sm:$0xff]
    %v8787 = vld [vmem:[#allocation4 + $0x198] sm:$0xff]
    %v8788 = vld [vmem:[#allocation4 + $0x1a0] sm:$0xff]
    %v8789 = vld [vmem:[#allocation4 + $0x1a8] sm:$0xff]
    %v8790 = vld [vmem:[#allocation4 + $0x1b0] sm:$0xff]
    %v8791 = vld [vmem:[#allocation4 + $0x1b8] sm:$0xff]
    %v8792 = vld [vmem:[#allocation4 + $0x1c0] sm:$0xff]
    %v8793 = vld [vmem:[#allocation4 + $0x1c8] sm:$0xff]
    %v8794 = vld [vmem:[#allocation4 + $0x1d0] sm:$0xff]
    %v8795 = vld [vmem:[#allocation4 + $0x1d8] sm:$0xff]
    %v8796 = vld [vmem:[#allocation4 + $0x1e0] sm:$0xff]
    %v8797 = vld [vmem:[#allocation4 + $0x1e8] sm:$0xff]
    %v8798 = vld [vmem:[#allocation4 + $0x1f0] sm:$0xff]
    %v8799 = vld [vmem:[#allocation4 + $0x1f8] sm:$0xff]
    %v8800 = vadd.f32 %v8672, %v8736
    %v8801 = vadd.f32 %v8673, %v8737
    %v8802 = vadd.f32 %v8674, %v8738
    %v8803 = vadd.f32 %v8675, %v8739
    %v8804 = vadd.f32 %v8676, %v8740
    %v8805 = vadd.f32 %v8677, %v8741
    %v8806 = vadd.f32 %v8678, %v8742
    %v8807 = vadd.f32 %v8679, %v8743
    %v8808 = vadd.f32 %v8680, %v8744
    %v8809 = vadd.f32 %v8681, %v8745
    %v8810 = vadd.f32 %v8682, %v8746
    %v8811 = vadd.f32 %v8683, %v8747
    %v8812 = vadd.f32 %v8684, %v8748
    %v8813 = vadd.f32 %v8685, %v8749
    %v8814 = vadd.f32 %v8686, %v8750
    %v8815 = vadd.f32 %v8687, %v8751
    %v8816 = vadd.f32 %v8688, %v8752
    %v8817 = vadd.f32 %v8689, %v8753
    %v8818 = vadd.f32 %v8690, %v8754
    %v8819 = vadd.f32 %v8691, %v8755
    %v8820 = vadd.f32 %v8692, %v8756
    %v8821 = vadd.f32 %v8693, %v8757
    %v8822 = vadd.f32 %v8694, %v8758
    %v8823 = vadd.f32 %v8695, %v8759
    %v8824 = vadd.f32 %v8696, %v8760
    %v8825 = vadd.f32 %v8697, %v8761
    %v8826 = vadd.f32 %v8698, %v8762
    %v8827 = vadd.f32 %v8699, %v8763
    %v8828 = vadd.f32 %v8700, %v8764
    %v8829 = vadd.f32 %v8701, %v8765
    %v8830 = vadd.f32 %v8702, %v8766
    %v8831 = vadd.f32 %v8703, %v8767
    %v8832 = vadd.f32 %v8704, %v8768
    %v8833 = vadd.f32 %v8705, %v8769
    %v8834 = vadd.f32 %v8706, %v8770
    %v8835 = vadd.f32 %v8707, %v8771
    %v8836 = vadd.f32 %v8708, %v8772
    %v8837 = vadd.f32 %v8709, %v8773
    %v8838 = vadd.f32 %v8710, %v8774
    %v8839 = vadd.f32 %v8711, %v8775
    %v8840 = vadd.f32 %v8712, %v8776
    %v8841 = vadd.f32 %v8713, %v8777
    %v8842 = vadd.f32 %v8714, %v8778
    %v8843 = vadd.f32 %v8715, %v8779
    %v8844 = vadd.f32 %v8716, %v8780
    %v8845 = vadd.f32 %v8717, %v8781
    %v8846 = vadd.f32 %v8718, %v8782
    %v8847 = vadd.f32 %v8719, %v8783
    %v8848 = vadd.f32 %v8720, %v8784
    %v8849 = vadd.f32 %v8721, %v8785
    %v8850 = vadd.f32 %v8722, %v8786
    %v8851 = vadd.f32 %v8723, %v8787
    %v8852 = vadd.f32 %v8724, %v8788
    %v8853 = vadd.f32 %v8725, %v8789
    %v8854 = vadd.f32 %v8726, %v8790
    %v8855 = vadd.f32 %v8727, %v8791
    %v8856 = vadd.f32 %v8728, %v8792
    %v8857 = vadd.f32 %v8729, %v8793
    %v8858 = vadd.f32 %v8730, %v8794
    %v8859 = vadd.f32 %v8731, %v8795
    %v8860 = vadd.f32 %v8732, %v8796
    %v8861 = vadd.f32 %v8733, %v8797
    %v8862 = vadd.f32 %v8734, %v8798
    %v8863 = vadd.f32 %v8735, %v8799
    %v8864 = vmax.f32 %v8800, 0.0
    %v8865 = vmax.f32 %v8801, 0.0
    %v8866 = vmax.f32 %v8802, 0.0
    %v8867 = vmax.f32 %v8803, 0.0
    %v8868 = vmax.f32 %v8804, 0.0
    %v8869 = vmax.f32 %v8805, 0.0
    %v8870 = vmax.f32 %v8806, 0.0
    %v8871 = vmax.f32 %v8807, 0.0
    %v8872 = vmax.f32 %v8808, 0.0
    %v8873 = vmax.f32 %v8809, 0.0
    %v8874 = vmax.f32 %v8810, 0.0
    %v8875 = vmax.f32 %v8811, 0.0
    %v8876 = vmax.f32 %v8812, 0.0
    %v8877 = vmax.f32 %v8813, 0.0
    %v8878 = vmax.f32 %v8814, 0.0
    %v8879 = vmax.f32 %v8815, 0.0
    %v8880 = vmax.f32 %v8816, 0.0
    %v8881 = vmax.f32 %v8817, 0.0
    %v8882 = vmax.f32 %v8818, 0.0
    %v8883 = vmax.f32 %v8819, 0.0
    %v8884 = vmax.f32 %v8820, 0.0
    %v8885 = vmax.f32 %v8821, 0.0
    %v8886 = vmax.f32 %v8822, 0.0
    %v8887 = vmax.f32 %v8823, 0.0
    %v8888 = vmax.f32 %v8824, 0.0
    %v8889 = vmax.f32 %v8825, 0.0
    %v8890 = vmax.f32 %v8826, 0.0
    %v8891 = vmax.f32 %v8827, 0.0
    %v8892 = vmax.f32 %v8828, 0.0
    %v8893 = vmax.f32 %v8829, 0.0
    %v8894 = vmax.f32 %v8830, 0.0
    %v8895 = vmax.f32 %v8831, 0.0
    %v8896 = vmax.f32 %v8832, 0.0
    %v8897 = vmax.f32 %v8833, 0.0
    %v8898 = vmax.f32 %v8834, 0.0
    %v8899 = vmax.f32 %v8835, 0.0
    %v8900 = vmax.f32 %v8836, 0.0
    %v8901 = vmax.f32 %v8837, 0.0
    %v8902 = vmax.f32 %v8838, 0.0
    %v8903 = vmax.f32 %v8839, 0.0
    %v8904 = vmax.f32 %v8840, 0.0
    %v8905 = vmax.f32 %v8841, 0.0
    %v8906 = vmax.f32 %v8842, 0.0
    %v8907 = vmax.f32 %v8843, 0.0
    %v8908 = vmax.f32 %v8844, 0.0
    %v8909 = vmax.f32 %v8845, 0.0
    %v8910 = vmax.f32 %v8846, 0.0
    %v8911 = vmax.f32 %v8847, 0.0
    %v8912 = vmax.f32 %v8848, 0.0
    %v8913 = vmax.f32 %v8849, 0.0
    %v8914 = vmax.f32 %v8850, 0.0
    %v8915 = vmax.f32 %v8851, 0.0
    %v8916 = vmax.f32 %v8852, 0.0
    %v8917 = vmax.f32 %v8853, 0.0
    %v8918 = vmax.f32 %v8854, 0.0
    %v8919 = vmax.f32 %v8855, 0.0
    %v8920 = vmax.f32 %v8856, 0.0
    %v8921 = vmax.f32 %v8857, 0.0
    %v8922 = vmax.f32 %v8858, 0.0
    %v8923 = vmax.f32 %v8859, 0.0
    %v8924 = vmax.f32 %v8860, 0.0
    %v8925 = vmax.f32 %v8861, 0.0
    %v8926 = vmax.f32 %v8862, 0.0
    %v8927 = vmax.f32 %v8863, 0.0
    %8928 = vst [vmem:[#allocation10] sm:$0xff] %v8864
    %8929 = vst [vmem:[#allocation10 + $0x8] sm:$0xff] %v8865
    %8930 = vst [vmem:[#allocation10 + $0x10] sm:$0xff] %v8866
    %8931 = vst [vmem:[#allocation10 + $0x18] sm:$0xff] %v8867
    %8932 = vst [vmem:[#allocation10 + $0x20] sm:$0xff] %v8868
    %8933 = vst [vmem:[#allocation10 + $0x28] sm:$0xff] %v8869
    %8934 = vst [vmem:[#allocation10 + $0x30] sm:$0xff] %v8870
    %8935 = vst [vmem:[#allocation10 + $0x38] sm:$0xff] %v8871
    %8936 = vst [vmem:[#allocation10 + $0x40] sm:$0xff] %v8872
    %8937 = vst [vmem:[#allocation10 + $0x48] sm:$0xff] %v8873
    %8938 = vst [vmem:[#allocation10 + $0x50] sm:$0xff] %v8874
    %8939 = vst [vmem:[#allocation10 + $0x58] sm:$0xff] %v8875
    %8940 = vst [vmem:[#allocation10 + $0x60] sm:$0xff] %v8876
    %8941 = vst [vmem:[#allocation10 + $0x68] sm:$0xff] %v8877
    %8942 = vst [vmem:[#allocation10 + $0x70] sm:$0xff] %v8878
    %8943 = vst [vmem:[#allocation10 + $0x78] sm:$0xff] %v8879
    %8944 = vst [vmem:[#allocation10 + $0x80] sm:$0xff] %v8880
    %8945 = vst [vmem:[#allocation10 + $0x88] sm:$0xff] %v8881
    %8946 = vst [vmem:[#allocation10 + $0x90] sm:$0xff] %v8882
    %8947 = vst [vmem:[#allocation10 + $0x98] sm:$0xff] %v8883
    %8948 = vst [vmem:[#allocation10 + $0xa0] sm:$0xff] %v8884
    %8949 = vst [vmem:[#allocation10 + $0xa8] sm:$0xff] %v8885
    %8950 = vst [vmem:[#allocation10 + $0xb0] sm:$0xff] %v8886
    %8951 = vst [vmem:[#allocation10 + $0xb8] sm:$0xff] %v8887
    %8952 = vst [vmem:[#allocation10 + $0xc0] sm:$0xff] %v8888
    %8953 = vst [vmem:[#allocation10 + $0xc8] sm:$0xff] %v8889
    %8954 = vst [vmem:[#allocation10 + $0xd0] sm:$0xff] %v8890
    %8955 = vst [vmem:[#allocation10 + $0xd8] sm:$0xff] %v8891
    %8956 = vst [vmem:[#allocation10 + $0xe0] sm:$0xff] %v8892
    %8957 = vst [vmem:[#allocation10 + $0xe8] sm:$0xff] %v8893
    %8958 = vst [vmem:[#allocation10 + $0xf0] sm:$0xff] %v8894
    %8959 = vst [vmem:[#allocation10 + $0xf8] sm:$0xff] %v8895
    %8960 = vst [vmem:[#allocation10 + $0x100] sm:$0xff] %v8896
    %8961 = vst [vmem:[#allocation10 + $0x108] sm:$0xff] %v8897
    %8962 = vst [vmem:[#allocation10 + $0x110] sm:$0xff] %v8898
    %8963 = vst [vmem:[#allocation10 + $0x118] sm:$0xff] %v8899
    %8964 = vst [vmem:[#allocation10 + $0x120] sm:$0xff] %v8900
    %8965 = vst [vmem:[#allocation10 + $0x128] sm:$0xff] %v8901
    %8966 = vst [vmem:[#allocation10 + $0x130] sm:$0xff] %v8902
    %8967 = vst [vmem:[#allocation10 + $0x138] sm:$0xff] %v8903
    %8968 = vst [vmem:[#allocation10 + $0x140] sm:$0xff] %v8904
    %8969 = vst [vmem:[#allocation10 + $0x148] sm:$0xff] %v8905
    %8970 = vst [vmem:[#allocation10 + $0x150] sm:$0xff] %v8906
    %8971 = vst [vmem:[#allocation10 + $0x158] sm:$0xff] %v8907
    %8972 = vst [vmem:[#allocation10 + $0x160] sm:$0xff] %v8908
    %8973 = vst [vmem:[#allocation10 + $0x168] sm:$0xff] %v8909
    %8974 = vst [vmem:[#allocation10 + $0x170] sm:$0xff] %v8910
    %8975 = vst [vmem:[#allocation10 + $0x178] sm:$0xff] %v8911
    %8976 = vst [vmem:[#allocation10 + $0x180] sm:$0xff] %v8912
    %8977 = vst [vmem:[#allocation10 + $0x188] sm:$0xff] %v8913
    %8978 = vst [vmem:[#allocation10 + $0x190] sm:$0xff] %v8914
    %8979 = vst [vmem:[#allocation10 + $0x198] sm:$0xff] %v8915
    %8980 = vst [vmem:[#allocation10 + $0x1a0] sm:$0xff] %v8916
    %8981 = vst [vmem:[#allocation10 + $0x1a8] sm:$0xff] %v8917
    %8982 = vst [vmem:[#allocation10 + $0x1b0] sm:$0xff] %v8918
    %8983 = vst [vmem:[#allocation10 + $0x1b8] sm:$0xff] %v8919
    %8984 = vst [vmem:[#allocation10 + $0x1c0] sm:$0xff] %v8920
    %8985 = vst [vmem:[#allocation10 + $0x1c8] sm:$0xff] %v8921
    %8986 = vst [vmem:[#allocation10 + $0x1d0] sm:$0xff] %v8922
    %8987 = vst [vmem:[#allocation10 + $0x1d8] sm:$0xff] %v8923
    %8988 = vst [vmem:[#allocation10 + $0x1e0] sm:$0xff] %v8924
    %8989 = vst [vmem:[#allocation10 + $0x1e8] sm:$0xff] %v8925
    %8990 = vst [vmem:[#allocation10 + $0x1f0] sm:$0xff] %v8926
    %8991 = vst [vmem:[#allocation10 + $0x1f8] sm:$0xff] %v8927
    // Predicated region
    $region42: #{tpu_custom_call.1} parent=1 // pred_check
      _
    $region43: #{tpu_custom_call.1} parent=1 // pred_check_branch
      %8993 = sbr.rel (0) target = $region45
    $region44: #{tpu_custom_call.1} parent=1 // pred_region
      %s8995 = ssub.s32 8192, 8192
      %8996 = vsyncadd [#allocation6], %s8995
      %s8997 = sshll.u32 [#allocation10], 4
      %s8998 = int_to_ptr.vmem [resolvable:$true] %s8997
      %9003 = dma.vmem_to_hbm [thread:$0]  %s8998, 8192, %s7, [#allocation6], 128, 128, 8
    $region45: #{tpu_custom_call.1} parent=1 // pred_fallthru
      _
    // Predicated region
    $region46: #{tpu_custom_call.1} parent=1 // pred_check
      _
    $region47: #{tpu_custom_call.1} parent=1 // pred_check_branch
      %9005 = sbr.rel (0) target = $region49
    $region48: #{tpu_custom_call.1} parent=1 // pred_region
      %9006 = dma.done [#allocation6], 8192
    $region49: #{tpu_custom_call.1} parent=1 // pred_fallthru
      _
    %9007 = vsyncpa [#allocation5], 1
    %9008 = vsyncpa [#allocation8], 1
    %9009 = vsyncpa [#allocation6], 1

</llo_original>
